<compile_context>
chip_gen: v6e
topology: v6e:2x2x1
jax: 0.10.0
libtpu: 0.0.40
codegen_flags: <defaults>
</compile_context>

<pallas_src>
import jax
import jax.numpy as jnp
import numpy as np
from jax.experimental import pallas as pl
from jax.experimental.pallas import tpu as pltpu

EPS = 1e-5


def _round_up(x, m):
    return ((x + m - 1) // m) * m


# --------------------------------------------------------------------------- #
# Fused kernel: conv1/2/3 (+folded BN, ReLU) -> running max over point tiles
#               -> fc1/fc2/fc3 head (on the last point tile)
# --------------------------------------------------------------------------- #
def _stn3d_kernel(x_ref, w1_ref, b1_ref, w2_ref, b2_ref, w3_ref, b3_ref,
                  wf1_ref, bf1_ref, wf2_ref, bf2_ref, wf3_ref, bf3_ref,
                  out_ref, pooled_acc):
    n_idx = pl.program_id(1)
    n_last = pl.num_programs(1) - 1
    bb, tn, cp = x_ref.shape
    f3 = w3_ref.shape[1]

    # Flatten (Bb, tn, Cp) -> (Bb*tn, Cp): conv(kernel=1) is per-point, so
    # batch boundaries do not matter for the matmuls.
    x = x_ref[...].reshape(bb * tn, cp)

    # conv1 + bn1 + relu  (BN folded into w/b; f32 accumulate + f32 elementwise)
    h = jnp.dot(x, w1_ref[...], preferred_element_type=jnp.float32) + b1_ref[...]
    h = jnp.maximum(h, 0.0)                                    # (rows, 64)
    # conv2 + bn2 + relu
    h = jnp.dot(h.astype(w2_ref.dtype), w2_ref[...],
                preferred_element_type=jnp.float32) + b2_ref[...]
    h = jnp.maximum(h, 0.0)                                    # (rows, 128)
    # conv3 + bn3 + relu
    h = jnp.dot(h.astype(w3_ref.dtype), w3_ref[...],
                preferred_element_type=jnp.float32) + b3_ref[...]
    h = jnp.maximum(h, 0.0)                                    # (rows, 1024)

    # torch.max(x, 2)[0] -> running max over point tiles (VMEM accumulator).
    tile_max = jnp.max(h.reshape(bb, tn, f3), axis=1)          # (Bb, 1024)

    @pl.when(n_idx == 0)
    def _():
        pooled_acc[...] = tile_max

    @pl.when(n_idx > 0)
    def _():
        pooled_acc[...] = jnp.maximum(pooled_acc[...], tile_max)

    # fc head on the finished pooled feature; identity already folded into bf3.
    @pl.when(n_idx == n_last)
    def _():
        g = pooled_acc[...].astype(wf1_ref.dtype)              # (Bb, 1024)
        f = jnp.dot(g, wf1_ref[...],
                    preferred_element_type=jnp.float32) + bf1_ref[...]
        f = jnp.maximum(f, 0.0)                                # (Bb, 512)
        f = jnp.dot(f.astype(wf2_ref.dtype), wf2_ref[...],
                    preferred_element_type=jnp.float32) + bf2_ref[...]
        f = jnp.maximum(f, 0.0)                                # (Bb, 256)
        f = jnp.dot(f.astype(wf3_ref.dtype), wf3_ref[...],
                    preferred_element_type=jnp.float32) + bf3_ref[...]
        out_ref[...] = f[:, None, :]                           # (Bb, 1, 128)


# --------------------------------------------------------------------------- #
# Wrapper
# --------------------------------------------------------------------------- #
def _const_spec(arr, single_buffer):
    """BlockSpec for a grid-constant (weight/bias) input."""
    nd = arr.ndim
    idx = lambda *_args, _nd=nd: (0,) * _nd
    if single_buffer:
        try:
            # Weights never change across the grid -> one VMEM buffer suffices.
            return pl.BlockSpec(arr.shape, idx, pipeline_mode=pl.Buffered(1))
        except (TypeError, ValueError):
            pass
    return pl.BlockSpec(arr.shape, idx)


def _choose_tiles(batch, n_points):
    """Point tiles of <=512 points; batch block sized so each conv matmul sees
    ~1024 rows (fills MXU sublanes, amortizes per-grid-step overhead) while the
    (rows, 1024) f32 activation stays a few MiB regardless of N."""
    n8 = _round_up(n_points, 8)
    n_tiles = -(-n8 // 512)
    tn = _round_up(-(-n8 // n_tiles), 8)
    np_pad = tn * n_tiles
    bb = max(1, min(batch, 1024 // tn))
    bp = _round_up(batch, bb)
    return bb, bp, tn, np_pad


def _stn3d_forward_impl(x_bcn, params, compute_dtype, single_buffer_weights):
    (w1, b1, w2, b2, w3, b3, wf1, bf1, wf2, bf2, wf3, bf3) = params
    B, C, N = x_bcn.shape
    Cp = w1.shape[0]          # channel dim, already padded to a multiple of 8
    F3 = w3.shape[1]          # 1024
    F_out = wf3.shape[1]      # 128 (lane-dense padded head output)

    Bb, Bp, tn, Np = _choose_tiles(B, N)

    # (B, C, N) -> (B, N, C); edge-pad points (neutral for max), zero-pad batch
    # rows (sliced away later) and channels (matching zero weight rows).
    x = jnp.transpose(x_bcn, (0, 2, 1))
    x = jnp.pad(x, ((0, 0), (0, Np - N), (0, 0)), mode="edge")
    x = jnp.pad(x, ((0, Bp - B), (0, 0), (0, Cp - C)))
    x = x.astype(compute_dtype)

    in_specs = [pl.BlockSpec((Bb, tn, Cp), lambda b, n: (b, n, 0))]
    for arr in (w1, b1, w2, b2, w3, b3, wf1, bf1, wf2, bf2, wf3, bf3):
        in_specs.append(_const_spec(arr, single_buffer_weights))

    head = pl.pallas_call(
        _stn3d_kernel,
        out_shape=jax.ShapeDtypeStruct((Bp, 1, F_out), jnp.float32),
        grid=(Bp // Bb, Np // tn),
        in_specs=in_specs,
        out_specs=pl.BlockSpec((Bb, 1, F_out), lambda b, n: (b, 0, 0)),
        scratch_shapes=[pltpu.VMEM((Bb, F3), jnp.float32)],
        compiler_params=pltpu.CompilerParams(
            dimension_semantics=("parallel", "arbitrary")),
    )(x, w1, b1, w2, b2, w3, b3, wf1, bf1, wf2, bf2, wf3, bf3)

    return head.reshape(Bp, F_out)[:B, :9].reshape(B, 3, 3)


def stn3d_forward(x_bcn, params, *, compute_dtype=jnp.bfloat16):
    """x_bcn: (B, C, N) float32 (PyTorch NCW layout). Returns (B, 3, 3)."""
    try:
        return _stn3d_forward_impl(x_bcn, params, compute_dtype, True)
    except Exception:
        # Fallback if pl.Buffered(1) is rejected by this jax/Mosaic version.
        return _stn3d_forward_impl(x_bcn, params, compute_dtype, False)


# --------------------------------------------------------------------------- #
# Parameter construction (deterministic, mimics nn.Module __init__ shapes)
# --------------------------------------------------------------------------- #
def init_raw_params(key, channel):
    """Raw PyTorch-style params: conv/linear weights (out, in), biases (out,),
    BatchNorm (gamma, beta, running_mean, running_var)."""
    keys = jax.random.split(key, 6)

    def lin(k, fan_in, fan_out):
        bound = 1.0 / np.sqrt(fan_in)
        kw, kb = jax.random.split(k)
        w = jax.random.uniform(kw, (fan_out, fan_in), jnp.float32, -bound, bound)
        b = jax.random.uniform(kb, (fan_out,), jnp.float32, -bound, bound)
        return w, b

    def bn(dim):
        # nn.BatchNorm1d default init; eval-mode (running stats) semantics.
        return (jnp.ones((dim,), jnp.float32), jnp.zeros((dim,), jnp.float32),
                jnp.zeros((dim,), jnp.float32), jnp.ones((dim,), jnp.float32))

    raw = {}
    raw['w1'], raw['b1'] = lin(keys[0], channel, 64)
    raw['w2'], raw['b2'] = lin(keys[1], 64, 128)
    raw['w3'], raw['b3'] = lin(keys[2], 128, 1024)
    raw['wf1'], raw['bf1'] = lin(keys[3], 1024, 512)
    raw['wf2'], raw['bf2'] = lin(keys[4], 512, 256)
    raw['wf3'], raw['bf3'] = lin(keys[5], 256, 9)
    raw['bn1'], raw['bn2'], raw['bn3'] = bn(64), bn(128), bn(1024)
    raw['bn4'], raw['bn5'] = bn(512), bn(256)
    return raw


def fold_params_for_kernel(raw, compute_dtype=jnp.bfloat16):
    """Fold eval-mode BatchNorm into the preceding weight/bias (in f32),
    transpose weights to (in, out), zero-pad conv1's input channels to a
    multiple of 8, fold the 3x3 identity into the fc3 bias, lane-pad the fc3
    output 9 -> 128, and cast weights to `compute_dtype` (biases stay f32)."""
    # TODO(synk): training-mode BatchNorm (batch statistics) is not implemented;
    # eval-mode running-stats semantics are used instead.
    def fold(w_oi, b_o, bn):
        gamma, beta, mean, var = bn
        scale = gamma / jnp.sqrt(var + EPS)
        shift = beta - mean * scale
        w_io = w_oi.T * scale[None, :]
        b = (b_o * scale + shift)[None, :]
        return w_io, b

    w1, b1 = fold(raw['w1'], raw['b1'], raw['bn1'])
    w2, b2 = fold(raw['w2'], raw['b2'], raw['bn2'])
    w3, b3 = fold(raw['w3'], raw['b3'], raw['bn3'])
    wf1, bf1 = fold(raw['wf1'], raw['bf1'], raw['bn4'])
    wf2, bf2 = fold(raw['wf2'], raw['bf2'], raw['bn5'])

    # conv1: zero-pad K (input channels) to a multiple of 8 for the MXU.
    c = w1.shape[0]
    cp = _round_up(c, 8)
    w1 = jnp.pad(w1, ((0, cp - c), (0, 0)))

    # fc3: fold the flattened 3x3 identity into the bias and pad the output
    # dim 9 -> 128 so the head's store is lane-dense.
    iden = jnp.array([[1., 0., 0., 0., 1., 0., 0., 0., 1.]], dtype=jnp.float32)
    wf3 = raw['wf3'].T                                       # (256, 9)
    bf3 = raw['bf3'][None, :] + iden                         # (1, 9)
    wf3 = jnp.pad(wf3, ((0, 0), (0, 128 - wf3.shape[1])))
    bf3 = jnp.pad(bf3, ((0, 0), (0, 128 - bf3.shape[1])))

    cast = lambda w: w.astype(compute_dtype)
    return (cast(w1), b1, cast(w2), b2, cast(w3), b3,
            cast(wf1), bf1, cast(wf2), bf2, cast(wf3), bf3)


# --------------------------------------------------------------------------- #
# Plain-JAX reference (PyTorch NCW layout, un-fused BN) for verification
# --------------------------------------------------------------------------- #
def reference_forward(x_bcn, raw):
    def conv_bn_relu(h, w, b, bn):                  # h: (B, Cin, N)
        y = jnp.einsum('oc,bcn->bon', w, h) + b[None, :, None]
        g, bb, m, v = bn
        y = g[None, :, None] * (y - m[None, :, None]) / jnp.sqrt(v[None, :, None] + EPS) \
            + bb[None, :, None]
        return jnp.maximum(y, 0.0)

    def fc_bn_relu(h, w, b, bn):                    # h: (B, Fin)
        y = h @ w.T + b
        g, bb, m, v = bn
        y = g * (y - m) / jnp.sqrt(v + EPS) + bb
        return jnp.maximum(y, 0.0)

    h = conv_bn_relu(x_bcn, raw['w1'], raw['b1'], raw['bn1'])
    h = conv_bn_relu(h, raw['w2'], raw['b2'], raw['bn2'])
    h = conv_bn_relu(h, raw['w3'], raw['b3'], raw['bn3'])
    h = jnp.max(h, axis=2)                          # (B, 1024)
    h = fc_bn_relu(h, raw['wf1'], raw['bf1'], raw['bn4'])
    h = fc_bn_relu(h, raw['wf2'], raw['bf2'], raw['bn5'])
    h = h @ raw['wf3'].T + raw['bf3']
    iden = jnp.array([1., 0., 0., 0., 1., 0., 0., 0., 1.], dtype=jnp.float32)
    h = h + iden[None, :]
    return h.reshape(-1, 3, 3)


# --------------------------------------------------------------------------- #
if __name__ == "__main__":
    B, C, N = 2, 3, 32                              # STN3d: channel=3, N points
    key = jax.random.PRNGKey(0)
    k_x, k_p = jax.random.split(key)

    x = jax.random.normal(k_x, (B, C, N), dtype=jnp.float32)   # PyTorch NCW

    raw = init_raw_params(k_p, C)
    ref = jax.block_until_ready(reference_forward(x, raw))

    # f32 path: tight check against the un-fused reference.
    out_f32 = stn3d_forward(x, fold_params_for_kernel(raw, jnp.float32),
                            compute_dtype=jnp.float32)
    out_f32 = jax.block_until_ready(out_f32)
    assert out_f32.shape == (B, 3, 3)
    np.testing.assert_allclose(np.asarray(out_f32), np.asarray(ref),
                               rtol=1e-4, atol=1e-4)

    # bf16 weights/activations with f32 accumulation (v6e/v7x fast path).
    out_bf16 = stn3d_forward(x, fold_params_for_kernel(raw, jnp.bfloat16),
                             compute_dtype=jnp.bfloat16)
    out_bf16 = jax.block_until_ready(out_bf16)
    assert out_bf16.shape == (B, 3, 3)
    np.testing.assert_allclose(np.asarray(out_bf16), np.asarray(ref),
                               rtol=5e-2, atol=5e-2)

    print("KERNEL_OK")
</pallas_src>

<mosaic_0001>
module attributes {stable_mosaic.version = 11 : i64} {
  func.func @_stn3d_kernel(%arg0: i32, %arg1: i32, %arg2: memref<2x32x8xf32, #tpu.memory_space<vmem>>, %arg3: memref<8x64xf32, #tpu.memory_space<vmem>>, %arg4: memref<1x64xf32, #tpu.memory_space<vmem>>, %arg5: memref<64x128xf32, #tpu.memory_space<vmem>>, %arg6: memref<1x128xf32, #tpu.memory_space<vmem>>, %arg7: memref<128x1024xf32, #tpu.memory_space<vmem>>, %arg8: memref<1x1024xf32, #tpu.memory_space<vmem>>, %arg9: memref<1024x512xf32, #tpu.memory_space<vmem>>, %arg10: memref<1x512xf32, #tpu.memory_space<vmem>>, %arg11: memref<512x256xf32, #tpu.memory_space<vmem>>, %arg12: memref<1x256xf32, #tpu.memory_space<vmem>>, %arg13: memref<256x128xf32, #tpu.memory_space<vmem>>, %arg14: memref<1x128xf32, #tpu.memory_space<vmem>>, %arg15: memref<2x1x128xf32, #tpu.memory_space<vmem>>, %arg16: memref<2x1024xf32, #tpu.memory_space<vmem>>) attributes {dimension_semantics = [#tpu.dimension_semantics<parallel>, #tpu.dimension_semantics<arbitrary>], iteration_bounds = array<i64: 1, 1>, scalar_prefetch = 0 : i64, scratch_operands = 1 : i64, tpu.core_type = #tpu.core_type<tc>, window_params = [{transform_indices = @transform_0, window_bounds = array<i64: 2, 32, 8>}, {pipeline_mode = #tpu.pipeline_mode<synchronous>, transform_indices = @transform_1, window_bounds = array<i64: 8, 64>}, {pipeline_mode = #tpu.pipeline_mode<synchronous>, transform_indices = @transform_2, window_bounds = array<i64: 1, 64>}, {pipeline_mode = #tpu.pipeline_mode<synchronous>, transform_indices = @transform_3, window_bounds = array<i64: 64, 128>}, {pipeline_mode = #tpu.pipeline_mode<synchronous>, transform_indices = @transform_4, window_bounds = array<i64: 1, 128>}, {pipeline_mode = #tpu.pipeline_mode<synchronous>, transform_indices = @transform_5, window_bounds = array<i64: 128, 1024>}, {pipeline_mode = #tpu.pipeline_mode<synchronous>, transform_indices = @transform_6, window_bounds = array<i64: 1, 1024>}, {pipeline_mode = #tpu.pipeline_mode<synchronous>, transform_indices = @transform_7, window_bounds = array<i64: 1024, 512>}, {pipeline_mode = #tpu.pipeline_mode<synchronous>, transform_indices = @transform_8, window_bounds = array<i64: 1, 512>}, {pipeline_mode = #tpu.pipeline_mode<synchronous>, transform_indices = @transform_9, window_bounds = array<i64: 512, 256>}, {pipeline_mode = #tpu.pipeline_mode<synchronous>, transform_indices = @transform_10, window_bounds = array<i64: 1, 256>}, {pipeline_mode = #tpu.pipeline_mode<synchronous>, transform_indices = @transform_11, window_bounds = array<i64: 256, 128>}, {pipeline_mode = #tpu.pipeline_mode<synchronous>, transform_indices = @transform_12, window_bounds = array<i64: 1, 128>}, {transform_indices = @transform_13, window_bounds = array<i64: 2, 1, 128>}]} {
    %c0 = arith.constant 0 : index
    %c0_0 = arith.constant 0 : index
    %c0_1 = arith.constant 0 : index
    %0 = vector.load %arg2[%c0, %c0_0, %c0_1] : memref<2x32x8xf32, #tpu.memory_space<vmem>>, vector<2x32x8xf32>
    %1 = vector.shape_cast %0 : vector<2x32x8xf32> to vector<64x8xf32>
    %c0_2 = arith.constant 0 : index
    %c0_3 = arith.constant 0 : index
    %2 = vector.load %arg3[%c0_2, %c0_3] : memref<8x64xf32, #tpu.memory_space<vmem>>, vector<8x64xf32>
    %cst = arith.constant dense<0.000000e+00> : vector<64x64xf32>
    %3 = tpu.matmul %1, %2, %cst {dimension_numbers = #tpu.dot_dimension_numbers<[1], [0], [0], [1], [0, 0, 1, 1], [], []>} : vector<64x8xf32>, vector<8x64xf32>, vector<64x64xf32> -> vector<64x64xf32>
    %c0_4 = arith.constant 0 : index
    %c0_5 = arith.constant 0 : index
    %4 = vector.load %arg4[%c0_4, %c0_5] : memref<1x64xf32, #tpu.memory_space<vmem>>, vector<1x64xf32>
    %5 = vector.broadcast %4 : vector<1x64xf32> to vector<64x64xf32>
    %6 = arith.addf %3, %5 : vector<64x64xf32>
    %cst_6 = arith.constant 0.000000e+00 : f32
    %7 = vector.broadcast %cst_6 : f32 to vector<64x64xf32>
    %8 = arith.maximumf %6, %7 : vector<64x64xf32>
    %c0_7 = arith.constant 0 : index
    %c0_8 = arith.constant 0 : index
    %9 = vector.load %arg5[%c0_7, %c0_8] : memref<64x128xf32, #tpu.memory_space<vmem>>, vector<64x128xf32>
    %cst_9 = arith.constant dense<0.000000e+00> : vector<64x128xf32>
    %10 = tpu.matmul %8, %9, %cst_9 {dimension_numbers = #tpu.dot_dimension_numbers<[1], [0], [0], [1], [0, 0, 1, 1], [], []>} : vector<64x64xf32>, vector<64x128xf32>, vector<64x128xf32> -> vector<64x128xf32>
    %c0_10 = arith.constant 0 : index
    %c0_11 = arith.constant 0 : index
    %11 = vector.load %arg6[%c0_10, %c0_11] : memref<1x128xf32, #tpu.memory_space<vmem>>, vector<1x128xf32>
    %12 = vector.broadcast %11 : vector<1x128xf32> to vector<64x128xf32>
    %13 = arith.addf %10, %12 : vector<64x128xf32>
    %cst_12 = arith.constant 0.000000e+00 : f32
    %14 = vector.broadcast %cst_12 : f32 to vector<64x128xf32>
    %15 = arith.maximumf %13, %14 : vector<64x128xf32>
    %c0_13 = arith.constant 0 : index
    %c0_14 = arith.constant 0 : index
    %16 = vector.load %arg7[%c0_13, %c0_14] : memref<128x1024xf32, #tpu.memory_space<vmem>>, vector<128x1024xf32>
    %cst_15 = arith.constant dense<0.000000e+00> : vector<64x1024xf32>
    %17 = tpu.matmul %15, %16, %cst_15 {dimension_numbers = #tpu.dot_dimension_numbers<[1], [0], [0], [1], [0, 0, 1, 1], [], []>} : vector<64x128xf32>, vector<128x1024xf32>, vector<64x1024xf32> -> vector<64x1024xf32>
    %c0_16 = arith.constant 0 : index
    %c0_17 = arith.constant 0 : index
    %18 = vector.load %arg8[%c0_16, %c0_17] : memref<1x1024xf32, #tpu.memory_space<vmem>>, vector<1x1024xf32>
    %19 = vector.broadcast %18 : vector<1x1024xf32> to vector<64x1024xf32>
    %20 = arith.addf %17, %19 : vector<64x1024xf32>
    %cst_18 = arith.constant 0.000000e+00 : f32
    %21 = vector.broadcast %cst_18 : f32 to vector<64x1024xf32>
    %22 = arith.maximumf %20, %21 : vector<64x1024xf32>
    %23 = vector.shape_cast %22 : vector<64x1024xf32> to vector<2x32x1024xf32>
    %cst_19 = arith.constant dense<0xFF800000> : vector<2x1024xf32>
    %24 = vector.multi_reduction <maximumf>, %23, %cst_19 [1] : vector<2x32x1024xf32> to vector<2x1024xf32>
    %c0_i32 = arith.constant 0 : i32
    %25 = arith.cmpi eq, %arg1, %c0_i32 : i32
    %26 = arith.extui %25 : i1 to i32
    %c0_i32_20 = arith.constant 0 : i32
    %27 = arith.cmpi ne, %26, %c0_i32_20 : i32
    scf.if %27 {
      %c0_25 = arith.constant 0 : index
      %c0_26 = arith.constant 0 : index
      %34 = vector.load %arg16[%c0_25, %c0_26] : memref<2x1024xf32, #tpu.memory_space<vmem>>, vector<2x1024xf32>
      tpu.vector_store %arg16[%c0_25, %c0_26], %24 {strides = array<i32>} : memref<2x1024xf32, #tpu.memory_space<vmem>>, vector<2x1024xf32>,
    } else {
    }
    %c0_i32_21 = arith.constant 0 : i32
    %28 = arith.cmpi sgt, %arg1, %c0_i32_21 : i32
    %29 = arith.extui %28 : i1 to i32
    %c0_i32_22 = arith.constant 0 : i32
    %30 = arith.cmpi ne, %29, %c0_i32_22 : i32
    scf.if %30 {
      %c0_25 = arith.constant 0 : index
      %c0_26 = arith.constant 0 : index
      %34 = vector.load %arg16[%c0_25, %c0_26] : memref<2x1024xf32, #tpu.memory_space<vmem>>, vector<2x1024xf32>
      %35 = arith.maximumf %34, %24 : vector<2x1024xf32>
      %c0_27 = arith.constant 0 : index
      %c0_28 = arith.constant 0 : index
      %36 = vector.load %arg16[%c0_27, %c0_28] : memref<2x1024xf32, #tpu.memory_space<vmem>>, vector<2x1024xf32>
      tpu.vector_store %arg16[%c0_27, %c0_28], %35 {strides = array<i32>} : memref<2x1024xf32, #tpu.memory_space<vmem>>, vector<2x1024xf32>,
    } else {
    }
    %c0_i32_23 = arith.constant 0 : i32
    %31 = arith.cmpi eq, %arg1, %c0_i32_23 : i32
    %32 = arith.extui %31 : i1 to i32
    %c0_i32_24 = arith.constant 0 : i32
    %33 = arith.cmpi ne, %32, %c0_i32_24 : i32
    scf.if %33 {
      %c0_25 = arith.constant 0 : index
      %c0_26 = arith.constant 0 : index
      %34 = vector.load %arg16[%c0_25, %c0_26] : memref<2x1024xf32, #tpu.memory_space<vmem>>, vector<2x1024xf32>
      %c0_27 = arith.constant 0 : index
      %c0_28 = arith.constant 0 : index
      %35 = vector.load %arg9[%c0_27, %c0_28] : memref<1024x512xf32, #tpu.memory_space<vmem>>, vector<1024x512xf32>
      %cst_29 = arith.constant dense<0.000000e+00> : vector<2x512xf32>
      %36 = tpu.matmul %34, %35, %cst_29 {dimension_numbers = #tpu.dot_dimension_numbers<[1], [0], [0], [1], [0, 0, 1, 1], [], []>} : vector<2x1024xf32>, vector<1024x512xf32>, vector<2x512xf32> -> vector<2x512xf32>
      %c0_30 = arith.constant 0 : index
      %c0_31 = arith.constant 0 : index
      %37 = vector.load %arg10[%c0_30, %c0_31] : memref<1x512xf32, #tpu.memory_space<vmem>>, vector<1x512xf32>
      %38 = vector.broadcast %37 : vector<1x512xf32> to vector<2x512xf32>
      %39 = arith.addf %36, %38 : vector<2x512xf32>
      %cst_32 = arith.constant 0.000000e+00 : f32
      %40 = vector.broadcast %cst_32 : f32 to vector<2x512xf32>
      %41 = arith.maximumf %39, %40 : vector<2x512xf32>
      %c0_33 = arith.constant 0 : index
      %c0_34 = arith.constant 0 : index
      %42 = vector.load %arg11[%c0_33, %c0_34] : memref<512x256xf32, #tpu.memory_space<vmem>>, vector<512x256xf32>
      %cst_35 = arith.constant dense<0.000000e+00> : vector<2x256xf32>
      %43 = tpu.matmul %41, %42, %cst_35 {dimension_numbers = #tpu.dot_dimension_numbers<[1], [0], [0], [1], [0, 0, 1, 1], [], []>} : vector<2x512xf32>, vector<512x256xf32>, vector<2x256xf32> -> vector<2x256xf32>
      %c0_36 = arith.constant 0 : index
      %c0_37 = arith.constant 0 : index
      %44 = vector.load %arg12[%c0_36, %c0_37] : memref<1x256xf32, #tpu.memory_space<vmem>>, vector<1x256xf32>
      %45 = vector.broadcast %44 : vector<1x256xf32> to vector<2x256xf32>
      %46 = arith.addf %43, %45 : vector<2x256xf32>
      %cst_38 = arith.constant 0.000000e+00 : f32
      %47 = vector.broadcast %cst_38 : f32 to vector<2x256xf32>
      %48 = arith.maximumf %46, %47 : vector<2x256xf32>
      %c0_39 = arith.constant 0 : index
      %c0_40 = arith.constant 0 : index
      %49 = vector.load %arg13[%c0_39, %c0_40] : memref<256x128xf32, #tpu.memory_space<vmem>>, vector<256x128xf32>
      %cst_41 = arith.constant dense<0.000000e+00> : vector<2x128xf32>
      %50 = tpu.matmul %48, %49, %cst_41 {dimension_numbers = #tpu.dot_dimension_numbers<[1], [0], [0], [1], [0, 0, 1, 1], [], []>} : vector<2x256xf32>, vector<256x128xf32>, vector<2x128xf32> -> vector<2x128xf32>
      %c0_42 = arith.constant 0 : index
      %c0_43 = arith.constant 0 : index
      %51 = vector.load %arg14[%c0_42, %c0_43] : memref<1x128xf32, #tpu.memory_space<vmem>>, vector<1x128xf32>
      %52 = vector.broadcast %51 : vector<1x128xf32> to vector<2x128xf32>
      %53 = arith.addf %50, %52 : vector<2x128xf32>
      %54 = vector.shape_cast %53 : vector<2x128xf32> to vector<2x1x128xf32>
      %c0_44 = arith.constant 0 : index
      %c0_45 = arith.constant 0 : index
      %c0_46 = arith.constant 0 : index
      %55 = vector.load %arg15[%c0_44, %c0_45, %c0_46] : memref<2x1x128xf32, #tpu.memory_space<vmem>>, vector<2x1x128xf32>
      tpu.vector_store %arg15[%c0_44, %c0_45, %c0_46], %54 {strides = array<i32>} : memref<2x1x128xf32, #tpu.memory_space<vmem>>, vector<2x1x128xf32>,
    } else {
    }
    return
  }
  func.func @transform_0(%arg0: i32, %arg1: i32) -> (i32, i32, i32) {
    %c0_i32 = arith.constant 0 : i32
    %c0_i32_0 = arith.constant 0 : i32
    return %arg0, %arg1, %c0_i32 : i32, i32, i32
  }
  func.func @transform_1(%arg0: i32, %arg1: i32) -> (i32, i32) {
    %c0_i32 = arith.constant 0 : i32
    %c0_i32_0 = arith.constant 0 : i32
    %c0_i32_1 = arith.constant 0 : i32
    return %c0_i32, %c0_i32_0 : i32, i32
  }
  func.func @transform_2(%arg0: i32, %arg1: i32) -> (i32, i32) {
    %c0_i32 = arith.constant 0 : i32
    %c0_i32_0 = arith.constant 0 : i32
    %c0_i32_1 = arith.constant 0 : i32
    return %c0_i32, %c0_i32_0 : i32, i32
  }
  func.func @transform_3(%arg0: i32, %arg1: i32) -> (i32, i32) {
    %c0_i32 = arith.constant 0 : i32
    %c0_i32_0 = arith.constant 0 : i32
    %c0_i32_1 = arith.constant 0 : i32
    return %c0_i32, %c0_i32_0 : i32, i32
  }
  func.func @transform_4(%arg0: i32, %arg1: i32) -> (i32, i32) {
    %c0_i32 = arith.constant 0 : i32
    %c0_i32_0 = arith.constant 0 : i32
    %c0_i32_1 = arith.constant 0 : i32
    return %c0_i32, %c0_i32_0 : i32, i32
  }
  func.func @transform_5(%arg0: i32, %arg1: i32) -> (i32, i32) {
    %c0_i32 = arith.constant 0 : i32
    %c0_i32_0 = arith.constant 0 : i32
    %c0_i32_1 = arith.constant 0 : i32
    return %c0_i32, %c0_i32_0 : i32, i32
  }
  func.func @transform_6(%arg0: i32, %arg1: i32) -> (i32, i32) {
    %c0_i32 = arith.constant 0 : i32
    %c0_i32_0 = arith.constant 0 : i32
    %c0_i32_1 = arith.constant 0 : i32
    return %c0_i32, %c0_i32_0 : i32, i32
  }
  func.func @transform_7(%arg0: i32, %arg1: i32) -> (i32, i32) {
    %c0_i32 = arith.constant 0 : i32
    %c0_i32_0 = arith.constant 0 : i32
    %c0_i32_1 = arith.constant 0 : i32
    return %c0_i32, %c0_i32_0 : i32, i32
  }
  func.func @transform_8(%arg0: i32, %arg1: i32) -> (i32, i32) {
    %c0_i32 = arith.constant 0 : i32
    %c0_i32_0 = arith.constant 0 : i32
    %c0_i32_1 = arith.constant 0 : i32
    return %c0_i32, %c0_i32_0 : i32, i32
  }
  func.func @transform_9(%arg0: i32, %arg1: i32) -> (i32, i32) {
    %c0_i32 = arith.constant 0 : i32
    %c0_i32_0 = arith.constant 0 : i32
    %c0_i32_1 = arith.constant 0 : i32
    return %c0_i32, %c0_i32_0 : i32, i32
  }
  func.func @transform_10(%arg0: i32, %arg1: i32) -> (i32, i32) {
    %c0_i32 = arith.constant 0 : i32
    %c0_i32_0 = arith.constant 0 : i32
    %c0_i32_1 = arith.constant 0 : i32
    return %c0_i32, %c0_i32_0 : i32, i32
  }
  func.func @transform_11(%arg0: i32, %arg1: i32) -> (i32, i32) {
    %c0_i32 = arith.constant 0 : i32
    %c0_i32_0 = arith.constant 0 : i32
    %c0_i32_1 = arith.constant 0 : i32
    return %c0_i32, %c0_i32_0 : i32, i32
  }
  func.func @transform_12(%arg0: i32, %arg1: i32) -> (i32, i32) {
    %c0_i32 = arith.constant 0 : i32
    %c0_i32_0 = arith.constant 0 : i32
    %c0_i32_1 = arith.constant 0 : i32
    return %c0_i32, %c0_i32_0 : i32, i32
  }
  func.func @transform_13(%arg0: i32, %arg1: i32) -> (i32, i32, i32) {
    %c0_i32 = arith.constant 0 : i32
    %c0_i32_0 = arith.constant 0 : i32
    %c0_i32_1 = arith.constant 0 : i32
    return %arg0, %c0_i32, %c0_i32_0 : i32, i32, i32
  }
}

module attributes {stable_mosaic.version = 11 : i64} {
  func.func @_stn3d_kernel(%arg0: i32, %arg1: i32, %arg2: memref<2x32x8xf32, #tpu.memory_space<vmem>>, %arg3: memref<8x64xf32, #tpu.memory_space<vmem>>, %arg4: memref<1x64xf32, #tpu.memory_space<vmem>>, %arg5: memref<64x128xf32, #tpu.memory_space<vmem>>, %arg6: memref<1x128xf32, #tpu.memory_space<vmem>>, %arg7: memref<128x1024xf32, #tpu.memory_space<vmem>>, %arg8: memref<1x1024xf32, #tpu.memory_space<vmem>>, %arg9: memref<1024x512xf32, #tpu.memory_space<vmem>>, %arg10: memref<1x512xf32, #tpu.memory_space<vmem>>, %arg11: memref<512x256xf32, #tpu.memory_space<vmem>>, %arg12: memref<1x256xf32, #tpu.memory_space<vmem>>, %arg13: memref<256x128xf32, #tpu.memory_space<vmem>>, %arg14: memref<1x128xf32, #tpu.memory_space<vmem>>, %arg15: memref<2x1x128xf32, #tpu.memory_space<vmem>>, %arg16: memref<2x1024xf32, #tpu.memory_space<vmem>>) attributes {dimension_semantics = [#tpu.dimension_semantics<parallel>, #tpu.dimension_semantics<arbitrary>], iteration_bounds = array<i64: 1, 1>, scalar_prefetch = 0 : i64, scratch_operands = 1 : i64, tpu.core_type = #tpu.core_type<tc>, window_params = [{transform_indices = @transform_0, window_bounds = array<i64: 2, 32, 8>}, {pipeline_mode = #tpu.pipeline_mode<synchronous>, transform_indices = @transform_1, window_bounds = array<i64: 8, 64>}, {pipeline_mode = #tpu.pipeline_mode<synchronous>, transform_indices = @transform_2, window_bounds = array<i64: 1, 64>}, {pipeline_mode = #tpu.pipeline_mode<synchronous>, transform_indices = @transform_3, window_bounds = array<i64: 64, 128>}, {pipeline_mode = #tpu.pipeline_mode<synchronous>, transform_indices = @transform_4, window_bounds = array<i64: 1, 128>}, {pipeline_mode = #tpu.pipeline_mode<synchronous>, transform_indices = @transform_5, window_bounds = array<i64: 128, 1024>}, {pipeline_mode = #tpu.pipeline_mode<synchronous>, transform_indices = @transform_6, window_bounds = array<i64: 1, 1024>}, {pipeline_mode = #tpu.pipeline_mode<synchronous>, transform_indices = @transform_7, window_bounds = array<i64: 1024, 512>}, {pipeline_mode = #tpu.pipeline_mode<synchronous>, transform_indices = @transform_8, window_bounds = array<i64: 1, 512>}, {pipeline_mode = #tpu.pipeline_mode<synchronous>, transform_indices = @transform_9, window_bounds = array<i64: 512, 256>}, {pipeline_mode = #tpu.pipeline_mode<synchronous>, transform_indices = @transform_10, window_bounds = array<i64: 1, 256>}, {pipeline_mode = #tpu.pipeline_mode<synchronous>, transform_indices = @transform_11, window_bounds = array<i64: 256, 128>}, {pipeline_mode = #tpu.pipeline_mode<synchronous>, transform_indices = @transform_12, window_bounds = array<i64: 1, 128>}, {transform_indices = @transform_13, window_bounds = array<i64: 2, 1, 128>}]} {
    %c0 = arith.constant 0 : index
    %c0_0 = arith.constant 0 : index
    %c0_1 = arith.constant 0 : index
    %0 = vector.load %arg2[%c0, %c0_0, %c0_1] : memref<2x32x8xf32, #tpu.memory_space<vmem>>, vector<2x32x8xf32>
    %1 = vector.shape_cast %0 : vector<2x32x8xf32> to vector<64x8xf32>
    %c0_2 = arith.constant 0 : index
    %c0_3 = arith.constant 0 : index
    %2 = vector.load %arg3[%c0_2, %c0_3] : memref<8x64xf32, #tpu.memory_space<vmem>>, vector<8x64xf32>
    %cst = arith.constant dense<0.000000e+00> : vector<64x64xf32>
    %3 = tpu.matmul %1, %2, %cst {dimension_numbers = #tpu.dot_dimension_numbers<[1], [0], [0], [1], [0, 0, 1, 1], [], []>} : vector<64x8xf32>, vector<8x64xf32>, vector<64x64xf32> -> vector<64x64xf32>
    %c0_4 = arith.constant 0 : index
    %c0_5 = arith.constant 0 : index
    %4 = vector.load %arg4[%c0_4, %c0_5] : memref<1x64xf32, #tpu.memory_space<vmem>>, vector<1x64xf32>
    %5 = vector.broadcast %4 : vector<1x64xf32> to vector<64x64xf32>
    %6 = arith.addf %3, %5 : vector<64x64xf32>
    %cst_6 = arith.constant 0.000000e+00 : f32
    %7 = vector.broadcast %cst_6 : f32 to vector<64x64xf32>
    %8 = arith.maximumf %6, %7 : vector<64x64xf32>
    %c0_7 = arith.constant 0 : index
    %c0_8 = arith.constant 0 : index
    %9 = vector.load %arg5[%c0_7, %c0_8] : memref<64x128xf32, #tpu.memory_space<vmem>>, vector<64x128xf32>
    %cst_9 = arith.constant dense<0.000000e+00> : vector<64x128xf32>
    %10 = tpu.matmul %8, %9, %cst_9 {dimension_numbers = #tpu.dot_dimension_numbers<[1], [0], [0], [1], [0, 0, 1, 1], [], []>} : vector<64x64xf32>, vector<64x128xf32>, vector<64x128xf32> -> vector<64x128xf32>
    %c0_10 = arith.constant 0 : index
    %c0_11 = arith.constant 0 : index
    %11 = vector.load %arg6[%c0_10, %c0_11] : memref<1x128xf32, #tpu.memory_space<vmem>>, vector<1x128xf32>
    %12 = vector.broadcast %11 : vector<1x128xf32> to vector<64x128xf32>
    %13 = arith.addf %10, %12 : vector<64x128xf32>
    %cst_12 = arith.constant 0.000000e+00 : f32
    %14 = vector.broadcast %cst_12 : f32 to vector<64x128xf32>
    %15 = arith.maximumf %13, %14 : vector<64x128xf32>
    %c0_13 = arith.constant 0 : index
    %c0_14 = arith.constant 0 : index
    %16 = vector.load %arg7[%c0_13, %c0_14] : memref<128x1024xf32, #tpu.memory_space<vmem>>, vector<128x1024xf32>
    %cst_15 = arith.constant dense<0.000000e+00> : vector<64x1024xf32>
    %17 = tpu.matmul %15, %16, %cst_15 {dimension_numbers = #tpu.dot_dimension_numbers<[1], [0], [0], [1], [0, 0, 1, 1], [], []>} : vector<64x128xf32>, vector<128x1024xf32>, vector<64x1024xf32> -> vector<64x1024xf32>
    %c0_16 = arith.constant 0 : index
    %c0_17 = arith.constant 0 : index
    %18 = vector.load %arg8[%c0_16, %c0_17] : memref<1x1024xf32, #tpu.memory_space<vmem>>, vector<1x1024xf32>
    %19 = vector.broadcast %18 : vector<1x1024xf32> to vector<64x1024xf32>
    %20 = arith.addf %17, %19 : vector<64x1024xf32>
    %cst_18 = arith.constant 0.000000e+00 : f32
    %21 = vector.broadcast %cst_18 : f32 to vector<64x1024xf32>
    %22 = arith.maximumf %20, %21 : vector<64x1024xf32>
    %23 = vector.shape_cast %22 : vector<64x1024xf32> to vector<2x32x1024xf32>
    %cst_19 = arith.constant dense<0xFF800000> : vector<2x1024xf32>
    %24 = vector.multi_reduction <maximumf>, %23, %cst_19 [1] : vector<2x32x1024xf32> to vector<2x1024xf32>
    %c0_i32 = arith.constant 0 : i32
    %25 = arith.cmpi eq, %arg1, %c0_i32 : i32
    %26 = arith.extui %25 : i1 to i32
    %c0_i32_20 = arith.constant 0 : i32
    %27 = arith.cmpi ne, %26, %c0_i32_20 : i32
    scf.if %27 {
      %c0_25 = arith.constant 0 : index
      %c0_26 = arith.constant 0 : index
      %34 = vector.load %arg16[%c0_25, %c0_26] : memref<2x1024xf32, #tpu.memory_space<vmem>>, vector<2x1024xf32>
      tpu.vector_store %arg16[%c0_25, %c0_26], %24 {strides = array<i32>} : memref<2x1024xf32, #tpu.memory_space<vmem>>, vector<2x1024xf32>,
    } else {
    }
    %c0_i32_21 = arith.constant 0 : i32
    %28 = arith.cmpi sgt, %arg1, %c0_i32_21 : i32
    %29 = arith.extui %28 : i1 to i32
    %c0_i32_22 = arith.constant 0 : i32
    %30 = arith.cmpi ne, %29, %c0_i32_22 : i32
    scf.if %30 {
      %c0_25 = arith.constant 0 : index
      %c0_26 = arith.constant 0 : index
      %34 = vector.load %arg16[%c0_25, %c0_26] : memref<2x1024xf32, #tpu.memory_space<vmem>>, vector<2x1024xf32>
      %35 = arith.maximumf %34, %24 : vector<2x1024xf32>
      %c0_27 = arith.constant 0 : index
      %c0_28 = arith.constant 0 : index
      %36 = vector.load %arg16[%c0_27, %c0_28] : memref<2x1024xf32, #tpu.memory_space<vmem>>, vector<2x1024xf32>
      tpu.vector_store %arg16[%c0_27, %c0_28], %35 {strides = array<i32>} : memref<2x1024xf32, #tpu.memory_space<vmem>>, vector<2x1024xf32>,
    } else {
    }
    %c0_i32_23 = arith.constant 0 : i32
    %31 = arith.cmpi eq, %arg1, %c0_i32_23 : i32
    %32 = arith.extui %31 : i1 to i32
    %c0_i32_24 = arith.constant 0 : i32
    %33 = arith.cmpi ne, %32, %c0_i32_24 : i32
    scf.if %33 {
      %c0_25 = arith.constant 0 : index
      %c0_26 = arith.constant 0 : index
      %34 = vector.load %arg16[%c0_25, %c0_26] : memref<2x1024xf32, #tpu.memory_space<vmem>>, vector<2x1024xf32>
      %c0_27 = arith.constant 0 : index
      %c0_28 = arith.constant 0 : index
      %35 = vector.load %arg9[%c0_27, %c0_28] : memref<1024x512xf32, #tpu.memory_space<vmem>>, vector<1024x512xf32>
      %cst_29 = arith.constant dense<0.000000e+00> : vector<2x512xf32>
      %36 = tpu.matmul %34, %35, %cst_29 {dimension_numbers = #tpu.dot_dimension_numbers<[1], [0], [0], [1], [0, 0, 1, 1], [], []>} : vector<2x1024xf32>, vector<1024x512xf32>, vector<2x512xf32> -> vector<2x512xf32>
      %c0_30 = arith.constant 0 : index
      %c0_31 = arith.constant 0 : index
      %37 = vector.load %arg10[%c0_30, %c0_31] : memref<1x512xf32, #tpu.memory_space<vmem>>, vector<1x512xf32>
      %38 = vector.broadcast %37 : vector<1x512xf32> to vector<2x512xf32>
      %39 = arith.addf %36, %38 : vector<2x512xf32>
      %cst_32 = arith.constant 0.000000e+00 : f32
      %40 = vector.broadcast %cst_32 : f32 to vector<2x512xf32>
      %41 = arith.maximumf %39, %40 : vector<2x512xf32>
      %c0_33 = arith.constant 0 : index
      %c0_34 = arith.constant 0 : index
      %42 = vector.load %arg11[%c0_33, %c0_34] : memref<512x256xf32, #tpu.memory_space<vmem>>, vector<512x256xf32>
      %cst_35 = arith.constant dense<0.000000e+00> : vector<2x256xf32>
      %43 = tpu.matmul %41, %42, %cst_35 {dimension_numbers = #tpu.dot_dimension_numbers<[1], [0], [0], [1], [0, 0, 1, 1], [], []>} : vector<2x512xf32>, vector<512x256xf32>, vector<2x256xf32> -> vector<2x256xf32>
      %c0_36 = arith.constant 0 : index
      %c0_37 = arith.constant 0 : index
      %44 = vector.load %arg12[%c0_36, %c0_37] : memref<1x256xf32, #tpu.memory_space<vmem>>, vector<1x256xf32>
      %45 = vector.broadcast %44 : vector<1x256xf32> to vector<2x256xf32>
      %46 = arith.addf %43, %45 : vector<2x256xf32>
      %cst_38 = arith.constant 0.000000e+00 : f32
      %47 = vector.broadcast %cst_38 : f32 to vector<2x256xf32>
      %48 = arith.maximumf %46, %47 : vector<2x256xf32>
      %c0_39 = arith.constant 0 : index
      %c0_40 = arith.constant 0 : index
      %49 = vector.load %arg13[%c0_39, %c0_40] : memref<256x128xf32, #tpu.memory_space<vmem>>, vector<256x128xf32>
      %cst_41 = arith.constant dense<0.000000e+00> : vector<2x128xf32>
      %50 = tpu.matmul %48, %49, %cst_41 {dimension_numbers = #tpu.dot_dimension_numbers<[1], [0], [0], [1], [0, 0, 1, 1], [], []>} : vector<2x256xf32>, vector<256x128xf32>, vector<2x128xf32> -> vector<2x128xf32>
      %c0_42 = arith.constant 0 : index
      %c0_43 = arith.constant 0 : index
      %51 = vector.load %arg14[%c0_42, %c0_43] : memref<1x128xf32, #tpu.memory_space<vmem>>, vector<1x128xf32>
      %52 = vector.broadcast %51 : vector<1x128xf32> to vector<2x128xf32>
      %53 = arith.addf %50, %52 : vector<2x128xf32>
      %54 = vector.shape_cast %53 : vector<2x128xf32> to vector<2x1x128xf32>
      %c0_44 = arith.constant 0 : index
      %c0_45 = arith.constant 0 : index
      %c0_46 = arith.constant 0 : index
      %55 = vector.load %arg15[%c0_44, %c0_45, %c0_46] : memref<2x1x128xf32, #tpu.memory_space<vmem>>, vector<2x1x128xf32>
      tpu.vector_store %arg15[%c0_44, %c0_45, %c0_46], %54 {strides = array<i32>} : memref<2x1x128xf32, #tpu.memory_space<vmem>>, vector<2x1x128xf32>,
    } else {
    }
    return
  }
  func.func @transform_0(%arg0: i32, %arg1: i32) -> (i32, i32, i32) {
    %c0_i32 = arith.constant 0 : i32
    %c0_i32_0 = arith.constant 0 : i32
    return %arg0, %arg1, %c0_i32 : i32, i32, i32
  }
  func.func @transform_1(%arg0: i32, %arg1: i32) -> (i32, i32) {
    %c0_i32 = arith.constant 0 : i32
    %c0_i32_0 = arith.constant 0 : i32
    %c0_i32_1 = arith.constant 0 : i32
    return %c0_i32, %c0_i32_0 : i32, i32
  }
  func.func @transform_2(%arg0: i32, %arg1: i32) -> (i32, i32) {
    %c0_i32 = arith.constant 0 : i32
    %c0_i32_0 = arith.constant 0 : i32
    %c0_i32_1 = arith.constant 0 : i32
    return %c0_i32, %c0_i32_0 : i32, i32
  }
  func.func @transform_3(%arg0: i32, %arg1: i32) -> (i32, i32) {
    %c0_i32 = arith.constant 0 : i32
    %c0_i32_0 = arith.constant 0 : i32
    %c0_i32_1 = arith.constant 0 : i32
    return %c0_i32, %c0_i32_0 : i32, i32
  }
  func.func @transform_4(%arg0: i32, %arg1: i32) -> (i32, i32) {
    %c0_i32 = arith.constant 0 : i32
    %c0_i32_0 = arith.constant 0 : i32
    %c0_i32_1 = arith.constant 0 : i32
    return %c0_i32, %c0_i32_0 : i32, i32
  }
  func.func @transform_5(%arg0: i32, %arg1: i32) -> (i32, i32) {
    %c0_i32 = arith.constant 0 : i32
    %c0_i32_0 = arith.constant 0 : i32
    %c0_i32_1 = arith.constant 0 : i32
    return %c0_i32, %c0_i32_0 : i32, i32
  }
  func.func @transform_6(%arg0: i32, %arg1: i32) -> (i32, i32) {
    %c0_i32 = arith.constant 0 : i32
    %c0_i32_0 = arith.constant 0 : i32
    %c0_i32_1 = arith.constant 0 : i32
    return %c0_i32, %c0_i32_0 : i32, i32
  }
  func.func @transform_7(%arg0: i32, %arg1: i32) -> (i32, i32) {
    %c0_i32 = arith.constant 0 : i32
    %c0_i32_0 = arith.constant 0 : i32
    %c0_i32_1 = arith.constant 0 : i32
    return %c0_i32, %c0_i32_0 : i32, i32
  }
  func.func @transform_8(%arg0: i32, %arg1: i32) -> (i32, i32) {
    %c0_i32 = arith.constant 0 : i32
    %c0_i32_0 = arith.constant 0 : i32
    %c0_i32_1 = arith.constant 0 : i32
    return %c0_i32, %c0_i32_0 : i32, i32
  }
  func.func @transform_9(%arg0: i32, %arg1: i32) -> (i32, i32) {
    %c0_i32 = arith.constant 0 : i32
    %c0_i32_0 = arith.constant 0 : i32
    %c0_i32_1 = arith.constant 0 : i32
    return %c0_i32, %c0_i32_0 : i32, i32
  }
  func.func @transform_10(%arg0: i32, %arg1: i32) -> (i32, i32) {
    %c0_i32 = arith.constant 0 : i32
    %c0_i32_0 = arith.constant 0 : i32
    %c0_i32_1 = arith.constant 0 : i32
    return %c0_i32, %c0_i32_0 : i32, i32
  }
  func.func @transform_11(%arg0: i32, %arg1: i32) -> (i32, i32) {
    %c0_i32 = arith.constant 0 : i32
    %c0_i32_0 = arith.constant 0 : i32
    %c0_i32_1 = arith.constant 0 : i32
    return %c0_i32, %c0_i32_0 : i32, i32
  }
  func.func @transform_12(%arg0: i32, %arg1: i32) -> (i32, i32) {
    %c0_i32 = arith.constant 0 : i32
    %c0_i32_0 = arith.constant 0 : i32
    %c0_i32_1 = arith.constant 0 : i32
    return %c0_i32, %c0_i32_0 : i32, i32
  }
  func.func @transform_13(%arg0: i32, %arg1: i32) -> (i32, i32, i32) {
    %c0_i32 = arith.constant 0 : i32
    %c0_i32_0 = arith.constant 0 : i32
    %c0_i32_1 = arith.constant 0 : i32
    return %arg0, %c0_i32, %c0_i32_0 : i32, i32, i32
  }
}

</mosaic_0001>

<llo_original>
// kernel: tpu_custom_call.1
$region0: #{tpu_custom_call.1}
  #allocation0 [shape = 'u32[]', space=smem, size = 0x4, offset = 0x4, fixed_abs, tag = 'smem constant byte address 0x4 - core index']
  #allocation1 [shape = 'u32[144,128]{1,0:T(1,128)}', space=vmem, size = 0x12000, scoped, tag = 'internal scratch']
  #allocation2 [shape = 'f32[2,1024]{1,0:T(2,128)}', space=vmem, size = 0x2000, scoped, tag = 'scratch operand']
  %s0 = inlined_call_operand.vmem [shape: f32[2,32,8], index: 0, kind: input, shape index: {}]
  %s1 = inlined_call_operand.hbm [shape: f32[8,64], index: 1, kind: input, shape index: {}]
  %s2 = inlined_call_operand.hbm [shape: f32[1,64], index: 2, kind: input, shape index: {}]
  %s3 = inlined_call_operand.hbm [shape: f32[64,128], index: 3, kind: input, shape index: {}]
  %s4 = inlined_call_operand.hbm [shape: f32[1,128], index: 4, kind: input, shape index: {}]
  %s5 = inlined_call_operand.hbm [shape: f32[128,1024], index: 5, kind: input, shape index: {}]
  %s6 = inlined_call_operand.hbm [shape: f32[1,1024], index: 6, kind: input, shape index: {}]
  %s7 = inlined_call_operand.hbm [shape: f32[1024,512], index: 7, kind: input, shape index: {}]
  %s8 = inlined_call_operand.hbm [shape: f32[1,512], index: 8, kind: input, shape index: {}]
  %s9 = inlined_call_operand.hbm [shape: f32[512,256], index: 9, kind: input, shape index: {}]
  %s10 = inlined_call_operand.hbm [shape: f32[1,256], index: 10, kind: input, shape index: {}]
  %s11 = inlined_call_operand.hbm [shape: f32[256,128], index: 11, kind: input, shape index: {}]
  %s12 = inlined_call_operand.hbm [shape: f32[1,128], index: 12, kind: input, shape index: {}]
  %s13 = inlined_call_operand.hbm [shape: f32[2,1,128], index: 13, kind: output, shape index: {}]
  %s14 = sld [smem:[#allocation0]]
  $region122: #{tpu_custom_call.1} parent=0
    _
  %s16 = ssub.s32 1, %s14
  %s17 = scalar_select 0, %s16, %s14
  $region1: #{tpu_custom_call.1} parent=0
    #allocation3 [shape = 'u8[4096]{0}', space=vmem, size = 0x1000, scoped, tag = 'input window, operand 1, single buffered']
    #allocation4 [shape = 's32[1]{0}', space=sflag, size = 0x4, scoped, tag = 'scoped memory for tpu_custom_call.1']
    #allocation5 [shape = 's32[1]{0}', space=sflag, size = 0x4, scoped, tag = 'scoped memory for tpu_custom_call.1']
    #allocation6 [shape = 'u8[512]{0}', space=vmem, size = 0x400, scoped, tag = 'input window, operand 2, single buffered']
    #allocation7 [shape = 's32[1]{0}', space=sflag, size = 0x4, scoped, tag = 'scoped memory for tpu_custom_call.1']
    #allocation8 [shape = 'u8[32768]{0}', space=vmem, size = 0x8000, scoped, tag = 'input window, operand 3, single buffered']
    #allocation9 [shape = 'u8[512]{0}', space=vmem, size = 0x400, scoped, tag = 'input window, operand 4, single buffered']
    #allocation10 [shape = 's32[1]{0}', space=sflag, size = 0x4, scoped, tag = 'scoped memory for tpu_custom_call.1']
    #allocation11 [shape = 'u8[524288]{0}', space=vmem, size = 0x80000, scoped, tag = 'input window, operand 5, single buffered']
    #allocation12 [shape = 'u8[4096]{0}', space=vmem, size = 0x1000, scoped, tag = 'input window, operand 6, single buffered']
    #allocation13 [shape = 's32[1]{0}', space=sflag, size = 0x4, scoped, tag = 'scoped memory for tpu_custom_call.1']
    #allocation14 [shape = 'u8[2097152]{0}', space=vmem, size = 0x200000, scoped, tag = 'input window, operand 7, single buffered']
    #allocation15 [shape = 'u8[2048]{0}', space=vmem, size = 0x800, scoped, tag = 'input window, operand 8, single buffered']
    #allocation16 [shape = 's32[1]{0}', space=sflag, size = 0x4, scoped, tag = 'scoped memory for tpu_custom_call.1']
    #allocation17 [shape = 'u8[524288]{0}', space=vmem, size = 0x80000, scoped, tag = 'input window, operand 9, single buffered']
    #allocation18 [shape = 'u8[1024]{0}', space=vmem, size = 0x400, scoped, tag = 'input window, operand 10, single buffered']
    #allocation19 [shape = 's32[1]{0}', space=sflag, size = 0x4, scoped, tag = 'scoped memory for tpu_custom_call.1']
    #allocation20 [shape = 'u8[131072]{0}', space=vmem, size = 0x20000, scoped, tag = 'input window, operand 11, single buffered']
    #allocation21 [shape = 'u8[512]{0}', space=vmem, size = 0x400, scoped, tag = 'input window, operand 12, single buffered']
    #allocation22 [shape = 's32[1]{0}', space=sflag, size = 0x4, scoped, tag = 'scoped memory for tpu_custom_call.1']
    #allocation23 [shape = 'u8[1024]{0}', space=vmem, size = 0x400, scoped, tag = 'output window, operand 0, single buffered']
    %18 = vsyncpa [#allocation4], 0
    %19 = vsyncpa [#allocation7], 0
    %20 = vsyncpa [#allocation10], 0
    %21 = vsyncpa [#allocation13], 0
    %22 = vsyncpa [#allocation16], 0
    %23 = vsyncpa [#allocation19], 0
    %24 = vsyncpa [#allocation22], 0
    %25 = vsyncpa [#allocation5], 0
    // Predicated region
    $region2: #{tpu_custom_call.1} parent=1 // pred_check
      _
    $region3: #{tpu_custom_call.1} parent=1 // pred_check_branch
      %27 = sbr.rel (0) target = $region5
    $region4: #{tpu_custom_call.1} parent=1 // pred_region
      _
    $region5: #{tpu_custom_call.1} parent=1 // pred_fallthru
      _
    // Predicated region
    $region6: #{tpu_custom_call.1} parent=1 // pred_check
      _
    $region7: #{tpu_custom_call.1} parent=1 // pred_check_branch
      %29 = sbr.rel (0) target = $region9
    $region8: #{tpu_custom_call.1} parent=1 // pred_region
      %s31 = ssub.s32 128, 128
      %32 = vsyncadd [#allocation4], %s31
      %s34 = sshll.u32 [#allocation3], 4
      %s35 = int_to_ptr.vmem [resolvable:$true] %s34
      %37 = dma.hbm_to_vmem [thread:$0]  %s1, 128, %s35, [#allocation4]
    $region9: #{tpu_custom_call.1} parent=1 // pred_fallthru
      _
    // Predicated region
    $region10: #{tpu_custom_call.1} parent=1 // pred_check
      _
    $region11: #{tpu_custom_call.1} parent=1 // pred_check_branch
      %39 = sbr.rel (0) target = $region13
    $region12: #{tpu_custom_call.1} parent=1 // pred_region
      %s41 = ssub.s32 16, 16
      %42 = vsyncadd [#allocation7], %s41
      %s44 = sshll.u32 [#allocation6], 4
      %s45 = int_to_ptr.vmem [resolvable:$true] %s44
      %47 = dma.hbm_to_vmem [thread:$0]  %s2, 16, %s45, [#allocation7]
    $region13: #{tpu_custom_call.1} parent=1 // pred_fallthru
      _
    // Predicated region
    $region14: #{tpu_custom_call.1} parent=1 // pred_check
      _
    $region15: #{tpu_custom_call.1} parent=1 // pred_check_branch
      %49 = sbr.rel (0) target = $region17
    $region16: #{tpu_custom_call.1} parent=1 // pred_region
      %s51 = ssub.s32 1024, 1024
      %52 = vsyncadd [#allocation7], %s51
      %s53 = sshll.u32 [#allocation8], 4
      %s54 = int_to_ptr.vmem [resolvable:$true] %s53
      %59 = dma.hbm_to_vmem [thread:$0]  %s3, 1024, %s54, [#allocation7], 128, 128, 8
    $region17: #{tpu_custom_call.1} parent=1 // pred_fallthru
      _
    // Predicated region
    $region18: #{tpu_custom_call.1} parent=1 // pred_check
      _
    $region19: #{tpu_custom_call.1} parent=1 // pred_check_branch
      %61 = sbr.rel (0) target = $region21
    $region20: #{tpu_custom_call.1} parent=1 // pred_region
      %s63 = ssub.s32 16, 16
      %64 = vsyncadd [#allocation10], %s63
      %s66 = sshll.u32 [#allocation9], 4
      %s67 = int_to_ptr.vmem [resolvable:$true] %s66
      %69 = dma.hbm_to_vmem [thread:$0]  %s4, 16, %s67, [#allocation10]
    $region21: #{tpu_custom_call.1} parent=1 // pred_fallthru
      _
    // Predicated region
    $region22: #{tpu_custom_call.1} parent=1 // pred_check
      _
    $region23: #{tpu_custom_call.1} parent=1 // pred_check_branch
      %71 = sbr.rel (0) target = $region25
    $region24: #{tpu_custom_call.1} parent=1 // pred_region
      %s73 = ssub.s32 16384, 16384
      %74 = vsyncadd [#allocation10], %s73
      %s75 = sshll.u32 [#allocation11], 4
      %s76 = int_to_ptr.vmem [resolvable:$true] %s75
      %81 = dma.hbm_to_vmem [thread:$0]  %s5, 16384, %s76, [#allocation10], 1024, 1024, 64
    $region25: #{tpu_custom_call.1} parent=1 // pred_fallthru
      _
    // Predicated region
    $region26: #{tpu_custom_call.1} parent=1 // pred_check
      _
    $region27: #{tpu_custom_call.1} parent=1 // pred_check_branch
      %83 = sbr.rel (0) target = $region29
    $region28: #{tpu_custom_call.1} parent=1 // pred_region
      %s85 = ssub.s32 128, 128
      %86 = vsyncadd [#allocation13], %s85
      %s88 = sshll.u32 [#allocation12], 4
      %s89 = int_to_ptr.vmem [resolvable:$true] %s88
      %91 = dma.hbm_to_vmem [thread:$0]  %s6, 128, %s89, [#allocation13]
    $region29: #{tpu_custom_call.1} parent=1 // pred_fallthru
      _
    // Predicated region
    $region30: #{tpu_custom_call.1} parent=1 // pred_check
      _
    $region31: #{tpu_custom_call.1} parent=1 // pred_check_branch
      %93 = sbr.rel (0) target = $region33
    $region32: #{tpu_custom_call.1} parent=1 // pred_region
      %s95 = ssub.s32 65536, 65536
      %96 = vsyncadd [#allocation13], %s95
      %s97 = sshll.u32 [#allocation14], 4
      %s98 = int_to_ptr.vmem [resolvable:$true] %s97
      %103 = dma.hbm_to_vmem [thread:$0]  %s7, 65536, %s98, [#allocation13], 512, 512, 32
    $region33: #{tpu_custom_call.1} parent=1 // pred_fallthru
      _
    // Predicated region
    $region34: #{tpu_custom_call.1} parent=1 // pred_check
      _
    $region35: #{tpu_custom_call.1} parent=1 // pred_check_branch
      %105 = sbr.rel (0) target = $region37
    $region36: #{tpu_custom_call.1} parent=1 // pred_region
      %s107 = ssub.s32 64, 64
      %108 = vsyncadd [#allocation16], %s107
      %s110 = sshll.u32 [#allocation15], 4
      %s111 = int_to_ptr.vmem [resolvable:$true] %s110
      %113 = dma.hbm_to_vmem [thread:$0]  %s8, 64, %s111, [#allocation16]
    $region37: #{tpu_custom_call.1} parent=1 // pred_fallthru
      _
    // Predicated region
    $region38: #{tpu_custom_call.1} parent=1 // pred_check
      _
    $region39: #{tpu_custom_call.1} parent=1 // pred_check_branch
      %115 = sbr.rel (0) target = $region41
    $region40: #{tpu_custom_call.1} parent=1 // pred_region
      %s117 = ssub.s32 16384, 16384
      %118 = vsyncadd [#allocation16], %s117
      %s119 = sshll.u32 [#allocation17], 4
      %s120 = int_to_ptr.vmem [resolvable:$true] %s119
      %125 = dma.hbm_to_vmem [thread:$0]  %s9, 16384, %s120, [#allocation16], 256, 256, 16
    $region41: #{tpu_custom_call.1} parent=1 // pred_fallthru
      _
    // Predicated region
    $region42: #{tpu_custom_call.1} parent=1 // pred_check
      _
    $region43: #{tpu_custom_call.1} parent=1 // pred_check_branch
      %127 = sbr.rel (0) target = $region45
    $region44: #{tpu_custom_call.1} parent=1 // pred_region
      %s129 = ssub.s32 32, 32
      %130 = vsyncadd [#allocation19], %s129
      %s132 = sshll.u32 [#allocation18], 4
      %s133 = int_to_ptr.vmem [resolvable:$true] %s132
      %135 = dma.hbm_to_vmem [thread:$0]  %s10, 32, %s133, [#allocation19]
    $region45: #{tpu_custom_call.1} parent=1 // pred_fallthru
      _
    // Predicated region
    $region46: #{tpu_custom_call.1} parent=1 // pred_check
      _
    $region47: #{tpu_custom_call.1} parent=1 // pred_check_branch
      %137 = sbr.rel (0) target = $region49
    $region48: #{tpu_custom_call.1} parent=1 // pred_region
      %s139 = ssub.s32 4096, 4096
      %140 = vsyncadd [#allocation19], %s139
      %s141 = sshll.u32 [#allocation20], 4
      %s142 = int_to_ptr.vmem [resolvable:$true] %s141
      %147 = dma.hbm_to_vmem [thread:$0]  %s11, 4096, %s142, [#allocation19], 128, 128, 8
    $region49: #{tpu_custom_call.1} parent=1 // pred_fallthru
      _
    // Predicated region
    $region50: #{tpu_custom_call.1} parent=1 // pred_check
      _
    $region51: #{tpu_custom_call.1} parent=1 // pred_check_branch
      %149 = sbr.rel (0) target = $region53
    $region52: #{tpu_custom_call.1} parent=1 // pred_region
      %s151 = ssub.s32 16, 16
      %152 = vsyncadd [#allocation22], %s151
      %s154 = sshll.u32 [#allocation21], 4
      %s155 = int_to_ptr.vmem [resolvable:$true] %s154
      %157 = dma.hbm_to_vmem [thread:$0]  %s12, 16, %s155, [#allocation22]
    $region53: #{tpu_custom_call.1} parent=1 // pred_fallthru
      _
    // Predicated region
    $region54: #{tpu_custom_call.1} parent=1 // pred_check
      _
    $region55: #{tpu_custom_call.1} parent=1 // pred_check_branch
      %159 = sbr.rel (0) target = $region57
    $region56: #{tpu_custom_call.1} parent=1 // pred_region
      %160 = dma.done [#allocation4], 128
    $region57: #{tpu_custom_call.1} parent=1 // pred_fallthru
      _
    // Predicated region
    $region58: #{tpu_custom_call.1} parent=1 // pred_check
      _
    $region59: #{tpu_custom_call.1} parent=1 // pred_check_branch
      %162 = sbr.rel (0) target = $region61
    $region60: #{tpu_custom_call.1} parent=1 // pred_region
      %163 = dma.done [#allocation7], 16
    $region61: #{tpu_custom_call.1} parent=1 // pred_fallthru
      _
    // Predicated region
    $region62: #{tpu_custom_call.1} parent=1 // pred_check
      _
    $region63: #{tpu_custom_call.1} parent=1 // pred_check_branch
      %165 = sbr.rel (0) target = $region65
    $region64: #{tpu_custom_call.1} parent=1 // pred_region
      %166 = dma.done [#allocation7], 1024
    $region65: #{tpu_custom_call.1} parent=1 // pred_fallthru
      _
    // Predicated region
    $region66: #{tpu_custom_call.1} parent=1 // pred_check
      _
    $region67: #{tpu_custom_call.1} parent=1 // pred_check_branch
      %168 = sbr.rel (0) target = $region69
    $region68: #{tpu_custom_call.1} parent=1 // pred_region
      %169 = dma.done [#allocation10], 16
    $region69: #{tpu_custom_call.1} parent=1 // pred_fallthru
      _
    // Predicated region
    $region70: #{tpu_custom_call.1} parent=1 // pred_check
      _
    $region71: #{tpu_custom_call.1} parent=1 // pred_check_branch
      %171 = sbr.rel (0) target = $region73
    $region72: #{tpu_custom_call.1} parent=1 // pred_region
      %172 = dma.done [#allocation10], 16384
    $region73: #{tpu_custom_call.1} parent=1 // pred_fallthru
      _
    // Predicated region
    $region74: #{tpu_custom_call.1} parent=1 // pred_check
      _
    $region75: #{tpu_custom_call.1} parent=1 // pred_check_branch
      %174 = sbr.rel (0) target = $region77
    $region76: #{tpu_custom_call.1} parent=1 // pred_region
      %175 = dma.done [#allocation13], 128
    $region77: #{tpu_custom_call.1} parent=1 // pred_fallthru
      _
    // Predicated region
    $region78: #{tpu_custom_call.1} parent=1 // pred_check
      _
    $region79: #{tpu_custom_call.1} parent=1 // pred_check_branch
      %177 = sbr.rel (0) target = $region81
    $region80: #{tpu_custom_call.1} parent=1 // pred_region
      %178 = dma.done [#allocation13], 65536
    $region81: #{tpu_custom_call.1} parent=1 // pred_fallthru
      _
    // Predicated region
    $region82: #{tpu_custom_call.1} parent=1 // pred_check
      _
    $region83: #{tpu_custom_call.1} parent=1 // pred_check_branch
      %180 = sbr.rel (0) target = $region85
    $region84: #{tpu_custom_call.1} parent=1 // pred_region
      %181 = dma.done [#allocation16], 64
    $region85: #{tpu_custom_call.1} parent=1 // pred_fallthru
      _
    // Predicated region
    $region86: #{tpu_custom_call.1} parent=1 // pred_check
      _
    $region87: #{tpu_custom_call.1} parent=1 // pred_check_branch
      %183 = sbr.rel (0) target = $region89
    $region88: #{tpu_custom_call.1} parent=1 // pred_region
      %184 = dma.done [#allocation16], 16384
    $region89: #{tpu_custom_call.1} parent=1 // pred_fallthru
      _
    // Predicated region
    $region90: #{tpu_custom_call.1} parent=1 // pred_check
      _
    $region91: #{tpu_custom_call.1} parent=1 // pred_check_branch
      %186 = sbr.rel (0) target = $region93
    $region92: #{tpu_custom_call.1} parent=1 // pred_region
      %187 = dma.done [#allocation19], 32
    $region93: #{tpu_custom_call.1} parent=1 // pred_fallthru
      _
    // Predicated region
    $region94: #{tpu_custom_call.1} parent=1 // pred_check
      _
    $region95: #{tpu_custom_call.1} parent=1 // pred_check_branch
      %189 = sbr.rel (0) target = $region97
    $region96: #{tpu_custom_call.1} parent=1 // pred_region
      %190 = dma.done [#allocation19], 4096
    $region97: #{tpu_custom_call.1} parent=1 // pred_fallthru
      _
    // Predicated region
    $region98: #{tpu_custom_call.1} parent=1 // pred_check
      _
    $region99: #{tpu_custom_call.1} parent=1 // pred_check_branch
      %192 = sbr.rel (0) target = $region101
    $region100: #{tpu_custom_call.1} parent=1 // pred_region
      %193 = dma.done [#allocation22], 16
    $region101: #{tpu_custom_call.1} parent=1 // pred_fallthru
      _
    %v194 = vld [vmem:[%s0] sm:$0xff]
    %v195 = vld [vmem:[%s0 + $0x8] sm:$0xff]
    %v196 = vld [vmem:[%s0 + $0x10] sm:$0xff]
    %v197 = vld [vmem:[%s0 + $0x18] sm:$0xff]
    %v198 = vld [vmem:[%s0 + $0x20] sm:$0xff]
    %v199 = vld [vmem:[%s0 + $0x28] sm:$0xff]
    %v200 = vld [vmem:[%s0 + $0x30] sm:$0xff]
    %v201 = vld [vmem:[%s0 + $0x38] sm:$0xff]
    %v202 = vld [vmem:[#allocation3] sm:$0xff]
    %v203 = vld [vmem:[#allocation6] sm:$0x1]
    %v205 = vlaneseq
    %v206 = vshrl.u32 %v205, 7
    %v207 = vsub.s32 0, %v206
    %v208 = vrot.slane %v203, %v207
    %vm210 = vcmask 64512
    %v212 = vsel %vm210, %v194, 0
    %v215 = vsel %vm210, %v195, 0
    %v218 = vsel %vm210, %v196, 0
    %v221 = vsel %vm210, %v197, 0
    %v224 = vsel %vm210, %v198, 0
    %v227 = vsel %vm210, %v199, 0
    %v230 = vsel %vm210, %v200, 0
    %v233 = vsel %vm210, %v201, 0
    %235 = vmatprep.subr.mxu0 0.0
    %236 = vmatpush1.msra.mxu0 0.0
    %237 = vmatprep.subr.mxu0 0.0
    %238 = vmatpush1.msra.mxu0 0.0
    %239 = vmatprep.subr.mxu0 0.0
    %240 = vmatpush1.msra.mxu0 0.0
    %241 = vmatprep.subr.mxu0 0.0
    %242 = vmatpush1.msra.mxu0 0.0
    %243 = vmatprep.subr.mxu0 0.0
    %244 = vmatpush1.msra.mxu0 0.0
    %245 = vmatprep.subr.mxu0 0.0
    %246 = vmatpush1.msra.mxu0 0.0
    %247 = vmatprep.subr.mxu0 0.0
    %248 = vmatpush1.msra.mxu0 0.0
    %249 = vmatprep.subr.mxu0 0.0
    %250 = vmatpush1.msra.mxu0 0.0
    %251 = vmatprep.subr.mxu0 0.0
    %252 = vmatpush1.msra.mxu0 0.0
    %253 = vmatprep.subr.mxu0 0.0
    %254 = vmatpush1.msra.mxu0 0.0
    %255 = vmatprep.subr.mxu0 0.0
    %256 = vmatpush1.msra.mxu0 0.0
    %257 = vmatprep.subr.mxu0 0.0
    %258 = vmatpush1.msra.mxu0 0.0
    %259 = vmatprep.subr.mxu0 0.0
    %260 = vmatpush1.msra.mxu0 0.0
    %261 = vmatprep.subr.mxu0 0.0
    %262 = vmatpush1.msra.mxu0 0.0
    %263 = vmatprep.subr.mxu0 0.0
    %264 = vmatpush1.msra.mxu0 0.0
    %265 = vmatprep.subr.mxu0 0.0
    %266 = vmatpush1.msra.mxu0 %v202
    %267 = vmatprep.subr.mxu0 0.0
    %268 = vmatpush2.msra.mxu0 0.0
    %269 = vmatprep.subr.mxu0 0.0
    %270 = vmatpush2.msra.mxu0 0.0
    %271 = vmatprep.subr.mxu0 0.0
    %272 = vmatpush2.msra.mxu0 0.0
    %273 = vmatprep.subr.mxu0 0.0
    %274 = vmatpush2.msra.mxu0 0.0
    %275 = vmatprep.subr.mxu0 0.0
    %276 = vmatpush2.msra.mxu0 0.0
    %277 = vmatprep.subr.mxu0 0.0
    %278 = vmatpush2.msra.mxu0 0.0
    %279 = vmatprep.subr.mxu0 0.0
    %280 = vmatpush2.msra.mxu0 0.0
    %281 = vmatprep.subr.mxu0 0.0
    %282 = vmatpush2.msra.mxu0 0.0
    %283 = vmatprep.subr.mxu0 0.0
    %284 = vmatpush2.msra.mxu0 0.0
    %285 = vmatprep.subr.mxu0 0.0
    %286 = vmatpush2.msra.mxu0 0.0
    %287 = vmatprep.subr.mxu0 0.0
    %288 = vmatpush2.msra.mxu0 0.0
    %289 = vmatprep.subr.mxu0 0.0
    %290 = vmatpush2.msra.mxu0 0.0
    %291 = vmatprep.subr.mxu0 0.0
    %292 = vmatpush2.msra.mxu0 0.0
    %293 = vmatprep.subr.mxu0 0.0
    %294 = vmatpush2.msra.mxu0 0.0
    %295 = vmatprep.subr.mxu0 0.0
    %296 = vmatpush2.msra.mxu0 0.0
    %297 = vmatprep.subr.mxu0 0.0
    %298 = vmatpush2.msra.mxu0 0.0
    %299 = vmatprep.mubr.f32.mxu0 0.0
    %300 = vmatmul.mubr.f32.gmra.mxu0 %v212
    %v301 = vpop.f32.mrf.mxu0
    %v302 = vadd.f32 %v208, %v301
    %v303 = vpop.f32.mrf.mxu0
    %304 = vmatprep.mubr.f32.mxu0 0.0
    %305 = vmatmul.mubr.f32.gmra.mxu0 %v215
    %v306 = vpop.f32.mrf.mxu0
    %v307 = vadd.f32 %v208, %v306
    %v308 = vpop.f32.mrf.mxu0
    %309 = vmatprep.mubr.f32.mxu0 0.0
    %310 = vmatmul.mubr.f32.gmra.mxu0 %v218
    %v311 = vpop.f32.mrf.mxu0
    %v312 = vadd.f32 %v208, %v311
    %v313 = vpop.f32.mrf.mxu0
    %314 = vmatprep.mubr.f32.mxu0 0.0
    %315 = vmatmul.mubr.f32.gmra.mxu0 %v221
    %v316 = vpop.f32.mrf.mxu0
    %v317 = vadd.f32 %v208, %v316
    %v318 = vpop.f32.mrf.mxu0
    %319 = vmatprep.mubr.f32.mxu0 0.0
    %320 = vmatmul.mubr.f32.gmra.mxu0 %v224
    %v321 = vpop.f32.mrf.mxu0
    %v322 = vadd.f32 %v208, %v321
    %v323 = vpop.f32.mrf.mxu0
    %324 = vmatprep.mubr.f32.mxu0 0.0
    %325 = vmatmul.mubr.f32.gmra.mxu0 %v227
    %v326 = vpop.f32.mrf.mxu0
    %v327 = vadd.f32 %v208, %v326
    %v328 = vpop.f32.mrf.mxu0
    %329 = vmatprep.mubr.f32.mxu0 0.0
    %330 = vmatmul.mubr.f32.gmra.mxu0 %v230
    %v331 = vpop.f32.mrf.mxu0
    %v332 = vadd.f32 %v208, %v331
    %v333 = vpop.f32.mrf.mxu0
    %334 = vmatprep.mubr.f32.mxu0 0.0
    %335 = vmatmul.mubr.f32.gmra.mxu0 %v233
    %v336 = vpop.f32.mrf.mxu0
    %v337 = vadd.f32 %v208, %v336
    %v338 = vpop.f32.mrf.mxu0
    %339 = vdwg.mxu0
    %v340 = vmax.f32 %v302, 0.0
    %v341 = vmax.f32 %v307, 0.0
    %v342 = vmax.f32 %v312, 0.0
    %v343 = vmax.f32 %v317, 0.0
    %v344 = vmax.f32 %v322, 0.0
    %v345 = vmax.f32 %v327, 0.0
    %v346 = vmax.f32 %v332, 0.0
    %v347 = vmax.f32 %v337, 0.0
    %v348 = vld [vmem:[#allocation8] sm:$0xff]
    %v349 = vld [vmem:[#allocation8 + $0x8] sm:$0xff]
    %v350 = vld [vmem:[#allocation8 + $0x10] sm:$0xff]
    %v351 = vld [vmem:[#allocation8 + $0x18] sm:$0xff]
    %v352 = vld [vmem:[#allocation8 + $0x20] sm:$0xff]
    %v353 = vld [vmem:[#allocation8 + $0x28] sm:$0xff]
    %v354 = vld [vmem:[#allocation8 + $0x30] sm:$0xff]
    %v355 = vld [vmem:[#allocation8 + $0x38] sm:$0xff]
    %v356 = vld [vmem:[#allocation9] sm:$0x1]
    %v358 = vlaneseq
    %v359 = vshrl.u32 %v358, 7
    %v360 = vsub.s32 0, %v359
    %v361 = vrot.slane %v356, %v360
    %vm363 = vcmask 523264
    %v365 = vsel %vm363, %v340, 0
    %v368 = vsel %vm363, %v341, 0
    %v371 = vsel %vm363, %v342, 0
    %v374 = vsel %vm363, %v343, 0
    %v377 = vsel %vm363, %v344, 0
    %v380 = vsel %vm363, %v345, 0
    %v383 = vsel %vm363, %v346, 0
    %v386 = vsel %vm363, %v347, 0
    %388 = vmatprep.subr.mxu0 0.0
    %389 = vmatpush1.msra.mxu0 0.0
    %390 = vmatprep.subr.mxu0 0.0
    %391 = vmatpush1.msra.mxu0 0.0
    %392 = vmatprep.subr.mxu0 0.0
    %393 = vmatpush1.msra.mxu0 0.0
    %394 = vmatprep.subr.mxu0 0.0
    %395 = vmatpush1.msra.mxu0 0.0
    %396 = vmatprep.subr.mxu0 0.0
    %397 = vmatpush1.msra.mxu0 0.0
    %398 = vmatprep.subr.mxu0 0.0
    %399 = vmatpush1.msra.mxu0 0.0
    %400 = vmatprep.subr.mxu0 0.0
    %401 = vmatpush1.msra.mxu0 0.0
    %402 = vmatprep.subr.mxu0 0.0
    %403 = vmatpush1.msra.mxu0 0.0
    %404 = vmatprep.subr.mxu0 0.0
    %405 = vmatpush1.msra.mxu0 %v355
    %406 = vmatprep.subr.mxu0 0.0
    %407 = vmatpush1.msra.mxu0 %v354
    %408 = vmatprep.subr.mxu0 0.0
    %409 = vmatpush1.msra.mxu0 %v353
    %410 = vmatprep.subr.mxu0 0.0
    %411 = vmatpush1.msra.mxu0 %v352
    %412 = vmatprep.subr.mxu0 0.0
    %413 = vmatpush1.msra.mxu0 %v351
    %414 = vmatprep.subr.mxu0 0.0
    %415 = vmatpush1.msra.mxu0 %v350
    %416 = vmatprep.subr.mxu0 0.0
    %417 = vmatpush1.msra.mxu0 %v349
    %418 = vmatprep.subr.mxu0 0.0
    %419 = vmatpush1.msra.mxu0 %v348
    %420 = vmatprep.subr.mxu0 0.0
    %421 = vmatpush2.msra.mxu0 0.0
    %422 = vmatprep.subr.mxu0 0.0
    %423 = vmatpush2.msra.mxu0 0.0
    %424 = vmatprep.subr.mxu0 0.0
    %425 = vmatpush2.msra.mxu0 0.0
    %426 = vmatprep.subr.mxu0 0.0
    %427 = vmatpush2.msra.mxu0 0.0
    %428 = vmatprep.subr.mxu0 0.0
    %429 = vmatpush2.msra.mxu0 0.0
    %430 = vmatprep.subr.mxu0 0.0
    %431 = vmatpush2.msra.mxu0 0.0
    %432 = vmatprep.subr.mxu0 0.0
    %433 = vmatpush2.msra.mxu0 0.0
    %434 = vmatprep.subr.mxu0 0.0
    %435 = vmatpush2.msra.mxu0 0.0
    %436 = vmatprep.subr.mxu0 0.0
    %437 = vmatpush2.msra.mxu0 0.0
    %438 = vmatprep.subr.mxu0 0.0
    %439 = vmatpush2.msra.mxu0 0.0
    %440 = vmatprep.subr.mxu0 0.0
    %441 = vmatpush2.msra.mxu0 0.0
    %442 = vmatprep.subr.mxu0 0.0
    %443 = vmatpush2.msra.mxu0 0.0
    %444 = vmatprep.subr.mxu0 0.0
    %445 = vmatpush2.msra.mxu0 0.0
    %446 = vmatprep.subr.mxu0 0.0
    %447 = vmatpush2.msra.mxu0 0.0
    %448 = vmatprep.subr.mxu0 0.0
    %449 = vmatpush2.msra.mxu0 0.0
    %450 = vmatprep.subr.mxu0 0.0
    %451 = vmatpush2.msra.mxu0 0.0
    %452 = vmatprep.mubr.f32.mxu0 0.0
    %453 = vmatmul.mubr.f32.gmra.mxu0 %v365
    %v454 = vpop.f32.mrf.mxu0
    %v455 = vadd.f32 %v361, %v454
    %v456 = vpop.f32.mrf.mxu0
    %457 = vmatprep.mubr.f32.mxu0 0.0
    %458 = vmatmul.mubr.f32.gmra.mxu0 %v368
    %v459 = vpop.f32.mrf.mxu0
    %v460 = vadd.f32 %v361, %v459
    %v461 = vpop.f32.mrf.mxu0
    %462 = vmatprep.mubr.f32.mxu0 0.0
    %463 = vmatmul.mubr.f32.gmra.mxu0 %v371
    %v464 = vpop.f32.mrf.mxu0
    %v465 = vadd.f32 %v361, %v464
    %v466 = vpop.f32.mrf.mxu0
    %467 = vmatprep.mubr.f32.mxu0 0.0
    %468 = vmatmul.mubr.f32.gmra.mxu0 %v374
    %v469 = vpop.f32.mrf.mxu0
    %v470 = vadd.f32 %v361, %v469
    %v471 = vpop.f32.mrf.mxu0
    %472 = vmatprep.mubr.f32.mxu0 0.0
    %473 = vmatmul.mubr.f32.gmra.mxu0 %v377
    %v474 = vpop.f32.mrf.mxu0
    %v475 = vadd.f32 %v361, %v474
    %v476 = vpop.f32.mrf.mxu0
    %477 = vmatprep.mubr.f32.mxu0 0.0
    %478 = vmatmul.mubr.f32.gmra.mxu0 %v380
    %v479 = vpop.f32.mrf.mxu0
    %v480 = vadd.f32 %v361, %v479
    %v481 = vpop.f32.mrf.mxu0
    %482 = vmatprep.mubr.f32.mxu0 0.0
    %483 = vmatmul.mubr.f32.gmra.mxu0 %v383
    %v484 = vpop.f32.mrf.mxu0
    %v485 = vadd.f32 %v361, %v484
    %v486 = vpop.f32.mrf.mxu0
    %487 = vmatprep.mubr.f32.mxu0 0.0
    %488 = vmatmul.mubr.f32.gmra.mxu0 %v386
    %v489 = vpop.f32.mrf.mxu0
    %v490 = vadd.f32 %v361, %v489
    %v491 = vpop.f32.mrf.mxu0
    %492 = vdwg.mxu0
    %v493 = vmax.f32 %v455, 0.0
    %v494 = vmax.f32 %v460, 0.0
    %v495 = vmax.f32 %v465, 0.0
    %v496 = vmax.f32 %v470, 0.0
    %v497 = vmax.f32 %v475, 0.0
    %v498 = vmax.f32 %v480, 0.0
    %v499 = vmax.f32 %v485, 0.0
    %v500 = vmax.f32 %v490, 0.0
    %v501 = vld [vmem:[#allocation11] sm:$0xff]
    %v502 = vld [vmem:[#allocation11 + $0x8] sm:$0xff]
    %v503 = vld [vmem:[#allocation11 + $0x10] sm:$0xff]
    %v504 = vld [vmem:[#allocation11 + $0x18] sm:$0xff]
    %v505 = vld [vmem:[#allocation11 + $0x20] sm:$0xff]
    %v506 = vld [vmem:[#allocation11 + $0x28] sm:$0xff]
    %v507 = vld [vmem:[#allocation11 + $0x30] sm:$0xff]
    %v508 = vld [vmem:[#allocation11 + $0x38] sm:$0xff]
    %v509 = vld [vmem:[#allocation11 + $0x40] sm:$0xff]
    %v510 = vld [vmem:[#allocation11 + $0x48] sm:$0xff]
    %v511 = vld [vmem:[#allocation11 + $0x50] sm:$0xff]
    %v512 = vld [vmem:[#allocation11 + $0x58] sm:$0xff]
    %v513 = vld [vmem:[#allocation11 + $0x60] sm:$0xff]
    %v514 = vld [vmem:[#allocation11 + $0x68] sm:$0xff]
    %v515 = vld [vmem:[#allocation11 + $0x70] sm:$0xff]
    %v516 = vld [vmem:[#allocation11 + $0x78] sm:$0xff]
    %v517 = vld [vmem:[#allocation11 + $0x80] sm:$0xff]
    %v518 = vld [vmem:[#allocation11 + $0x88] sm:$0xff]
    %v519 = vld [vmem:[#allocation11 + $0x90] sm:$0xff]
    %v520 = vld [vmem:[#allocation11 + $0x98] sm:$0xff]
    %v521 = vld [vmem:[#allocation11 + $0xa0] sm:$0xff]
    %v522 = vld [vmem:[#allocation11 + $0xa8] sm:$0xff]
    %v523 = vld [vmem:[#allocation11 + $0xb0] sm:$0xff]
    %v524 = vld [vmem:[#allocation11 + $0xb8] sm:$0xff]
    %v525 = vld [vmem:[#allocation11 + $0xc0] sm:$0xff]
    %v526 = vld [vmem:[#allocation11 + $0xc8] sm:$0xff]
    %v527 = vld [vmem:[#allocation11 + $0xd0] sm:$0xff]
    %v528 = vld [vmem:[#allocation11 + $0xd8] sm:$0xff]
    %v529 = vld [vmem:[#allocation11 + $0xe0] sm:$0xff]
    %v530 = vld [vmem:[#allocation11 + $0xe8] sm:$0xff]
    %v531 = vld [vmem:[#allocation11 + $0xf0] sm:$0xff]
    %v532 = vld [vmem:[#allocation11 + $0xf8] sm:$0xff]
    %v533 = vld [vmem:[#allocation11 + $0x100] sm:$0xff]
    %v534 = vld [vmem:[#allocation11 + $0x108] sm:$0xff]
    %v535 = vld [vmem:[#allocation11 + $0x110] sm:$0xff]
    %v536 = vld [vmem:[#allocation11 + $0x118] sm:$0xff]
    %v537 = vld [vmem:[#allocation11 + $0x120] sm:$0xff]
    %v538 = vld [vmem:[#allocation11 + $0x128] sm:$0xff]
    %v539 = vld [vmem:[#allocation11 + $0x130] sm:$0xff]
    %v540 = vld [vmem:[#allocation11 + $0x138] sm:$0xff]
    %v541 = vld [vmem:[#allocation11 + $0x140] sm:$0xff]
    %v542 = vld [vmem:[#allocation11 + $0x148] sm:$0xff]
    %v543 = vld [vmem:[#allocation11 + $0x150] sm:$0xff]
    %v544 = vld [vmem:[#allocation11 + $0x158] sm:$0xff]
    %v545 = vld [vmem:[#allocation11 + $0x160] sm:$0xff]
    %v546 = vld [vmem:[#allocation11 + $0x168] sm:$0xff]
    %v547 = vld [vmem:[#allocation11 + $0x170] sm:$0xff]
    %v548 = vld [vmem:[#allocation11 + $0x178] sm:$0xff]
    %v549 = vld [vmem:[#allocation11 + $0x180] sm:$0xff]
    %v550 = vld [vmem:[#allocation11 + $0x188] sm:$0xff]
    %v551 = vld [vmem:[#allocation11 + $0x190] sm:$0xff]
    %v552 = vld [vmem:[#allocation11 + $0x198] sm:$0xff]
    %v553 = vld [vmem:[#allocation11 + $0x1a0] sm:$0xff]
    %v554 = vld [vmem:[#allocation11 + $0x1a8] sm:$0xff]
    %v555 = vld [vmem:[#allocation11 + $0x1b0] sm:$0xff]
    %v556 = vld [vmem:[#allocation11 + $0x1b8] sm:$0xff]
    %v557 = vld [vmem:[#allocation11 + $0x1c0] sm:$0xff]
    %v558 = vld [vmem:[#allocation11 + $0x1c8] sm:$0xff]
    %v559 = vld [vmem:[#allocation11 + $0x1d0] sm:$0xff]
    %v560 = vld [vmem:[#allocation11 + $0x1d8] sm:$0xff]
    %v561 = vld [vmem:[#allocation11 + $0x1e0] sm:$0xff]
    %v562 = vld [vmem:[#allocation11 + $0x1e8] sm:$0xff]
    %v563 = vld [vmem:[#allocation11 + $0x1f0] sm:$0xff]
    %v564 = vld [vmem:[#allocation11 + $0x1f8] sm:$0xff]
    %v565 = vld [vmem:[#allocation11 + $0x200] sm:$0xff]
    %v566 = vld [vmem:[#allocation11 + $0x208] sm:$0xff]
    %v567 = vld [vmem:[#allocation11 + $0x210] sm:$0xff]
    %v568 = vld [vmem:[#allocation11 + $0x218] sm:$0xff]
    %v569 = vld [vmem:[#allocation11 + $0x220] sm:$0xff]
    %v570 = vld [vmem:[#allocation11 + $0x228] sm:$0xff]
    %v571 = vld [vmem:[#allocation11 + $0x230] sm:$0xff]
    %v572 = vld [vmem:[#allocation11 + $0x238] sm:$0xff]
    %v573 = vld [vmem:[#allocation11 + $0x240] sm:$0xff]
    %v574 = vld [vmem:[#allocation11 + $0x248] sm:$0xff]
    %v575 = vld [vmem:[#allocation11 + $0x250] sm:$0xff]
    %v576 = vld [vmem:[#allocation11 + $0x258] sm:$0xff]
    %v577 = vld [vmem:[#allocation11 + $0x260] sm:$0xff]
    %v578 = vld [vmem:[#allocation11 + $0x268] sm:$0xff]
    %v579 = vld [vmem:[#allocation11 + $0x270] sm:$0xff]
    %v580 = vld [vmem:[#allocation11 + $0x278] sm:$0xff]
    %v581 = vld [vmem:[#allocation11 + $0x280] sm:$0xff]
    %v582 = vld [vmem:[#allocation11 + $0x288] sm:$0xff]
    %v583 = vld [vmem:[#allocation11 + $0x290] sm:$0xff]
    %v584 = vld [vmem:[#allocation11 + $0x298] sm:$0xff]
    %v585 = vld [vmem:[#allocation11 + $0x2a0] sm:$0xff]
    %v586 = vld [vmem:[#allocation11 + $0x2a8] sm:$0xff]
    %v587 = vld [vmem:[#allocation11 + $0x2b0] sm:$0xff]
    %v588 = vld [vmem:[#allocation11 + $0x2b8] sm:$0xff]
    %v589 = vld [vmem:[#allocation11 + $0x2c0] sm:$0xff]
    %v590 = vld [vmem:[#allocation11 + $0x2c8] sm:$0xff]
    %v591 = vld [vmem:[#allocation11 + $0x2d0] sm:$0xff]
    %v592 = vld [vmem:[#allocation11 + $0x2d8] sm:$0xff]
    %v593 = vld [vmem:[#allocation11 + $0x2e0] sm:$0xff]
    %v594 = vld [vmem:[#allocation11 + $0x2e8] sm:$0xff]
    %v595 = vld [vmem:[#allocation11 + $0x2f0] sm:$0xff]
    %v596 = vld [vmem:[#allocation11 + $0x2f8] sm:$0xff]
    %v597 = vld [vmem:[#allocation11 + $0x300] sm:$0xff]
    %v598 = vld [vmem:[#allocation11 + $0x308] sm:$0xff]
    %v599 = vld [vmem:[#allocation11 + $0x310] sm:$0xff]
    %v600 = vld [vmem:[#allocation11 + $0x318] sm:$0xff]
    %v601 = vld [vmem:[#allocation11 + $0x320] sm:$0xff]
    %v602 = vld [vmem:[#allocation11 + $0x328] sm:$0xff]
    %v603 = vld [vmem:[#allocation11 + $0x330] sm:$0xff]
    %v604 = vld [vmem:[#allocation11 + $0x338] sm:$0xff]
    %v605 = vld [vmem:[#allocation11 + $0x340] sm:$0xff]
    %v606 = vld [vmem:[#allocation11 + $0x348] sm:$0xff]
    %v607 = vld [vmem:[#allocation11 + $0x350] sm:$0xff]
    %v608 = vld [vmem:[#allocation11 + $0x358] sm:$0xff]
    %v609 = vld [vmem:[#allocation11 + $0x360] sm:$0xff]
    %v610 = vld [vmem:[#allocation11 + $0x368] sm:$0xff]
    %v611 = vld [vmem:[#allocation11 + $0x370] sm:$0xff]
    %v612 = vld [vmem:[#allocation11 + $0x378] sm:$0xff]
    %v613 = vld [vmem:[#allocation11 + $0x380] sm:$0xff]
    %v614 = vld [vmem:[#allocation11 + $0x388] sm:$0xff]
    %v615 = vld [vmem:[#allocation11 + $0x390] sm:$0xff]
    %v616 = vld [vmem:[#allocation11 + $0x398] sm:$0xff]
    %v617 = vld [vmem:[#allocation11 + $0x3a0] sm:$0xff]
    %v618 = vld [vmem:[#allocation11 + $0x3a8] sm:$0xff]
    %v619 = vld [vmem:[#allocation11 + $0x3b0] sm:$0xff]
    %v620 = vld [vmem:[#allocation11 + $0x3b8] sm:$0xff]
    %v621 = vld [vmem:[#allocation11 + $0x3c0] sm:$0xff]
    %v622 = vld [vmem:[#allocation11 + $0x3c8] sm:$0xff]
    %v623 = vld [vmem:[#allocation11 + $0x3d0] sm:$0xff]
    %v624 = vld [vmem:[#allocation11 + $0x3d8] sm:$0xff]
    %v625 = vld [vmem:[#allocation11 + $0x3e0] sm:$0xff]
    %v626 = vld [vmem:[#allocation11 + $0x3e8] sm:$0xff]
    %v627 = vld [vmem:[#allocation11 + $0x3f0] sm:$0xff]
    %v628 = vld [vmem:[#allocation11 + $0x3f8] sm:$0xff]
    %v629 = vld [vmem:[#allocation12] sm:$0xff]
    %v631 = vlaneseq
    %v632 = vshrl.u32 %v631, 7
    %v633 = vsub.s32 0, %v632
    %v634 = vrot.slane %v629, %v633
    %v635 = vlaneseq
    %v636 = vshrl.u32 %v635, 7
    %v637 = vsub.s32 1, %v636
    %v638 = vrot.slane %v629, %v637
    %v639 = vlaneseq
    %v640 = vshrl.u32 %v639, 7
    %v641 = vsub.s32 2, %v640
    %v642 = vrot.slane %v629, %v641
    %v643 = vlaneseq
    %v644 = vshrl.u32 %v643, 7
    %v645 = vsub.s32 3, %v644
    %v646 = vrot.slane %v629, %v645
    %v647 = vlaneseq
    %v648 = vshrl.u32 %v647, 7
    %v649 = vsub.s32 4, %v648
    %v650 = vrot.slane %v629, %v649
    %v651 = vlaneseq
    %v652 = vshrl.u32 %v651, 7
    %v653 = vsub.s32 5, %v652
    %v654 = vrot.slane %v629, %v653
    %v655 = vlaneseq
    %v656 = vshrl.u32 %v655, 7
    %v657 = vsub.s32 6, %v656
    %v658 = vrot.slane %v629, %v657
    %v659 = vlaneseq
    %v660 = vshrl.u32 %v659, 7
    %v661 = vsub.s32 7, %v660
    %v662 = vrot.slane %v629, %v661
    %671 = vmatprep.subr.mxu0 %v622
    %672 = vmatpush1.msra.mxu0 %v621
    %673 = vmatprep.subr.mxu0 %v614
    %674 = vmatpush1.msra.mxu0 %v613
    %675 = vmatprep.subr.mxu0 %v606
    %676 = vmatpush1.msra.mxu0 %v605
    %677 = vmatprep.subr.mxu0 %v598
    %678 = vmatpush1.msra.mxu0 %v597
    %679 = vmatprep.subr.mxu0 %v590
    %680 = vmatpush1.msra.mxu0 %v589
    %681 = vmatprep.subr.mxu0 %v582
    %682 = vmatpush1.msra.mxu0 %v581
    %683 = vmatprep.subr.mxu0 %v574
    %684 = vmatpush1.msra.mxu0 %v573
    %685 = vmatprep.subr.mxu0 %v566
    %686 = vmatpush1.msra.mxu0 %v565
    %687 = vmatprep.subr.mxu0 %v558
    %688 = vmatpush1.msra.mxu0 %v557
    %689 = vmatprep.subr.mxu0 %v550
    %690 = vmatpush1.msra.mxu0 %v549
    %691 = vmatprep.subr.mxu0 %v542
    %692 = vmatpush1.msra.mxu0 %v541
    %693 = vmatprep.subr.mxu0 %v534
    %694 = vmatpush1.msra.mxu0 %v533
    %695 = vmatprep.subr.mxu0 %v526
    %696 = vmatpush1.msra.mxu0 %v525
    %697 = vmatprep.subr.mxu0 %v518
    %698 = vmatpush1.msra.mxu0 %v517
    %699 = vmatprep.subr.mxu0 %v510
    %700 = vmatpush1.msra.mxu0 %v509
    %701 = vmatprep.subr.mxu0 %v502
    %702 = vmatpush1.msra.mxu0 %v501
    %703 = vmatprep.subr.mxu0 0.0
    %704 = vmatpush2.msra.mxu0 0.0
    %705 = vmatprep.subr.mxu0 0.0
    %706 = vmatpush2.msra.mxu0 0.0
    %707 = vmatprep.subr.mxu0 0.0
    %708 = vmatpush2.msra.mxu0 0.0
    %709 = vmatprep.subr.mxu0 0.0
    %710 = vmatpush2.msra.mxu0 0.0
    %711 = vmatprep.subr.mxu0 0.0
    %712 = vmatpush2.msra.mxu0 0.0
    %713 = vmatprep.subr.mxu0 0.0
    %714 = vmatpush2.msra.mxu0 0.0
    %715 = vmatprep.subr.mxu0 0.0
    %716 = vmatpush2.msra.mxu0 0.0
    %717 = vmatprep.subr.mxu0 0.0
    %718 = vmatpush2.msra.mxu0 0.0
    %719 = vmatprep.subr.mxu0 0.0
    %720 = vmatpush2.msra.mxu0 0.0
    %721 = vmatprep.subr.mxu0 0.0
    %722 = vmatpush2.msra.mxu0 0.0
    %723 = vmatprep.subr.mxu0 0.0
    %724 = vmatpush2.msra.mxu0 0.0
    %725 = vmatprep.subr.mxu0 0.0
    %726 = vmatpush2.msra.mxu0 0.0
    %727 = vmatprep.subr.mxu0 0.0
    %728 = vmatpush2.msra.mxu0 0.0
    %729 = vmatprep.subr.mxu0 0.0
    %730 = vmatpush2.msra.mxu0 0.0
    %731 = vmatprep.subr.mxu0 0.0
    %732 = vmatpush2.msra.mxu0 0.0
    %733 = vmatprep.subr.mxu0 0.0
    %734 = vmatpush2.msra.mxu0 0.0
    %735 = vmatprep.mubr.f32.mxu0 0.0
    %736 = vmatmul.mubr.f32.gmra.mxu0 %v493
    %v737 = vpop.f32.mrf.mxu0
    %v738 = vadd.f32 %v634, %v737
    %v739 = vpop.f32.mrf.mxu0
    %v740 = vadd.f32 %v638, %v739
    %741 = vmatprep.mubr.f32.mxu0 0.0
    %742 = vmatmul.mubr.f32.gmra.mxu0 %v494
    %v743 = vpop.f32.mrf.mxu0
    %v744 = vadd.f32 %v634, %v743
    %v745 = vpop.f32.mrf.mxu0
    %v746 = vadd.f32 %v638, %v745
    %747 = vmatprep.mubr.f32.mxu0 0.0
    %748 = vmatmul.mubr.f32.gmra.mxu0 %v495
    %v749 = vpop.f32.mrf.mxu0
    %v750 = vadd.f32 %v634, %v749
    %v751 = vpop.f32.mrf.mxu0
    %v752 = vadd.f32 %v638, %v751
    %753 = vmatprep.mubr.f32.mxu0 0.0
    %754 = vmatmul.mubr.f32.gmra.mxu0 %v496
    %v755 = vpop.f32.mrf.mxu0
    %v756 = vadd.f32 %v634, %v755
    %v757 = vpop.f32.mrf.mxu0
    %v758 = vadd.f32 %v638, %v757
    %759 = vmatprep.mubr.f32.mxu0 0.0
    %760 = vmatmul.mubr.f32.gmra.mxu0 %v497
    %v761 = vpop.f32.mrf.mxu0
    %v762 = vadd.f32 %v634, %v761
    %v763 = vpop.f32.mrf.mxu0
    %v764 = vadd.f32 %v638, %v763
    %765 = vmatprep.mubr.f32.mxu0 0.0
    %766 = vmatmul.mubr.f32.gmra.mxu0 %v498
    %v767 = vpop.f32.mrf.mxu0
    %v768 = vadd.f32 %v634, %v767
    %v769 = vpop.f32.mrf.mxu0
    %v770 = vadd.f32 %v638, %v769
    %771 = vmatprep.mubr.f32.mxu0 0.0
    %772 = vmatmul.mubr.f32.gmra.mxu0 %v499
    %v773 = vpop.f32.mrf.mxu0
    %v774 = vadd.f32 %v634, %v773
    %v775 = vpop.f32.mrf.mxu0
    %v776 = vadd.f32 %v638, %v775
    %777 = vmatprep.mubr.f32.mxu0 0.0
    %778 = vmatmul.mubr.f32.gmra.mxu0 %v500
    %v779 = vpop.f32.mrf.mxu0
    %v780 = vadd.f32 %v634, %v779
    %v781 = vpop.f32.mrf.mxu0
    %v782 = vadd.f32 %v638, %v781
    %783 = vdwg.mxu0
    %784 = vmatprep.subr.mxu0 %v624
    %785 = vmatpush1.msra.mxu0 %v623
    %786 = vmatprep.subr.mxu0 %v616
    %787 = vmatpush1.msra.mxu0 %v615
    %788 = vmatprep.subr.mxu0 %v608
    %789 = vmatpush1.msra.mxu0 %v607
    %790 = vmatprep.subr.mxu0 %v600
    %791 = vmatpush1.msra.mxu0 %v599
    %792 = vmatprep.subr.mxu0 %v592
    %793 = vmatpush1.msra.mxu0 %v591
    %794 = vmatprep.subr.mxu0 %v584
    %795 = vmatpush1.msra.mxu0 %v583
    %796 = vmatprep.subr.mxu0 %v576
    %797 = vmatpush1.msra.mxu0 %v575
    %798 = vmatprep.subr.mxu0 %v568
    %799 = vmatpush1.msra.mxu0 %v567
    %800 = vmatprep.subr.mxu0 %v560
    %801 = vmatpush1.msra.mxu0 %v559
    %802 = vmatprep.subr.mxu0 %v552
    %803 = vmatpush1.msra.mxu0 %v551
    %804 = vmatprep.subr.mxu0 %v544
    %805 = vmatpush1.msra.mxu0 %v543
    %806 = vmatprep.subr.mxu0 %v536
    %807 = vmatpush1.msra.mxu0 %v535
    %808 = vmatprep.subr.mxu0 %v528
    %809 = vmatpush1.msra.mxu0 %v527
    %810 = vmatprep.subr.mxu0 %v520
    %811 = vmatpush1.msra.mxu0 %v519
    %812 = vmatprep.subr.mxu0 %v512
    %813 = vmatpush1.msra.mxu0 %v511
    %814 = vmatprep.subr.mxu0 %v504
    %815 = vmatpush1.msra.mxu0 %v503
    %816 = vmatprep.subr.mxu0 0.0
    %817 = vmatpush2.msra.mxu0 0.0
    %818 = vmatprep.subr.mxu0 0.0
    %819 = vmatpush2.msra.mxu0 0.0
    %820 = vmatprep.subr.mxu0 0.0
    %821 = vmatpush2.msra.mxu0 0.0
    %822 = vmatprep.subr.mxu0 0.0
    %823 = vmatpush2.msra.mxu0 0.0
    %824 = vmatprep.subr.mxu0 0.0
    %825 = vmatpush2.msra.mxu0 0.0
    %826 = vmatprep.subr.mxu0 0.0
    %827 = vmatpush2.msra.mxu0 0.0
    %828 = vmatprep.subr.mxu0 0.0
    %829 = vmatpush2.msra.mxu0 0.0
    %830 = vmatprep.subr.mxu0 0.0
    %831 = vmatpush2.msra.mxu0 0.0
    %832 = vmatprep.subr.mxu0 0.0
    %833 = vmatpush2.msra.mxu0 0.0
    %834 = vmatprep.subr.mxu0 0.0
    %835 = vmatpush2.msra.mxu0 0.0
    %836 = vmatprep.subr.mxu0 0.0
    %837 = vmatpush2.msra.mxu0 0.0
    %838 = vmatprep.subr.mxu0 0.0
    %839 = vmatpush2.msra.mxu0 0.0
    %840 = vmatprep.subr.mxu0 0.0
    %841 = vmatpush2.msra.mxu0 0.0
    %842 = vmatprep.subr.mxu0 0.0
    %843 = vmatpush2.msra.mxu0 0.0
    %844 = vmatprep.subr.mxu0 0.0
    %845 = vmatpush2.msra.mxu0 0.0
    %846 = vmatprep.subr.mxu0 0.0
    %847 = vmatpush2.msra.mxu0 0.0
    %848 = vmatprep.mubr.f32.mxu0 0.0
    %849 = vmatmul.mubr.f32.gmra.mxu0 %v493
    %v850 = vpop.f32.mrf.mxu0
    %v851 = vadd.f32 %v642, %v850
    %v852 = vpop.f32.mrf.mxu0
    %v853 = vadd.f32 %v646, %v852
    %854 = vmatprep.mubr.f32.mxu0 0.0
    %855 = vmatmul.mubr.f32.gmra.mxu0 %v494
    %v856 = vpop.f32.mrf.mxu0
    %v857 = vadd.f32 %v642, %v856
    %v858 = vpop.f32.mrf.mxu0
    %v859 = vadd.f32 %v646, %v858
    %860 = vmatprep.mubr.f32.mxu0 0.0
    %861 = vmatmul.mubr.f32.gmra.mxu0 %v495
    %v862 = vpop.f32.mrf.mxu0
    %v863 = vadd.f32 %v642, %v862
    %v864 = vpop.f32.mrf.mxu0
    %v865 = vadd.f32 %v646, %v864
    %866 = vmatprep.mubr.f32.mxu0 0.0
    %867 = vmatmul.mubr.f32.gmra.mxu0 %v496
    %v868 = vpop.f32.mrf.mxu0
    %v869 = vadd.f32 %v642, %v868
    %v870 = vpop.f32.mrf.mxu0
    %v871 = vadd.f32 %v646, %v870
    %872 = vmatprep.mubr.f32.mxu0 0.0
    %873 = vmatmul.mubr.f32.gmra.mxu0 %v497
    %v874 = vpop.f32.mrf.mxu0
    %v875 = vadd.f32 %v642, %v874
    %v876 = vpop.f32.mrf.mxu0
    %v877 = vadd.f32 %v646, %v876
    %878 = vmatprep.mubr.f32.mxu0 0.0
    %879 = vmatmul.mubr.f32.gmra.mxu0 %v498
    %v880 = vpop.f32.mrf.mxu0
    %v881 = vadd.f32 %v642, %v880
    %v882 = vpop.f32.mrf.mxu0
    %v883 = vadd.f32 %v646, %v882
    %884 = vmatprep.mubr.f32.mxu0 0.0
    %885 = vmatmul.mubr.f32.gmra.mxu0 %v499
    %v886 = vpop.f32.mrf.mxu0
    %v887 = vadd.f32 %v642, %v886
    %v888 = vpop.f32.mrf.mxu0
    %v889 = vadd.f32 %v646, %v888
    %890 = vmatprep.mubr.f32.mxu0 0.0
    %891 = vmatmul.mubr.f32.gmra.mxu0 %v500
    %v892 = vpop.f32.mrf.mxu0
    %v893 = vadd.f32 %v642, %v892
    %v894 = vpop.f32.mrf.mxu0
    %v895 = vadd.f32 %v646, %v894
    %896 = vdwg.mxu0
    %897 = vmatprep.subr.mxu0 %v626
    %898 = vmatpush1.msra.mxu0 %v625
    %899 = vmatprep.subr.mxu0 %v618
    %900 = vmatpush1.msra.mxu0 %v617
    %901 = vmatprep.subr.mxu0 %v610
    %902 = vmatpush1.msra.mxu0 %v609
    %903 = vmatprep.subr.mxu0 %v602
    %904 = vmatpush1.msra.mxu0 %v601
    %905 = vmatprep.subr.mxu0 %v594
    %906 = vmatpush1.msra.mxu0 %v593
    %907 = vmatprep.subr.mxu0 %v586
    %908 = vmatpush1.msra.mxu0 %v585
    %909 = vmatprep.subr.mxu0 %v578
    %910 = vmatpush1.msra.mxu0 %v577
    %911 = vmatprep.subr.mxu0 %v570
    %912 = vmatpush1.msra.mxu0 %v569
    %913 = vmatprep.subr.mxu0 %v562
    %914 = vmatpush1.msra.mxu0 %v561
    %915 = vmatprep.subr.mxu0 %v554
    %916 = vmatpush1.msra.mxu0 %v553
    %917 = vmatprep.subr.mxu0 %v546
    %918 = vmatpush1.msra.mxu0 %v545
    %919 = vmatprep.subr.mxu0 %v538
    %920 = vmatpush1.msra.mxu0 %v537
    %921 = vmatprep.subr.mxu0 %v530
    %922 = vmatpush1.msra.mxu0 %v529
    %923 = vmatprep.subr.mxu0 %v522
    %924 = vmatpush1.msra.mxu0 %v521
    %925 = vmatprep.subr.mxu0 %v514
    %926 = vmatpush1.msra.mxu0 %v513
    %927 = vmatprep.subr.mxu0 %v506
    %928 = vmatpush1.msra.mxu0 %v505
    %929 = vmatprep.subr.mxu0 0.0
    %930 = vmatpush2.msra.mxu0 0.0
    %931 = vmatprep.subr.mxu0 0.0
    %932 = vmatpush2.msra.mxu0 0.0
    %933 = vmatprep.subr.mxu0 0.0
    %934 = vmatpush2.msra.mxu0 0.0
    %935 = vmatprep.subr.mxu0 0.0
    %936 = vmatpush2.msra.mxu0 0.0
    %937 = vmatprep.subr.mxu0 0.0
    %938 = vmatpush2.msra.mxu0 0.0
    %939 = vmatprep.subr.mxu0 0.0
    %940 = vmatpush2.msra.mxu0 0.0
    %941 = vmatprep.subr.mxu0 0.0
    %942 = vmatpush2.msra.mxu0 0.0
    %943 = vmatprep.subr.mxu0 0.0
    %944 = vmatpush2.msra.mxu0 0.0
    %945 = vmatprep.subr.mxu0 0.0
    %946 = vmatpush2.msra.mxu0 0.0
    %947 = vmatprep.subr.mxu0 0.0
    %948 = vmatpush2.msra.mxu0 0.0
    %949 = vmatprep.subr.mxu0 0.0
    %950 = vmatpush2.msra.mxu0 0.0
    %951 = vmatprep.subr.mxu0 0.0
    %952 = vmatpush2.msra.mxu0 0.0
    %953 = vmatprep.subr.mxu0 0.0
    %954 = vmatpush2.msra.mxu0 0.0
    %955 = vmatprep.subr.mxu0 0.0
    %956 = vmatpush2.msra.mxu0 0.0
    %957 = vmatprep.subr.mxu0 0.0
    %958 = vmatpush2.msra.mxu0 0.0
    %959 = vmatprep.subr.mxu0 0.0
    %960 = vmatpush2.msra.mxu0 0.0
    %961 = vmatprep.mubr.f32.mxu0 0.0
    %962 = vmatmul.mubr.f32.gmra.mxu0 %v493
    %v963 = vpop.f32.mrf.mxu0
    %v964 = vadd.f32 %v650, %v963
    %v965 = vpop.f32.mrf.mxu0
    %v966 = vadd.f32 %v654, %v965
    %967 = vmatprep.mubr.f32.mxu0 0.0
    %968 = vmatmul.mubr.f32.gmra.mxu0 %v494
    %v969 = vpop.f32.mrf.mxu0
    %v970 = vadd.f32 %v650, %v969
    %v971 = vpop.f32.mrf.mxu0
    %v972 = vadd.f32 %v654, %v971
    %973 = vmatprep.mubr.f32.mxu0 0.0
    %974 = vmatmul.mubr.f32.gmra.mxu0 %v495
    %v975 = vpop.f32.mrf.mxu0
    %v976 = vadd.f32 %v650, %v975
    %v977 = vpop.f32.mrf.mxu0
    %v978 = vadd.f32 %v654, %v977
    %979 = vmatprep.mubr.f32.mxu0 0.0
    %980 = vmatmul.mubr.f32.gmra.mxu0 %v496
    %v981 = vpop.f32.mrf.mxu0
    %v982 = vadd.f32 %v650, %v981
    %v983 = vpop.f32.mrf.mxu0
    %v984 = vadd.f32 %v654, %v983
    %985 = vmatprep.mubr.f32.mxu0 0.0
    %986 = vmatmul.mubr.f32.gmra.mxu0 %v497
    %v987 = vpop.f32.mrf.mxu0
    %v988 = vadd.f32 %v650, %v987
    %v989 = vpop.f32.mrf.mxu0
    %v990 = vadd.f32 %v654, %v989
    %991 = vmatprep.mubr.f32.mxu0 0.0
    %992 = vmatmul.mubr.f32.gmra.mxu0 %v498
    %v993 = vpop.f32.mrf.mxu0
    %v994 = vadd.f32 %v650, %v993
    %v995 = vpop.f32.mrf.mxu0
    %v996 = vadd.f32 %v654, %v995
    %997 = vmatprep.mubr.f32.mxu0 0.0
    %998 = vmatmul.mubr.f32.gmra.mxu0 %v499
    %v999 = vpop.f32.mrf.mxu0
    %v1000 = vadd.f32 %v650, %v999
    %v1001 = vpop.f32.mrf.mxu0
    %v1002 = vadd.f32 %v654, %v1001
    %1003 = vmatprep.mubr.f32.mxu0 0.0
    %1004 = vmatmul.mubr.f32.gmra.mxu0 %v500
    %v1005 = vpop.f32.mrf.mxu0
    %v1006 = vadd.f32 %v650, %v1005
    %v1007 = vpop.f32.mrf.mxu0
    %v1008 = vadd.f32 %v654, %v1007
    %1009 = vdwg.mxu0
    %1010 = vmatprep.subr.mxu0 %v628
    %1011 = vmatpush1.msra.mxu0 %v627
    %1012 = vmatprep.subr.mxu0 %v620
    %1013 = vmatpush1.msra.mxu0 %v619
    %1014 = vmatprep.subr.mxu0 %v612
    %1015 = vmatpush1.msra.mxu0 %v611
    %1016 = vmatprep.subr.mxu0 %v604
    %1017 = vmatpush1.msra.mxu0 %v603
    %1018 = vmatprep.subr.mxu0 %v596
    %1019 = vmatpush1.msra.mxu0 %v595
    %1020 = vmatprep.subr.mxu0 %v588
    %1021 = vmatpush1.msra.mxu0 %v587
    %1022 = vmatprep.subr.mxu0 %v580
    %1023 = vmatpush1.msra.mxu0 %v579
    %1024 = vmatprep.subr.mxu0 %v572
    %1025 = vmatpush1.msra.mxu0 %v571
    %1026 = vmatprep.subr.mxu0 %v564
    %1027 = vmatpush1.msra.mxu0 %v563
    %1028 = vmatprep.subr.mxu0 %v556
    %1029 = vmatpush1.msra.mxu0 %v555
    %1030 = vmatprep.subr.mxu0 %v548
    %1031 = vmatpush1.msra.mxu0 %v547
    %1032 = vmatprep.subr.mxu0 %v540
    %1033 = vmatpush1.msra.mxu0 %v539
    %1034 = vmatprep.subr.mxu0 %v532
    %1035 = vmatpush1.msra.mxu0 %v531
    %1036 = vmatprep.subr.mxu0 %v524
    %1037 = vmatpush1.msra.mxu0 %v523
    %1038 = vmatprep.subr.mxu0 %v516
    %1039 = vmatpush1.msra.mxu0 %v515
    %1040 = vmatprep.subr.mxu0 %v508
    %1041 = vmatpush1.msra.mxu0 %v507
    %1042 = vmatprep.subr.mxu0 0.0
    %1043 = vmatpush2.msra.mxu0 0.0
    %1044 = vmatprep.subr.mxu0 0.0
    %1045 = vmatpush2.msra.mxu0 0.0
    %1046 = vmatprep.subr.mxu0 0.0
    %1047 = vmatpush2.msra.mxu0 0.0
    %1048 = vmatprep.subr.mxu0 0.0
    %1049 = vmatpush2.msra.mxu0 0.0
    %1050 = vmatprep.subr.mxu0 0.0
    %1051 = vmatpush2.msra.mxu0 0.0
    %1052 = vmatprep.subr.mxu0 0.0
    %1053 = vmatpush2.msra.mxu0 0.0
    %1054 = vmatprep.subr.mxu0 0.0
    %1055 = vmatpush2.msra.mxu0 0.0
    %1056 = vmatprep.subr.mxu0 0.0
    %1057 = vmatpush2.msra.mxu0 0.0
    %1058 = vmatprep.subr.mxu0 0.0
    %1059 = vmatpush2.msra.mxu0 0.0
    %1060 = vmatprep.subr.mxu0 0.0
    %1061 = vmatpush2.msra.mxu0 0.0
    %1062 = vmatprep.subr.mxu0 0.0
    %1063 = vmatpush2.msra.mxu0 0.0
    %1064 = vmatprep.subr.mxu0 0.0
    %1065 = vmatpush2.msra.mxu0 0.0
    %1066 = vmatprep.subr.mxu0 0.0
    %1067 = vmatpush2.msra.mxu0 0.0
    %1068 = vmatprep.subr.mxu0 0.0
    %1069 = vmatpush2.msra.mxu0 0.0
    %1070 = vmatprep.subr.mxu0 0.0
    %1071 = vmatpush2.msra.mxu0 0.0
    %1072 = vmatprep.subr.mxu0 0.0
    %1073 = vmatpush2.msra.mxu0 0.0
    %1074 = vmatprep.mubr.f32.mxu0 0.0
    %1075 = vmatmul.mubr.f32.gmra.mxu0 %v493
    %v1076 = vpop.f32.mrf.mxu0
    %v1077 = vadd.f32 %v658, %v1076
    %v1078 = vpop.f32.mrf.mxu0
    %v1079 = vadd.f32 %v662, %v1078
    %1080 = vmatprep.mubr.f32.mxu0 0.0
    %1081 = vmatmul.mubr.f32.gmra.mxu0 %v494
    %v1082 = vpop.f32.mrf.mxu0
    %v1083 = vadd.f32 %v658, %v1082
    %v1084 = vpop.f32.mrf.mxu0
    %v1085 = vadd.f32 %v662, %v1084
    %1086 = vmatprep.mubr.f32.mxu0 0.0
    %1087 = vmatmul.mubr.f32.gmra.mxu0 %v495
    %v1088 = vpop.f32.mrf.mxu0
    %v1089 = vadd.f32 %v658, %v1088
    %v1090 = vpop.f32.mrf.mxu0
    %v1091 = vadd.f32 %v662, %v1090
    %1092 = vmatprep.mubr.f32.mxu0 0.0
    %1093 = vmatmul.mubr.f32.gmra.mxu0 %v496
    %v1094 = vpop.f32.mrf.mxu0
    %v1095 = vadd.f32 %v658, %v1094
    %v1096 = vpop.f32.mrf.mxu0
    %v1097 = vadd.f32 %v662, %v1096
    %1098 = vmatprep.mubr.f32.mxu0 0.0
    %1099 = vmatmul.mubr.f32.gmra.mxu0 %v497
    %v1100 = vpop.f32.mrf.mxu0
    %v1101 = vadd.f32 %v658, %v1100
    %v1102 = vpop.f32.mrf.mxu0
    %v1103 = vadd.f32 %v662, %v1102
    %1104 = vmatprep.mubr.f32.mxu0 0.0
    %1105 = vmatmul.mubr.f32.gmra.mxu0 %v498
    %v1106 = vpop.f32.mrf.mxu0
    %v1107 = vadd.f32 %v658, %v1106
    %v1108 = vpop.f32.mrf.mxu0
    %v1109 = vadd.f32 %v662, %v1108
    %1110 = vmatprep.mubr.f32.mxu0 0.0
    %1111 = vmatmul.mubr.f32.gmra.mxu0 %v499
    %v1112 = vpop.f32.mrf.mxu0
    %v1113 = vadd.f32 %v658, %v1112
    %v1114 = vpop.f32.mrf.mxu0
    %v1115 = vadd.f32 %v662, %v1114
    %1116 = vmatprep.mubr.f32.mxu0 0.0
    %1117 = vmatmul.mubr.f32.gmra.mxu0 %v500
    %v1118 = vpop.f32.mrf.mxu0
    %v1119 = vadd.f32 %v658, %v1118
    %v1120 = vpop.f32.mrf.mxu0
    %v1121 = vadd.f32 %v662, %v1120
    %1122 = vdwg.mxu0
    %v1123 = vmax.f32 %v738, 0.0
    %v1124 = vmax.f32 %v740, 0.0
    %v1125 = vmax.f32 %v851, 0.0
    %v1126 = vmax.f32 %v853, 0.0
    %v1127 = vmax.f32 %v964, 0.0
    %v1128 = vmax.f32 %v966, 0.0
    %v1129 = vmax.f32 %v1077, 0.0
    %v1130 = vmax.f32 %v1079, 0.0
    %v1131 = vmax.f32 %v744, 0.0
    %v1132 = vmax.f32 %v746, 0.0
    %v1133 = vmax.f32 %v857, 0.0
    %v1134 = vmax.f32 %v859, 0.0
    %v1135 = vmax.f32 %v970, 0.0
    %v1136 = vmax.f32 %v972, 0.0
    %v1137 = vmax.f32 %v1083, 0.0
    %v1138 = vmax.f32 %v1085, 0.0
    %v1139 = vmax.f32 %v750, 0.0
    %v1140 = vmax.f32 %v752, 0.0
    %v1141 = vmax.f32 %v863, 0.0
    %v1142 = vmax.f32 %v865, 0.0
    %v1143 = vmax.f32 %v976, 0.0
    %v1144 = vmax.f32 %v978, 0.0
    %v1145 = vmax.f32 %v1089, 0.0
    %v1146 = vmax.f32 %v1091, 0.0
    %v1147 = vmax.f32 %v756, 0.0
    %v1148 = vmax.f32 %v758, 0.0
    %v1149 = vmax.f32 %v869, 0.0
    %v1150 = vmax.f32 %v871, 0.0
    %v1151 = vmax.f32 %v982, 0.0
    %v1152 = vmax.f32 %v984, 0.0
    %v1153 = vmax.f32 %v1095, 0.0
    %v1154 = vmax.f32 %v1097, 0.0
    %v1155 = vmax.f32 %v762, 0.0
    %v1156 = vmax.f32 %v764, 0.0
    %v1157 = vmax.f32 %v875, 0.0
    %v1158 = vmax.f32 %v877, 0.0
    %v1159 = vmax.f32 %v988, 0.0
    %v1160 = vmax.f32 %v990, 0.0
    %v1161 = vmax.f32 %v1101, 0.0
    %v1162 = vmax.f32 %v1103, 0.0
    %v1163 = vmax.f32 %v768, 0.0
    %v1164 = vmax.f32 %v770, 0.0
    %v1165 = vmax.f32 %v881, 0.0
    %v1166 = vmax.f32 %v883, 0.0
    %v1167 = vmax.f32 %v994, 0.0
    %v1168 = vmax.f32 %v996, 0.0
    %v1169 = vmax.f32 %v1107, 0.0
    %v1170 = vmax.f32 %v1109, 0.0
    %v1171 = vmax.f32 %v774, 0.0
    %v1172 = vmax.f32 %v776, 0.0
    %v1173 = vmax.f32 %v887, 0.0
    %v1174 = vmax.f32 %v889, 0.0
    %v1175 = vmax.f32 %v1000, 0.0
    %v1176 = vmax.f32 %v1002, 0.0
    %v1177 = vmax.f32 %v1113, 0.0
    %v1178 = vmax.f32 %v1115, 0.0
    %v1179 = vmax.f32 %v780, 0.0
    %v1180 = vmax.f32 %v782, 0.0
    %v1181 = vmax.f32 %v893, 0.0
    %v1182 = vmax.f32 %v895, 0.0
    %v1183 = vmax.f32 %v1006, 0.0
    %v1184 = vmax.f32 %v1008, 0.0
    %v1185 = vmax.f32 %v1119, 0.0
    %v1186 = vmax.f32 %v1121, 0.0
    %v1187 = vmax.f32 %v1123, %v1131
    %v1188 = vmax.f32 %v1187, %v1139
    %v1189 = vmax.f32 %v1188, %v1147
    %v1190 = vrot.slane %v1189, 4
    %v1191 = vmax.f32 %v1189, %v1190
    %v1192 = vrot.slane %v1191, 2
    %v1193 = vmax.f32 %v1191, %v1192
    %v1194 = vrot.slane %v1193, 1
    %v1195 = vmax.f32 %v1193, %v1194
    %v1196 = vmax.f32 %v1124, %v1132
    %v1197 = vmax.f32 %v1196, %v1140
    %v1198 = vmax.f32 %v1197, %v1148
    %v1199 = vrot.slane %v1198, 4
    %v1200 = vmax.f32 %v1198, %v1199
    %v1201 = vrot.slane %v1200, 2
    %v1202 = vmax.f32 %v1200, %v1201
    %v1203 = vrot.slane %v1202, 1
    %v1204 = vmax.f32 %v1202, %v1203
    %v1205 = vmax.f32 %v1125, %v1133
    %v1206 = vmax.f32 %v1205, %v1141
    %v1207 = vmax.f32 %v1206, %v1149
    %v1208 = vrot.slane %v1207, 4
    %v1209 = vmax.f32 %v1207, %v1208
    %v1210 = vrot.slane %v1209, 2
    %v1211 = vmax.f32 %v1209, %v1210
    %v1212 = vrot.slane %v1211, 1
    %v1213 = vmax.f32 %v1211, %v1212
    %v1214 = vmax.f32 %v1126, %v1134
    %v1215 = vmax.f32 %v1214, %v1142
    %v1216 = vmax.f32 %v1215, %v1150
    %v1217 = vrot.slane %v1216, 4
    %v1218 = vmax.f32 %v1216, %v1217
    %v1219 = vrot.slane %v1218, 2
    %v1220 = vmax.f32 %v1218, %v1219
    %v1221 = vrot.slane %v1220, 1
    %v1222 = vmax.f32 %v1220, %v1221
    %v1223 = vmax.f32 %v1127, %v1135
    %v1224 = vmax.f32 %v1223, %v1143
    %v1225 = vmax.f32 %v1224, %v1151
    %v1226 = vrot.slane %v1225, 4
    %v1227 = vmax.f32 %v1225, %v1226
    %v1228 = vrot.slane %v1227, 2
    %v1229 = vmax.f32 %v1227, %v1228
    %v1230 = vrot.slane %v1229, 1
    %v1231 = vmax.f32 %v1229, %v1230
    %v1232 = vmax.f32 %v1128, %v1136
    %v1233 = vmax.f32 %v1232, %v1144
    %v1234 = vmax.f32 %v1233, %v1152
    %v1235 = vrot.slane %v1234, 4
    %v1236 = vmax.f32 %v1234, %v1235
    %v1237 = vrot.slane %v1236, 2
    %v1238 = vmax.f32 %v1236, %v1237
    %v1239 = vrot.slane %v1238, 1
    %v1240 = vmax.f32 %v1238, %v1239
    %v1241 = vmax.f32 %v1129, %v1137
    %v1242 = vmax.f32 %v1241, %v1145
    %v1243 = vmax.f32 %v1242, %v1153
    %v1244 = vrot.slane %v1243, 4
    %v1245 = vmax.f32 %v1243, %v1244
    %v1246 = vrot.slane %v1245, 2
    %v1247 = vmax.f32 %v1245, %v1246
    %v1248 = vrot.slane %v1247, 1
    %v1249 = vmax.f32 %v1247, %v1248
    %v1250 = vmax.f32 %v1130, %v1138
    %v1251 = vmax.f32 %v1250, %v1146
    %v1252 = vmax.f32 %v1251, %v1154
    %v1253 = vrot.slane %v1252, 4
    %v1254 = vmax.f32 %v1252, %v1253
    %v1255 = vrot.slane %v1254, 2
    %v1256 = vmax.f32 %v1254, %v1255
    %v1257 = vrot.slane %v1256, 1
    %v1258 = vmax.f32 %v1256, %v1257
    %v1259 = vmax.f32 %v1155, %v1163
    %v1260 = vmax.f32 %v1259, %v1171
    %v1261 = vmax.f32 %v1260, %v1179
    %v1262 = vrot.slane %v1261, 4
    %v1263 = vmax.f32 %v1261, %v1262
    %v1264 = vrot.slane %v1263, 2
    %v1265 = vmax.f32 %v1263, %v1264
    %v1266 = vrot.slane %v1265, 1
    %v1267 = vmax.f32 %v1265, %v1266
    %v1268 = vmax.f32 %v1156, %v1164
    %v1269 = vmax.f32 %v1268, %v1172
    %v1270 = vmax.f32 %v1269, %v1180
    %v1271 = vrot.slane %v1270, 4
    %v1272 = vmax.f32 %v1270, %v1271
    %v1273 = vrot.slane %v1272, 2
    %v1274 = vmax.f32 %v1272, %v1273
    %v1275 = vrot.slane %v1274, 1
    %v1276 = vmax.f32 %v1274, %v1275
    %v1277 = vmax.f32 %v1157, %v1165
    %v1278 = vmax.f32 %v1277, %v1173
    %v1279 = vmax.f32 %v1278, %v1181
    %v1280 = vrot.slane %v1279, 4
    %v1281 = vmax.f32 %v1279, %v1280
    %v1282 = vrot.slane %v1281, 2
    %v1283 = vmax.f32 %v1281, %v1282
    %v1284 = vrot.slane %v1283, 1
    %v1285 = vmax.f32 %v1283, %v1284
    %v1286 = vmax.f32 %v1158, %v1166
    %v1287 = vmax.f32 %v1286, %v1174
    %v1288 = vmax.f32 %v1287, %v1182
    %v1289 = vrot.slane %v1288, 4
    %v1290 = vmax.f32 %v1288, %v1289
    %v1291 = vrot.slane %v1290, 2
    %v1292 = vmax.f32 %v1290, %v1291
    %v1293 = vrot.slane %v1292, 1
    %v1294 = vmax.f32 %v1292, %v1293
    %v1295 = vmax.f32 %v1159, %v1167
    %v1296 = vmax.f32 %v1295, %v1175
    %v1297 = vmax.f32 %v1296, %v1183
    %v1298 = vrot.slane %v1297, 4
    %v1299 = vmax.f32 %v1297, %v1298
    %v1300 = vrot.slane %v1299, 2
    %v1301 = vmax.f32 %v1299, %v1300
    %v1302 = vrot.slane %v1301, 1
    %v1303 = vmax.f32 %v1301, %v1302
    %v1304 = vmax.f32 %v1160, %v1168
    %v1305 = vmax.f32 %v1304, %v1176
    %v1306 = vmax.f32 %v1305, %v1184
    %v1307 = vrot.slane %v1306, 4
    %v1308 = vmax.f32 %v1306, %v1307
    %v1309 = vrot.slane %v1308, 2
    %v1310 = vmax.f32 %v1308, %v1309
    %v1311 = vrot.slane %v1310, 1
    %v1312 = vmax.f32 %v1310, %v1311
    %v1313 = vmax.f32 %v1161, %v1169
    %v1314 = vmax.f32 %v1313, %v1177
    %v1315 = vmax.f32 %v1314, %v1185
    %v1316 = vrot.slane %v1315, 4
    %v1317 = vmax.f32 %v1315, %v1316
    %v1318 = vrot.slane %v1317, 2
    %v1319 = vmax.f32 %v1317, %v1318
    %v1320 = vrot.slane %v1319, 1
    %v1321 = vmax.f32 %v1319, %v1320
    %v1322 = vmax.f32 %v1162, %v1170
    %v1323 = vmax.f32 %v1322, %v1178
    %v1324 = vmax.f32 %v1323, %v1186
    %v1325 = vrot.slane %v1324, 4
    %v1326 = vmax.f32 %v1324, %v1325
    %v1327 = vrot.slane %v1326, 2
    %v1328 = vmax.f32 %v1326, %v1327
    %v1329 = vrot.slane %v1328, 1
    %v1330 = vmax.f32 %v1328, %v1329
    %p1331 = scmp.eq.s32.totalorder 0, 0
    // Predicated region
    $region102: #{tpu_custom_call.1} parent=1 // pred_check
      %p1332 = pneg %p1331
    $region103: #{tpu_custom_call.1} parent=1 // pred_check_branch
      %1334 = sbr.rel (%p1332) target = $region105
    $region104: #{tpu_custom_call.1} parent=1 // pred_region
      %v1351 = vcombine.low %v1195, %v1204
      %v1352 = vcombine.low %v1213, %v1222
      %v1354 = vunpack.c.l.s4 1983009808
      %v1355 = vunpack.c.0.s8 %v1354
      %v1356 = vlaneseq
      %v1357 = vshrl.u32 %v1356, 7
      %v1358 = vsub.s32 %v1355, %v1357
      %v1359 = vrot.slane %v1351, %v1358
      %v1361 = vunpack.c.l.s4 1983009808
      %v1362 = vunpack.c.0.s8 %v1361
      %v1363 = vlaneseq
      %v1364 = vshrl.u32 %v1363, 7
      %v1365 = vsub.s32 %v1362, %v1364
      %v1366 = vrot.slane %v1352, %v1365
      %v1367 = vcombine.low %v1359, %v1366
      %v1368 = vcombine.low %v1231, %v1240
      %v1369 = vcombine.low %v1249, %v1258
      %v1371 = vunpack.c.l.s4 1983009808
      %v1372 = vunpack.c.0.s8 %v1371
      %v1373 = vlaneseq
      %v1374 = vshrl.u32 %v1373, 7
      %v1375 = vsub.s32 %v1372, %v1374
      %v1376 = vrot.slane %v1368, %v1375
      %v1378 = vunpack.c.l.s4 1983009808
      %v1379 = vunpack.c.0.s8 %v1378
      %v1380 = vlaneseq
      %v1381 = vshrl.u32 %v1380, 7
      %v1382 = vsub.s32 %v1379, %v1381
      %v1383 = vrot.slane %v1369, %v1382
      %v1384 = vcombine.low %v1376, %v1383
      %v1385 = vcombine.low %v1267, %v1276
      %v1386 = vcombine.low %v1285, %v1294
      %v1388 = vunpack.c.l.s4 1983009808
      %v1389 = vunpack.c.0.s8 %v1388
      %v1390 = vlaneseq
      %v1391 = vshrl.u32 %v1390, 7
      %v1392 = vsub.s32 %v1389, %v1391
      %v1393 = vrot.slane %v1385, %v1392
      %v1395 = vunpack.c.l.s4 1983009808
      %v1396 = vunpack.c.0.s8 %v1395
      %v1397 = vlaneseq
      %v1398 = vshrl.u32 %v1397, 7
      %v1399 = vsub.s32 %v1396, %v1398
      %v1400 = vrot.slane %v1386, %v1399
      %v1401 = vcombine.low %v1393, %v1400
      %v1402 = vcombine.low %v1303, %v1312
      %v1403 = vcombine.low %v1321, %v1330
      %v1405 = vunpack.c.l.s4 1983009808
      %v1406 = vunpack.c.0.s8 %v1405
      %v1407 = vlaneseq
      %v1408 = vshrl.u32 %v1407, 7
      %v1409 = vsub.s32 %v1406, %v1408
      %v1410 = vrot.slane %v1402, %v1409
      %v1412 = vunpack.c.l.s4 1983009808
      %v1413 = vunpack.c.0.s8 %v1412
      %v1414 = vlaneseq
      %v1415 = vshrl.u32 %v1414, 7
      %v1416 = vsub.s32 %v1413, %v1415
      %v1417 = vrot.slane %v1403, %v1416
      %v1418 = vcombine.low %v1410, %v1417
      %vm1419 = vcmask 1044484
      %v1420 = vsel %vm1419, %v1367, %v1367
      %vm1421 = vcmask 1046534
      %v1422 = vsel %vm1421, %v1367, %v1420
      %v1423 = vrot.slane %v1401, 7
      %vm1424 = vcmask 1041409
      %v1425 = vsel %vm1424, %v1423, %v1422
      %vm1426 = vcmask 1043459
      %v1427 = vsel %vm1426, %v1423, %v1425
      %vm1428 = vcmask 1045509
      %v1429 = vsel %vm1428, %v1423, %v1427
      %vm1430 = vcmask 1047559
      %v1431 = vsel %vm1430, %v1423, %v1429
      %v1432 = vsel %vm1419, %v1384, %v1384
      %v1433 = vsel %vm1421, %v1384, %v1432
      %v1434 = vrot.slane %v1418, 7
      %v1435 = vsel %vm1424, %v1434, %v1433
      %v1436 = vsel %vm1426, %v1434, %v1435
      %v1437 = vsel %vm1428, %v1434, %v1436
      %v1438 = vsel %vm1430, %v1434, %v1437
      %1441 = vst [vmem:[#allocation2] sm:$0xff] %v1431
      %1442 = vst [vmem:[#allocation2 + $0x8] sm:$0xff] %v1438
    $region105: #{tpu_custom_call.1} parent=1 // pred_fallthru
      _
    %p1443 = scmp.gt.s32.totalorder 0, 0
    // Predicated region
    $region106: #{tpu_custom_call.1} parent=1 // pred_check
      %p1444 = pneg %p1443
    $region107: #{tpu_custom_call.1} parent=1 // pred_check_branch
      %1446 = sbr.rel (%p1444) target = $region109
    $region108: #{tpu_custom_call.1} parent=1 // pred_region
      %v1447 = vld [vmem:[#allocation2] sm:$0xff]
      %v1448 = vld [vmem:[#allocation2 + $0x8] sm:$0xff]
      %v1465 = vcombine.low %v1195, %v1204
      %v1466 = vcombine.low %v1213, %v1222
      %v1468 = vunpack.c.l.s4 1983009808
      %v1469 = vunpack.c.0.s8 %v1468
      %v1470 = vlaneseq
      %v1471 = vshrl.u32 %v1470, 7
      %v1472 = vsub.s32 %v1469, %v1471
      %v1473 = vrot.slane %v1465, %v1472
      %v1475 = vunpack.c.l.s4 1983009808
      %v1476 = vunpack.c.0.s8 %v1475
      %v1477 = vlaneseq
      %v1478 = vshrl.u32 %v1477, 7
      %v1479 = vsub.s32 %v1476, %v1478
      %v1480 = vrot.slane %v1466, %v1479
      %v1481 = vcombine.low %v1473, %v1480
      %v1482 = vcombine.low %v1231, %v1240
      %v1483 = vcombine.low %v1249, %v1258
      %v1485 = vunpack.c.l.s4 1983009808
      %v1486 = vunpack.c.0.s8 %v1485
      %v1487 = vlaneseq
      %v1488 = vshrl.u32 %v1487, 7
      %v1489 = vsub.s32 %v1486, %v1488
      %v1490 = vrot.slane %v1482, %v1489
      %v1492 = vunpack.c.l.s4 1983009808
      %v1493 = vunpack.c.0.s8 %v1492
      %v1494 = vlaneseq
      %v1495 = vshrl.u32 %v1494, 7
      %v1496 = vsub.s32 %v1493, %v1495
      %v1497 = vrot.slane %v1483, %v1496
      %v1498 = vcombine.low %v1490, %v1497
      %v1499 = vcombine.low %v1267, %v1276
      %v1500 = vcombine.low %v1285, %v1294
      %v1502 = vunpack.c.l.s4 1983009808
      %v1503 = vunpack.c.0.s8 %v1502
      %v1504 = vlaneseq
      %v1505 = vshrl.u32 %v1504, 7
      %v1506 = vsub.s32 %v1503, %v1505
      %v1507 = vrot.slane %v1499, %v1506
      %v1509 = vunpack.c.l.s4 1983009808
      %v1510 = vunpack.c.0.s8 %v1509
      %v1511 = vlaneseq
      %v1512 = vshrl.u32 %v1511, 7
      %v1513 = vsub.s32 %v1510, %v1512
      %v1514 = vrot.slane %v1500, %v1513
      %v1515 = vcombine.low %v1507, %v1514
      %v1516 = vcombine.low %v1303, %v1312
      %v1517 = vcombine.low %v1321, %v1330
      %v1519 = vunpack.c.l.s4 1983009808
      %v1520 = vunpack.c.0.s8 %v1519
      %v1521 = vlaneseq
      %v1522 = vshrl.u32 %v1521, 7
      %v1523 = vsub.s32 %v1520, %v1522
      %v1524 = vrot.slane %v1516, %v1523
      %v1526 = vunpack.c.l.s4 1983009808
      %v1527 = vunpack.c.0.s8 %v1526
      %v1528 = vlaneseq
      %v1529 = vshrl.u32 %v1528, 7
      %v1530 = vsub.s32 %v1527, %v1529
      %v1531 = vrot.slane %v1517, %v1530
      %v1532 = vcombine.low %v1524, %v1531
      %vm1533 = vcmask 1044484
      %v1534 = vsel %vm1533, %v1481, %v1481
      %vm1535 = vcmask 1046534
      %v1536 = vsel %vm1535, %v1481, %v1534
      %v1537 = vrot.slane %v1515, 7
      %vm1538 = vcmask 1041409
      %v1539 = vsel %vm1538, %v1537, %v1536
      %vm1540 = vcmask 1043459
      %v1541 = vsel %vm1540, %v1537, %v1539
      %vm1542 = vcmask 1045509
      %v1543 = vsel %vm1542, %v1537, %v1541
      %vm1544 = vcmask 1047559
      %v1545 = vsel %vm1544, %v1537, %v1543
      %v1546 = vsel %vm1533, %v1498, %v1498
      %v1547 = vsel %vm1535, %v1498, %v1546
      %v1548 = vrot.slane %v1532, 7
      %v1549 = vsel %vm1538, %v1548, %v1547
      %v1550 = vsel %vm1540, %v1548, %v1549
      %v1551 = vsel %vm1542, %v1548, %v1550
      %v1552 = vsel %vm1544, %v1548, %v1551
      %v1555 = vmax.f32 %v1447, %v1545
      %v1556 = vmax.f32 %v1448, %v1552
      %1557 = vst [vmem:[#allocation2] sm:$0xff] %v1555
      %1558 = vst [vmem:[#allocation2 + $0x8] sm:$0xff] %v1556
    $region109: #{tpu_custom_call.1} parent=1 // pred_fallthru
      _
    // Predicated region
    $region110: #{tpu_custom_call.1} parent=1 // pred_check
      %p1559 = pneg %p1331
    $region111: #{tpu_custom_call.1} parent=1 // pred_check_branch
      %1561 = sbr.rel (%p1559) target = $region113
    $region112: #{tpu_custom_call.1} parent=1 // pred_region
      %v1562 = vld [vmem:[#allocation2] sm:$0xff]
      %v1563 = vld [vmem:[#allocation2 + $0x8] sm:$0xff]
      %v1564 = vld [vmem:[#allocation14] sm:$0xff]
      %v1565 = vld [vmem:[#allocation14 + $0x8] sm:$0xff]
      %v1566 = vld [vmem:[#allocation14 + $0x10] sm:$0xff]
      %v1567 = vld [vmem:[#allocation14 + $0x18] sm:$0xff]
      %v1568 = vld [vmem:[#allocation14 + $0x20] sm:$0xff]
      %v1569 = vld [vmem:[#allocation14 + $0x28] sm:$0xff]
      %v1570 = vld [vmem:[#allocation14 + $0x30] sm:$0xff]
      %v1571 = vld [vmem:[#allocation14 + $0x38] sm:$0xff]
      %v1572 = vld [vmem:[#allocation14 + $0x40] sm:$0xff]
      %v1573 = vld [vmem:[#allocation14 + $0x48] sm:$0xff]
      %v1574 = vld [vmem:[#allocation14 + $0x50] sm:$0xff]
      %v1575 = vld [vmem:[#allocation14 + $0x58] sm:$0xff]
      %v1576 = vld [vmem:[#allocation14 + $0x60] sm:$0xff]
      %v1577 = vld [vmem:[#allocation14 + $0x68] sm:$0xff]
      %v1578 = vld [vmem:[#allocation14 + $0x70] sm:$0xff]
      %v1579 = vld [vmem:[#allocation14 + $0x78] sm:$0xff]
      %v1580 = vld [vmem:[#allocation14 + $0x80] sm:$0xff]
      %v1581 = vld [vmem:[#allocation14 + $0x88] sm:$0xff]
      %v1582 = vld [vmem:[#allocation14 + $0x90] sm:$0xff]
      %v1583 = vld [vmem:[#allocation14 + $0x98] sm:$0xff]
      %v1584 = vld [vmem:[#allocation14 + $0xa0] sm:$0xff]
      %v1585 = vld [vmem:[#allocation14 + $0xa8] sm:$0xff]
      %v1586 = vld [vmem:[#allocation14 + $0xb0] sm:$0xff]
      %v1587 = vld [vmem:[#allocation14 + $0xb8] sm:$0xff]
      %v1588 = vld [vmem:[#allocation14 + $0xc0] sm:$0xff]
      %v1589 = vld [vmem:[#allocation14 + $0xc8] sm:$0xff]
      %v1590 = vld [vmem:[#allocation14 + $0xd0] sm:$0xff]
      %v1591 = vld [vmem:[#allocation14 + $0xd8] sm:$0xff]
      %v1592 = vld [vmem:[#allocation14 + $0xe0] sm:$0xff]
      %v1593 = vld [vmem:[#allocation14 + $0xe8] sm:$0xff]
      %v1594 = vld [vmem:[#allocation14 + $0xf0] sm:$0xff]
      %v1595 = vld [vmem:[#allocation14 + $0xf8] sm:$0xff]
      %v1596 = vld [vmem:[#allocation14 + $0x100] sm:$0xff]
      %v1597 = vld [vmem:[#allocation14 + $0x108] sm:$0xff]
      %v1598 = vld [vmem:[#allocation14 + $0x110] sm:$0xff]
      %v1599 = vld [vmem:[#allocation14 + $0x118] sm:$0xff]
      %v1600 = vld [vmem:[#allocation14 + $0x120] sm:$0xff]
      %v1601 = vld [vmem:[#allocation14 + $0x128] sm:$0xff]
      %v1602 = vld [vmem:[#allocation14 + $0x130] sm:$0xff]
      %v1603 = vld [vmem:[#allocation14 + $0x138] sm:$0xff]
      %v1604 = vld [vmem:[#allocation14 + $0x140] sm:$0xff]
      %v1605 = vld [vmem:[#allocation14 + $0x148] sm:$0xff]
      %v1606 = vld [vmem:[#allocation14 + $0x150] sm:$0xff]
      %v1607 = vld [vmem:[#allocation14 + $0x158] sm:$0xff]
      %v1608 = vld [vmem:[#allocation14 + $0x160] sm:$0xff]
      %v1609 = vld [vmem:[#allocation14 + $0x168] sm:$0xff]
      %v1610 = vld [vmem:[#allocation14 + $0x170] sm:$0xff]
      %v1611 = vld [vmem:[#allocation14 + $0x178] sm:$0xff]
      %v1612 = vld [vmem:[#allocation14 + $0x180] sm:$0xff]
      %v1613 = vld [vmem:[#allocation14 + $0x188] sm:$0xff]
      %v1614 = vld [vmem:[#allocation14 + $0x190] sm:$0xff]
      %v1615 = vld [vmem:[#allocation14 + $0x198] sm:$0xff]
      %v1616 = vld [vmem:[#allocation14 + $0x1a0] sm:$0xff]
      %v1617 = vld [vmem:[#allocation14 + $0x1a8] sm:$0xff]
      %v1618 = vld [vmem:[#allocation14 + $0x1b0] sm:$0xff]
      %v1619 = vld [vmem:[#allocation14 + $0x1b8] sm:$0xff]
      %v1620 = vld [vmem:[#allocation14 + $0x1c0] sm:$0xff]
      %v1621 = vld [vmem:[#allocation14 + $0x1c8] sm:$0xff]
      %v1622 = vld [vmem:[#allocation14 + $0x1d0] sm:$0xff]
      %v1623 = vld [vmem:[#allocation14 + $0x1d8] sm:$0xff]
      %v1624 = vld [vmem:[#allocation14 + $0x1e0] sm:$0xff]
      %v1625 = vld [vmem:[#allocation14 + $0x1e8] sm:$0xff]
      %v1626 = vld [vmem:[#allocation14 + $0x1f0] sm:$0xff]
      %v1627 = vld [vmem:[#allocation14 + $0x1f8] sm:$0xff]
      %v1628 = vld [vmem:[#allocation14 + $0x200] sm:$0xff]
      %v1629 = vld [vmem:[#allocation14 + $0x208] sm:$0xff]
      %v1630 = vld [vmem:[#allocation14 + $0x210] sm:$0xff]
      %v1631 = vld [vmem:[#allocation14 + $0x218] sm:$0xff]
      %v1632 = vld [vmem:[#allocation14 + $0x220] sm:$0xff]
      %v1633 = vld [vmem:[#allocation14 + $0x228] sm:$0xff]
      %v1634 = vld [vmem:[#allocation14 + $0x230] sm:$0xff]
      %v1635 = vld [vmem:[#allocation14 + $0x238] sm:$0xff]
      %v1636 = vld [vmem:[#allocation14 + $0x240] sm:$0xff]
      %v1637 = vld [vmem:[#allocation14 + $0x248] sm:$0xff]
      %v1638 = vld [vmem:[#allocation14 + $0x250] sm:$0xff]
      %v1639 = vld [vmem:[#allocation14 + $0x258] sm:$0xff]
      %v1640 = vld [vmem:[#allocation14 + $0x260] sm:$0xff]
      %v1641 = vld [vmem:[#allocation14 + $0x268] sm:$0xff]
      %v1642 = vld [vmem:[#allocation14 + $0x270] sm:$0xff]
      %v1643 = vld [vmem:[#allocation14 + $0x278] sm:$0xff]
      %v1644 = vld [vmem:[#allocation14 + $0x280] sm:$0xff]
      %v1645 = vld [vmem:[#allocation14 + $0x288] sm:$0xff]
      %v1646 = vld [vmem:[#allocation14 + $0x290] sm:$0xff]
      %v1647 = vld [vmem:[#allocation14 + $0x298] sm:$0xff]
      %v1648 = vld [vmem:[#allocation14 + $0x2a0] sm:$0xff]
      %v1649 = vld [vmem:[#allocation14 + $0x2a8] sm:$0xff]
      %v1650 = vld [vmem:[#allocation14 + $0x2b0] sm:$0xff]
      %v1651 = vld [vmem:[#allocation14 + $0x2b8] sm:$0xff]
      %v1652 = vld [vmem:[#allocation14 + $0x2c0] sm:$0xff]
      %v1653 = vld [vmem:[#allocation14 + $0x2c8] sm:$0xff]
      %v1654 = vld [vmem:[#allocation14 + $0x2d0] sm:$0xff]
      %v1655 = vld [vmem:[#allocation14 + $0x2d8] sm:$0xff]
      %v1656 = vld [vmem:[#allocation14 + $0x2e0] sm:$0xff]
      %v1657 = vld [vmem:[#allocation14 + $0x2e8] sm:$0xff]
      %v1658 = vld [vmem:[#allocation14 + $0x2f0] sm:$0xff]
      %v1659 = vld [vmem:[#allocation14 + $0x2f8] sm:$0xff]
      %v1660 = vld [vmem:[#allocation14 + $0x300] sm:$0xff]
      %v1661 = vld [vmem:[#allocation14 + $0x308] sm:$0xff]
      %v1662 = vld [vmem:[#allocation14 + $0x310] sm:$0xff]
      %v1663 = vld [vmem:[#allocation14 + $0x318] sm:$0xff]
      %v1664 = vld [vmem:[#allocation14 + $0x320] sm:$0xff]
      %v1665 = vld [vmem:[#allocation14 + $0x328] sm:$0xff]
      %v1666 = vld [vmem:[#allocation14 + $0x330] sm:$0xff]
      %v1667 = vld [vmem:[#allocation14 + $0x338] sm:$0xff]
      %v1668 = vld [vmem:[#allocation14 + $0x340] sm:$0xff]
      %v1669 = vld [vmem:[#allocation14 + $0x348] sm:$0xff]
      %v1670 = vld [vmem:[#allocation14 + $0x350] sm:$0xff]
      %v1671 = vld [vmem:[#allocation14 + $0x358] sm:$0xff]
      %v1672 = vld [vmem:[#allocation14 + $0x360] sm:$0xff]
      %v1673 = vld [vmem:[#allocation14 + $0x368] sm:$0xff]
      %v1674 = vld [vmem:[#allocation14 + $0x370] sm:$0xff]
      %v1675 = vld [vmem:[#allocation14 + $0x378] sm:$0xff]
      %v1676 = vld [vmem:[#allocation14 + $0x380] sm:$0xff]
      %v1677 = vld [vmem:[#allocation14 + $0x388] sm:$0xff]
      %v1678 = vld [vmem:[#allocation14 + $0x390] sm:$0xff]
      %v1679 = vld [vmem:[#allocation14 + $0x398] sm:$0xff]
      %v1680 = vld [vmem:[#allocation14 + $0x3a0] sm:$0xff]
      %v1681 = vld [vmem:[#allocation14 + $0x3a8] sm:$0xff]
      %v1682 = vld [vmem:[#allocation14 + $0x3b0] sm:$0xff]
      %v1683 = vld [vmem:[#allocation14 + $0x3b8] sm:$0xff]
      %v1684 = vld [vmem:[#allocation14 + $0x3c0] sm:$0xff]
      %v1685 = vld [vmem:[#allocation14 + $0x3c8] sm:$0xff]
      %v1686 = vld [vmem:[#allocation14 + $0x3d0] sm:$0xff]
      %v1687 = vld [vmem:[#allocation14 + $0x3d8] sm:$0xff]
      %v1688 = vld [vmem:[#allocation14 + $0x3e0] sm:$0xff]
      %v1689 = vld [vmem:[#allocation14 + $0x3e8] sm:$0xff]
      %v1690 = vld [vmem:[#allocation14 + $0x3f0] sm:$0xff]
      %v1691 = vld [vmem:[#allocation14 + $0x3f8] sm:$0xff]
      %v1692 = vld [vmem:[#allocation14 + $0x400] sm:$0xff]
      %v1693 = vld [vmem:[#allocation14 + $0x408] sm:$0xff]
      %v1694 = vld [vmem:[#allocation14 + $0x410] sm:$0xff]
      %v1695 = vld [vmem:[#allocation14 + $0x418] sm:$0xff]
      %v1696 = vld [vmem:[#allocation14 + $0x420] sm:$0xff]
      %v1697 = vld [vmem:[#allocation14 + $0x428] sm:$0xff]
      %v1698 = vld [vmem:[#allocation14 + $0x430] sm:$0xff]
      %v1699 = vld [vmem:[#allocation14 + $0x438] sm:$0xff]
      %v1700 = vld [vmem:[#allocation14 + $0x440] sm:$0xff]
      %v1701 = vld [vmem:[#allocation14 + $0x448] sm:$0xff]
      %v1702 = vld [vmem:[#allocation14 + $0x450] sm:$0xff]
      %v1703 = vld [vmem:[#allocation14 + $0x458] sm:$0xff]
      %v1704 = vld [vmem:[#allocation14 + $0x460] sm:$0xff]
      %v1705 = vld [vmem:[#allocation14 + $0x468] sm:$0xff]
      %v1706 = vld [vmem:[#allocation14 + $0x470] sm:$0xff]
      %v1707 = vld [vmem:[#allocation14 + $0x478] sm:$0xff]
      %v1708 = vld [vmem:[#allocation14 + $0x480] sm:$0xff]
      %v1709 = vld [vmem:[#allocation14 + $0x488] sm:$0xff]
      %v1710 = vld [vmem:[#allocation14 + $0x490] sm:$0xff]
      %v1711 = vld [vmem:[#allocation14 + $0x498] sm:$0xff]
      %v1712 = vld [vmem:[#allocation14 + $0x4a0] sm:$0xff]
      %v1713 = vld [vmem:[#allocation14 + $0x4a8] sm:$0xff]
      %v1714 = vld [vmem:[#allocation14 + $0x4b0] sm:$0xff]
      %v1715 = vld [vmem:[#allocation14 + $0x4b8] sm:$0xff]
      %v1716 = vld [vmem:[#allocation14 + $0x4c0] sm:$0xff]
      %v1717 = vld [vmem:[#allocation14 + $0x4c8] sm:$0xff]
      %v1718 = vld [vmem:[#allocation14 + $0x4d0] sm:$0xff]
      %v1719 = vld [vmem:[#allocation14 + $0x4d8] sm:$0xff]
      %v1720 = vld [vmem:[#allocation14 + $0x4e0] sm:$0xff]
      %v1721 = vld [vmem:[#allocation14 + $0x4e8] sm:$0xff]
      %v1722 = vld [vmem:[#allocation14 + $0x4f0] sm:$0xff]
      %v1723 = vld [vmem:[#allocation14 + $0x4f8] sm:$0xff]
      %v1724 = vld [vmem:[#allocation14 + $0x500] sm:$0xff]
      %v1725 = vld [vmem:[#allocation14 + $0x508] sm:$0xff]
      %v1726 = vld [vmem:[#allocation14 + $0x510] sm:$0xff]
      %v1727 = vld [vmem:[#allocation14 + $0x518] sm:$0xff]
      %v1728 = vld [vmem:[#allocation14 + $0x520] sm:$0xff]
      %v1729 = vld [vmem:[#allocation14 + $0x528] sm:$0xff]
      %v1730 = vld [vmem:[#allocation14 + $0x530] sm:$0xff]
      %v1731 = vld [vmem:[#allocation14 + $0x538] sm:$0xff]
      %v1732 = vld [vmem:[#allocation14 + $0x540] sm:$0xff]
      %v1733 = vld [vmem:[#allocation14 + $0x548] sm:$0xff]
      %v1734 = vld [vmem:[#allocation14 + $0x550] sm:$0xff]
      %v1735 = vld [vmem:[#allocation14 + $0x558] sm:$0xff]
      %v1736 = vld [vmem:[#allocation14 + $0x560] sm:$0xff]
      %v1737 = vld [vmem:[#allocation14 + $0x568] sm:$0xff]
      %v1738 = vld [vmem:[#allocation14 + $0x570] sm:$0xff]
      %v1739 = vld [vmem:[#allocation14 + $0x578] sm:$0xff]
      %v1740 = vld [vmem:[#allocation14 + $0x580] sm:$0xff]
      %v1741 = vld [vmem:[#allocation14 + $0x588] sm:$0xff]
      %v1742 = vld [vmem:[#allocation14 + $0x590] sm:$0xff]
      %v1743 = vld [vmem:[#allocation14 + $0x598] sm:$0xff]
      %v1744 = vld [vmem:[#allocation14 + $0x5a0] sm:$0xff]
      %v1745 = vld [vmem:[#allocation14 + $0x5a8] sm:$0xff]
      %v1746 = vld [vmem:[#allocation14 + $0x5b0] sm:$0xff]
      %v1747 = vld [vmem:[#allocation14 + $0x5b8] sm:$0xff]
      %v1748 = vld [vmem:[#allocation14 + $0x5c0] sm:$0xff]
      %v1749 = vld [vmem:[#allocation14 + $0x5c8] sm:$0xff]
      %v1750 = vld [vmem:[#allocation14 + $0x5d0] sm:$0xff]
      %v1751 = vld [vmem:[#allocation14 + $0x5d8] sm:$0xff]
      %v1752 = vld [vmem:[#allocation14 + $0x5e0] sm:$0xff]
      %v1753 = vld [vmem:[#allocation14 + $0x5e8] sm:$0xff]
      %v1754 = vld [vmem:[#allocation14 + $0x5f0] sm:$0xff]
      %v1755 = vld [vmem:[#allocation14 + $0x5f8] sm:$0xff]
      %v1756 = vld [vmem:[#allocation14 + $0x600] sm:$0xff]
      %v1757 = vld [vmem:[#allocation14 + $0x608] sm:$0xff]
      %v1758 = vld [vmem:[#allocation14 + $0x610] sm:$0xff]
      %v1759 = vld [vmem:[#allocation14 + $0x618] sm:$0xff]
      %v1760 = vld [vmem:[#allocation14 + $0x620] sm:$0xff]
      %v1761 = vld [vmem:[#allocation14 + $0x628] sm:$0xff]
      %v1762 = vld [vmem:[#allocation14 + $0x630] sm:$0xff]
      %v1763 = vld [vmem:[#allocation14 + $0x638] sm:$0xff]
      %v1764 = vld [vmem:[#allocation14 + $0x640] sm:$0xff]
      %v1765 = vld [vmem:[#allocation14 + $0x648] sm:$0xff]
      %v1766 = vld [vmem:[#allocation14 + $0x650] sm:$0xff]
      %v1767 = vld [vmem:[#allocation14 + $0x658] sm:$0xff]
      %v1768 = vld [vmem:[#allocation14 + $0x660] sm:$0xff]
      %v1769 = vld [vmem:[#allocation14 + $0x668] sm:$0xff]
      %v1770 = vld [vmem:[#allocation14 + $0x670] sm:$0xff]
      %v1771 = vld [vmem:[#allocation14 + $0x678] sm:$0xff]
      %v1772 = vld [vmem:[#allocation14 + $0x680] sm:$0xff]
      %v1773 = vld [vmem:[#allocation14 + $0x688] sm:$0xff]
      %v1774 = vld [vmem:[#allocation14 + $0x690] sm:$0xff]
      %v1775 = vld [vmem:[#allocation14 + $0x698] sm:$0xff]
      %v1776 = vld [vmem:[#allocation14 + $0x6a0] sm:$0xff]
      %v1777 = vld [vmem:[#allocation14 + $0x6a8] sm:$0xff]
      %v1778 = vld [vmem:[#allocation14 + $0x6b0] sm:$0xff]
      %v1779 = vld [vmem:[#allocation14 + $0x6b8] sm:$0xff]
      %v1780 = vld [vmem:[#allocation14 + $0x6c0] sm:$0xff]
      %v1781 = vld [vmem:[#allocation14 + $0x6c8] sm:$0xff]
      %v1782 = vld [vmem:[#allocation14 + $0x6d0] sm:$0xff]
      %v1783 = vld [vmem:[#allocation14 + $0x6d8] sm:$0xff]
      %v1784 = vld [vmem:[#allocation14 + $0x6e0] sm:$0xff]
      %v1785 = vld [vmem:[#allocation14 + $0x6e8] sm:$0xff]
      %v1786 = vld [vmem:[#allocation14 + $0x6f0] sm:$0xff]
      %v1787 = vld [vmem:[#allocation14 + $0x6f8] sm:$0xff]
      %v1788 = vld [vmem:[#allocation14 + $0x700] sm:$0xff]
      %v1789 = vld [vmem:[#allocation14 + $0x708] sm:$0xff]
      %v1790 = vld [vmem:[#allocation14 + $0x710] sm:$0xff]
      %v1791 = vld [vmem:[#allocation14 + $0x718] sm:$0xff]
      %v1792 = vld [vmem:[#allocation14 + $0x720] sm:$0xff]
      %v1793 = vld [vmem:[#allocation14 + $0x728] sm:$0xff]
      %v1794 = vld [vmem:[#allocation14 + $0x730] sm:$0xff]
      %v1795 = vld [vmem:[#allocation14 + $0x738] sm:$0xff]
      %v1796 = vld [vmem:[#allocation14 + $0x740] sm:$0xff]
      %v1797 = vld [vmem:[#allocation14 + $0x748] sm:$0xff]
      %v1798 = vld [vmem:[#allocation14 + $0x750] sm:$0xff]
      %v1799 = vld [vmem:[#allocation14 + $0x758] sm:$0xff]
      %v1800 = vld [vmem:[#allocation14 + $0x760] sm:$0xff]
      %v1801 = vld [vmem:[#allocation14 + $0x768] sm:$0xff]
      %v1802 = vld [vmem:[#allocation14 + $0x770] sm:$0xff]
      %v1803 = vld [vmem:[#allocation14 + $0x778] sm:$0xff]
      %v1804 = vld [vmem:[#allocation14 + $0x780] sm:$0xff]
      %v1805 = vld [vmem:[#allocation14 + $0x788] sm:$0xff]
      %v1806 = vld [vmem:[#allocation14 + $0x790] sm:$0xff]
      %v1807 = vld [vmem:[#allocation14 + $0x798] sm:$0xff]
      %v1808 = vld [vmem:[#allocation14 + $0x7a0] sm:$0xff]
      %v1809 = vld [vmem:[#allocation14 + $0x7a8] sm:$0xff]
      %v1810 = vld [vmem:[#allocation14 + $0x7b0] sm:$0xff]
      %v1811 = vld [vmem:[#allocation14 + $0x7b8] sm:$0xff]
      %v1812 = vld [vmem:[#allocation14 + $0x7c0] sm:$0xff]
      %v1813 = vld [vmem:[#allocation14 + $0x7c8] sm:$0xff]
      %v1814 = vld [vmem:[#allocation14 + $0x7d0] sm:$0xff]
      %v1815 = vld [vmem:[#allocation14 + $0x7d8] sm:$0xff]
      %v1816 = vld [vmem:[#allocation14 + $0x7e0] sm:$0xff]
      %v1817 = vld [vmem:[#allocation14 + $0x7e8] sm:$0xff]
      %v1818 = vld [vmem:[#allocation14 + $0x7f0] sm:$0xff]
      %v1819 = vld [vmem:[#allocation14 + $0x7f8] sm:$0xff]
      %v1820 = vld [vmem:[#allocation14 + $0x800] sm:$0xff]
      %v1821 = vld [vmem:[#allocation14 + $0x808] sm:$0xff]
      %v1822 = vld [vmem:[#allocation14 + $0x810] sm:$0xff]
      %v1823 = vld [vmem:[#allocation14 + $0x818] sm:$0xff]
      %v1824 = vld [vmem:[#allocation14 + $0x820] sm:$0xff]
      %v1825 = vld [vmem:[#allocation14 + $0x828] sm:$0xff]
      %v1826 = vld [vmem:[#allocation14 + $0x830] sm:$0xff]
      %v1827 = vld [vmem:[#allocation14 + $0x838] sm:$0xff]
      %v1828 = vld [vmem:[#allocation14 + $0x840] sm:$0xff]
      %v1829 = vld [vmem:[#allocation14 + $0x848] sm:$0xff]
      %v1830 = vld [vmem:[#allocation14 + $0x850] sm:$0xff]
      %v1831 = vld [vmem:[#allocation14 + $0x858] sm:$0xff]
      %v1832 = vld [vmem:[#allocation14 + $0x860] sm:$0xff]
      %v1833 = vld [vmem:[#allocation14 + $0x868] sm:$0xff]
      %v1834 = vld [vmem:[#allocation14 + $0x870] sm:$0xff]
      %v1835 = vld [vmem:[#allocation14 + $0x878] sm:$0xff]
      %v1836 = vld [vmem:[#allocation14 + $0x880] sm:$0xff]
      %v1837 = vld [vmem:[#allocation14 + $0x888] sm:$0xff]
      %v1838 = vld [vmem:[#allocation14 + $0x890] sm:$0xff]
      %v1839 = vld [vmem:[#allocation14 + $0x898] sm:$0xff]
      %v1840 = vld [vmem:[#allocation14 + $0x8a0] sm:$0xff]
      %v1841 = vld [vmem:[#allocation14 + $0x8a8] sm:$0xff]
      %v1842 = vld [vmem:[#allocation14 + $0x8b0] sm:$0xff]
      %v1843 = vld [vmem:[#allocation14 + $0x8b8] sm:$0xff]
      %v1844 = vld [vmem:[#allocation14 + $0x8c0] sm:$0xff]
      %v1845 = vld [vmem:[#allocation14 + $0x8c8] sm:$0xff]
      %v1846 = vld [vmem:[#allocation14 + $0x8d0] sm:$0xff]
      %v1847 = vld [vmem:[#allocation14 + $0x8d8] sm:$0xff]
      %v1848 = vld [vmem:[#allocation14 + $0x8e0] sm:$0xff]
      %v1849 = vld [vmem:[#allocation14 + $0x8e8] sm:$0xff]
      %v1850 = vld [vmem:[#allocation14 + $0x8f0] sm:$0xff]
      %v1851 = vld [vmem:[#allocation14 + $0x8f8] sm:$0xff]
      %v1852 = vld [vmem:[#allocation14 + $0x900] sm:$0xff]
      %v1853 = vld [vmem:[#allocation14 + $0x908] sm:$0xff]
      %v1854 = vld [vmem:[#allocation14 + $0x910] sm:$0xff]
      %v1855 = vld [vmem:[#allocation14 + $0x918] sm:$0xff]
      %v1856 = vld [vmem:[#allocation14 + $0x920] sm:$0xff]
      %v1857 = vld [vmem:[#allocation14 + $0x928] sm:$0xff]
      %v1858 = vld [vmem:[#allocation14 + $0x930] sm:$0xff]
      %v1859 = vld [vmem:[#allocation14 + $0x938] sm:$0xff]
      %v1860 = vld [vmem:[#allocation14 + $0x940] sm:$0xff]
      %v1861 = vld [vmem:[#allocation14 + $0x948] sm:$0xff]
      %v1862 = vld [vmem:[#allocation14 + $0x950] sm:$0xff]
      %v1863 = vld [vmem:[#allocation14 + $0x958] sm:$0xff]
      %v1864 = vld [vmem:[#allocation14 + $0x960] sm:$0xff]
      %v1865 = vld [vmem:[#allocation14 + $0x968] sm:$0xff]
      %v1866 = vld [vmem:[#allocation14 + $0x970] sm:$0xff]
      %v1867 = vld [vmem:[#allocation14 + $0x978] sm:$0xff]
      %v1868 = vld [vmem:[#allocation14 + $0x980] sm:$0xff]
      %v1869 = vld [vmem:[#allocation14 + $0x988] sm:$0xff]
      %v1870 = vld [vmem:[#allocation14 + $0x990] sm:$0xff]
      %v1871 = vld [vmem:[#allocation14 + $0x998] sm:$0xff]
      %v1872 = vld [vmem:[#allocation14 + $0x9a0] sm:$0xff]
      %v1873 = vld [vmem:[#allocation14 + $0x9a8] sm:$0xff]
      %v1874 = vld [vmem:[#allocation14 + $0x9b0] sm:$0xff]
      %v1875 = vld [vmem:[#allocation14 + $0x9b8] sm:$0xff]
      %v1876 = vld [vmem:[#allocation14 + $0x9c0] sm:$0xff]
      %v1877 = vld [vmem:[#allocation14 + $0x9c8] sm:$0xff]
      %v1878 = vld [vmem:[#allocation14 + $0x9d0] sm:$0xff]
      %v1879 = vld [vmem:[#allocation14 + $0x9d8] sm:$0xff]
      %v1880 = vld [vmem:[#allocation14 + $0x9e0] sm:$0xff]
      %v1881 = vld [vmem:[#allocation14 + $0x9e8] sm:$0xff]
      %v1882 = vld [vmem:[#allocation14 + $0x9f0] sm:$0xff]
      %v1883 = vld [vmem:[#allocation14 + $0x9f8] sm:$0xff]
      %v1884 = vld [vmem:[#allocation14 + $0xa00] sm:$0xff]
      %v1885 = vld [vmem:[#allocation14 + $0xa08] sm:$0xff]
      %v1886 = vld [vmem:[#allocation14 + $0xa10] sm:$0xff]
      %v1887 = vld [vmem:[#allocation14 + $0xa18] sm:$0xff]
      %v1888 = vld [vmem:[#allocation14 + $0xa20] sm:$0xff]
      %v1889 = vld [vmem:[#allocation14 + $0xa28] sm:$0xff]
      %v1890 = vld [vmem:[#allocation14 + $0xa30] sm:$0xff]
      %v1891 = vld [vmem:[#allocation14 + $0xa38] sm:$0xff]
      %v1892 = vld [vmem:[#allocation14 + $0xa40] sm:$0xff]
      %v1893 = vld [vmem:[#allocation14 + $0xa48] sm:$0xff]
      %v1894 = vld [vmem:[#allocation14 + $0xa50] sm:$0xff]
      %v1895 = vld [vmem:[#allocation14 + $0xa58] sm:$0xff]
      %v1896 = vld [vmem:[#allocation14 + $0xa60] sm:$0xff]
      %v1897 = vld [vmem:[#allocation14 + $0xa68] sm:$0xff]
      %v1898 = vld [vmem:[#allocation14 + $0xa70] sm:$0xff]
      %v1899 = vld [vmem:[#allocation14 + $0xa78] sm:$0xff]
      %v1900 = vld [vmem:[#allocation14 + $0xa80] sm:$0xff]
      %v1901 = vld [vmem:[#allocation14 + $0xa88] sm:$0xff]
      %v1902 = vld [vmem:[#allocation14 + $0xa90] sm:$0xff]
      %v1903 = vld [vmem:[#allocation14 + $0xa98] sm:$0xff]
      %v1904 = vld [vmem:[#allocation14 + $0xaa0] sm:$0xff]
      %v1905 = vld [vmem:[#allocation14 + $0xaa8] sm:$0xff]
      %v1906 = vld [vmem:[#allocation14 + $0xab0] sm:$0xff]
      %v1907 = vld [vmem:[#allocation14 + $0xab8] sm:$0xff]
      %v1908 = vld [vmem:[#allocation14 + $0xac0] sm:$0xff]
      %v1909 = vld [vmem:[#allocation14 + $0xac8] sm:$0xff]
      %v1910 = vld [vmem:[#allocation14 + $0xad0] sm:$0xff]
      %v1911 = vld [vmem:[#allocation14 + $0xad8] sm:$0xff]
      %v1912 = vld [vmem:[#allocation14 + $0xae0] sm:$0xff]
      %v1913 = vld [vmem:[#allocation14 + $0xae8] sm:$0xff]
      %v1914 = vld [vmem:[#allocation14 + $0xaf0] sm:$0xff]
      %v1915 = vld [vmem:[#allocation14 + $0xaf8] sm:$0xff]
      %v1916 = vld [vmem:[#allocation14 + $0xb00] sm:$0xff]
      %v1917 = vld [vmem:[#allocation14 + $0xb08] sm:$0xff]
      %v1918 = vld [vmem:[#allocation14 + $0xb10] sm:$0xff]
      %v1919 = vld [vmem:[#allocation14 + $0xb18] sm:$0xff]
      %v1920 = vld [vmem:[#allocation14 + $0xb20] sm:$0xff]
      %v1921 = vld [vmem:[#allocation14 + $0xb28] sm:$0xff]
      %v1922 = vld [vmem:[#allocation14 + $0xb30] sm:$0xff]
      %v1923 = vld [vmem:[#allocation14 + $0xb38] sm:$0xff]
      %v1924 = vld [vmem:[#allocation14 + $0xb40] sm:$0xff]
      %v1925 = vld [vmem:[#allocation14 + $0xb48] sm:$0xff]
      %v1926 = vld [vmem:[#allocation14 + $0xb50] sm:$0xff]
      %v1927 = vld [vmem:[#allocation14 + $0xb58] sm:$0xff]
      %v1928 = vld [vmem:[#allocation14 + $0xb60] sm:$0xff]
      %v1929 = vld [vmem:[#allocation14 + $0xb68] sm:$0xff]
      %v1930 = vld [vmem:[#allocation14 + $0xb70] sm:$0xff]
      %v1931 = vld [vmem:[#allocation14 + $0xb78] sm:$0xff]
      %v1932 = vld [vmem:[#allocation14 + $0xb80] sm:$0xff]
      %v1933 = vld [vmem:[#allocation14 + $0xb88] sm:$0xff]
      %v1934 = vld [vmem:[#allocation14 + $0xb90] sm:$0xff]
      %v1935 = vld [vmem:[#allocation14 + $0xb98] sm:$0xff]
      %v1936 = vld [vmem:[#allocation14 + $0xba0] sm:$0xff]
      %v1937 = vld [vmem:[#allocation14 + $0xba8] sm:$0xff]
      %v1938 = vld [vmem:[#allocation14 + $0xbb0] sm:$0xff]
      %v1939 = vld [vmem:[#allocation14 + $0xbb8] sm:$0xff]
      %v1940 = vld [vmem:[#allocation14 + $0xbc0] sm:$0xff]
      %v1941 = vld [vmem:[#allocation14 + $0xbc8] sm:$0xff]
      %v1942 = vld [vmem:[#allocation14 + $0xbd0] sm:$0xff]
      %v1943 = vld [vmem:[#allocation14 + $0xbd8] sm:$0xff]
      %v1944 = vld [vmem:[#allocation14 + $0xbe0] sm:$0xff]
      %v1945 = vld [vmem:[#allocation14 + $0xbe8] sm:$0xff]
      %v1946 = vld [vmem:[#allocation14 + $0xbf0] sm:$0xff]
      %v1947 = vld [vmem:[#allocation14 + $0xbf8] sm:$0xff]
      %v1948 = vld [vmem:[#allocation14 + $0xc00] sm:$0xff]
      %v1949 = vld [vmem:[#allocation14 + $0xc08] sm:$0xff]
      %v1950 = vld [vmem:[#allocation14 + $0xc10] sm:$0xff]
      %v1951 = vld [vmem:[#allocation14 + $0xc18] sm:$0xff]
      %v1952 = vld [vmem:[#allocation14 + $0xc20] sm:$0xff]
      %v1953 = vld [vmem:[#allocation14 + $0xc28] sm:$0xff]
      %v1954 = vld [vmem:[#allocation14 + $0xc30] sm:$0xff]
      %v1955 = vld [vmem:[#allocation14 + $0xc38] sm:$0xff]
      %v1956 = vld [vmem:[#allocation14 + $0xc40] sm:$0xff]
      %v1957 = vld [vmem:[#allocation14 + $0xc48] sm:$0xff]
      %v1958 = vld [vmem:[#allocation14 + $0xc50] sm:$0xff]
      %v1959 = vld [vmem:[#allocation14 + $0xc58] sm:$0xff]
      %v1960 = vld [vmem:[#allocation14 + $0xc60] sm:$0xff]
      %v1961 = vld [vmem:[#allocation14 + $0xc68] sm:$0xff]
      %v1962 = vld [vmem:[#allocation14 + $0xc70] sm:$0xff]
      %v1963 = vld [vmem:[#allocation14 + $0xc78] sm:$0xff]
      %v1964 = vld [vmem:[#allocation14 + $0xc80] sm:$0xff]
      %v1965 = vld [vmem:[#allocation14 + $0xc88] sm:$0xff]
      %v1966 = vld [vmem:[#allocation14 + $0xc90] sm:$0xff]
      %v1967 = vld [vmem:[#allocation14 + $0xc98] sm:$0xff]
      %v1968 = vld [vmem:[#allocation14 + $0xca0] sm:$0xff]
      %v1969 = vld [vmem:[#allocation14 + $0xca8] sm:$0xff]
      %v1970 = vld [vmem:[#allocation14 + $0xcb0] sm:$0xff]
      %v1971 = vld [vmem:[#allocation14 + $0xcb8] sm:$0xff]
      %v1972 = vld [vmem:[#allocation14 + $0xcc0] sm:$0xff]
      %v1973 = vld [vmem:[#allocation14 + $0xcc8] sm:$0xff]
      %v1974 = vld [vmem:[#allocation14 + $0xcd0] sm:$0xff]
      %v1975 = vld [vmem:[#allocation14 + $0xcd8] sm:$0xff]
      %v1976 = vld [vmem:[#allocation14 + $0xce0] sm:$0xff]
      %v1977 = vld [vmem:[#allocation14 + $0xce8] sm:$0xff]
      %v1978 = vld [vmem:[#allocation14 + $0xcf0] sm:$0xff]
      %v1979 = vld [vmem:[#allocation14 + $0xcf8] sm:$0xff]
      %v1980 = vld [vmem:[#allocation14 + $0xd00] sm:$0xff]
      %v1981 = vld [vmem:[#allocation14 + $0xd08] sm:$0xff]
      %v1982 = vld [vmem:[#allocation14 + $0xd10] sm:$0xff]
      %v1983 = vld [vmem:[#allocation14 + $0xd18] sm:$0xff]
      %v1984 = vld [vmem:[#allocation14 + $0xd20] sm:$0xff]
      %v1985 = vld [vmem:[#allocation14 + $0xd28] sm:$0xff]
      %v1986 = vld [vmem:[#allocation14 + $0xd30] sm:$0xff]
      %v1987 = vld [vmem:[#allocation14 + $0xd38] sm:$0xff]
      %v1988 = vld [vmem:[#allocation14 + $0xd40] sm:$0xff]
      %v1989 = vld [vmem:[#allocation14 + $0xd48] sm:$0xff]
      %v1990 = vld [vmem:[#allocation14 + $0xd50] sm:$0xff]
      %v1991 = vld [vmem:[#allocation14 + $0xd58] sm:$0xff]
      %v1992 = vld [vmem:[#allocation14 + $0xd60] sm:$0xff]
      %v1993 = vld [vmem:[#allocation14 + $0xd68] sm:$0xff]
      %v1994 = vld [vmem:[#allocation14 + $0xd70] sm:$0xff]
      %v1995 = vld [vmem:[#allocation14 + $0xd78] sm:$0xff]
      %v1996 = vld [vmem:[#allocation14 + $0xd80] sm:$0xff]
      %v1997 = vld [vmem:[#allocation14 + $0xd88] sm:$0xff]
      %v1998 = vld [vmem:[#allocation14 + $0xd90] sm:$0xff]
      %v1999 = vld [vmem:[#allocation14 + $0xd98] sm:$0xff]
      %v2000 = vld [vmem:[#allocation14 + $0xda0] sm:$0xff]
      %v2001 = vld [vmem:[#allocation14 + $0xda8] sm:$0xff]
      %v2002 = vld [vmem:[#allocation14 + $0xdb0] sm:$0xff]
      %v2003 = vld [vmem:[#allocation14 + $0xdb8] sm:$0xff]
      %v2004 = vld [vmem:[#allocation14 + $0xdc0] sm:$0xff]
      %v2005 = vld [vmem:[#allocation14 + $0xdc8] sm:$0xff]
      %v2006 = vld [vmem:[#allocation14 + $0xdd0] sm:$0xff]
      %v2007 = vld [vmem:[#allocation14 + $0xdd8] sm:$0xff]
      %v2008 = vld [vmem:[#allocation14 + $0xde0] sm:$0xff]
      %v2009 = vld [vmem:[#allocation14 + $0xde8] sm:$0xff]
      %v2010 = vld [vmem:[#allocation14 + $0xdf0] sm:$0xff]
      %v2011 = vld [vmem:[#allocation14 + $0xdf8] sm:$0xff]
      %v2012 = vld [vmem:[#allocation14 + $0xe00] sm:$0xff]
      %v2013 = vld [vmem:[#allocation14 + $0xe08] sm:$0xff]
      %v2014 = vld [vmem:[#allocation14 + $0xe10] sm:$0xff]
      %v2015 = vld [vmem:[#allocation14 + $0xe18] sm:$0xff]
      %v2016 = vld [vmem:[#allocation14 + $0xe20] sm:$0xff]
      %v2017 = vld [vmem:[#allocation14 + $0xe28] sm:$0xff]
      %v2018 = vld [vmem:[#allocation14 + $0xe30] sm:$0xff]
      %v2019 = vld [vmem:[#allocation14 + $0xe38] sm:$0xff]
      %v2020 = vld [vmem:[#allocation14 + $0xe40] sm:$0xff]
      %v2021 = vld [vmem:[#allocation14 + $0xe48] sm:$0xff]
      %v2022 = vld [vmem:[#allocation14 + $0xe50] sm:$0xff]
      %v2023 = vld [vmem:[#allocation14 + $0xe58] sm:$0xff]
      %v2024 = vld [vmem:[#allocation14 + $0xe60] sm:$0xff]
      %v2025 = vld [vmem:[#allocation14 + $0xe68] sm:$0xff]
      %v2026 = vld [vmem:[#allocation14 + $0xe70] sm:$0xff]
      %v2027 = vld [vmem:[#allocation14 + $0xe78] sm:$0xff]
      %v2028 = vld [vmem:[#allocation14 + $0xe80] sm:$0xff]
      %v2029 = vld [vmem:[#allocation14 + $0xe88] sm:$0xff]
      %v2030 = vld [vmem:[#allocation14 + $0xe90] sm:$0xff]
      %v2031 = vld [vmem:[#allocation14 + $0xe98] sm:$0xff]
      %v2032 = vld [vmem:[#allocation14 + $0xea0] sm:$0xff]
      %v2033 = vld [vmem:[#allocation14 + $0xea8] sm:$0xff]
      %v2034 = vld [vmem:[#allocation14 + $0xeb0] sm:$0xff]
      %v2035 = vld [vmem:[#allocation14 + $0xeb8] sm:$0xff]
      %v2036 = vld [vmem:[#allocation14 + $0xec0] sm:$0xff]
      %v2037 = vld [vmem:[#allocation14 + $0xec8] sm:$0xff]
      %v2038 = vld [vmem:[#allocation14 + $0xed0] sm:$0xff]
      %v2039 = vld [vmem:[#allocation14 + $0xed8] sm:$0xff]
      %v2040 = vld [vmem:[#allocation14 + $0xee0] sm:$0xff]
      %v2041 = vld [vmem:[#allocation14 + $0xee8] sm:$0xff]
      %v2042 = vld [vmem:[#allocation14 + $0xef0] sm:$0xff]
      %v2043 = vld [vmem:[#allocation14 + $0xef8] sm:$0xff]
      %v2044 = vld [vmem:[#allocation14 + $0xf00] sm:$0xff]
      %v2045 = vld [vmem:[#allocation14 + $0xf08] sm:$0xff]
      %v2046 = vld [vmem:[#allocation14 + $0xf10] sm:$0xff]
      %v2047 = vld [vmem:[#allocation14 + $0xf18] sm:$0xff]
      %v2048 = vld [vmem:[#allocation14 + $0xf20] sm:$0xff]
      %v2049 = vld [vmem:[#allocation14 + $0xf28] sm:$0xff]
      %v2050 = vld [vmem:[#allocation14 + $0xf30] sm:$0xff]
      %v2051 = vld [vmem:[#allocation14 + $0xf38] sm:$0xff]
      %v2052 = vld [vmem:[#allocation14 + $0xf40] sm:$0xff]
      %v2053 = vld [vmem:[#allocation14 + $0xf48] sm:$0xff]
      %v2054 = vld [vmem:[#allocation14 + $0xf50] sm:$0xff]
      %v2055 = vld [vmem:[#allocation14 + $0xf58] sm:$0xff]
      %v2056 = vld [vmem:[#allocation14 + $0xf60] sm:$0xff]
      %v2057 = vld [vmem:[#allocation14 + $0xf68] sm:$0xff]
      %v2058 = vld [vmem:[#allocation14 + $0xf70] sm:$0xff]
      %v2059 = vld [vmem:[#allocation14 + $0xf78] sm:$0xff]
      %v2060 = vld [vmem:[#allocation14 + $0xf80] sm:$0xff]
      %v2061 = vld [vmem:[#allocation14 + $0xf88] sm:$0xff]
      %v2062 = vld [vmem:[#allocation14 + $0xf90] sm:$0xff]
      %v2063 = vld [vmem:[#allocation14 + $0xf98] sm:$0xff]
      %v2064 = vld [vmem:[#allocation14 + $0xfa0] sm:$0xff]
      %v2065 = vld [vmem:[#allocation14 + $0xfa8] sm:$0xff]
      %v2066 = vld [vmem:[#allocation14 + $0xfb0] sm:$0xff]
      %v2067 = vld [vmem:[#allocation14 + $0xfb8] sm:$0xff]
      %v2068 = vld [vmem:[#allocation14 + $0xfc0] sm:$0xff]
      %v2069 = vld [vmem:[#allocation14 + $0xfc8] sm:$0xff]
      %v2070 = vld [vmem:[#allocation14 + $0xfd0] sm:$0xff]
      %v2071 = vld [vmem:[#allocation14 + $0xfd8] sm:$0xff]
      %v2072 = vld [vmem:[#allocation14 + $0xfe0] sm:$0xff]
      %v2073 = vld [vmem:[#allocation14 + $0xfe8] sm:$0xff]
      %v2074 = vld [vmem:[#allocation14 + $0xff0] sm:$0xff]
      %v2075 = vld [vmem:[#allocation14 + $0xff8] sm:$0xff]
      %v2076 = vld [vmem:[#allocation15] sm:$0xf]
      %v2078 = vlaneseq
      %v2079 = vshrl.u32 %v2078, 7
      %v2080 = vsub.s32 0, %v2079
      %v2081 = vrot.slane %v2076, %v2080
      %v2082 = vlaneseq
      %v2083 = vshrl.u32 %v2082, 7
      %v2084 = vsub.s32 1, %v2083
      %v2085 = vrot.slane %v2076, %v2084
      %v2086 = vlaneseq
      %v2087 = vshrl.u32 %v2086, 7
      %v2088 = vsub.s32 2, %v2087
      %v2089 = vrot.slane %v2076, %v2088
      %v2090 = vlaneseq
      %v2091 = vshrl.u32 %v2090, 7
      %v2092 = vsub.s32 3, %v2091
      %v2093 = vrot.slane %v2076, %v2092
      %v2100 = vcombine.high %v1562, %v1562
      %v2102 = vunpack.c.l.s4 1983009808
      %v2103 = vunpack.c.0.s8 %v2102
      %v2104 = vlaneseq
      %v2105 = vshrl.u32 %v2104, 7
      %v2106 = vsub.s32 %v2103, %v2105
      %v2107 = vrot.slane %v1562, %v2106
      %v2109 = vunpack.c.l.s4 1983009808
      %v2110 = vunpack.c.0.s8 %v2109
      %v2111 = vlaneseq
      %v2112 = vshrl.u32 %v2111, 7
      %v2113 = vsub.s32 %v2110, %v2112
      %v2114 = vrot.slane %v2100, %v2113
      %v2115 = vcombine.high %v2107, %v2107
      %v2116 = vcombine.high %v2114, %v2114
      %v2117 = vcombine.high %v1563, %v1563
      %v2119 = vunpack.c.l.s4 1983009808
      %v2120 = vunpack.c.0.s8 %v2119
      %v2121 = vlaneseq
      %v2122 = vshrl.u32 %v2121, 7
      %v2123 = vsub.s32 %v2120, %v2122
      %v2124 = vrot.slane %v1563, %v2123
      %v2126 = vunpack.c.l.s4 1983009808
      %v2127 = vunpack.c.0.s8 %v2126
      %v2128 = vlaneseq
      %v2129 = vshrl.u32 %v2128, 7
      %v2130 = vsub.s32 %v2127, %v2129
      %v2131 = vrot.slane %v2117, %v2130
      %v2132 = vcombine.high %v2124, %v2124
      %v2133 = vcombine.high %v2131, %v2131
      %2142 = vmatprep.subr.mxu0 %v1625
      %2143 = vmatpush1.msra.mxu0 %v1624
      %2144 = vmatprep.subr.mxu0 %v1621
      %2145 = vmatpush1.msra.mxu0 %v1620
      %2146 = vmatprep.subr.mxu0 %v1617
      %2147 = vmatpush1.msra.mxu0 %v1616
      %2148 = vmatprep.subr.mxu0 %v1613
      %2149 = vmatpush1.msra.mxu0 %v1612
      %2150 = vmatprep.subr.mxu0 %v1609
      %2151 = vmatpush1.msra.mxu0 %v1608
      %2152 = vmatprep.subr.mxu0 %v1605
      %2153 = vmatpush1.msra.mxu0 %v1604
      %2154 = vmatprep.subr.mxu0 %v1601
      %2155 = vmatpush1.msra.mxu0 %v1600
      %2156 = vmatprep.subr.mxu0 %v1597
      %2157 = vmatpush1.msra.mxu0 %v1596
      %2158 = vmatprep.subr.mxu0 %v1593
      %2159 = vmatpush1.msra.mxu0 %v1592
      %2160 = vmatprep.subr.mxu0 %v1589
      %2161 = vmatpush1.msra.mxu0 %v1588
      %2162 = vmatprep.subr.mxu0 %v1585
      %2163 = vmatpush1.msra.mxu0 %v1584
      %2164 = vmatprep.subr.mxu0 %v1581
      %2165 = vmatpush1.msra.mxu0 %v1580
      %2166 = vmatprep.subr.mxu0 %v1577
      %2167 = vmatpush1.msra.mxu0 %v1576
      %2168 = vmatprep.subr.mxu0 %v1573
      %2169 = vmatpush1.msra.mxu0 %v1572
      %2170 = vmatprep.subr.mxu0 %v1569
      %2171 = vmatpush1.msra.mxu0 %v1568
      %2172 = vmatprep.subr.mxu0 %v1565
      %2173 = vmatpush1.msra.mxu0 %v1564
      %2174 = vmatprep.subr.mxu0 %v1689
      %2175 = vmatpush2.msra.mxu0 %v1688
      %2176 = vmatprep.subr.mxu0 %v1685
      %2177 = vmatpush2.msra.mxu0 %v1684
      %2178 = vmatprep.subr.mxu0 %v1681
      %2179 = vmatpush2.msra.mxu0 %v1680
      %2180 = vmatprep.subr.mxu0 %v1677
      %2181 = vmatpush2.msra.mxu0 %v1676
      %2182 = vmatprep.subr.mxu0 %v1673
      %2183 = vmatpush2.msra.mxu0 %v1672
      %2184 = vmatprep.subr.mxu0 %v1669
      %2185 = vmatpush2.msra.mxu0 %v1668
      %2186 = vmatprep.subr.mxu0 %v1665
      %2187 = vmatpush2.msra.mxu0 %v1664
      %2188 = vmatprep.subr.mxu0 %v1661
      %2189 = vmatpush2.msra.mxu0 %v1660
      %2190 = vmatprep.subr.mxu0 %v1657
      %2191 = vmatpush2.msra.mxu0 %v1656
      %2192 = vmatprep.subr.mxu0 %v1653
      %2193 = vmatpush2.msra.mxu0 %v1652
      %2194 = vmatprep.subr.mxu0 %v1649
      %2195 = vmatpush2.msra.mxu0 %v1648
      %2196 = vmatprep.subr.mxu0 %v1645
      %2197 = vmatpush2.msra.mxu0 %v1644
      %2198 = vmatprep.subr.mxu0 %v1641
      %2199 = vmatpush2.msra.mxu0 %v1640
      %2200 = vmatprep.subr.mxu0 %v1637
      %2201 = vmatpush2.msra.mxu0 %v1636
      %2202 = vmatprep.subr.mxu0 %v1633
      %2203 = vmatpush2.msra.mxu0 %v1632
      %2204 = vmatprep.subr.mxu0 %v1629
      %2205 = vmatpush2.msra.mxu0 %v1628
      %2206 = vmatprep.mubr.f32.mxu0 %v2115
      %2207 = vmatmul.mubr.f32.gmra.mxu0 %v2107
      %v2208 = vpop.f32.mrf.mxu0
      %v2209 = vadd.f32 %v2081, %v2208
      %v2210 = vpop.f32.mrf.mxu0
      %v2211 = vadd.f32 %v2085, %v2210
      %2212 = vdwg.mxu0
      %2213 = vmatprep.subr.mxu0 %v1753
      %2214 = vmatpush1.msra.mxu0 %v1752
      %2215 = vmatprep.subr.mxu0 %v1749
      %2216 = vmatpush1.msra.mxu0 %v1748
      %2217 = vmatprep.subr.mxu0 %v1745
      %2218 = vmatpush1.msra.mxu0 %v1744
      %2219 = vmatprep.subr.mxu0 %v1741
      %2220 = vmatpush1.msra.mxu0 %v1740
      %2221 = vmatprep.subr.mxu0 %v1737
      %2222 = vmatpush1.msra.mxu0 %v1736
      %2223 = vmatprep.subr.mxu0 %v1733
      %2224 = vmatpush1.msra.mxu0 %v1732
      %2225 = vmatprep.subr.mxu0 %v1729
      %2226 = vmatpush1.msra.mxu0 %v1728
      %2227 = vmatprep.subr.mxu0 %v1725
      %2228 = vmatpush1.msra.mxu0 %v1724
      %2229 = vmatprep.subr.mxu0 %v1721
      %2230 = vmatpush1.msra.mxu0 %v1720
      %2231 = vmatprep.subr.mxu0 %v1717
      %2232 = vmatpush1.msra.mxu0 %v1716
      %2233 = vmatprep.subr.mxu0 %v1713
      %2234 = vmatpush1.msra.mxu0 %v1712
      %2235 = vmatprep.subr.mxu0 %v1709
      %2236 = vmatpush1.msra.mxu0 %v1708
      %2237 = vmatprep.subr.mxu0 %v1705
      %2238 = vmatpush1.msra.mxu0 %v1704
      %2239 = vmatprep.subr.mxu0 %v1701
      %2240 = vmatpush1.msra.mxu0 %v1700
      %2241 = vmatprep.subr.mxu0 %v1697
      %2242 = vmatpush1.msra.mxu0 %v1696
      %2243 = vmatprep.subr.mxu0 %v1693
      %2244 = vmatpush1.msra.mxu0 %v1692
      %2245 = vmatprep.subr.mxu0 %v1817
      %2246 = vmatpush2.msra.mxu0 %v1816
      %2247 = vmatprep.subr.mxu0 %v1813
      %2248 = vmatpush2.msra.mxu0 %v1812
      %2249 = vmatprep.subr.mxu0 %v1809
      %2250 = vmatpush2.msra.mxu0 %v1808
      %2251 = vmatprep.subr.mxu0 %v1805
      %2252 = vmatpush2.msra.mxu0 %v1804
      %2253 = vmatprep.subr.mxu0 %v1801
      %2254 = vmatpush2.msra.mxu0 %v1800
      %2255 = vmatprep.subr.mxu0 %v1797
      %2256 = vmatpush2.msra.mxu0 %v1796
      %2257 = vmatprep.subr.mxu0 %v1793
      %2258 = vmatpush2.msra.mxu0 %v1792
      %2259 = vmatprep.subr.mxu0 %v1789
      %2260 = vmatpush2.msra.mxu0 %v1788
      %2261 = vmatprep.subr.mxu0 %v1785
      %2262 = vmatpush2.msra.mxu0 %v1784
      %2263 = vmatprep.subr.mxu0 %v1781
      %2264 = vmatpush2.msra.mxu0 %v1780
      %2265 = vmatprep.subr.mxu0 %v1777
      %2266 = vmatpush2.msra.mxu0 %v1776
      %2267 = vmatprep.subr.mxu0 %v1773
      %2268 = vmatpush2.msra.mxu0 %v1772
      %2269 = vmatprep.subr.mxu0 %v1769
      %2270 = vmatpush2.msra.mxu0 %v1768
      %2271 = vmatprep.subr.mxu0 %v1765
      %2272 = vmatpush2.msra.mxu0 %v1764
      %2273 = vmatprep.subr.mxu0 %v1761
      %2274 = vmatpush2.msra.mxu0 %v1760
      %2275 = vmatprep.subr.mxu0 %v1757
      %2276 = vmatpush2.msra.mxu0 %v1756
      %2277 = vmatprep.mubr.f32.mxu0 %v2116
      %2278 = vmatmul.mubr.f32.gmra.mxu0 %v2114
      %v2279 = vpop.f32.mrf.mxu0
      %v2280 = vadd.f32 %v2209, %v2279
      %v2281 = vpop.f32.mrf.mxu0
      %v2282 = vadd.f32 %v2211, %v2281
      %2283 = vdwg.mxu0
      %2284 = vmatprep.subr.mxu0 %v1881
      %2285 = vmatpush1.msra.mxu0 %v1880
      %2286 = vmatprep.subr.mxu0 %v1877
      %2287 = vmatpush1.msra.mxu0 %v1876
      %2288 = vmatprep.subr.mxu0 %v1873
      %2289 = vmatpush1.msra.mxu0 %v1872
      %2290 = vmatprep.subr.mxu0 %v1869
      %2291 = vmatpush1.msra.mxu0 %v1868
      %2292 = vmatprep.subr.mxu0 %v1865
      %2293 = vmatpush1.msra.mxu0 %v1864
      %2294 = vmatprep.subr.mxu0 %v1861
      %2295 = vmatpush1.msra.mxu0 %v1860
      %2296 = vmatprep.subr.mxu0 %v1857
      %2297 = vmatpush1.msra.mxu0 %v1856
      %2298 = vmatprep.subr.mxu0 %v1853
      %2299 = vmatpush1.msra.mxu0 %v1852
      %2300 = vmatprep.subr.mxu0 %v1849
      %2301 = vmatpush1.msra.mxu0 %v1848
      %2302 = vmatprep.subr.mxu0 %v1845
      %2303 = vmatpush1.msra.mxu0 %v1844
      %2304 = vmatprep.subr.mxu0 %v1841
      %2305 = vmatpush1.msra.mxu0 %v1840
      %2306 = vmatprep.subr.mxu0 %v1837
      %2307 = vmatpush1.msra.mxu0 %v1836
      %2308 = vmatprep.subr.mxu0 %v1833
      %2309 = vmatpush1.msra.mxu0 %v1832
      %2310 = vmatprep.subr.mxu0 %v1829
      %2311 = vmatpush1.msra.mxu0 %v1828
      %2312 = vmatprep.subr.mxu0 %v1825
      %2313 = vmatpush1.msra.mxu0 %v1824
      %2314 = vmatprep.subr.mxu0 %v1821
      %2315 = vmatpush1.msra.mxu0 %v1820
      %2316 = vmatprep.subr.mxu0 %v1945
      %2317 = vmatpush2.msra.mxu0 %v1944
      %2318 = vmatprep.subr.mxu0 %v1941
      %2319 = vmatpush2.msra.mxu0 %v1940
      %2320 = vmatprep.subr.mxu0 %v1937
      %2321 = vmatpush2.msra.mxu0 %v1936
      %2322 = vmatprep.subr.mxu0 %v1933
      %2323 = vmatpush2.msra.mxu0 %v1932
      %2324 = vmatprep.subr.mxu0 %v1929
      %2325 = vmatpush2.msra.mxu0 %v1928
      %2326 = vmatprep.subr.mxu0 %v1925
      %2327 = vmatpush2.msra.mxu0 %v1924
      %2328 = vmatprep.subr.mxu0 %v1921
      %2329 = vmatpush2.msra.mxu0 %v1920
      %2330 = vmatprep.subr.mxu0 %v1917
      %2331 = vmatpush2.msra.mxu0 %v1916
      %2332 = vmatprep.subr.mxu0 %v1913
      %2333 = vmatpush2.msra.mxu0 %v1912
      %2334 = vmatprep.subr.mxu0 %v1909
      %2335 = vmatpush2.msra.mxu0 %v1908
      %2336 = vmatprep.subr.mxu0 %v1905
      %2337 = vmatpush2.msra.mxu0 %v1904
      %2338 = vmatprep.subr.mxu0 %v1901
      %2339 = vmatpush2.msra.mxu0 %v1900
      %2340 = vmatprep.subr.mxu0 %v1897
      %2341 = vmatpush2.msra.mxu0 %v1896
      %2342 = vmatprep.subr.mxu0 %v1893
      %2343 = vmatpush2.msra.mxu0 %v1892
      %2344 = vmatprep.subr.mxu0 %v1889
      %2345 = vmatpush2.msra.mxu0 %v1888
      %2346 = vmatprep.subr.mxu0 %v1885
      %2347 = vmatpush2.msra.mxu0 %v1884
      %2348 = vmatprep.mubr.f32.mxu0 %v2132
      %2349 = vmatmul.mubr.f32.gmra.mxu0 %v2124
      %v2350 = vpop.f32.mrf.mxu0
      %v2351 = vadd.f32 %v2280, %v2350
      %v2352 = vpop.f32.mrf.mxu0
      %v2353 = vadd.f32 %v2282, %v2352
      %2354 = vdwg.mxu0
      %2355 = vmatprep.subr.mxu0 %v2009
      %2356 = vmatpush1.msra.mxu0 %v2008
      %2357 = vmatprep.subr.mxu0 %v2005
      %2358 = vmatpush1.msra.mxu0 %v2004
      %2359 = vmatprep.subr.mxu0 %v2001
      %2360 = vmatpush1.msra.mxu0 %v2000
      %2361 = vmatprep.subr.mxu0 %v1997
      %2362 = vmatpush1.msra.mxu0 %v1996
      %2363 = vmatprep.subr.mxu0 %v1993
      %2364 = vmatpush1.msra.mxu0 %v1992
      %2365 = vmatprep.subr.mxu0 %v1989
      %2366 = vmatpush1.msra.mxu0 %v1988
      %2367 = vmatprep.subr.mxu0 %v1985
      %2368 = vmatpush1.msra.mxu0 %v1984
      %2369 = vmatprep.subr.mxu0 %v1981
      %2370 = vmatpush1.msra.mxu0 %v1980
      %2371 = vmatprep.subr.mxu0 %v1977
      %2372 = vmatpush1.msra.mxu0 %v1976
      %2373 = vmatprep.subr.mxu0 %v1973
      %2374 = vmatpush1.msra.mxu0 %v1972
      %2375 = vmatprep.subr.mxu0 %v1969
      %2376 = vmatpush1.msra.mxu0 %v1968
      %2377 = vmatprep.subr.mxu0 %v1965
      %2378 = vmatpush1.msra.mxu0 %v1964
      %2379 = vmatprep.subr.mxu0 %v1961
      %2380 = vmatpush1.msra.mxu0 %v1960
      %2381 = vmatprep.subr.mxu0 %v1957
      %2382 = vmatpush1.msra.mxu0 %v1956
      %2383 = vmatprep.subr.mxu0 %v1953
      %2384 = vmatpush1.msra.mxu0 %v1952
      %2385 = vmatprep.subr.mxu0 %v1949
      %2386 = vmatpush1.msra.mxu0 %v1948
      %2387 = vmatprep.subr.mxu0 %v2073
      %2388 = vmatpush2.msra.mxu0 %v2072
      %2389 = vmatprep.subr.mxu0 %v2069
      %2390 = vmatpush2.msra.mxu0 %v2068
      %2391 = vmatprep.subr.mxu0 %v2065
      %2392 = vmatpush2.msra.mxu0 %v2064
      %2393 = vmatprep.subr.mxu0 %v2061
      %2394 = vmatpush2.msra.mxu0 %v2060
      %2395 = vmatprep.subr.mxu0 %v2057
      %2396 = vmatpush2.msra.mxu0 %v2056
      %2397 = vmatprep.subr.mxu0 %v2053
      %2398 = vmatpush2.msra.mxu0 %v2052
      %2399 = vmatprep.subr.mxu0 %v2049
      %2400 = vmatpush2.msra.mxu0 %v2048
      %2401 = vmatprep.subr.mxu0 %v2045
      %2402 = vmatpush2.msra.mxu0 %v2044
      %2403 = vmatprep.subr.mxu0 %v2041
      %2404 = vmatpush2.msra.mxu0 %v2040
      %2405 = vmatprep.subr.mxu0 %v2037
      %2406 = vmatpush2.msra.mxu0 %v2036
      %2407 = vmatprep.subr.mxu0 %v2033
      %2408 = vmatpush2.msra.mxu0 %v2032
      %2409 = vmatprep.subr.mxu0 %v2029
      %2410 = vmatpush2.msra.mxu0 %v2028
      %2411 = vmatprep.subr.mxu0 %v2025
      %2412 = vmatpush2.msra.mxu0 %v2024
      %2413 = vmatprep.subr.mxu0 %v2021
      %2414 = vmatpush2.msra.mxu0 %v2020
      %2415 = vmatprep.subr.mxu0 %v2017
      %2416 = vmatpush2.msra.mxu0 %v2016
      %2417 = vmatprep.subr.mxu0 %v2013
      %2418 = vmatpush2.msra.mxu0 %v2012
      %2419 = vmatprep.mubr.f32.mxu0 %v2133
      %2420 = vmatmul.mubr.f32.gmra.mxu0 %v2131
      %v2421 = vpop.f32.mrf.mxu0
      %v2422 = vadd.f32 %v2351, %v2421
      %v2423 = vpop.f32.mrf.mxu0
      %v2424 = vadd.f32 %v2353, %v2423
      %2425 = vdwg.mxu0
      %2426 = vmatprep.subr.mxu0 %v1627
      %2427 = vmatpush1.msra.mxu0 %v1626
      %2428 = vmatprep.subr.mxu0 %v1623
      %2429 = vmatpush1.msra.mxu0 %v1622
      %2430 = vmatprep.subr.mxu0 %v1619
      %2431 = vmatpush1.msra.mxu0 %v1618
      %2432 = vmatprep.subr.mxu0 %v1615
      %2433 = vmatpush1.msra.mxu0 %v1614
      %2434 = vmatprep.subr.mxu0 %v1611
      %2435 = vmatpush1.msra.mxu0 %v1610
      %2436 = vmatprep.subr.mxu0 %v1607
      %2437 = vmatpush1.msra.mxu0 %v1606
      %2438 = vmatprep.subr.mxu0 %v1603
      %2439 = vmatpush1.msra.mxu0 %v1602
      %2440 = vmatprep.subr.mxu0 %v1599
      %2441 = vmatpush1.msra.mxu0 %v1598
      %2442 = vmatprep.subr.mxu0 %v1595
      %2443 = vmatpush1.msra.mxu0 %v1594
      %2444 = vmatprep.subr.mxu0 %v1591
      %2445 = vmatpush1.msra.mxu0 %v1590
      %2446 = vmatprep.subr.mxu0 %v1587
      %2447 = vmatpush1.msra.mxu0 %v1586
      %2448 = vmatprep.subr.mxu0 %v1583
      %2449 = vmatpush1.msra.mxu0 %v1582
      %2450 = vmatprep.subr.mxu0 %v1579
      %2451 = vmatpush1.msra.mxu0 %v1578
      %2452 = vmatprep.subr.mxu0 %v1575
      %2453 = vmatpush1.msra.mxu0 %v1574
      %2454 = vmatprep.subr.mxu0 %v1571
      %2455 = vmatpush1.msra.mxu0 %v1570
      %2456 = vmatprep.subr.mxu0 %v1567
      %2457 = vmatpush1.msra.mxu0 %v1566
      %2458 = vmatprep.subr.mxu0 %v1691
      %2459 = vmatpush2.msra.mxu0 %v1690
      %2460 = vmatprep.subr.mxu0 %v1687
      %2461 = vmatpush2.msra.mxu0 %v1686
      %2462 = vmatprep.subr.mxu0 %v1683
      %2463 = vmatpush2.msra.mxu0 %v1682
      %2464 = vmatprep.subr.mxu0 %v1679
      %2465 = vmatpush2.msra.mxu0 %v1678
      %2466 = vmatprep.subr.mxu0 %v1675
      %2467 = vmatpush2.msra.mxu0 %v1674
      %2468 = vmatprep.subr.mxu0 %v1671
      %2469 = vmatpush2.msra.mxu0 %v1670
      %2470 = vmatprep.subr.mxu0 %v1667
      %2471 = vmatpush2.msra.mxu0 %v1666
      %2472 = vmatprep.subr.mxu0 %v1663
      %2473 = vmatpush2.msra.mxu0 %v1662
      %2474 = vmatprep.subr.mxu0 %v1659
      %2475 = vmatpush2.msra.mxu0 %v1658
      %2476 = vmatprep.subr.mxu0 %v1655
      %2477 = vmatpush2.msra.mxu0 %v1654
      %2478 = vmatprep.subr.mxu0 %v1651
      %2479 = vmatpush2.msra.mxu0 %v1650
      %2480 = vmatprep.subr.mxu0 %v1647
      %2481 = vmatpush2.msra.mxu0 %v1646
      %2482 = vmatprep.subr.mxu0 %v1643
      %2483 = vmatpush2.msra.mxu0 %v1642
      %2484 = vmatprep.subr.mxu0 %v1639
      %2485 = vmatpush2.msra.mxu0 %v1638
      %2486 = vmatprep.subr.mxu0 %v1635
      %2487 = vmatpush2.msra.mxu0 %v1634
      %2488 = vmatprep.subr.mxu0 %v1631
      %2489 = vmatpush2.msra.mxu0 %v1630
      %2490 = vmatprep.mubr.f32.mxu0 %v2115
      %2491 = vmatmul.mubr.f32.gmra.mxu0 %v2107
      %v2492 = vpop.f32.mrf.mxu0
      %v2493 = vadd.f32 %v2089, %v2492
      %v2494 = vpop.f32.mrf.mxu0
      %v2495 = vadd.f32 %v2093, %v2494
      %2496 = vdwg.mxu0
      %2497 = vmatprep.subr.mxu0 %v1755
      %2498 = vmatpush1.msra.mxu0 %v1754
      %2499 = vmatprep.subr.mxu0 %v1751
      %2500 = vmatpush1.msra.mxu0 %v1750
      %2501 = vmatprep.subr.mxu0 %v1747
      %2502 = vmatpush1.msra.mxu0 %v1746
      %2503 = vmatprep.subr.mxu0 %v1743
      %2504 = vmatpush1.msra.mxu0 %v1742
      %2505 = vmatprep.subr.mxu0 %v1739
      %2506 = vmatpush1.msra.mxu0 %v1738
      %2507 = vmatprep.subr.mxu0 %v1735
      %2508 = vmatpush1.msra.mxu0 %v1734
      %2509 = vmatprep.subr.mxu0 %v1731
      %2510 = vmatpush1.msra.mxu0 %v1730
      %2511 = vmatprep.subr.mxu0 %v1727
      %2512 = vmatpush1.msra.mxu0 %v1726
      %2513 = vmatprep.subr.mxu0 %v1723
      %2514 = vmatpush1.msra.mxu0 %v1722
      %2515 = vmatprep.subr.mxu0 %v1719
      %2516 = vmatpush1.msra.mxu0 %v1718
      %2517 = vmatprep.subr.mxu0 %v1715
      %2518 = vmatpush1.msra.mxu0 %v1714
      %2519 = vmatprep.subr.mxu0 %v1711
      %2520 = vmatpush1.msra.mxu0 %v1710
      %2521 = vmatprep.subr.mxu0 %v1707
      %2522 = vmatpush1.msra.mxu0 %v1706
      %2523 = vmatprep.subr.mxu0 %v1703
      %2524 = vmatpush1.msra.mxu0 %v1702
      %2525 = vmatprep.subr.mxu0 %v1699
      %2526 = vmatpush1.msra.mxu0 %v1698
      %2527 = vmatprep.subr.mxu0 %v1695
      %2528 = vmatpush1.msra.mxu0 %v1694
      %2529 = vmatprep.subr.mxu0 %v1819
      %2530 = vmatpush2.msra.mxu0 %v1818
      %2531 = vmatprep.subr.mxu0 %v1815
      %2532 = vmatpush2.msra.mxu0 %v1814
      %2533 = vmatprep.subr.mxu0 %v1811
      %2534 = vmatpush2.msra.mxu0 %v1810
      %2535 = vmatprep.subr.mxu0 %v1807
      %2536 = vmatpush2.msra.mxu0 %v1806
      %2537 = vmatprep.subr.mxu0 %v1803
      %2538 = vmatpush2.msra.mxu0 %v1802
      %2539 = vmatprep.subr.mxu0 %v1799
      %2540 = vmatpush2.msra.mxu0 %v1798
      %2541 = vmatprep.subr.mxu0 %v1795
      %2542 = vmatpush2.msra.mxu0 %v1794
      %2543 = vmatprep.subr.mxu0 %v1791
      %2544 = vmatpush2.msra.mxu0 %v1790
      %2545 = vmatprep.subr.mxu0 %v1787
      %2546 = vmatpush2.msra.mxu0 %v1786
      %2547 = vmatprep.subr.mxu0 %v1783
      %2548 = vmatpush2.msra.mxu0 %v1782
      %2549 = vmatprep.subr.mxu0 %v1779
      %2550 = vmatpush2.msra.mxu0 %v1778
      %2551 = vmatprep.subr.mxu0 %v1775
      %2552 = vmatpush2.msra.mxu0 %v1774
      %2553 = vmatprep.subr.mxu0 %v1771
      %2554 = vmatpush2.msra.mxu0 %v1770
      %2555 = vmatprep.subr.mxu0 %v1767
      %2556 = vmatpush2.msra.mxu0 %v1766
      %2557 = vmatprep.subr.mxu0 %v1763
      %2558 = vmatpush2.msra.mxu0 %v1762
      %2559 = vmatprep.subr.mxu0 %v1759
      %2560 = vmatpush2.msra.mxu0 %v1758
      %2561 = vmatprep.mubr.f32.mxu0 %v2116
      %2562 = vmatmul.mubr.f32.gmra.mxu0 %v2114
      %v2563 = vpop.f32.mrf.mxu0
      %v2564 = vadd.f32 %v2493, %v2563
      %v2565 = vpop.f32.mrf.mxu0
      %v2566 = vadd.f32 %v2495, %v2565
      %2567 = vdwg.mxu0
      %2568 = vmatprep.subr.mxu0 %v1883
      %2569 = vmatpush1.msra.mxu0 %v1882
      %2570 = vmatprep.subr.mxu0 %v1879
      %2571 = vmatpush1.msra.mxu0 %v1878
      %2572 = vmatprep.subr.mxu0 %v1875
      %2573 = vmatpush1.msra.mxu0 %v1874
      %2574 = vmatprep.subr.mxu0 %v1871
      %2575 = vmatpush1.msra.mxu0 %v1870
      %2576 = vmatprep.subr.mxu0 %v1867
      %2577 = vmatpush1.msra.mxu0 %v1866
      %2578 = vmatprep.subr.mxu0 %v1863
      %2579 = vmatpush1.msra.mxu0 %v1862
      %2580 = vmatprep.subr.mxu0 %v1859
      %2581 = vmatpush1.msra.mxu0 %v1858
      %2582 = vmatprep.subr.mxu0 %v1855
      %2583 = vmatpush1.msra.mxu0 %v1854
      %2584 = vmatprep.subr.mxu0 %v1851
      %2585 = vmatpush1.msra.mxu0 %v1850
      %2586 = vmatprep.subr.mxu0 %v1847
      %2587 = vmatpush1.msra.mxu0 %v1846
      %2588 = vmatprep.subr.mxu0 %v1843
      %2589 = vmatpush1.msra.mxu0 %v1842
      %2590 = vmatprep.subr.mxu0 %v1839
      %2591 = vmatpush1.msra.mxu0 %v1838
      %2592 = vmatprep.subr.mxu0 %v1835
      %2593 = vmatpush1.msra.mxu0 %v1834
      %2594 = vmatprep.subr.mxu0 %v1831
      %2595 = vmatpush1.msra.mxu0 %v1830
      %2596 = vmatprep.subr.mxu0 %v1827
      %2597 = vmatpush1.msra.mxu0 %v1826
      %2598 = vmatprep.subr.mxu0 %v1823
      %2599 = vmatpush1.msra.mxu0 %v1822
      %2600 = vmatprep.subr.mxu0 %v1947
      %2601 = vmatpush2.msra.mxu0 %v1946
      %2602 = vmatprep.subr.mxu0 %v1943
      %2603 = vmatpush2.msra.mxu0 %v1942
      %2604 = vmatprep.subr.mxu0 %v1939
      %2605 = vmatpush2.msra.mxu0 %v1938
      %2606 = vmatprep.subr.mxu0 %v1935
      %2607 = vmatpush2.msra.mxu0 %v1934
      %2608 = vmatprep.subr.mxu0 %v1931
      %2609 = vmatpush2.msra.mxu0 %v1930
      %2610 = vmatprep.subr.mxu0 %v1927
      %2611 = vmatpush2.msra.mxu0 %v1926
      %2612 = vmatprep.subr.mxu0 %v1923
      %2613 = vmatpush2.msra.mxu0 %v1922
      %2614 = vmatprep.subr.mxu0 %v1919
      %2615 = vmatpush2.msra.mxu0 %v1918
      %2616 = vmatprep.subr.mxu0 %v1915
      %2617 = vmatpush2.msra.mxu0 %v1914
      %2618 = vmatprep.subr.mxu0 %v1911
      %2619 = vmatpush2.msra.mxu0 %v1910
      %2620 = vmatprep.subr.mxu0 %v1907
      %2621 = vmatpush2.msra.mxu0 %v1906
      %2622 = vmatprep.subr.mxu0 %v1903
      %2623 = vmatpush2.msra.mxu0 %v1902
      %2624 = vmatprep.subr.mxu0 %v1899
      %2625 = vmatpush2.msra.mxu0 %v1898
      %2626 = vmatprep.subr.mxu0 %v1895
      %2627 = vmatpush2.msra.mxu0 %v1894
      %2628 = vmatprep.subr.mxu0 %v1891
      %2629 = vmatpush2.msra.mxu0 %v1890
      %2630 = vmatprep.subr.mxu0 %v1887
      %2631 = vmatpush2.msra.mxu0 %v1886
      %2632 = vmatprep.mubr.f32.mxu0 %v2132
      %2633 = vmatmul.mubr.f32.gmra.mxu0 %v2124
      %v2634 = vpop.f32.mrf.mxu0
      %v2635 = vadd.f32 %v2564, %v2634
      %v2636 = vpop.f32.mrf.mxu0
      %v2637 = vadd.f32 %v2566, %v2636
      %2638 = vdwg.mxu0
      %2639 = vmatprep.subr.mxu0 %v2011
      %2640 = vmatpush1.msra.mxu0 %v2010
      %2641 = vmatprep.subr.mxu0 %v2007
      %2642 = vmatpush1.msra.mxu0 %v2006
      %2643 = vmatprep.subr.mxu0 %v2003
      %2644 = vmatpush1.msra.mxu0 %v2002
      %2645 = vmatprep.subr.mxu0 %v1999
      %2646 = vmatpush1.msra.mxu0 %v1998
      %2647 = vmatprep.subr.mxu0 %v1995
      %2648 = vmatpush1.msra.mxu0 %v1994
      %2649 = vmatprep.subr.mxu0 %v1991
      %2650 = vmatpush1.msra.mxu0 %v1990
      %2651 = vmatprep.subr.mxu0 %v1987
      %2652 = vmatpush1.msra.mxu0 %v1986
      %2653 = vmatprep.subr.mxu0 %v1983
      %2654 = vmatpush1.msra.mxu0 %v1982
      %2655 = vmatprep.subr.mxu0 %v1979
      %2656 = vmatpush1.msra.mxu0 %v1978
      %2657 = vmatprep.subr.mxu0 %v1975
      %2658 = vmatpush1.msra.mxu0 %v1974
      %2659 = vmatprep.subr.mxu0 %v1971
      %2660 = vmatpush1.msra.mxu0 %v1970
      %2661 = vmatprep.subr.mxu0 %v1967
      %2662 = vmatpush1.msra.mxu0 %v1966
      %2663 = vmatprep.subr.mxu0 %v1963
      %2664 = vmatpush1.msra.mxu0 %v1962
      %2665 = vmatprep.subr.mxu0 %v1959
      %2666 = vmatpush1.msra.mxu0 %v1958
      %2667 = vmatprep.subr.mxu0 %v1955
      %2668 = vmatpush1.msra.mxu0 %v1954
      %2669 = vmatprep.subr.mxu0 %v1951
      %2670 = vmatpush1.msra.mxu0 %v1950
      %2671 = vmatprep.subr.mxu0 %v2075
      %2672 = vmatpush2.msra.mxu0 %v2074
      %2673 = vmatprep.subr.mxu0 %v2071
      %2674 = vmatpush2.msra.mxu0 %v2070
      %2675 = vmatprep.subr.mxu0 %v2067
      %2676 = vmatpush2.msra.mxu0 %v2066
      %2677 = vmatprep.subr.mxu0 %v2063
      %2678 = vmatpush2.msra.mxu0 %v2062
      %2679 = vmatprep.subr.mxu0 %v2059
      %2680 = vmatpush2.msra.mxu0 %v2058
      %2681 = vmatprep.subr.mxu0 %v2055
      %2682 = vmatpush2.msra.mxu0 %v2054
      %2683 = vmatprep.subr.mxu0 %v2051
      %2684 = vmatpush2.msra.mxu0 %v2050
      %2685 = vmatprep.subr.mxu0 %v2047
      %2686 = vmatpush2.msra.mxu0 %v2046
      %2687 = vmatprep.subr.mxu0 %v2043
      %2688 = vmatpush2.msra.mxu0 %v2042
      %2689 = vmatprep.subr.mxu0 %v2039
      %2690 = vmatpush2.msra.mxu0 %v2038
      %2691 = vmatprep.subr.mxu0 %v2035
      %2692 = vmatpush2.msra.mxu0 %v2034
      %2693 = vmatprep.subr.mxu0 %v2031
      %2694 = vmatpush2.msra.mxu0 %v2030
      %2695 = vmatprep.subr.mxu0 %v2027
      %2696 = vmatpush2.msra.mxu0 %v2026
      %2697 = vmatprep.subr.mxu0 %v2023
      %2698 = vmatpush2.msra.mxu0 %v2022
      %2699 = vmatprep.subr.mxu0 %v2019
      %2700 = vmatpush2.msra.mxu0 %v2018
      %2701 = vmatprep.subr.mxu0 %v2015
      %2702 = vmatpush2.msra.mxu0 %v2014
      %2703 = vmatprep.mubr.f32.mxu0 %v2133
      %2704 = vmatmul.mubr.f32.gmra.mxu0 %v2131
      %v2705 = vpop.f32.mrf.mxu0
      %v2706 = vadd.f32 %v2635, %v2705
      %v2707 = vpop.f32.mrf.mxu0
      %v2708 = vadd.f32 %v2637, %v2707
      %2709 = vdwg.mxu0
      %v2710 = vmax.f32 %v2422, 0.0
      %v2711 = vmax.f32 %v2424, 0.0
      %v2712 = vmax.f32 %v2706, 0.0
      %v2713 = vmax.f32 %v2708, 0.0
      %v2714 = vld [vmem:[#allocation17] sm:$0xff]
      %v2715 = vld [vmem:[#allocation17 + $0x8] sm:$0xff]
      %v2716 = vld [vmem:[#allocation17 + $0x10] sm:$0xff]
      %v2717 = vld [vmem:[#allocation17 + $0x18] sm:$0xff]
      %v2718 = vld [vmem:[#allocation17 + $0x20] sm:$0xff]
      %v2719 = vld [vmem:[#allocation17 + $0x28] sm:$0xff]
      %v2720 = vld [vmem:[#allocation17 + $0x30] sm:$0xff]
      %v2721 = vld [vmem:[#allocation17 + $0x38] sm:$0xff]
      %v2722 = vld [vmem:[#allocation17 + $0x40] sm:$0xff]
      %v2723 = vld [vmem:[#allocation17 + $0x48] sm:$0xff]
      %v2724 = vld [vmem:[#allocation17 + $0x50] sm:$0xff]
      %v2725 = vld [vmem:[#allocation17 + $0x58] sm:$0xff]
      %v2726 = vld [vmem:[#allocation17 + $0x60] sm:$0xff]
      %v2727 = vld [vmem:[#allocation17 + $0x68] sm:$0xff]
      %v2728 = vld [vmem:[#allocation17 + $0x70] sm:$0xff]
      %v2729 = vld [vmem:[#allocation17 + $0x78] sm:$0xff]
      %v2730 = vld [vmem:[#allocation17 + $0x80] sm:$0xff]
      %v2731 = vld [vmem:[#allocation17 + $0x88] sm:$0xff]
      %v2732 = vld [vmem:[#allocation17 + $0x90] sm:$0xff]
      %v2733 = vld [vmem:[#allocation17 + $0x98] sm:$0xff]
      %v2734 = vld [vmem:[#allocation17 + $0xa0] sm:$0xff]
      %v2735 = vld [vmem:[#allocation17 + $0xa8] sm:$0xff]
      %v2736 = vld [vmem:[#allocation17 + $0xb0] sm:$0xff]
      %v2737 = vld [vmem:[#allocation17 + $0xb8] sm:$0xff]
      %v2738 = vld [vmem:[#allocation17 + $0xc0] sm:$0xff]
      %v2739 = vld [vmem:[#allocation17 + $0xc8] sm:$0xff]
      %v2740 = vld [vmem:[#allocation17 + $0xd0] sm:$0xff]
      %v2741 = vld [vmem:[#allocation17 + $0xd8] sm:$0xff]
      %v2742 = vld [vmem:[#allocation17 + $0xe0] sm:$0xff]
      %v2743 = vld [vmem:[#allocation17 + $0xe8] sm:$0xff]
      %v2744 = vld [vmem:[#allocation17 + $0xf0] sm:$0xff]
      %v2745 = vld [vmem:[#allocation17 + $0xf8] sm:$0xff]
      %v2746 = vld [vmem:[#allocation17 + $0x100] sm:$0xff]
      %v2747 = vld [vmem:[#allocation17 + $0x108] sm:$0xff]
      %v2748 = vld [vmem:[#allocation17 + $0x110] sm:$0xff]
      %v2749 = vld [vmem:[#allocation17 + $0x118] sm:$0xff]
      %v2750 = vld [vmem:[#allocation17 + $0x120] sm:$0xff]
      %v2751 = vld [vmem:[#allocation17 + $0x128] sm:$0xff]
      %v2752 = vld [vmem:[#allocation17 + $0x130] sm:$0xff]
      %v2753 = vld [vmem:[#allocation17 + $0x138] sm:$0xff]
      %v2754 = vld [vmem:[#allocation17 + $0x140] sm:$0xff]
      %v2755 = vld [vmem:[#allocation17 + $0x148] sm:$0xff]
      %v2756 = vld [vmem:[#allocation17 + $0x150] sm:$0xff]
      %v2757 = vld [vmem:[#allocation17 + $0x158] sm:$0xff]
      %v2758 = vld [vmem:[#allocation17 + $0x160] sm:$0xff]
      %v2759 = vld [vmem:[#allocation17 + $0x168] sm:$0xff]
      %v2760 = vld [vmem:[#allocation17 + $0x170] sm:$0xff]
      %v2761 = vld [vmem:[#allocation17 + $0x178] sm:$0xff]
      %v2762 = vld [vmem:[#allocation17 + $0x180] sm:$0xff]
      %v2763 = vld [vmem:[#allocation17 + $0x188] sm:$0xff]
      %v2764 = vld [vmem:[#allocation17 + $0x190] sm:$0xff]
      %v2765 = vld [vmem:[#allocation17 + $0x198] sm:$0xff]
      %v2766 = vld [vmem:[#allocation17 + $0x1a0] sm:$0xff]
      %v2767 = vld [vmem:[#allocation17 + $0x1a8] sm:$0xff]
      %v2768 = vld [vmem:[#allocation17 + $0x1b0] sm:$0xff]
      %v2769 = vld [vmem:[#allocation17 + $0x1b8] sm:$0xff]
      %v2770 = vld [vmem:[#allocation17 + $0x1c0] sm:$0xff]
      %v2771 = vld [vmem:[#allocation17 + $0x1c8] sm:$0xff]
      %v2772 = vld [vmem:[#allocation17 + $0x1d0] sm:$0xff]
      %v2773 = vld [vmem:[#allocation17 + $0x1d8] sm:$0xff]
      %v2774 = vld [vmem:[#allocation17 + $0x1e0] sm:$0xff]
      %v2775 = vld [vmem:[#allocation17 + $0x1e8] sm:$0xff]
      %v2776 = vld [vmem:[#allocation17 + $0x1f0] sm:$0xff]
      %v2777 = vld [vmem:[#allocation17 + $0x1f8] sm:$0xff]
      %v2778 = vld [vmem:[#allocation17 + $0x200] sm:$0xff]
      %v2779 = vld [vmem:[#allocation17 + $0x208] sm:$0xff]
      %v2780 = vld [vmem:[#allocation17 + $0x210] sm:$0xff]
      %v2781 = vld [vmem:[#allocation17 + $0x218] sm:$0xff]
      %v2782 = vld [vmem:[#allocation17 + $0x220] sm:$0xff]
      %v2783 = vld [vmem:[#allocation17 + $0x228] sm:$0xff]
      %v2784 = vld [vmem:[#allocation17 + $0x230] sm:$0xff]
      %v2785 = vld [vmem:[#allocation17 + $0x238] sm:$0xff]
      %v2786 = vld [vmem:[#allocation17 + $0x240] sm:$0xff]
      %v2787 = vld [vmem:[#allocation17 + $0x248] sm:$0xff]
      %v2788 = vld [vmem:[#allocation17 + $0x250] sm:$0xff]
      %v2789 = vld [vmem:[#allocation17 + $0x258] sm:$0xff]
      %v2790 = vld [vmem:[#allocation17 + $0x260] sm:$0xff]
      %v2791 = vld [vmem:[#allocation17 + $0x268] sm:$0xff]
      %v2792 = vld [vmem:[#allocation17 + $0x270] sm:$0xff]
      %v2793 = vld [vmem:[#allocation17 + $0x278] sm:$0xff]
      %v2794 = vld [vmem:[#allocation17 + $0x280] sm:$0xff]
      %v2795 = vld [vmem:[#allocation17 + $0x288] sm:$0xff]
      %v2796 = vld [vmem:[#allocation17 + $0x290] sm:$0xff]
      %v2797 = vld [vmem:[#allocation17 + $0x298] sm:$0xff]
      %v2798 = vld [vmem:[#allocation17 + $0x2a0] sm:$0xff]
      %v2799 = vld [vmem:[#allocation17 + $0x2a8] sm:$0xff]
      %v2800 = vld [vmem:[#allocation17 + $0x2b0] sm:$0xff]
      %v2801 = vld [vmem:[#allocation17 + $0x2b8] sm:$0xff]
      %v2802 = vld [vmem:[#allocation17 + $0x2c0] sm:$0xff]
      %v2803 = vld [vmem:[#allocation17 + $0x2c8] sm:$0xff]
      %v2804 = vld [vmem:[#allocation17 + $0x2d0] sm:$0xff]
      %v2805 = vld [vmem:[#allocation17 + $0x2d8] sm:$0xff]
      %v2806 = vld [vmem:[#allocation17 + $0x2e0] sm:$0xff]
      %v2807 = vld [vmem:[#allocation17 + $0x2e8] sm:$0xff]
      %v2808 = vld [vmem:[#allocation17 + $0x2f0] sm:$0xff]
      %v2809 = vld [vmem:[#allocation17 + $0x2f8] sm:$0xff]
      %v2810 = vld [vmem:[#allocation17 + $0x300] sm:$0xff]
      %v2811 = vld [vmem:[#allocation17 + $0x308] sm:$0xff]
      %v2812 = vld [vmem:[#allocation17 + $0x310] sm:$0xff]
      %v2813 = vld [vmem:[#allocation17 + $0x318] sm:$0xff]
      %v2814 = vld [vmem:[#allocation17 + $0x320] sm:$0xff]
      %v2815 = vld [vmem:[#allocation17 + $0x328] sm:$0xff]
      %v2816 = vld [vmem:[#allocation17 + $0x330] sm:$0xff]
      %v2817 = vld [vmem:[#allocation17 + $0x338] sm:$0xff]
      %v2818 = vld [vmem:[#allocation17 + $0x340] sm:$0xff]
      %v2819 = vld [vmem:[#allocation17 + $0x348] sm:$0xff]
      %v2820 = vld [vmem:[#allocation17 + $0x350] sm:$0xff]
      %v2821 = vld [vmem:[#allocation17 + $0x358] sm:$0xff]
      %v2822 = vld [vmem:[#allocation17 + $0x360] sm:$0xff]
      %v2823 = vld [vmem:[#allocation17 + $0x368] sm:$0xff]
      %v2824 = vld [vmem:[#allocation17 + $0x370] sm:$0xff]
      %v2825 = vld [vmem:[#allocation17 + $0x378] sm:$0xff]
      %v2826 = vld [vmem:[#allocation17 + $0x380] sm:$0xff]
      %v2827 = vld [vmem:[#allocation17 + $0x388] sm:$0xff]
      %v2828 = vld [vmem:[#allocation17 + $0x390] sm:$0xff]
      %v2829 = vld [vmem:[#allocation17 + $0x398] sm:$0xff]
      %v2830 = vld [vmem:[#allocation17 + $0x3a0] sm:$0xff]
      %v2831 = vld [vmem:[#allocation17 + $0x3a8] sm:$0xff]
      %v2832 = vld [vmem:[#allocation17 + $0x3b0] sm:$0xff]
      %v2833 = vld [vmem:[#allocation17 + $0x3b8] sm:$0xff]
      %v2834 = vld [vmem:[#allocation17 + $0x3c0] sm:$0xff]
      %v2835 = vld [vmem:[#allocation17 + $0x3c8] sm:$0xff]
      %v2836 = vld [vmem:[#allocation17 + $0x3d0] sm:$0xff]
      %v2837 = vld [vmem:[#allocation17 + $0x3d8] sm:$0xff]
      %v2838 = vld [vmem:[#allocation17 + $0x3e0] sm:$0xff]
      %v2839 = vld [vmem:[#allocation17 + $0x3e8] sm:$0xff]
      %v2840 = vld [vmem:[#allocation17 + $0x3f0] sm:$0xff]
      %v2841 = vld [vmem:[#allocation17 + $0x3f8] sm:$0xff]
      %v2842 = vld [vmem:[#allocation18] sm:$0x3]
      %v2844 = vlaneseq
      %v2845 = vshrl.u32 %v2844, 7
      %v2846 = vsub.s32 0, %v2845
      %v2847 = vrot.slane %v2842, %v2846
      %v2848 = vlaneseq
      %v2849 = vshrl.u32 %v2848, 7
      %v2850 = vsub.s32 1, %v2849
      %v2851 = vrot.slane %v2842, %v2850
      %2854 = vmatprep.subr.mxu0 %v2745
      %2855 = vmatpush1.msra.mxu0 %v2744
      %2856 = vmatprep.subr.mxu0 %v2743
      %2857 = vmatpush1.msra.mxu0 %v2742
      %2858 = vmatprep.subr.mxu0 %v2741
      %2859 = vmatpush1.msra.mxu0 %v2740
      %2860 = vmatprep.subr.mxu0 %v2739
      %2861 = vmatpush1.msra.mxu0 %v2738
      %2862 = vmatprep.subr.mxu0 %v2737
      %2863 = vmatpush1.msra.mxu0 %v2736
      %2864 = vmatprep.subr.mxu0 %v2735
      %2865 = vmatpush1.msra.mxu0 %v2734
      %2866 = vmatprep.subr.mxu0 %v2733
      %2867 = vmatpush1.msra.mxu0 %v2732
      %2868 = vmatprep.subr.mxu0 %v2731
      %2869 = vmatpush1.msra.mxu0 %v2730
      %2870 = vmatprep.subr.mxu0 %v2729
      %2871 = vmatpush1.msra.mxu0 %v2728
      %2872 = vmatprep.subr.mxu0 %v2727
      %2873 = vmatpush1.msra.mxu0 %v2726
      %2874 = vmatprep.subr.mxu0 %v2725
      %2875 = vmatpush1.msra.mxu0 %v2724
      %2876 = vmatprep.subr.mxu0 %v2723
      %2877 = vmatpush1.msra.mxu0 %v2722
      %2878 = vmatprep.subr.mxu0 %v2721
      %2879 = vmatpush1.msra.mxu0 %v2720
      %2880 = vmatprep.subr.mxu0 %v2719
      %2881 = vmatpush1.msra.mxu0 %v2718
      %2882 = vmatprep.subr.mxu0 %v2717
      %2883 = vmatpush1.msra.mxu0 %v2716
      %2884 = vmatprep.subr.mxu0 %v2715
      %2885 = vmatpush1.msra.mxu0 %v2714
      %2886 = vmatprep.subr.mxu0 %v2777
      %2887 = vmatpush2.msra.mxu0 %v2776
      %2888 = vmatprep.subr.mxu0 %v2775
      %2889 = vmatpush2.msra.mxu0 %v2774
      %2890 = vmatprep.subr.mxu0 %v2773
      %2891 = vmatpush2.msra.mxu0 %v2772
      %2892 = vmatprep.subr.mxu0 %v2771
      %2893 = vmatpush2.msra.mxu0 %v2770
      %2894 = vmatprep.subr.mxu0 %v2769
      %2895 = vmatpush2.msra.mxu0 %v2768
      %2896 = vmatprep.subr.mxu0 %v2767
      %2897 = vmatpush2.msra.mxu0 %v2766
      %2898 = vmatprep.subr.mxu0 %v2765
      %2899 = vmatpush2.msra.mxu0 %v2764
      %2900 = vmatprep.subr.mxu0 %v2763
      %2901 = vmatpush2.msra.mxu0 %v2762
      %2902 = vmatprep.subr.mxu0 %v2761
      %2903 = vmatpush2.msra.mxu0 %v2760
      %2904 = vmatprep.subr.mxu0 %v2759
      %2905 = vmatpush2.msra.mxu0 %v2758
      %2906 = vmatprep.subr.mxu0 %v2757
      %2907 = vmatpush2.msra.mxu0 %v2756
      %2908 = vmatprep.subr.mxu0 %v2755
      %2909 = vmatpush2.msra.mxu0 %v2754
      %2910 = vmatprep.subr.mxu0 %v2753
      %2911 = vmatpush2.msra.mxu0 %v2752
      %2912 = vmatprep.subr.mxu0 %v2751
      %2913 = vmatpush2.msra.mxu0 %v2750
      %2914 = vmatprep.subr.mxu0 %v2749
      %2915 = vmatpush2.msra.mxu0 %v2748
      %2916 = vmatprep.subr.mxu0 %v2747
      %2917 = vmatpush2.msra.mxu0 %v2746
      %2918 = vmatprep.mubr.f32.mxu0 %v2711
      %2919 = vmatmul.mubr.f32.gmra.mxu0 %v2710
      %v2920 = vpop.f32.mrf.mxu0
      %v2921 = vadd.f32 %v2847, %v2920
      %v2922 = vpop.f32.mrf.mxu0
      %v2923 = vadd.f32 %v2851, %v2922
      %2924 = vdwg.mxu0
      %2925 = vmatprep.subr.mxu0 %v2809
      %2926 = vmatpush1.msra.mxu0 %v2808
      %2927 = vmatprep.subr.mxu0 %v2807
      %2928 = vmatpush1.msra.mxu0 %v2806
      %2929 = vmatprep.subr.mxu0 %v2805
      %2930 = vmatpush1.msra.mxu0 %v2804
      %2931 = vmatprep.subr.mxu0 %v2803
      %2932 = vmatpush1.msra.mxu0 %v2802
      %2933 = vmatprep.subr.mxu0 %v2801
      %2934 = vmatpush1.msra.mxu0 %v2800
      %2935 = vmatprep.subr.mxu0 %v2799
      %2936 = vmatpush1.msra.mxu0 %v2798
      %2937 = vmatprep.subr.mxu0 %v2797
      %2938 = vmatpush1.msra.mxu0 %v2796
      %2939 = vmatprep.subr.mxu0 %v2795
      %2940 = vmatpush1.msra.mxu0 %v2794
      %2941 = vmatprep.subr.mxu0 %v2793
      %2942 = vmatpush1.msra.mxu0 %v2792
      %2943 = vmatprep.subr.mxu0 %v2791
      %2944 = vmatpush1.msra.mxu0 %v2790
      %2945 = vmatprep.subr.mxu0 %v2789
      %2946 = vmatpush1.msra.mxu0 %v2788
      %2947 = vmatprep.subr.mxu0 %v2787
      %2948 = vmatpush1.msra.mxu0 %v2786
      %2949 = vmatprep.subr.mxu0 %v2785
      %2950 = vmatpush1.msra.mxu0 %v2784
      %2951 = vmatprep.subr.mxu0 %v2783
      %2952 = vmatpush1.msra.mxu0 %v2782
      %2953 = vmatprep.subr.mxu0 %v2781
      %2954 = vmatpush1.msra.mxu0 %v2780
      %2955 = vmatprep.subr.mxu0 %v2779
      %2956 = vmatpush1.msra.mxu0 %v2778
      %2957 = vmatprep.subr.mxu0 %v2841
      %2958 = vmatpush2.msra.mxu0 %v2840
      %2959 = vmatprep.subr.mxu0 %v2839
      %2960 = vmatpush2.msra.mxu0 %v2838
      %2961 = vmatprep.subr.mxu0 %v2837
      %2962 = vmatpush2.msra.mxu0 %v2836
      %2963 = vmatprep.subr.mxu0 %v2835
      %2964 = vmatpush2.msra.mxu0 %v2834
      %2965 = vmatprep.subr.mxu0 %v2833
      %2966 = vmatpush2.msra.mxu0 %v2832
      %2967 = vmatprep.subr.mxu0 %v2831
      %2968 = vmatpush2.msra.mxu0 %v2830
      %2969 = vmatprep.subr.mxu0 %v2829
      %2970 = vmatpush2.msra.mxu0 %v2828
      %2971 = vmatprep.subr.mxu0 %v2827
      %2972 = vmatpush2.msra.mxu0 %v2826
      %2973 = vmatprep.subr.mxu0 %v2825
      %2974 = vmatpush2.msra.mxu0 %v2824
      %2975 = vmatprep.subr.mxu0 %v2823
      %2976 = vmatpush2.msra.mxu0 %v2822
      %2977 = vmatprep.subr.mxu0 %v2821
      %2978 = vmatpush2.msra.mxu0 %v2820
      %2979 = vmatprep.subr.mxu0 %v2819
      %2980 = vmatpush2.msra.mxu0 %v2818
      %2981 = vmatprep.subr.mxu0 %v2817
      %2982 = vmatpush2.msra.mxu0 %v2816
      %2983 = vmatprep.subr.mxu0 %v2815
      %2984 = vmatpush2.msra.mxu0 %v2814
      %2985 = vmatprep.subr.mxu0 %v2813
      %2986 = vmatpush2.msra.mxu0 %v2812
      %2987 = vmatprep.subr.mxu0 %v2811
      %2988 = vmatpush2.msra.mxu0 %v2810
      %2989 = vmatprep.mubr.f32.mxu0 %v2713
      %2990 = vmatmul.mubr.f32.gmra.mxu0 %v2712
      %v2991 = vpop.f32.mrf.mxu0
      %v2992 = vadd.f32 %v2921, %v2991
      %v2993 = vpop.f32.mrf.mxu0
      %v2994 = vadd.f32 %v2923, %v2993
      %2995 = vdwg.mxu0
      %v2996 = vmax.f32 %v2992, 0.0
      %v2997 = vmax.f32 %v2994, 0.0
      %v2998 = vld [vmem:[#allocation20] sm:$0xff]
      %v2999 = vld [vmem:[#allocation20 + $0x8] sm:$0xff]
      %v3000 = vld [vmem:[#allocation20 + $0x10] sm:$0xff]
      %v3001 = vld [vmem:[#allocation20 + $0x18] sm:$0xff]
      %v3002 = vld [vmem:[#allocation20 + $0x20] sm:$0xff]
      %v3003 = vld [vmem:[#allocation20 + $0x28] sm:$0xff]
      %v3004 = vld [vmem:[#allocation20 + $0x30] sm:$0xff]
      %v3005 = vld [vmem:[#allocation20 + $0x38] sm:$0xff]
      %v3006 = vld [vmem:[#allocation20 + $0x40] sm:$0xff]
      %v3007 = vld [vmem:[#allocation20 + $0x48] sm:$0xff]
      %v3008 = vld [vmem:[#allocation20 + $0x50] sm:$0xff]
      %v3009 = vld [vmem:[#allocation20 + $0x58] sm:$0xff]
      %v3010 = vld [vmem:[#allocation20 + $0x60] sm:$0xff]
      %v3011 = vld [vmem:[#allocation20 + $0x68] sm:$0xff]
      %v3012 = vld [vmem:[#allocation20 + $0x70] sm:$0xff]
      %v3013 = vld [vmem:[#allocation20 + $0x78] sm:$0xff]
      %v3014 = vld [vmem:[#allocation20 + $0x80] sm:$0xff]
      %v3015 = vld [vmem:[#allocation20 + $0x88] sm:$0xff]
      %v3016 = vld [vmem:[#allocation20 + $0x90] sm:$0xff]
      %v3017 = vld [vmem:[#allocation20 + $0x98] sm:$0xff]
      %v3018 = vld [vmem:[#allocation20 + $0xa0] sm:$0xff]
      %v3019 = vld [vmem:[#allocation20 + $0xa8] sm:$0xff]
      %v3020 = vld [vmem:[#allocation20 + $0xb0] sm:$0xff]
      %v3021 = vld [vmem:[#allocation20 + $0xb8] sm:$0xff]
      %v3022 = vld [vmem:[#allocation20 + $0xc0] sm:$0xff]
      %v3023 = vld [vmem:[#allocation20 + $0xc8] sm:$0xff]
      %v3024 = vld [vmem:[#allocation20 + $0xd0] sm:$0xff]
      %v3025 = vld [vmem:[#allocation20 + $0xd8] sm:$0xff]
      %v3026 = vld [vmem:[#allocation20 + $0xe0] sm:$0xff]
      %v3027 = vld [vmem:[#allocation20 + $0xe8] sm:$0xff]
      %v3028 = vld [vmem:[#allocation20 + $0xf0] sm:$0xff]
      %v3029 = vld [vmem:[#allocation20 + $0xf8] sm:$0xff]
      %v3030 = vld [vmem:[#allocation21] sm:$0x1]
      %v3032 = vlaneseq
      %v3033 = vshrl.u32 %v3032, 7
      %v3034 = vsub.s32 0, %v3033
      %v3035 = vrot.slane %v3030, %v3034
      %3037 = vmatprep.subr.mxu0 0.0
      %3038 = vmatpush1.msra.mxu0 %v3013
      %3039 = vmatprep.subr.mxu0 0.0
      %3040 = vmatpush1.msra.mxu0 %v3012
      %3041 = vmatprep.subr.mxu0 0.0
      %3042 = vmatpush1.msra.mxu0 %v3011
      %3043 = vmatprep.subr.mxu0 0.0
      %3044 = vmatpush1.msra.mxu0 %v3010
      %3045 = vmatprep.subr.mxu0 0.0
      %3046 = vmatpush1.msra.mxu0 %v3009
      %3047 = vmatprep.subr.mxu0 0.0
      %3048 = vmatpush1.msra.mxu0 %v3008
      %3049 = vmatprep.subr.mxu0 0.0
      %3050 = vmatpush1.msra.mxu0 %v3007
      %3051 = vmatprep.subr.mxu0 0.0
      %3052 = vmatpush1.msra.mxu0 %v3006
      %3053 = vmatprep.subr.mxu0 0.0
      %3054 = vmatpush1.msra.mxu0 %v3005
      %3055 = vmatprep.subr.mxu0 0.0
      %3056 = vmatpush1.msra.mxu0 %v3004
      %3057 = vmatprep.subr.mxu0 0.0
      %3058 = vmatpush1.msra.mxu0 %v3003
      %3059 = vmatprep.subr.mxu0 0.0
      %3060 = vmatpush1.msra.mxu0 %v3002
      %3061 = vmatprep.subr.mxu0 0.0
      %3062 = vmatpush1.msra.mxu0 %v3001
      %3063 = vmatprep.subr.mxu0 0.0
      %3064 = vmatpush1.msra.mxu0 %v3000
      %3065 = vmatprep.subr.mxu0 0.0
      %3066 = vmatpush1.msra.mxu0 %v2999
      %3067 = vmatprep.subr.mxu0 0.0
      %3068 = vmatpush1.msra.mxu0 %v2998
      %3069 = vmatprep.subr.mxu0 0.0
      %3070 = vmatpush2.msra.mxu0 %v3029
      %3071 = vmatprep.subr.mxu0 0.0
      %3072 = vmatpush2.msra.mxu0 %v3028
      %3073 = vmatprep.subr.mxu0 0.0
      %3074 = vmatpush2.msra.mxu0 %v3027
      %3075 = vmatprep.subr.mxu0 0.0
      %3076 = vmatpush2.msra.mxu0 %v3026
      %3077 = vmatprep.subr.mxu0 0.0
      %3078 = vmatpush2.msra.mxu0 %v3025
      %3079 = vmatprep.subr.mxu0 0.0
      %3080 = vmatpush2.msra.mxu0 %v3024
      %3081 = vmatprep.subr.mxu0 0.0
      %3082 = vmatpush2.msra.mxu0 %v3023
      %3083 = vmatprep.subr.mxu0 0.0
      %3084 = vmatpush2.msra.mxu0 %v3022
      %3085 = vmatprep.subr.mxu0 0.0
      %3086 = vmatpush2.msra.mxu0 %v3021
      %3087 = vmatprep.subr.mxu0 0.0
      %3088 = vmatpush2.msra.mxu0 %v3020
      %3089 = vmatprep.subr.mxu0 0.0
      %3090 = vmatpush2.msra.mxu0 %v3019
      %3091 = vmatprep.subr.mxu0 0.0
      %3092 = vmatpush2.msra.mxu0 %v3018
      %3093 = vmatprep.subr.mxu0 0.0
      %3094 = vmatpush2.msra.mxu0 %v3017
      %3095 = vmatprep.subr.mxu0 0.0
      %3096 = vmatpush2.msra.mxu0 %v3016
      %3097 = vmatprep.subr.mxu0 0.0
      %3098 = vmatpush2.msra.mxu0 %v3015
      %3099 = vmatprep.subr.mxu0 0.0
      %3100 = vmatpush2.msra.mxu0 %v3014
      %3101 = vmatprep.mubr.f32.mxu0 %v2997
      %3102 = vmatmul.mubr.f32.gmra.mxu0 %v2996
      %v3103 = vpop.f32.mrf.mxu0
      %v3104 = vadd.f32 %v3035, %v3103
      %v3105 = vpop.f32.mrf.mxu0
      %3106 = vdwg.mxu0
      %v3109 = vunpack.c.l.s4 1966171168
      %v3110 = vunpack.c.0.s8 %v3109
      %v3111 = vlaneseq
      %v3112 = vshrl.u32 %v3111, 7
      %v3113 = vsub.s32 %v3110, %v3112
      %v3114 = vrot.slane %v3104, %v3113
      %v3115 = vcombine.high %v3114, %v3114
      %v3117 = vunpack.c.l.s4 1966171168
      %v3118 = vunpack.c.0.s8 %v3117
      %v3119 = vlaneseq
      %v3120 = vshrl.u32 %v3119, 7
      %v3121 = vsub.s32 %v3118, %v3120
      %v3122 = vrot.slane %v3114, %v3121
      %v3124 = vunpack.c.l.s4 1966171168
      %v3125 = vunpack.c.0.s8 %v3124
      %v3126 = vlaneseq
      %v3127 = vshrl.u32 %v3126, 7
      %v3128 = vsub.s32 %v3125, %v3127
      %v3129 = vrot.slane %v3115, %v3128
      %3132 = vst [vmem:[#allocation23] sm:$0x1] %v3122
      %3133 = vst [vmem:[#allocation23 + $0x1] sm:$0x1] %v3129
    $region113: #{tpu_custom_call.1} parent=1 // pred_fallthru
      _
    // Predicated region
    $region114: #{tpu_custom_call.1} parent=1 // pred_check
      _
    $region115: #{tpu_custom_call.1} parent=1 // pred_check_branch
      %3135 = sbr.rel (0) target = $region117
    $region116: #{tpu_custom_call.1} parent=1 // pred_region
      %s3137 = ssub.s32 32, 32
      %3138 = vsyncadd [#allocation5], %s3137
      %s3139 = sshll.u32 [#allocation23], 4
      %s3140 = int_to_ptr.vmem [resolvable:$true] %s3139
      %3145 = dma.vmem_to_hbm [thread:$0]  %s3140, 32, %s13, [#allocation5], 16, 16, 1
    $region117: #{tpu_custom_call.1} parent=1 // pred_fallthru
      _
    // Predicated region
    $region118: #{tpu_custom_call.1} parent=1 // pred_check
      _
    $region119: #{tpu_custom_call.1} parent=1 // pred_check_branch
      %3147 = sbr.rel (0) target = $region121
    $region120: #{tpu_custom_call.1} parent=1 // pred_region
      %3148 = dma.done [#allocation5], 32
    $region121: #{tpu_custom_call.1} parent=1 // pred_fallthru
      _
    %3149 = vsyncpa [#allocation4], 1
    %3150 = vsyncpa [#allocation7], 1
    %3151 = vsyncpa [#allocation10], 1
    %3152 = vsyncpa [#allocation13], 1
    %3153 = vsyncpa [#allocation16], 1
    %3154 = vsyncpa [#allocation19], 1
    %3155 = vsyncpa [#allocation22], 1
    %3156 = vsyncpa [#allocation5], 1

// kernel: tpu_custom_call.1
$region0: #{tpu_custom_call.1}
  #allocation0 [shape = 'u32[]', space=smem, size = 0x4, offset = 0x4, fixed_abs, tag = 'smem constant byte address 0x4 - core index']
  #allocation1 [shape = 'u32[144,128]{1,0:T(1,128)}', space=vmem, size = 0x12000, scoped, tag = 'internal scratch']
  #allocation2 [shape = 'f32[2,1024]{1,0:T(2,128)}', space=vmem, size = 0x2000, scoped, tag = 'scratch operand']
  %s0 = inlined_call_operand.vmem [shape: f32[2,32,8], index: 0, kind: input, shape index: {}]
  %s1 = inlined_call_operand.hbm [shape: f32[8,64], index: 1, kind: input, shape index: {}]
  %s2 = inlined_call_operand.hbm [shape: f32[1,64], index: 2, kind: input, shape index: {}]
  %s3 = inlined_call_operand.hbm [shape: f32[64,128], index: 3, kind: input, shape index: {}]
  %s4 = inlined_call_operand.hbm [shape: f32[1,128], index: 4, kind: input, shape index: {}]
  %s5 = inlined_call_operand.hbm [shape: f32[128,1024], index: 5, kind: input, shape index: {}]
  %s6 = inlined_call_operand.hbm [shape: f32[1,1024], index: 6, kind: input, shape index: {}]
  %s7 = inlined_call_operand.hbm [shape: f32[1024,512], index: 7, kind: input, shape index: {}]
  %s8 = inlined_call_operand.hbm [shape: f32[1,512], index: 8, kind: input, shape index: {}]
  %s9 = inlined_call_operand.hbm [shape: f32[512,256], index: 9, kind: input, shape index: {}]
  %s10 = inlined_call_operand.hbm [shape: f32[1,256], index: 10, kind: input, shape index: {}]
  %s11 = inlined_call_operand.hbm [shape: f32[256,128], index: 11, kind: input, shape index: {}]
  %s12 = inlined_call_operand.hbm [shape: f32[1,128], index: 12, kind: input, shape index: {}]
  %s13 = inlined_call_operand.hbm [shape: f32[2,1,128], index: 13, kind: output, shape index: {}]
  %s14 = sld [smem:[#allocation0]]
  $region122: #{tpu_custom_call.1} parent=0
    _
  %s16 = ssub.s32 1, %s14
  %s17 = scalar_select 0, %s16, %s14
  $region1: #{tpu_custom_call.1} parent=0
    #allocation3 [shape = 'u8[4096]{0}', space=vmem, size = 0x1000, scoped, tag = 'input window, operand 1, single buffered']
    #allocation4 [shape = 's32[1]{0}', space=sflag, size = 0x4, scoped, tag = 'scoped memory for tpu_custom_call.1']
    #allocation5 [shape = 's32[1]{0}', space=sflag, size = 0x4, scoped, tag = 'scoped memory for tpu_custom_call.1']
    #allocation6 [shape = 'u8[512]{0}', space=vmem, size = 0x400, scoped, tag = 'input window, operand 2, single buffered']
    #allocation7 [shape = 's32[1]{0}', space=sflag, size = 0x4, scoped, tag = 'scoped memory for tpu_custom_call.1']
    #allocation8 [shape = 'u8[32768]{0}', space=vmem, size = 0x8000, scoped, tag = 'input window, operand 3, single buffered']
    #allocation9 [shape = 'u8[512]{0}', space=vmem, size = 0x400, scoped, tag = 'input window, operand 4, single buffered']
    #allocation10 [shape = 's32[1]{0}', space=sflag, size = 0x4, scoped, tag = 'scoped memory for tpu_custom_call.1']
    #allocation11 [shape = 'u8[524288]{0}', space=vmem, size = 0x80000, scoped, tag = 'input window, operand 5, single buffered']
    #allocation12 [shape = 'u8[4096]{0}', space=vmem, size = 0x1000, scoped, tag = 'input window, operand 6, single buffered']
    #allocation13 [shape = 's32[1]{0}', space=sflag, size = 0x4, scoped, tag = 'scoped memory for tpu_custom_call.1']
    #allocation14 [shape = 'u8[2097152]{0}', space=vmem, size = 0x200000, scoped, tag = 'input window, operand 7, single buffered']
    #allocation15 [shape = 'u8[2048]{0}', space=vmem, size = 0x800, scoped, tag = 'input window, operand 8, single buffered']
    #allocation16 [shape = 's32[1]{0}', space=sflag, size = 0x4, scoped, tag = 'scoped memory for tpu_custom_call.1']
    #allocation17 [shape = 'u8[524288]{0}', space=vmem, size = 0x80000, scoped, tag = 'input window, operand 9, single buffered']
    #allocation18 [shape = 'u8[1024]{0}', space=vmem, size = 0x400, scoped, tag = 'input window, operand 10, single buffered']
    #allocation19 [shape = 's32[1]{0}', space=sflag, size = 0x4, scoped, tag = 'scoped memory for tpu_custom_call.1']
    #allocation20 [shape = 'u8[131072]{0}', space=vmem, size = 0x20000, scoped, tag = 'input window, operand 11, single buffered']
    #allocation21 [shape = 'u8[512]{0}', space=vmem, size = 0x400, scoped, tag = 'input window, operand 12, single buffered']
    #allocation22 [shape = 's32[1]{0}', space=sflag, size = 0x4, scoped, tag = 'scoped memory for tpu_custom_call.1']
    #allocation23 [shape = 'u8[1024]{0}', space=vmem, size = 0x400, scoped, tag = 'output window, operand 0, single buffered']
    %18 = vsyncpa [#allocation4], 0
    %19 = vsyncpa [#allocation7], 0
    %20 = vsyncpa [#allocation10], 0
    %21 = vsyncpa [#allocation13], 0
    %22 = vsyncpa [#allocation16], 0
    %23 = vsyncpa [#allocation19], 0
    %24 = vsyncpa [#allocation22], 0
    %25 = vsyncpa [#allocation5], 0
    // Predicated region
    $region2: #{tpu_custom_call.1} parent=1 // pred_check
      _
    $region3: #{tpu_custom_call.1} parent=1 // pred_check_branch
      %27 = sbr.rel (0) target = $region5
    $region4: #{tpu_custom_call.1} parent=1 // pred_region
      _
    $region5: #{tpu_custom_call.1} parent=1 // pred_fallthru
      _
    // Predicated region
    $region6: #{tpu_custom_call.1} parent=1 // pred_check
      _
    $region7: #{tpu_custom_call.1} parent=1 // pred_check_branch
      %29 = sbr.rel (0) target = $region9
    $region8: #{tpu_custom_call.1} parent=1 // pred_region
      %s31 = ssub.s32 128, 128
      %32 = vsyncadd [#allocation4], %s31
      %s34 = sshll.u32 [#allocation3], 4
      %s35 = int_to_ptr.vmem [resolvable:$true] %s34
      %37 = dma.hbm_to_vmem [thread:$0]  %s1, 128, %s35, [#allocation4]
    $region9: #{tpu_custom_call.1} parent=1 // pred_fallthru
      _
    // Predicated region
    $region10: #{tpu_custom_call.1} parent=1 // pred_check
      _
    $region11: #{tpu_custom_call.1} parent=1 // pred_check_branch
      %39 = sbr.rel (0) target = $region13
    $region12: #{tpu_custom_call.1} parent=1 // pred_region
      %s41 = ssub.s32 16, 16
      %42 = vsyncadd [#allocation7], %s41
      %s44 = sshll.u32 [#allocation6], 4
      %s45 = int_to_ptr.vmem [resolvable:$true] %s44
      %47 = dma.hbm_to_vmem [thread:$0]  %s2, 16, %s45, [#allocation7]
    $region13: #{tpu_custom_call.1} parent=1 // pred_fallthru
      _
    // Predicated region
    $region14: #{tpu_custom_call.1} parent=1 // pred_check
      _
    $region15: #{tpu_custom_call.1} parent=1 // pred_check_branch
      %49 = sbr.rel (0) target = $region17
    $region16: #{tpu_custom_call.1} parent=1 // pred_region
      %s51 = ssub.s32 1024, 1024
      %52 = vsyncadd [#allocation7], %s51
      %s53 = sshll.u32 [#allocation8], 4
      %s54 = int_to_ptr.vmem [resolvable:$true] %s53
      %59 = dma.hbm_to_vmem [thread:$0]  %s3, 1024, %s54, [#allocation7], 128, 128, 8
    $region17: #{tpu_custom_call.1} parent=1 // pred_fallthru
      _
    // Predicated region
    $region18: #{tpu_custom_call.1} parent=1 // pred_check
      _
    $region19: #{tpu_custom_call.1} parent=1 // pred_check_branch
      %61 = sbr.rel (0) target = $region21
    $region20: #{tpu_custom_call.1} parent=1 // pred_region
      %s63 = ssub.s32 16, 16
      %64 = vsyncadd [#allocation10], %s63
      %s66 = sshll.u32 [#allocation9], 4
      %s67 = int_to_ptr.vmem [resolvable:$true] %s66
      %69 = dma.hbm_to_vmem [thread:$0]  %s4, 16, %s67, [#allocation10]
    $region21: #{tpu_custom_call.1} parent=1 // pred_fallthru
      _
    // Predicated region
    $region22: #{tpu_custom_call.1} parent=1 // pred_check
      _
    $region23: #{tpu_custom_call.1} parent=1 // pred_check_branch
      %71 = sbr.rel (0) target = $region25
    $region24: #{tpu_custom_call.1} parent=1 // pred_region
      %s73 = ssub.s32 16384, 16384
      %74 = vsyncadd [#allocation10], %s73
      %s75 = sshll.u32 [#allocation11], 4
      %s76 = int_to_ptr.vmem [resolvable:$true] %s75
      %81 = dma.hbm_to_vmem [thread:$0]  %s5, 16384, %s76, [#allocation10], 1024, 1024, 64
    $region25: #{tpu_custom_call.1} parent=1 // pred_fallthru
      _
    // Predicated region
    $region26: #{tpu_custom_call.1} parent=1 // pred_check
      _
    $region27: #{tpu_custom_call.1} parent=1 // pred_check_branch
      %83 = sbr.rel (0) target = $region29
    $region28: #{tpu_custom_call.1} parent=1 // pred_region
      %s85 = ssub.s32 128, 128
      %86 = vsyncadd [#allocation13], %s85
      %s88 = sshll.u32 [#allocation12], 4
      %s89 = int_to_ptr.vmem [resolvable:$true] %s88
      %91 = dma.hbm_to_vmem [thread:$0]  %s6, 128, %s89, [#allocation13]
    $region29: #{tpu_custom_call.1} parent=1 // pred_fallthru
      _
    // Predicated region
    $region30: #{tpu_custom_call.1} parent=1 // pred_check
      _
    $region31: #{tpu_custom_call.1} parent=1 // pred_check_branch
      %93 = sbr.rel (0) target = $region33
    $region32: #{tpu_custom_call.1} parent=1 // pred_region
      %s95 = ssub.s32 65536, 65536
      %96 = vsyncadd [#allocation13], %s95
      %s97 = sshll.u32 [#allocation14], 4
      %s98 = int_to_ptr.vmem [resolvable:$true] %s97
      %103 = dma.hbm_to_vmem [thread:$0]  %s7, 65536, %s98, [#allocation13], 512, 512, 32
    $region33: #{tpu_custom_call.1} parent=1 // pred_fallthru
      _
    // Predicated region
    $region34: #{tpu_custom_call.1} parent=1 // pred_check
      _
    $region35: #{tpu_custom_call.1} parent=1 // pred_check_branch
      %105 = sbr.rel (0) target = $region37
    $region36: #{tpu_custom_call.1} parent=1 // pred_region
      %s107 = ssub.s32 64, 64
      %108 = vsyncadd [#allocation16], %s107
      %s110 = sshll.u32 [#allocation15], 4
      %s111 = int_to_ptr.vmem [resolvable:$true] %s110
      %113 = dma.hbm_to_vmem [thread:$0]  %s8, 64, %s111, [#allocation16]
    $region37: #{tpu_custom_call.1} parent=1 // pred_fallthru
      _
    // Predicated region
    $region38: #{tpu_custom_call.1} parent=1 // pred_check
      _
    $region39: #{tpu_custom_call.1} parent=1 // pred_check_branch
      %115 = sbr.rel (0) target = $region41
    $region40: #{tpu_custom_call.1} parent=1 // pred_region
      %s117 = ssub.s32 16384, 16384
      %118 = vsyncadd [#allocation16], %s117
      %s119 = sshll.u32 [#allocation17], 4
      %s120 = int_to_ptr.vmem [resolvable:$true] %s119
      %125 = dma.hbm_to_vmem [thread:$0]  %s9, 16384, %s120, [#allocation16], 256, 256, 16
    $region41: #{tpu_custom_call.1} parent=1 // pred_fallthru
      _
    // Predicated region
    $region42: #{tpu_custom_call.1} parent=1 // pred_check
      _
    $region43: #{tpu_custom_call.1} parent=1 // pred_check_branch
      %127 = sbr.rel (0) target = $region45
    $region44: #{tpu_custom_call.1} parent=1 // pred_region
      %s129 = ssub.s32 32, 32
      %130 = vsyncadd [#allocation19], %s129
      %s132 = sshll.u32 [#allocation18], 4
      %s133 = int_to_ptr.vmem [resolvable:$true] %s132
      %135 = dma.hbm_to_vmem [thread:$0]  %s10, 32, %s133, [#allocation19]
    $region45: #{tpu_custom_call.1} parent=1 // pred_fallthru
      _
    // Predicated region
    $region46: #{tpu_custom_call.1} parent=1 // pred_check
      _
    $region47: #{tpu_custom_call.1} parent=1 // pred_check_branch
      %137 = sbr.rel (0) target = $region49
    $region48: #{tpu_custom_call.1} parent=1 // pred_region
      %s139 = ssub.s32 4096, 4096
      %140 = vsyncadd [#allocation19], %s139
      %s141 = sshll.u32 [#allocation20], 4
      %s142 = int_to_ptr.vmem [resolvable:$true] %s141
      %147 = dma.hbm_to_vmem [thread:$0]  %s11, 4096, %s142, [#allocation19], 128, 128, 8
    $region49: #{tpu_custom_call.1} parent=1 // pred_fallthru
      _
    // Predicated region
    $region50: #{tpu_custom_call.1} parent=1 // pred_check
      _
    $region51: #{tpu_custom_call.1} parent=1 // pred_check_branch
      %149 = sbr.rel (0) target = $region53
    $region52: #{tpu_custom_call.1} parent=1 // pred_region
      %s151 = ssub.s32 16, 16
      %152 = vsyncadd [#allocation22], %s151
      %s154 = sshll.u32 [#allocation21], 4
      %s155 = int_to_ptr.vmem [resolvable:$true] %s154
      %157 = dma.hbm_to_vmem [thread:$0]  %s12, 16, %s155, [#allocation22]
    $region53: #{tpu_custom_call.1} parent=1 // pred_fallthru
      _
    // Predicated region
    $region54: #{tpu_custom_call.1} parent=1 // pred_check
      _
    $region55: #{tpu_custom_call.1} parent=1 // pred_check_branch
      %159 = sbr.rel (0) target = $region57
    $region56: #{tpu_custom_call.1} parent=1 // pred_region
      %160 = dma.done [#allocation4], 128
    $region57: #{tpu_custom_call.1} parent=1 // pred_fallthru
      _
    // Predicated region
    $region58: #{tpu_custom_call.1} parent=1 // pred_check
      _
    $region59: #{tpu_custom_call.1} parent=1 // pred_check_branch
      %162 = sbr.rel (0) target = $region61
    $region60: #{tpu_custom_call.1} parent=1 // pred_region
      %163 = dma.done [#allocation7], 16
    $region61: #{tpu_custom_call.1} parent=1 // pred_fallthru
      _
    // Predicated region
    $region62: #{tpu_custom_call.1} parent=1 // pred_check
      _
    $region63: #{tpu_custom_call.1} parent=1 // pred_check_branch
      %165 = sbr.rel (0) target = $region65
    $region64: #{tpu_custom_call.1} parent=1 // pred_region
      %166 = dma.done [#allocation7], 1024
    $region65: #{tpu_custom_call.1} parent=1 // pred_fallthru
      _
    // Predicated region
    $region66: #{tpu_custom_call.1} parent=1 // pred_check
      _
    $region67: #{tpu_custom_call.1} parent=1 // pred_check_branch
      %168 = sbr.rel (0) target = $region69
    $region68: #{tpu_custom_call.1} parent=1 // pred_region
      %169 = dma.done [#allocation10], 16
    $region69: #{tpu_custom_call.1} parent=1 // pred_fallthru
      _
    // Predicated region
    $region70: #{tpu_custom_call.1} parent=1 // pred_check
      _
    $region71: #{tpu_custom_call.1} parent=1 // pred_check_branch
      %171 = sbr.rel (0) target = $region73
    $region72: #{tpu_custom_call.1} parent=1 // pred_region
      %172 = dma.done [#allocation10], 16384
    $region73: #{tpu_custom_call.1} parent=1 // pred_fallthru
      _
    // Predicated region
    $region74: #{tpu_custom_call.1} parent=1 // pred_check
      _
    $region75: #{tpu_custom_call.1} parent=1 // pred_check_branch
      %174 = sbr.rel (0) target = $region77
    $region76: #{tpu_custom_call.1} parent=1 // pred_region
      %175 = dma.done [#allocation13], 128
    $region77: #{tpu_custom_call.1} parent=1 // pred_fallthru
      _
    // Predicated region
    $region78: #{tpu_custom_call.1} parent=1 // pred_check
      _
    $region79: #{tpu_custom_call.1} parent=1 // pred_check_branch
      %177 = sbr.rel (0) target = $region81
    $region80: #{tpu_custom_call.1} parent=1 // pred_region
      %178 = dma.done [#allocation13], 65536
    $region81: #{tpu_custom_call.1} parent=1 // pred_fallthru
      _
    // Predicated region
    $region82: #{tpu_custom_call.1} parent=1 // pred_check
      _
    $region83: #{tpu_custom_call.1} parent=1 // pred_check_branch
      %180 = sbr.rel (0) target = $region85
    $region84: #{tpu_custom_call.1} parent=1 // pred_region
      %181 = dma.done [#allocation16], 64
    $region85: #{tpu_custom_call.1} parent=1 // pred_fallthru
      _
    // Predicated region
    $region86: #{tpu_custom_call.1} parent=1 // pred_check
      _
    $region87: #{tpu_custom_call.1} parent=1 // pred_check_branch
      %183 = sbr.rel (0) target = $region89
    $region88: #{tpu_custom_call.1} parent=1 // pred_region
      %184 = dma.done [#allocation16], 16384
    $region89: #{tpu_custom_call.1} parent=1 // pred_fallthru
      _
    // Predicated region
    $region90: #{tpu_custom_call.1} parent=1 // pred_check
      _
    $region91: #{tpu_custom_call.1} parent=1 // pred_check_branch
      %186 = sbr.rel (0) target = $region93
    $region92: #{tpu_custom_call.1} parent=1 // pred_region
      %187 = dma.done [#allocation19], 32
    $region93: #{tpu_custom_call.1} parent=1 // pred_fallthru
      _
    // Predicated region
    $region94: #{tpu_custom_call.1} parent=1 // pred_check
      _
    $region95: #{tpu_custom_call.1} parent=1 // pred_check_branch
      %189 = sbr.rel (0) target = $region97
    $region96: #{tpu_custom_call.1} parent=1 // pred_region
      %190 = dma.done [#allocation19], 4096
    $region97: #{tpu_custom_call.1} parent=1 // pred_fallthru
      _
    // Predicated region
    $region98: #{tpu_custom_call.1} parent=1 // pred_check
      _
    $region99: #{tpu_custom_call.1} parent=1 // pred_check_branch
      %192 = sbr.rel (0) target = $region101
    $region100: #{tpu_custom_call.1} parent=1 // pred_region
      %193 = dma.done [#allocation22], 16
    $region101: #{tpu_custom_call.1} parent=1 // pred_fallthru
      _
    %v194 = vld [vmem:[%s0] sm:$0xff]
    %v195 = vld [vmem:[%s0 + $0x8] sm:$0xff]
    %v196 = vld [vmem:[%s0 + $0x10] sm:$0xff]
    %v197 = vld [vmem:[%s0 + $0x18] sm:$0xff]
    %v198 = vld [vmem:[%s0 + $0x20] sm:$0xff]
    %v199 = vld [vmem:[%s0 + $0x28] sm:$0xff]
    %v200 = vld [vmem:[%s0 + $0x30] sm:$0xff]
    %v201 = vld [vmem:[%s0 + $0x38] sm:$0xff]
    %v202 = vld [vmem:[#allocation3] sm:$0xff]
    %v203 = vld [vmem:[#allocation6] sm:$0x1]
    %v205 = vlaneseq
    %v206 = vshrl.u32 %v205, 7
    %v207 = vsub.s32 0, %v206
    %v208 = vrot.slane %v203, %v207
    %vm210 = vcmask 64512
    %v212 = vsel %vm210, %v194, 0
    %v215 = vsel %vm210, %v195, 0
    %v218 = vsel %vm210, %v196, 0
    %v221 = vsel %vm210, %v197, 0
    %v224 = vsel %vm210, %v198, 0
    %v227 = vsel %vm210, %v199, 0
    %v230 = vsel %vm210, %v200, 0
    %v233 = vsel %vm210, %v201, 0
    %235 = vmatprep.subr.mxu0 0.0
    %236 = vmatpush1.msra.mxu0 0.0
    %237 = vmatprep.subr.mxu0 0.0
    %238 = vmatpush1.msra.mxu0 0.0
    %239 = vmatprep.subr.mxu0 0.0
    %240 = vmatpush1.msra.mxu0 0.0
    %241 = vmatprep.subr.mxu0 0.0
    %242 = vmatpush1.msra.mxu0 0.0
    %243 = vmatprep.subr.mxu0 0.0
    %244 = vmatpush1.msra.mxu0 0.0
    %245 = vmatprep.subr.mxu0 0.0
    %246 = vmatpush1.msra.mxu0 0.0
    %247 = vmatprep.subr.mxu0 0.0
    %248 = vmatpush1.msra.mxu0 0.0
    %249 = vmatprep.subr.mxu0 0.0
    %250 = vmatpush1.msra.mxu0 0.0
    %251 = vmatprep.subr.mxu0 0.0
    %252 = vmatpush1.msra.mxu0 0.0
    %253 = vmatprep.subr.mxu0 0.0
    %254 = vmatpush1.msra.mxu0 0.0
    %255 = vmatprep.subr.mxu0 0.0
    %256 = vmatpush1.msra.mxu0 0.0
    %257 = vmatprep.subr.mxu0 0.0
    %258 = vmatpush1.msra.mxu0 0.0
    %259 = vmatprep.subr.mxu0 0.0
    %260 = vmatpush1.msra.mxu0 0.0
    %261 = vmatprep.subr.mxu0 0.0
    %262 = vmatpush1.msra.mxu0 0.0
    %263 = vmatprep.subr.mxu0 0.0
    %264 = vmatpush1.msra.mxu0 0.0
    %265 = vmatprep.subr.mxu0 0.0
    %266 = vmatpush1.msra.mxu0 %v202
    %267 = vmatprep.subr.mxu0 0.0
    %268 = vmatpush2.msra.mxu0 0.0
    %269 = vmatprep.subr.mxu0 0.0
    %270 = vmatpush2.msra.mxu0 0.0
    %271 = vmatprep.subr.mxu0 0.0
    %272 = vmatpush2.msra.mxu0 0.0
    %273 = vmatprep.subr.mxu0 0.0
    %274 = vmatpush2.msra.mxu0 0.0
    %275 = vmatprep.subr.mxu0 0.0
    %276 = vmatpush2.msra.mxu0 0.0
    %277 = vmatprep.subr.mxu0 0.0
    %278 = vmatpush2.msra.mxu0 0.0
    %279 = vmatprep.subr.mxu0 0.0
    %280 = vmatpush2.msra.mxu0 0.0
    %281 = vmatprep.subr.mxu0 0.0
    %282 = vmatpush2.msra.mxu0 0.0
    %283 = vmatprep.subr.mxu0 0.0
    %284 = vmatpush2.msra.mxu0 0.0
    %285 = vmatprep.subr.mxu0 0.0
    %286 = vmatpush2.msra.mxu0 0.0
    %287 = vmatprep.subr.mxu0 0.0
    %288 = vmatpush2.msra.mxu0 0.0
    %289 = vmatprep.subr.mxu0 0.0
    %290 = vmatpush2.msra.mxu0 0.0
    %291 = vmatprep.subr.mxu0 0.0
    %292 = vmatpush2.msra.mxu0 0.0
    %293 = vmatprep.subr.mxu0 0.0
    %294 = vmatpush2.msra.mxu0 0.0
    %295 = vmatprep.subr.mxu0 0.0
    %296 = vmatpush2.msra.mxu0 0.0
    %297 = vmatprep.subr.mxu0 0.0
    %298 = vmatpush2.msra.mxu0 0.0
    %299 = vmatprep.mubr.f32.mxu0 0.0
    %300 = vmatmul.mubr.f32.gmra.mxu0 %v212
    %v301 = vpop.f32.mrf.mxu0
    %v302 = vadd.f32 %v208, %v301
    %v303 = vpop.f32.mrf.mxu0
    %304 = vmatprep.mubr.f32.mxu0 0.0
    %305 = vmatmul.mubr.f32.gmra.mxu0 %v215
    %v306 = vpop.f32.mrf.mxu0
    %v307 = vadd.f32 %v208, %v306
    %v308 = vpop.f32.mrf.mxu0
    %309 = vmatprep.mubr.f32.mxu0 0.0
    %310 = vmatmul.mubr.f32.gmra.mxu0 %v218
    %v311 = vpop.f32.mrf.mxu0
    %v312 = vadd.f32 %v208, %v311
    %v313 = vpop.f32.mrf.mxu0
    %314 = vmatprep.mubr.f32.mxu0 0.0
    %315 = vmatmul.mubr.f32.gmra.mxu0 %v221
    %v316 = vpop.f32.mrf.mxu0
    %v317 = vadd.f32 %v208, %v316
    %v318 = vpop.f32.mrf.mxu0
    %319 = vmatprep.mubr.f32.mxu0 0.0
    %320 = vmatmul.mubr.f32.gmra.mxu0 %v224
    %v321 = vpop.f32.mrf.mxu0
    %v322 = vadd.f32 %v208, %v321
    %v323 = vpop.f32.mrf.mxu0
    %324 = vmatprep.mubr.f32.mxu0 0.0
    %325 = vmatmul.mubr.f32.gmra.mxu0 %v227
    %v326 = vpop.f32.mrf.mxu0
    %v327 = vadd.f32 %v208, %v326
    %v328 = vpop.f32.mrf.mxu0
    %329 = vmatprep.mubr.f32.mxu0 0.0
    %330 = vmatmul.mubr.f32.gmra.mxu0 %v230
    %v331 = vpop.f32.mrf.mxu0
    %v332 = vadd.f32 %v208, %v331
    %v333 = vpop.f32.mrf.mxu0
    %334 = vmatprep.mubr.f32.mxu0 0.0
    %335 = vmatmul.mubr.f32.gmra.mxu0 %v233
    %v336 = vpop.f32.mrf.mxu0
    %v337 = vadd.f32 %v208, %v336
    %v338 = vpop.f32.mrf.mxu0
    %339 = vdwg.mxu0
    %v340 = vmax.f32 %v302, 0.0
    %v341 = vmax.f32 %v307, 0.0
    %v342 = vmax.f32 %v312, 0.0
    %v343 = vmax.f32 %v317, 0.0
    %v344 = vmax.f32 %v322, 0.0
    %v345 = vmax.f32 %v327, 0.0
    %v346 = vmax.f32 %v332, 0.0
    %v347 = vmax.f32 %v337, 0.0
    %v348 = vld [vmem:[#allocation8] sm:$0xff]
    %v349 = vld [vmem:[#allocation8 + $0x8] sm:$0xff]
    %v350 = vld [vmem:[#allocation8 + $0x10] sm:$0xff]
    %v351 = vld [vmem:[#allocation8 + $0x18] sm:$0xff]
    %v352 = vld [vmem:[#allocation8 + $0x20] sm:$0xff]
    %v353 = vld [vmem:[#allocation8 + $0x28] sm:$0xff]
    %v354 = vld [vmem:[#allocation8 + $0x30] sm:$0xff]
    %v355 = vld [vmem:[#allocation8 + $0x38] sm:$0xff]
    %v356 = vld [vmem:[#allocation9] sm:$0x1]
    %v358 = vlaneseq
    %v359 = vshrl.u32 %v358, 7
    %v360 = vsub.s32 0, %v359
    %v361 = vrot.slane %v356, %v360
    %vm363 = vcmask 523264
    %v365 = vsel %vm363, %v340, 0
    %v368 = vsel %vm363, %v341, 0
    %v371 = vsel %vm363, %v342, 0
    %v374 = vsel %vm363, %v343, 0
    %v377 = vsel %vm363, %v344, 0
    %v380 = vsel %vm363, %v345, 0
    %v383 = vsel %vm363, %v346, 0
    %v386 = vsel %vm363, %v347, 0
    %388 = vmatprep.subr.mxu0 0.0
    %389 = vmatpush1.msra.mxu0 0.0
    %390 = vmatprep.subr.mxu0 0.0
    %391 = vmatpush1.msra.mxu0 0.0
    %392 = vmatprep.subr.mxu0 0.0
    %393 = vmatpush1.msra.mxu0 0.0
    %394 = vmatprep.subr.mxu0 0.0
    %395 = vmatpush1.msra.mxu0 0.0
    %396 = vmatprep.subr.mxu0 0.0
    %397 = vmatpush1.msra.mxu0 0.0
    %398 = vmatprep.subr.mxu0 0.0
    %399 = vmatpush1.msra.mxu0 0.0
    %400 = vmatprep.subr.mxu0 0.0
    %401 = vmatpush1.msra.mxu0 0.0
    %402 = vmatprep.subr.mxu0 0.0
    %403 = vmatpush1.msra.mxu0 0.0
    %404 = vmatprep.subr.mxu0 0.0
    %405 = vmatpush1.msra.mxu0 %v355
    %406 = vmatprep.subr.mxu0 0.0
    %407 = vmatpush1.msra.mxu0 %v354
    %408 = vmatprep.subr.mxu0 0.0
    %409 = vmatpush1.msra.mxu0 %v353
    %410 = vmatprep.subr.mxu0 0.0
    %411 = vmatpush1.msra.mxu0 %v352
    %412 = vmatprep.subr.mxu0 0.0
    %413 = vmatpush1.msra.mxu0 %v351
    %414 = vmatprep.subr.mxu0 0.0
    %415 = vmatpush1.msra.mxu0 %v350
    %416 = vmatprep.subr.mxu0 0.0
    %417 = vmatpush1.msra.mxu0 %v349
    %418 = vmatprep.subr.mxu0 0.0
    %419 = vmatpush1.msra.mxu0 %v348
    %420 = vmatprep.subr.mxu0 0.0
    %421 = vmatpush2.msra.mxu0 0.0
    %422 = vmatprep.subr.mxu0 0.0
    %423 = vmatpush2.msra.mxu0 0.0
    %424 = vmatprep.subr.mxu0 0.0
    %425 = vmatpush2.msra.mxu0 0.0
    %426 = vmatprep.subr.mxu0 0.0
    %427 = vmatpush2.msra.mxu0 0.0
    %428 = vmatprep.subr.mxu0 0.0
    %429 = vmatpush2.msra.mxu0 0.0
    %430 = vmatprep.subr.mxu0 0.0
    %431 = vmatpush2.msra.mxu0 0.0
    %432 = vmatprep.subr.mxu0 0.0
    %433 = vmatpush2.msra.mxu0 0.0
    %434 = vmatprep.subr.mxu0 0.0
    %435 = vmatpush2.msra.mxu0 0.0
    %436 = vmatprep.subr.mxu0 0.0
    %437 = vmatpush2.msra.mxu0 0.0
    %438 = vmatprep.subr.mxu0 0.0
    %439 = vmatpush2.msra.mxu0 0.0
    %440 = vmatprep.subr.mxu0 0.0
    %441 = vmatpush2.msra.mxu0 0.0
    %442 = vmatprep.subr.mxu0 0.0
    %443 = vmatpush2.msra.mxu0 0.0
    %444 = vmatprep.subr.mxu0 0.0
    %445 = vmatpush2.msra.mxu0 0.0
    %446 = vmatprep.subr.mxu0 0.0
    %447 = vmatpush2.msra.mxu0 0.0
    %448 = vmatprep.subr.mxu0 0.0
    %449 = vmatpush2.msra.mxu0 0.0
    %450 = vmatprep.subr.mxu0 0.0
    %451 = vmatpush2.msra.mxu0 0.0
    %452 = vmatprep.mubr.f32.mxu0 0.0
    %453 = vmatmul.mubr.f32.gmra.mxu0 %v365
    %v454 = vpop.f32.mrf.mxu0
    %v455 = vadd.f32 %v361, %v454
    %v456 = vpop.f32.mrf.mxu0
    %457 = vmatprep.mubr.f32.mxu0 0.0
    %458 = vmatmul.mubr.f32.gmra.mxu0 %v368
    %v459 = vpop.f32.mrf.mxu0
    %v460 = vadd.f32 %v361, %v459
    %v461 = vpop.f32.mrf.mxu0
    %462 = vmatprep.mubr.f32.mxu0 0.0
    %463 = vmatmul.mubr.f32.gmra.mxu0 %v371
    %v464 = vpop.f32.mrf.mxu0
    %v465 = vadd.f32 %v361, %v464
    %v466 = vpop.f32.mrf.mxu0
    %467 = vmatprep.mubr.f32.mxu0 0.0
    %468 = vmatmul.mubr.f32.gmra.mxu0 %v374
    %v469 = vpop.f32.mrf.mxu0
    %v470 = vadd.f32 %v361, %v469
    %v471 = vpop.f32.mrf.mxu0
    %472 = vmatprep.mubr.f32.mxu0 0.0
    %473 = vmatmul.mubr.f32.gmra.mxu0 %v377
    %v474 = vpop.f32.mrf.mxu0
    %v475 = vadd.f32 %v361, %v474
    %v476 = vpop.f32.mrf.mxu0
    %477 = vmatprep.mubr.f32.mxu0 0.0
    %478 = vmatmul.mubr.f32.gmra.mxu0 %v380
    %v479 = vpop.f32.mrf.mxu0
    %v480 = vadd.f32 %v361, %v479
    %v481 = vpop.f32.mrf.mxu0
    %482 = vmatprep.mubr.f32.mxu0 0.0
    %483 = vmatmul.mubr.f32.gmra.mxu0 %v383
    %v484 = vpop.f32.mrf.mxu0
    %v485 = vadd.f32 %v361, %v484
    %v486 = vpop.f32.mrf.mxu0
    %487 = vmatprep.mubr.f32.mxu0 0.0
    %488 = vmatmul.mubr.f32.gmra.mxu0 %v386
    %v489 = vpop.f32.mrf.mxu0
    %v490 = vadd.f32 %v361, %v489
    %v491 = vpop.f32.mrf.mxu0
    %492 = vdwg.mxu0
    %v493 = vmax.f32 %v455, 0.0
    %v494 = vmax.f32 %v460, 0.0
    %v495 = vmax.f32 %v465, 0.0
    %v496 = vmax.f32 %v470, 0.0
    %v497 = vmax.f32 %v475, 0.0
    %v498 = vmax.f32 %v480, 0.0
    %v499 = vmax.f32 %v485, 0.0
    %v500 = vmax.f32 %v490, 0.0
    %v501 = vld [vmem:[#allocation11] sm:$0xff]
    %v502 = vld [vmem:[#allocation11 + $0x8] sm:$0xff]
    %v503 = vld [vmem:[#allocation11 + $0x10] sm:$0xff]
    %v504 = vld [vmem:[#allocation11 + $0x18] sm:$0xff]
    %v505 = vld [vmem:[#allocation11 + $0x20] sm:$0xff]
    %v506 = vld [vmem:[#allocation11 + $0x28] sm:$0xff]
    %v507 = vld [vmem:[#allocation11 + $0x30] sm:$0xff]
    %v508 = vld [vmem:[#allocation11 + $0x38] sm:$0xff]
    %v509 = vld [vmem:[#allocation11 + $0x40] sm:$0xff]
    %v510 = vld [vmem:[#allocation11 + $0x48] sm:$0xff]
    %v511 = vld [vmem:[#allocation11 + $0x50] sm:$0xff]
    %v512 = vld [vmem:[#allocation11 + $0x58] sm:$0xff]
    %v513 = vld [vmem:[#allocation11 + $0x60] sm:$0xff]
    %v514 = vld [vmem:[#allocation11 + $0x68] sm:$0xff]
    %v515 = vld [vmem:[#allocation11 + $0x70] sm:$0xff]
    %v516 = vld [vmem:[#allocation11 + $0x78] sm:$0xff]
    %v517 = vld [vmem:[#allocation11 + $0x80] sm:$0xff]
    %v518 = vld [vmem:[#allocation11 + $0x88] sm:$0xff]
    %v519 = vld [vmem:[#allocation11 + $0x90] sm:$0xff]
    %v520 = vld [vmem:[#allocation11 + $0x98] sm:$0xff]
    %v521 = vld [vmem:[#allocation11 + $0xa0] sm:$0xff]
    %v522 = vld [vmem:[#allocation11 + $0xa8] sm:$0xff]
    %v523 = vld [vmem:[#allocation11 + $0xb0] sm:$0xff]
    %v524 = vld [vmem:[#allocation11 + $0xb8] sm:$0xff]
    %v525 = vld [vmem:[#allocation11 + $0xc0] sm:$0xff]
    %v526 = vld [vmem:[#allocation11 + $0xc8] sm:$0xff]
    %v527 = vld [vmem:[#allocation11 + $0xd0] sm:$0xff]
    %v528 = vld [vmem:[#allocation11 + $0xd8] sm:$0xff]
    %v529 = vld [vmem:[#allocation11 + $0xe0] sm:$0xff]
    %v530 = vld [vmem:[#allocation11 + $0xe8] sm:$0xff]
    %v531 = vld [vmem:[#allocation11 + $0xf0] sm:$0xff]
    %v532 = vld [vmem:[#allocation11 + $0xf8] sm:$0xff]
    %v533 = vld [vmem:[#allocation11 + $0x100] sm:$0xff]
    %v534 = vld [vmem:[#allocation11 + $0x108] sm:$0xff]
    %v535 = vld [vmem:[#allocation11 + $0x110] sm:$0xff]
    %v536 = vld [vmem:[#allocation11 + $0x118] sm:$0xff]
    %v537 = vld [vmem:[#allocation11 + $0x120] sm:$0xff]
    %v538 = vld [vmem:[#allocation11 + $0x128] sm:$0xff]
    %v539 = vld [vmem:[#allocation11 + $0x130] sm:$0xff]
    %v540 = vld [vmem:[#allocation11 + $0x138] sm:$0xff]
    %v541 = vld [vmem:[#allocation11 + $0x140] sm:$0xff]
    %v542 = vld [vmem:[#allocation11 + $0x148] sm:$0xff]
    %v543 = vld [vmem:[#allocation11 + $0x150] sm:$0xff]
    %v544 = vld [vmem:[#allocation11 + $0x158] sm:$0xff]
    %v545 = vld [vmem:[#allocation11 + $0x160] sm:$0xff]
    %v546 = vld [vmem:[#allocation11 + $0x168] sm:$0xff]
    %v547 = vld [vmem:[#allocation11 + $0x170] sm:$0xff]
    %v548 = vld [vmem:[#allocation11 + $0x178] sm:$0xff]
    %v549 = vld [vmem:[#allocation11 + $0x180] sm:$0xff]
    %v550 = vld [vmem:[#allocation11 + $0x188] sm:$0xff]
    %v551 = vld [vmem:[#allocation11 + $0x190] sm:$0xff]
    %v552 = vld [vmem:[#allocation11 + $0x198] sm:$0xff]
    %v553 = vld [vmem:[#allocation11 + $0x1a0] sm:$0xff]
    %v554 = vld [vmem:[#allocation11 + $0x1a8] sm:$0xff]
    %v555 = vld [vmem:[#allocation11 + $0x1b0] sm:$0xff]
    %v556 = vld [vmem:[#allocation11 + $0x1b8] sm:$0xff]
    %v557 = vld [vmem:[#allocation11 + $0x1c0] sm:$0xff]
    %v558 = vld [vmem:[#allocation11 + $0x1c8] sm:$0xff]
    %v559 = vld [vmem:[#allocation11 + $0x1d0] sm:$0xff]
    %v560 = vld [vmem:[#allocation11 + $0x1d8] sm:$0xff]
    %v561 = vld [vmem:[#allocation11 + $0x1e0] sm:$0xff]
    %v562 = vld [vmem:[#allocation11 + $0x1e8] sm:$0xff]
    %v563 = vld [vmem:[#allocation11 + $0x1f0] sm:$0xff]
    %v564 = vld [vmem:[#allocation11 + $0x1f8] sm:$0xff]
    %v565 = vld [vmem:[#allocation11 + $0x200] sm:$0xff]
    %v566 = vld [vmem:[#allocation11 + $0x208] sm:$0xff]
    %v567 = vld [vmem:[#allocation11 + $0x210] sm:$0xff]
    %v568 = vld [vmem:[#allocation11 + $0x218] sm:$0xff]
    %v569 = vld [vmem:[#allocation11 + $0x220] sm:$0xff]
    %v570 = vld [vmem:[#allocation11 + $0x228] sm:$0xff]
    %v571 = vld [vmem:[#allocation11 + $0x230] sm:$0xff]
    %v572 = vld [vmem:[#allocation11 + $0x238] sm:$0xff]
    %v573 = vld [vmem:[#allocation11 + $0x240] sm:$0xff]
    %v574 = vld [vmem:[#allocation11 + $0x248] sm:$0xff]
    %v575 = vld [vmem:[#allocation11 + $0x250] sm:$0xff]
    %v576 = vld [vmem:[#allocation11 + $0x258] sm:$0xff]
    %v577 = vld [vmem:[#allocation11 + $0x260] sm:$0xff]
    %v578 = vld [vmem:[#allocation11 + $0x268] sm:$0xff]
    %v579 = vld [vmem:[#allocation11 + $0x270] sm:$0xff]
    %v580 = vld [vmem:[#allocation11 + $0x278] sm:$0xff]
    %v581 = vld [vmem:[#allocation11 + $0x280] sm:$0xff]
    %v582 = vld [vmem:[#allocation11 + $0x288] sm:$0xff]
    %v583 = vld [vmem:[#allocation11 + $0x290] sm:$0xff]
    %v584 = vld [vmem:[#allocation11 + $0x298] sm:$0xff]
    %v585 = vld [vmem:[#allocation11 + $0x2a0] sm:$0xff]
    %v586 = vld [vmem:[#allocation11 + $0x2a8] sm:$0xff]
    %v587 = vld [vmem:[#allocation11 + $0x2b0] sm:$0xff]
    %v588 = vld [vmem:[#allocation11 + $0x2b8] sm:$0xff]
    %v589 = vld [vmem:[#allocation11 + $0x2c0] sm:$0xff]
    %v590 = vld [vmem:[#allocation11 + $0x2c8] sm:$0xff]
    %v591 = vld [vmem:[#allocation11 + $0x2d0] sm:$0xff]
    %v592 = vld [vmem:[#allocation11 + $0x2d8] sm:$0xff]
    %v593 = vld [vmem:[#allocation11 + $0x2e0] sm:$0xff]
    %v594 = vld [vmem:[#allocation11 + $0x2e8] sm:$0xff]
    %v595 = vld [vmem:[#allocation11 + $0x2f0] sm:$0xff]
    %v596 = vld [vmem:[#allocation11 + $0x2f8] sm:$0xff]
    %v597 = vld [vmem:[#allocation11 + $0x300] sm:$0xff]
    %v598 = vld [vmem:[#allocation11 + $0x308] sm:$0xff]
    %v599 = vld [vmem:[#allocation11 + $0x310] sm:$0xff]
    %v600 = vld [vmem:[#allocation11 + $0x318] sm:$0xff]
    %v601 = vld [vmem:[#allocation11 + $0x320] sm:$0xff]
    %v602 = vld [vmem:[#allocation11 + $0x328] sm:$0xff]
    %v603 = vld [vmem:[#allocation11 + $0x330] sm:$0xff]
    %v604 = vld [vmem:[#allocation11 + $0x338] sm:$0xff]
    %v605 = vld [vmem:[#allocation11 + $0x340] sm:$0xff]
    %v606 = vld [vmem:[#allocation11 + $0x348] sm:$0xff]
    %v607 = vld [vmem:[#allocation11 + $0x350] sm:$0xff]
    %v608 = vld [vmem:[#allocation11 + $0x358] sm:$0xff]
    %v609 = vld [vmem:[#allocation11 + $0x360] sm:$0xff]
    %v610 = vld [vmem:[#allocation11 + $0x368] sm:$0xff]
    %v611 = vld [vmem:[#allocation11 + $0x370] sm:$0xff]
    %v612 = vld [vmem:[#allocation11 + $0x378] sm:$0xff]
    %v613 = vld [vmem:[#allocation11 + $0x380] sm:$0xff]
    %v614 = vld [vmem:[#allocation11 + $0x388] sm:$0xff]
    %v615 = vld [vmem:[#allocation11 + $0x390] sm:$0xff]
    %v616 = vld [vmem:[#allocation11 + $0x398] sm:$0xff]
    %v617 = vld [vmem:[#allocation11 + $0x3a0] sm:$0xff]
    %v618 = vld [vmem:[#allocation11 + $0x3a8] sm:$0xff]
    %v619 = vld [vmem:[#allocation11 + $0x3b0] sm:$0xff]
    %v620 = vld [vmem:[#allocation11 + $0x3b8] sm:$0xff]
    %v621 = vld [vmem:[#allocation11 + $0x3c0] sm:$0xff]
    %v622 = vld [vmem:[#allocation11 + $0x3c8] sm:$0xff]
    %v623 = vld [vmem:[#allocation11 + $0x3d0] sm:$0xff]
    %v624 = vld [vmem:[#allocation11 + $0x3d8] sm:$0xff]
    %v625 = vld [vmem:[#allocation11 + $0x3e0] sm:$0xff]
    %v626 = vld [vmem:[#allocation11 + $0x3e8] sm:$0xff]
    %v627 = vld [vmem:[#allocation11 + $0x3f0] sm:$0xff]
    %v628 = vld [vmem:[#allocation11 + $0x3f8] sm:$0xff]
    %v629 = vld [vmem:[#allocation12] sm:$0xff]
    %v631 = vlaneseq
    %v632 = vshrl.u32 %v631, 7
    %v633 = vsub.s32 0, %v632
    %v634 = vrot.slane %v629, %v633
    %v635 = vlaneseq
    %v636 = vshrl.u32 %v635, 7
    %v637 = vsub.s32 1, %v636
    %v638 = vrot.slane %v629, %v637
    %v639 = vlaneseq
    %v640 = vshrl.u32 %v639, 7
    %v641 = vsub.s32 2, %v640
    %v642 = vrot.slane %v629, %v641
    %v643 = vlaneseq
    %v644 = vshrl.u32 %v643, 7
    %v645 = vsub.s32 3, %v644
    %v646 = vrot.slane %v629, %v645
    %v647 = vlaneseq
    %v648 = vshrl.u32 %v647, 7
    %v649 = vsub.s32 4, %v648
    %v650 = vrot.slane %v629, %v649
    %v651 = vlaneseq
    %v652 = vshrl.u32 %v651, 7
    %v653 = vsub.s32 5, %v652
    %v654 = vrot.slane %v629, %v653
    %v655 = vlaneseq
    %v656 = vshrl.u32 %v655, 7
    %v657 = vsub.s32 6, %v656
    %v658 = vrot.slane %v629, %v657
    %v659 = vlaneseq
    %v660 = vshrl.u32 %v659, 7
    %v661 = vsub.s32 7, %v660
    %v662 = vrot.slane %v629, %v661
    %671 = vmatprep.subr.mxu0 %v622
    %672 = vmatpush1.msra.mxu0 %v621
    %673 = vmatprep.subr.mxu0 %v614
    %674 = vmatpush1.msra.mxu0 %v613
    %675 = vmatprep.subr.mxu0 %v606
    %676 = vmatpush1.msra.mxu0 %v605
    %677 = vmatprep.subr.mxu0 %v598
    %678 = vmatpush1.msra.mxu0 %v597
    %679 = vmatprep.subr.mxu0 %v590
    %680 = vmatpush1.msra.mxu0 %v589
    %681 = vmatprep.subr.mxu0 %v582
    %682 = vmatpush1.msra.mxu0 %v581
    %683 = vmatprep.subr.mxu0 %v574
    %684 = vmatpush1.msra.mxu0 %v573
    %685 = vmatprep.subr.mxu0 %v566
    %686 = vmatpush1.msra.mxu0 %v565
    %687 = vmatprep.subr.mxu0 %v558
    %688 = vmatpush1.msra.mxu0 %v557
    %689 = vmatprep.subr.mxu0 %v550
    %690 = vmatpush1.msra.mxu0 %v549
    %691 = vmatprep.subr.mxu0 %v542
    %692 = vmatpush1.msra.mxu0 %v541
    %693 = vmatprep.subr.mxu0 %v534
    %694 = vmatpush1.msra.mxu0 %v533
    %695 = vmatprep.subr.mxu0 %v526
    %696 = vmatpush1.msra.mxu0 %v525
    %697 = vmatprep.subr.mxu0 %v518
    %698 = vmatpush1.msra.mxu0 %v517
    %699 = vmatprep.subr.mxu0 %v510
    %700 = vmatpush1.msra.mxu0 %v509
    %701 = vmatprep.subr.mxu0 %v502
    %702 = vmatpush1.msra.mxu0 %v501
    %703 = vmatprep.subr.mxu0 0.0
    %704 = vmatpush2.msra.mxu0 0.0
    %705 = vmatprep.subr.mxu0 0.0
    %706 = vmatpush2.msra.mxu0 0.0
    %707 = vmatprep.subr.mxu0 0.0
    %708 = vmatpush2.msra.mxu0 0.0
    %709 = vmatprep.subr.mxu0 0.0
    %710 = vmatpush2.msra.mxu0 0.0
    %711 = vmatprep.subr.mxu0 0.0
    %712 = vmatpush2.msra.mxu0 0.0
    %713 = vmatprep.subr.mxu0 0.0
    %714 = vmatpush2.msra.mxu0 0.0
    %715 = vmatprep.subr.mxu0 0.0
    %716 = vmatpush2.msra.mxu0 0.0
    %717 = vmatprep.subr.mxu0 0.0
    %718 = vmatpush2.msra.mxu0 0.0
    %719 = vmatprep.subr.mxu0 0.0
    %720 = vmatpush2.msra.mxu0 0.0
    %721 = vmatprep.subr.mxu0 0.0
    %722 = vmatpush2.msra.mxu0 0.0
    %723 = vmatprep.subr.mxu0 0.0
    %724 = vmatpush2.msra.mxu0 0.0
    %725 = vmatprep.subr.mxu0 0.0
    %726 = vmatpush2.msra.mxu0 0.0
    %727 = vmatprep.subr.mxu0 0.0
    %728 = vmatpush2.msra.mxu0 0.0
    %729 = vmatprep.subr.mxu0 0.0
    %730 = vmatpush2.msra.mxu0 0.0
    %731 = vmatprep.subr.mxu0 0.0
    %732 = vmatpush2.msra.mxu0 0.0
    %733 = vmatprep.subr.mxu0 0.0
    %734 = vmatpush2.msra.mxu0 0.0
    %735 = vmatprep.mubr.f32.mxu0 0.0
    %736 = vmatmul.mubr.f32.gmra.mxu0 %v493
    %v737 = vpop.f32.mrf.mxu0
    %v738 = vadd.f32 %v634, %v737
    %v739 = vpop.f32.mrf.mxu0
    %v740 = vadd.f32 %v638, %v739
    %741 = vmatprep.mubr.f32.mxu0 0.0
    %742 = vmatmul.mubr.f32.gmra.mxu0 %v494
    %v743 = vpop.f32.mrf.mxu0
    %v744 = vadd.f32 %v634, %v743
    %v745 = vpop.f32.mrf.mxu0
    %v746 = vadd.f32 %v638, %v745
    %747 = vmatprep.mubr.f32.mxu0 0.0
    %748 = vmatmul.mubr.f32.gmra.mxu0 %v495
    %v749 = vpop.f32.mrf.mxu0
    %v750 = vadd.f32 %v634, %v749
    %v751 = vpop.f32.mrf.mxu0
    %v752 = vadd.f32 %v638, %v751
    %753 = vmatprep.mubr.f32.mxu0 0.0
    %754 = vmatmul.mubr.f32.gmra.mxu0 %v496
    %v755 = vpop.f32.mrf.mxu0
    %v756 = vadd.f32 %v634, %v755
    %v757 = vpop.f32.mrf.mxu0
    %v758 = vadd.f32 %v638, %v757
    %759 = vmatprep.mubr.f32.mxu0 0.0
    %760 = vmatmul.mubr.f32.gmra.mxu0 %v497
    %v761 = vpop.f32.mrf.mxu0
    %v762 = vadd.f32 %v634, %v761
    %v763 = vpop.f32.mrf.mxu0
    %v764 = vadd.f32 %v638, %v763
    %765 = vmatprep.mubr.f32.mxu0 0.0
    %766 = vmatmul.mubr.f32.gmra.mxu0 %v498
    %v767 = vpop.f32.mrf.mxu0
    %v768 = vadd.f32 %v634, %v767
    %v769 = vpop.f32.mrf.mxu0
    %v770 = vadd.f32 %v638, %v769
    %771 = vmatprep.mubr.f32.mxu0 0.0
    %772 = vmatmul.mubr.f32.gmra.mxu0 %v499
    %v773 = vpop.f32.mrf.mxu0
    %v774 = vadd.f32 %v634, %v773
    %v775 = vpop.f32.mrf.mxu0
    %v776 = vadd.f32 %v638, %v775
    %777 = vmatprep.mubr.f32.mxu0 0.0
    %778 = vmatmul.mubr.f32.gmra.mxu0 %v500
    %v779 = vpop.f32.mrf.mxu0
    %v780 = vadd.f32 %v634, %v779
    %v781 = vpop.f32.mrf.mxu0
    %v782 = vadd.f32 %v638, %v781
    %783 = vdwg.mxu0
    %784 = vmatprep.subr.mxu0 %v624
    %785 = vmatpush1.msra.mxu0 %v623
    %786 = vmatprep.subr.mxu0 %v616
    %787 = vmatpush1.msra.mxu0 %v615
    %788 = vmatprep.subr.mxu0 %v608
    %789 = vmatpush1.msra.mxu0 %v607
    %790 = vmatprep.subr.mxu0 %v600
    %791 = vmatpush1.msra.mxu0 %v599
    %792 = vmatprep.subr.mxu0 %v592
    %793 = vmatpush1.msra.mxu0 %v591
    %794 = vmatprep.subr.mxu0 %v584
    %795 = vmatpush1.msra.mxu0 %v583
    %796 = vmatprep.subr.mxu0 %v576
    %797 = vmatpush1.msra.mxu0 %v575
    %798 = vmatprep.subr.mxu0 %v568
    %799 = vmatpush1.msra.mxu0 %v567
    %800 = vmatprep.subr.mxu0 %v560
    %801 = vmatpush1.msra.mxu0 %v559
    %802 = vmatprep.subr.mxu0 %v552
    %803 = vmatpush1.msra.mxu0 %v551
    %804 = vmatprep.subr.mxu0 %v544
    %805 = vmatpush1.msra.mxu0 %v543
    %806 = vmatprep.subr.mxu0 %v536
    %807 = vmatpush1.msra.mxu0 %v535
    %808 = vmatprep.subr.mxu0 %v528
    %809 = vmatpush1.msra.mxu0 %v527
    %810 = vmatprep.subr.mxu0 %v520
    %811 = vmatpush1.msra.mxu0 %v519
    %812 = vmatprep.subr.mxu0 %v512
    %813 = vmatpush1.msra.mxu0 %v511
    %814 = vmatprep.subr.mxu0 %v504
    %815 = vmatpush1.msra.mxu0 %v503
    %816 = vmatprep.subr.mxu0 0.0
    %817 = vmatpush2.msra.mxu0 0.0
    %818 = vmatprep.subr.mxu0 0.0
    %819 = vmatpush2.msra.mxu0 0.0
    %820 = vmatprep.subr.mxu0 0.0
    %821 = vmatpush2.msra.mxu0 0.0
    %822 = vmatprep.subr.mxu0 0.0
    %823 = vmatpush2.msra.mxu0 0.0
    %824 = vmatprep.subr.mxu0 0.0
    %825 = vmatpush2.msra.mxu0 0.0
    %826 = vmatprep.subr.mxu0 0.0
    %827 = vmatpush2.msra.mxu0 0.0
    %828 = vmatprep.subr.mxu0 0.0
    %829 = vmatpush2.msra.mxu0 0.0
    %830 = vmatprep.subr.mxu0 0.0
    %831 = vmatpush2.msra.mxu0 0.0
    %832 = vmatprep.subr.mxu0 0.0
    %833 = vmatpush2.msra.mxu0 0.0
    %834 = vmatprep.subr.mxu0 0.0
    %835 = vmatpush2.msra.mxu0 0.0
    %836 = vmatprep.subr.mxu0 0.0
    %837 = vmatpush2.msra.mxu0 0.0
    %838 = vmatprep.subr.mxu0 0.0
    %839 = vmatpush2.msra.mxu0 0.0
    %840 = vmatprep.subr.mxu0 0.0
    %841 = vmatpush2.msra.mxu0 0.0
    %842 = vmatprep.subr.mxu0 0.0
    %843 = vmatpush2.msra.mxu0 0.0
    %844 = vmatprep.subr.mxu0 0.0
    %845 = vmatpush2.msra.mxu0 0.0
    %846 = vmatprep.subr.mxu0 0.0
    %847 = vmatpush2.msra.mxu0 0.0
    %848 = vmatprep.mubr.f32.mxu0 0.0
    %849 = vmatmul.mubr.f32.gmra.mxu0 %v493
    %v850 = vpop.f32.mrf.mxu0
    %v851 = vadd.f32 %v642, %v850
    %v852 = vpop.f32.mrf.mxu0
    %v853 = vadd.f32 %v646, %v852
    %854 = vmatprep.mubr.f32.mxu0 0.0
    %855 = vmatmul.mubr.f32.gmra.mxu0 %v494
    %v856 = vpop.f32.mrf.mxu0
    %v857 = vadd.f32 %v642, %v856
    %v858 = vpop.f32.mrf.mxu0
    %v859 = vadd.f32 %v646, %v858
    %860 = vmatprep.mubr.f32.mxu0 0.0
    %861 = vmatmul.mubr.f32.gmra.mxu0 %v495
    %v862 = vpop.f32.mrf.mxu0
    %v863 = vadd.f32 %v642, %v862
    %v864 = vpop.f32.mrf.mxu0
    %v865 = vadd.f32 %v646, %v864
    %866 = vmatprep.mubr.f32.mxu0 0.0
    %867 = vmatmul.mubr.f32.gmra.mxu0 %v496
    %v868 = vpop.f32.mrf.mxu0
    %v869 = vadd.f32 %v642, %v868
    %v870 = vpop.f32.mrf.mxu0
    %v871 = vadd.f32 %v646, %v870
    %872 = vmatprep.mubr.f32.mxu0 0.0
    %873 = vmatmul.mubr.f32.gmra.mxu0 %v497
    %v874 = vpop.f32.mrf.mxu0
    %v875 = vadd.f32 %v642, %v874
    %v876 = vpop.f32.mrf.mxu0
    %v877 = vadd.f32 %v646, %v876
    %878 = vmatprep.mubr.f32.mxu0 0.0
    %879 = vmatmul.mubr.f32.gmra.mxu0 %v498
    %v880 = vpop.f32.mrf.mxu0
    %v881 = vadd.f32 %v642, %v880
    %v882 = vpop.f32.mrf.mxu0
    %v883 = vadd.f32 %v646, %v882
    %884 = vmatprep.mubr.f32.mxu0 0.0
    %885 = vmatmul.mubr.f32.gmra.mxu0 %v499
    %v886 = vpop.f32.mrf.mxu0
    %v887 = vadd.f32 %v642, %v886
    %v888 = vpop.f32.mrf.mxu0
    %v889 = vadd.f32 %v646, %v888
    %890 = vmatprep.mubr.f32.mxu0 0.0
    %891 = vmatmul.mubr.f32.gmra.mxu0 %v500
    %v892 = vpop.f32.mrf.mxu0
    %v893 = vadd.f32 %v642, %v892
    %v894 = vpop.f32.mrf.mxu0
    %v895 = vadd.f32 %v646, %v894
    %896 = vdwg.mxu0
    %897 = vmatprep.subr.mxu0 %v626
    %898 = vmatpush1.msra.mxu0 %v625
    %899 = vmatprep.subr.mxu0 %v618
    %900 = vmatpush1.msra.mxu0 %v617
    %901 = vmatprep.subr.mxu0 %v610
    %902 = vmatpush1.msra.mxu0 %v609
    %903 = vmatprep.subr.mxu0 %v602
    %904 = vmatpush1.msra.mxu0 %v601
    %905 = vmatprep.subr.mxu0 %v594
    %906 = vmatpush1.msra.mxu0 %v593
    %907 = vmatprep.subr.mxu0 %v586
    %908 = vmatpush1.msra.mxu0 %v585
    %909 = vmatprep.subr.mxu0 %v578
    %910 = vmatpush1.msra.mxu0 %v577
    %911 = vmatprep.subr.mxu0 %v570
    %912 = vmatpush1.msra.mxu0 %v569
    %913 = vmatprep.subr.mxu0 %v562
    %914 = vmatpush1.msra.mxu0 %v561
    %915 = vmatprep.subr.mxu0 %v554
    %916 = vmatpush1.msra.mxu0 %v553
    %917 = vmatprep.subr.mxu0 %v546
    %918 = vmatpush1.msra.mxu0 %v545
    %919 = vmatprep.subr.mxu0 %v538
    %920 = vmatpush1.msra.mxu0 %v537
    %921 = vmatprep.subr.mxu0 %v530
    %922 = vmatpush1.msra.mxu0 %v529
    %923 = vmatprep.subr.mxu0 %v522
    %924 = vmatpush1.msra.mxu0 %v521
    %925 = vmatprep.subr.mxu0 %v514
    %926 = vmatpush1.msra.mxu0 %v513
    %927 = vmatprep.subr.mxu0 %v506
    %928 = vmatpush1.msra.mxu0 %v505
    %929 = vmatprep.subr.mxu0 0.0
    %930 = vmatpush2.msra.mxu0 0.0
    %931 = vmatprep.subr.mxu0 0.0
    %932 = vmatpush2.msra.mxu0 0.0
    %933 = vmatprep.subr.mxu0 0.0
    %934 = vmatpush2.msra.mxu0 0.0
    %935 = vmatprep.subr.mxu0 0.0
    %936 = vmatpush2.msra.mxu0 0.0
    %937 = vmatprep.subr.mxu0 0.0
    %938 = vmatpush2.msra.mxu0 0.0
    %939 = vmatprep.subr.mxu0 0.0
    %940 = vmatpush2.msra.mxu0 0.0
    %941 = vmatprep.subr.mxu0 0.0
    %942 = vmatpush2.msra.mxu0 0.0
    %943 = vmatprep.subr.mxu0 0.0
    %944 = vmatpush2.msra.mxu0 0.0
    %945 = vmatprep.subr.mxu0 0.0
    %946 = vmatpush2.msra.mxu0 0.0
    %947 = vmatprep.subr.mxu0 0.0
    %948 = vmatpush2.msra.mxu0 0.0
    %949 = vmatprep.subr.mxu0 0.0
    %950 = vmatpush2.msra.mxu0 0.0
    %951 = vmatprep.subr.mxu0 0.0
    %952 = vmatpush2.msra.mxu0 0.0
    %953 = vmatprep.subr.mxu0 0.0
    %954 = vmatpush2.msra.mxu0 0.0
    %955 = vmatprep.subr.mxu0 0.0
    %956 = vmatpush2.msra.mxu0 0.0
    %957 = vmatprep.subr.mxu0 0.0
    %958 = vmatpush2.msra.mxu0 0.0
    %959 = vmatprep.subr.mxu0 0.0
    %960 = vmatpush2.msra.mxu0 0.0
    %961 = vmatprep.mubr.f32.mxu0 0.0
    %962 = vmatmul.mubr.f32.gmra.mxu0 %v493
    %v963 = vpop.f32.mrf.mxu0
    %v964 = vadd.f32 %v650, %v963
    %v965 = vpop.f32.mrf.mxu0
    %v966 = vadd.f32 %v654, %v965
    %967 = vmatprep.mubr.f32.mxu0 0.0
    %968 = vmatmul.mubr.f32.gmra.mxu0 %v494
    %v969 = vpop.f32.mrf.mxu0
    %v970 = vadd.f32 %v650, %v969
    %v971 = vpop.f32.mrf.mxu0
    %v972 = vadd.f32 %v654, %v971
    %973 = vmatprep.mubr.f32.mxu0 0.0
    %974 = vmatmul.mubr.f32.gmra.mxu0 %v495
    %v975 = vpop.f32.mrf.mxu0
    %v976 = vadd.f32 %v650, %v975
    %v977 = vpop.f32.mrf.mxu0
    %v978 = vadd.f32 %v654, %v977
    %979 = vmatprep.mubr.f32.mxu0 0.0
    %980 = vmatmul.mubr.f32.gmra.mxu0 %v496
    %v981 = vpop.f32.mrf.mxu0
    %v982 = vadd.f32 %v650, %v981
    %v983 = vpop.f32.mrf.mxu0
    %v984 = vadd.f32 %v654, %v983
    %985 = vmatprep.mubr.f32.mxu0 0.0
    %986 = vmatmul.mubr.f32.gmra.mxu0 %v497
    %v987 = vpop.f32.mrf.mxu0
    %v988 = vadd.f32 %v650, %v987
    %v989 = vpop.f32.mrf.mxu0
    %v990 = vadd.f32 %v654, %v989
    %991 = vmatprep.mubr.f32.mxu0 0.0
    %992 = vmatmul.mubr.f32.gmra.mxu0 %v498
    %v993 = vpop.f32.mrf.mxu0
    %v994 = vadd.f32 %v650, %v993
    %v995 = vpop.f32.mrf.mxu0
    %v996 = vadd.f32 %v654, %v995
    %997 = vmatprep.mubr.f32.mxu0 0.0
    %998 = vmatmul.mubr.f32.gmra.mxu0 %v499
    %v999 = vpop.f32.mrf.mxu0
    %v1000 = vadd.f32 %v650, %v999
    %v1001 = vpop.f32.mrf.mxu0
    %v1002 = vadd.f32 %v654, %v1001
    %1003 = vmatprep.mubr.f32.mxu0 0.0
    %1004 = vmatmul.mubr.f32.gmra.mxu0 %v500
    %v1005 = vpop.f32.mrf.mxu0
    %v1006 = vadd.f32 %v650, %v1005
    %v1007 = vpop.f32.mrf.mxu0
    %v1008 = vadd.f32 %v654, %v1007
    %1009 = vdwg.mxu0
    %1010 = vmatprep.subr.mxu0 %v628
    %1011 = vmatpush1.msra.mxu0 %v627
    %1012 = vmatprep.subr.mxu0 %v620
    %1013 = vmatpush1.msra.mxu0 %v619
    %1014 = vmatprep.subr.mxu0 %v612
    %1015 = vmatpush1.msra.mxu0 %v611
    %1016 = vmatprep.subr.mxu0 %v604
    %1017 = vmatpush1.msra.mxu0 %v603
    %1018 = vmatprep.subr.mxu0 %v596
    %1019 = vmatpush1.msra.mxu0 %v595
    %1020 = vmatprep.subr.mxu0 %v588
    %1021 = vmatpush1.msra.mxu0 %v587
    %1022 = vmatprep.subr.mxu0 %v580
    %1023 = vmatpush1.msra.mxu0 %v579
    %1024 = vmatprep.subr.mxu0 %v572
    %1025 = vmatpush1.msra.mxu0 %v571
    %1026 = vmatprep.subr.mxu0 %v564
    %1027 = vmatpush1.msra.mxu0 %v563
    %1028 = vmatprep.subr.mxu0 %v556
    %1029 = vmatpush1.msra.mxu0 %v555
    %1030 = vmatprep.subr.mxu0 %v548
    %1031 = vmatpush1.msra.mxu0 %v547
    %1032 = vmatprep.subr.mxu0 %v540
    %1033 = vmatpush1.msra.mxu0 %v539
    %1034 = vmatprep.subr.mxu0 %v532
    %1035 = vmatpush1.msra.mxu0 %v531
    %1036 = vmatprep.subr.mxu0 %v524
    %1037 = vmatpush1.msra.mxu0 %v523
    %1038 = vmatprep.subr.mxu0 %v516
    %1039 = vmatpush1.msra.mxu0 %v515
    %1040 = vmatprep.subr.mxu0 %v508
    %1041 = vmatpush1.msra.mxu0 %v507
    %1042 = vmatprep.subr.mxu0 0.0
    %1043 = vmatpush2.msra.mxu0 0.0
    %1044 = vmatprep.subr.mxu0 0.0
    %1045 = vmatpush2.msra.mxu0 0.0
    %1046 = vmatprep.subr.mxu0 0.0
    %1047 = vmatpush2.msra.mxu0 0.0
    %1048 = vmatprep.subr.mxu0 0.0
    %1049 = vmatpush2.msra.mxu0 0.0
    %1050 = vmatprep.subr.mxu0 0.0
    %1051 = vmatpush2.msra.mxu0 0.0
    %1052 = vmatprep.subr.mxu0 0.0
    %1053 = vmatpush2.msra.mxu0 0.0
    %1054 = vmatprep.subr.mxu0 0.0
    %1055 = vmatpush2.msra.mxu0 0.0
    %1056 = vmatprep.subr.mxu0 0.0
    %1057 = vmatpush2.msra.mxu0 0.0
    %1058 = vmatprep.subr.mxu0 0.0
    %1059 = vmatpush2.msra.mxu0 0.0
    %1060 = vmatprep.subr.mxu0 0.0
    %1061 = vmatpush2.msra.mxu0 0.0
    %1062 = vmatprep.subr.mxu0 0.0
    %1063 = vmatpush2.msra.mxu0 0.0
    %1064 = vmatprep.subr.mxu0 0.0
    %1065 = vmatpush2.msra.mxu0 0.0
    %1066 = vmatprep.subr.mxu0 0.0
    %1067 = vmatpush2.msra.mxu0 0.0
    %1068 = vmatprep.subr.mxu0 0.0
    %1069 = vmatpush2.msra.mxu0 0.0
    %1070 = vmatprep.subr.mxu0 0.0
    %1071 = vmatpush2.msra.mxu0 0.0
    %1072 = vmatprep.subr.mxu0 0.0
    %1073 = vmatpush2.msra.mxu0 0.0
    %1074 = vmatprep.mubr.f32.mxu0 0.0
    %1075 = vmatmul.mubr.f32.gmra.mxu0 %v493
    %v1076 = vpop.f32.mrf.mxu0
    %v1077 = vadd.f32 %v658, %v1076
    %v1078 = vpop.f32.mrf.mxu0
    %v1079 = vadd.f32 %v662, %v1078
    %1080 = vmatprep.mubr.f32.mxu0 0.0
    %1081 = vmatmul.mubr.f32.gmra.mxu0 %v494
    %v1082 = vpop.f32.mrf.mxu0
    %v1083 = vadd.f32 %v658, %v1082
    %v1084 = vpop.f32.mrf.mxu0
    %v1085 = vadd.f32 %v662, %v1084
    %1086 = vmatprep.mubr.f32.mxu0 0.0
    %1087 = vmatmul.mubr.f32.gmra.mxu0 %v495
    %v1088 = vpop.f32.mrf.mxu0
    %v1089 = vadd.f32 %v658, %v1088
    %v1090 = vpop.f32.mrf.mxu0
    %v1091 = vadd.f32 %v662, %v1090
    %1092 = vmatprep.mubr.f32.mxu0 0.0
    %1093 = vmatmul.mubr.f32.gmra.mxu0 %v496
    %v1094 = vpop.f32.mrf.mxu0
    %v1095 = vadd.f32 %v658, %v1094
    %v1096 = vpop.f32.mrf.mxu0
    %v1097 = vadd.f32 %v662, %v1096
    %1098 = vmatprep.mubr.f32.mxu0 0.0
    %1099 = vmatmul.mubr.f32.gmra.mxu0 %v497
    %v1100 = vpop.f32.mrf.mxu0
    %v1101 = vadd.f32 %v658, %v1100
    %v1102 = vpop.f32.mrf.mxu0
    %v1103 = vadd.f32 %v662, %v1102
    %1104 = vmatprep.mubr.f32.mxu0 0.0
    %1105 = vmatmul.mubr.f32.gmra.mxu0 %v498
    %v1106 = vpop.f32.mrf.mxu0
    %v1107 = vadd.f32 %v658, %v1106
    %v1108 = vpop.f32.mrf.mxu0
    %v1109 = vadd.f32 %v662, %v1108
    %1110 = vmatprep.mubr.f32.mxu0 0.0
    %1111 = vmatmul.mubr.f32.gmra.mxu0 %v499
    %v1112 = vpop.f32.mrf.mxu0
    %v1113 = vadd.f32 %v658, %v1112
    %v1114 = vpop.f32.mrf.mxu0
    %v1115 = vadd.f32 %v662, %v1114
    %1116 = vmatprep.mubr.f32.mxu0 0.0
    %1117 = vmatmul.mubr.f32.gmra.mxu0 %v500
    %v1118 = vpop.f32.mrf.mxu0
    %v1119 = vadd.f32 %v658, %v1118
    %v1120 = vpop.f32.mrf.mxu0
    %v1121 = vadd.f32 %v662, %v1120
    %1122 = vdwg.mxu0
    %v1123 = vmax.f32 %v738, 0.0
    %v1124 = vmax.f32 %v740, 0.0
    %v1125 = vmax.f32 %v851, 0.0
    %v1126 = vmax.f32 %v853, 0.0
    %v1127 = vmax.f32 %v964, 0.0
    %v1128 = vmax.f32 %v966, 0.0
    %v1129 = vmax.f32 %v1077, 0.0
    %v1130 = vmax.f32 %v1079, 0.0
    %v1131 = vmax.f32 %v744, 0.0
    %v1132 = vmax.f32 %v746, 0.0
    %v1133 = vmax.f32 %v857, 0.0
    %v1134 = vmax.f32 %v859, 0.0
    %v1135 = vmax.f32 %v970, 0.0
    %v1136 = vmax.f32 %v972, 0.0
    %v1137 = vmax.f32 %v1083, 0.0
    %v1138 = vmax.f32 %v1085, 0.0
    %v1139 = vmax.f32 %v750, 0.0
    %v1140 = vmax.f32 %v752, 0.0
    %v1141 = vmax.f32 %v863, 0.0
    %v1142 = vmax.f32 %v865, 0.0
    %v1143 = vmax.f32 %v976, 0.0
    %v1144 = vmax.f32 %v978, 0.0
    %v1145 = vmax.f32 %v1089, 0.0
    %v1146 = vmax.f32 %v1091, 0.0
    %v1147 = vmax.f32 %v756, 0.0
    %v1148 = vmax.f32 %v758, 0.0
    %v1149 = vmax.f32 %v869, 0.0
    %v1150 = vmax.f32 %v871, 0.0
    %v1151 = vmax.f32 %v982, 0.0
    %v1152 = vmax.f32 %v984, 0.0
    %v1153 = vmax.f32 %v1095, 0.0
    %v1154 = vmax.f32 %v1097, 0.0
    %v1155 = vmax.f32 %v762, 0.0
    %v1156 = vmax.f32 %v764, 0.0
    %v1157 = vmax.f32 %v875, 0.0
    %v1158 = vmax.f32 %v877, 0.0
    %v1159 = vmax.f32 %v988, 0.0
    %v1160 = vmax.f32 %v990, 0.0
    %v1161 = vmax.f32 %v1101, 0.0
    %v1162 = vmax.f32 %v1103, 0.0
    %v1163 = vmax.f32 %v768, 0.0
    %v1164 = vmax.f32 %v770, 0.0
    %v1165 = vmax.f32 %v881, 0.0
    %v1166 = vmax.f32 %v883, 0.0
    %v1167 = vmax.f32 %v994, 0.0
    %v1168 = vmax.f32 %v996, 0.0
    %v1169 = vmax.f32 %v1107, 0.0
    %v1170 = vmax.f32 %v1109, 0.0
    %v1171 = vmax.f32 %v774, 0.0
    %v1172 = vmax.f32 %v776, 0.0
    %v1173 = vmax.f32 %v887, 0.0
    %v1174 = vmax.f32 %v889, 0.0
    %v1175 = vmax.f32 %v1000, 0.0
    %v1176 = vmax.f32 %v1002, 0.0
    %v1177 = vmax.f32 %v1113, 0.0
    %v1178 = vmax.f32 %v1115, 0.0
    %v1179 = vmax.f32 %v780, 0.0
    %v1180 = vmax.f32 %v782, 0.0
    %v1181 = vmax.f32 %v893, 0.0
    %v1182 = vmax.f32 %v895, 0.0
    %v1183 = vmax.f32 %v1006, 0.0
    %v1184 = vmax.f32 %v1008, 0.0
    %v1185 = vmax.f32 %v1119, 0.0
    %v1186 = vmax.f32 %v1121, 0.0
    %v1187 = vmax.f32 %v1123, %v1131
    %v1188 = vmax.f32 %v1187, %v1139
    %v1189 = vmax.f32 %v1188, %v1147
    %v1190 = vrot.slane %v1189, 4
    %v1191 = vmax.f32 %v1189, %v1190
    %v1192 = vrot.slane %v1191, 2
    %v1193 = vmax.f32 %v1191, %v1192
    %v1194 = vrot.slane %v1193, 1
    %v1195 = vmax.f32 %v1193, %v1194
    %v1196 = vmax.f32 %v1124, %v1132
    %v1197 = vmax.f32 %v1196, %v1140
    %v1198 = vmax.f32 %v1197, %v1148
    %v1199 = vrot.slane %v1198, 4
    %v1200 = vmax.f32 %v1198, %v1199
    %v1201 = vrot.slane %v1200, 2
    %v1202 = vmax.f32 %v1200, %v1201
    %v1203 = vrot.slane %v1202, 1
    %v1204 = vmax.f32 %v1202, %v1203
    %v1205 = vmax.f32 %v1125, %v1133
    %v1206 = vmax.f32 %v1205, %v1141
    %v1207 = vmax.f32 %v1206, %v1149
    %v1208 = vrot.slane %v1207, 4
    %v1209 = vmax.f32 %v1207, %v1208
    %v1210 = vrot.slane %v1209, 2
    %v1211 = vmax.f32 %v1209, %v1210
    %v1212 = vrot.slane %v1211, 1
    %v1213 = vmax.f32 %v1211, %v1212
    %v1214 = vmax.f32 %v1126, %v1134
    %v1215 = vmax.f32 %v1214, %v1142
    %v1216 = vmax.f32 %v1215, %v1150
    %v1217 = vrot.slane %v1216, 4
    %v1218 = vmax.f32 %v1216, %v1217
    %v1219 = vrot.slane %v1218, 2
    %v1220 = vmax.f32 %v1218, %v1219
    %v1221 = vrot.slane %v1220, 1
    %v1222 = vmax.f32 %v1220, %v1221
    %v1223 = vmax.f32 %v1127, %v1135
    %v1224 = vmax.f32 %v1223, %v1143
    %v1225 = vmax.f32 %v1224, %v1151
    %v1226 = vrot.slane %v1225, 4
    %v1227 = vmax.f32 %v1225, %v1226
    %v1228 = vrot.slane %v1227, 2
    %v1229 = vmax.f32 %v1227, %v1228
    %v1230 = vrot.slane %v1229, 1
    %v1231 = vmax.f32 %v1229, %v1230
    %v1232 = vmax.f32 %v1128, %v1136
    %v1233 = vmax.f32 %v1232, %v1144
    %v1234 = vmax.f32 %v1233, %v1152
    %v1235 = vrot.slane %v1234, 4
    %v1236 = vmax.f32 %v1234, %v1235
    %v1237 = vrot.slane %v1236, 2
    %v1238 = vmax.f32 %v1236, %v1237
    %v1239 = vrot.slane %v1238, 1
    %v1240 = vmax.f32 %v1238, %v1239
    %v1241 = vmax.f32 %v1129, %v1137
    %v1242 = vmax.f32 %v1241, %v1145
    %v1243 = vmax.f32 %v1242, %v1153
    %v1244 = vrot.slane %v1243, 4
    %v1245 = vmax.f32 %v1243, %v1244
    %v1246 = vrot.slane %v1245, 2
    %v1247 = vmax.f32 %v1245, %v1246
    %v1248 = vrot.slane %v1247, 1
    %v1249 = vmax.f32 %v1247, %v1248
    %v1250 = vmax.f32 %v1130, %v1138
    %v1251 = vmax.f32 %v1250, %v1146
    %v1252 = vmax.f32 %v1251, %v1154
    %v1253 = vrot.slane %v1252, 4
    %v1254 = vmax.f32 %v1252, %v1253
    %v1255 = vrot.slane %v1254, 2
    %v1256 = vmax.f32 %v1254, %v1255
    %v1257 = vrot.slane %v1256, 1
    %v1258 = vmax.f32 %v1256, %v1257
    %v1259 = vmax.f32 %v1155, %v1163
    %v1260 = vmax.f32 %v1259, %v1171
    %v1261 = vmax.f32 %v1260, %v1179
    %v1262 = vrot.slane %v1261, 4
    %v1263 = vmax.f32 %v1261, %v1262
    %v1264 = vrot.slane %v1263, 2
    %v1265 = vmax.f32 %v1263, %v1264
    %v1266 = vrot.slane %v1265, 1
    %v1267 = vmax.f32 %v1265, %v1266
    %v1268 = vmax.f32 %v1156, %v1164
    %v1269 = vmax.f32 %v1268, %v1172
    %v1270 = vmax.f32 %v1269, %v1180
    %v1271 = vrot.slane %v1270, 4
    %v1272 = vmax.f32 %v1270, %v1271
    %v1273 = vrot.slane %v1272, 2
    %v1274 = vmax.f32 %v1272, %v1273
    %v1275 = vrot.slane %v1274, 1
    %v1276 = vmax.f32 %v1274, %v1275
    %v1277 = vmax.f32 %v1157, %v1165
    %v1278 = vmax.f32 %v1277, %v1173
    %v1279 = vmax.f32 %v1278, %v1181
    %v1280 = vrot.slane %v1279, 4
    %v1281 = vmax.f32 %v1279, %v1280
    %v1282 = vrot.slane %v1281, 2
    %v1283 = vmax.f32 %v1281, %v1282
    %v1284 = vrot.slane %v1283, 1
    %v1285 = vmax.f32 %v1283, %v1284
    %v1286 = vmax.f32 %v1158, %v1166
    %v1287 = vmax.f32 %v1286, %v1174
    %v1288 = vmax.f32 %v1287, %v1182
    %v1289 = vrot.slane %v1288, 4
    %v1290 = vmax.f32 %v1288, %v1289
    %v1291 = vrot.slane %v1290, 2
    %v1292 = vmax.f32 %v1290, %v1291
    %v1293 = vrot.slane %v1292, 1
    %v1294 = vmax.f32 %v1292, %v1293
    %v1295 = vmax.f32 %v1159, %v1167
    %v1296 = vmax.f32 %v1295, %v1175
    %v1297 = vmax.f32 %v1296, %v1183
    %v1298 = vrot.slane %v1297, 4
    %v1299 = vmax.f32 %v1297, %v1298
    %v1300 = vrot.slane %v1299, 2
    %v1301 = vmax.f32 %v1299, %v1300
    %v1302 = vrot.slane %v1301, 1
    %v1303 = vmax.f32 %v1301, %v1302
    %v1304 = vmax.f32 %v1160, %v1168
    %v1305 = vmax.f32 %v1304, %v1176
    %v1306 = vmax.f32 %v1305, %v1184
    %v1307 = vrot.slane %v1306, 4
    %v1308 = vmax.f32 %v1306, %v1307
    %v1309 = vrot.slane %v1308, 2
    %v1310 = vmax.f32 %v1308, %v1309
    %v1311 = vrot.slane %v1310, 1
    %v1312 = vmax.f32 %v1310, %v1311
    %v1313 = vmax.f32 %v1161, %v1169
    %v1314 = vmax.f32 %v1313, %v1177
    %v1315 = vmax.f32 %v1314, %v1185
    %v1316 = vrot.slane %v1315, 4
    %v1317 = vmax.f32 %v1315, %v1316
    %v1318 = vrot.slane %v1317, 2
    %v1319 = vmax.f32 %v1317, %v1318
    %v1320 = vrot.slane %v1319, 1
    %v1321 = vmax.f32 %v1319, %v1320
    %v1322 = vmax.f32 %v1162, %v1170
    %v1323 = vmax.f32 %v1322, %v1178
    %v1324 = vmax.f32 %v1323, %v1186
    %v1325 = vrot.slane %v1324, 4
    %v1326 = vmax.f32 %v1324, %v1325
    %v1327 = vrot.slane %v1326, 2
    %v1328 = vmax.f32 %v1326, %v1327
    %v1329 = vrot.slane %v1328, 1
    %v1330 = vmax.f32 %v1328, %v1329
    %p1331 = scmp.eq.s32.totalorder 0, 0
    // Predicated region
    $region102: #{tpu_custom_call.1} parent=1 // pred_check
      %p1332 = pneg %p1331
    $region103: #{tpu_custom_call.1} parent=1 // pred_check_branch
      %1334 = sbr.rel (%p1332) target = $region105
    $region104: #{tpu_custom_call.1} parent=1 // pred_region
      %v1351 = vcombine.low %v1195, %v1204
      %v1352 = vcombine.low %v1213, %v1222
      %v1354 = vunpack.c.l.s4 1983009808
      %v1355 = vunpack.c.0.s8 %v1354
      %v1356 = vlaneseq
      %v1357 = vshrl.u32 %v1356, 7
      %v1358 = vsub.s32 %v1355, %v1357
      %v1359 = vrot.slane %v1351, %v1358
      %v1361 = vunpack.c.l.s4 1983009808
      %v1362 = vunpack.c.0.s8 %v1361
      %v1363 = vlaneseq
      %v1364 = vshrl.u32 %v1363, 7
      %v1365 = vsub.s32 %v1362, %v1364
      %v1366 = vrot.slane %v1352, %v1365
      %v1367 = vcombine.low %v1359, %v1366
      %v1368 = vcombine.low %v1231, %v1240
      %v1369 = vcombine.low %v1249, %v1258
      %v1371 = vunpack.c.l.s4 1983009808
      %v1372 = vunpack.c.0.s8 %v1371
      %v1373 = vlaneseq
      %v1374 = vshrl.u32 %v1373, 7
      %v1375 = vsub.s32 %v1372, %v1374
      %v1376 = vrot.slane %v1368, %v1375
      %v1378 = vunpack.c.l.s4 1983009808
      %v1379 = vunpack.c.0.s8 %v1378
      %v1380 = vlaneseq
      %v1381 = vshrl.u32 %v1380, 7
      %v1382 = vsub.s32 %v1379, %v1381
      %v1383 = vrot.slane %v1369, %v1382
      %v1384 = vcombine.low %v1376, %v1383
      %v1385 = vcombine.low %v1267, %v1276
      %v1386 = vcombine.low %v1285, %v1294
      %v1388 = vunpack.c.l.s4 1983009808
      %v1389 = vunpack.c.0.s8 %v1388
      %v1390 = vlaneseq
      %v1391 = vshrl.u32 %v1390, 7
      %v1392 = vsub.s32 %v1389, %v1391
      %v1393 = vrot.slane %v1385, %v1392
      %v1395 = vunpack.c.l.s4 1983009808
      %v1396 = vunpack.c.0.s8 %v1395
      %v1397 = vlaneseq
      %v1398 = vshrl.u32 %v1397, 7
      %v1399 = vsub.s32 %v1396, %v1398
      %v1400 = vrot.slane %v1386, %v1399
      %v1401 = vcombine.low %v1393, %v1400
      %v1402 = vcombine.low %v1303, %v1312
      %v1403 = vcombine.low %v1321, %v1330
      %v1405 = vunpack.c.l.s4 1983009808
      %v1406 = vunpack.c.0.s8 %v1405
      %v1407 = vlaneseq
      %v1408 = vshrl.u32 %v1407, 7
      %v1409 = vsub.s32 %v1406, %v1408
      %v1410 = vrot.slane %v1402, %v1409
      %v1412 = vunpack.c.l.s4 1983009808
      %v1413 = vunpack.c.0.s8 %v1412
      %v1414 = vlaneseq
      %v1415 = vshrl.u32 %v1414, 7
      %v1416 = vsub.s32 %v1413, %v1415
      %v1417 = vrot.slane %v1403, %v1416
      %v1418 = vcombine.low %v1410, %v1417
      %vm1419 = vcmask 1044484
      %v1420 = vsel %vm1419, %v1367, %v1367
      %vm1421 = vcmask 1046534
      %v1422 = vsel %vm1421, %v1367, %v1420
      %v1423 = vrot.slane %v1401, 7
      %vm1424 = vcmask 1041409
      %v1425 = vsel %vm1424, %v1423, %v1422
      %vm1426 = vcmask 1043459
      %v1427 = vsel %vm1426, %v1423, %v1425
      %vm1428 = vcmask 1045509
      %v1429 = vsel %vm1428, %v1423, %v1427
      %vm1430 = vcmask 1047559
      %v1431 = vsel %vm1430, %v1423, %v1429
      %v1432 = vsel %vm1419, %v1384, %v1384
      %v1433 = vsel %vm1421, %v1384, %v1432
      %v1434 = vrot.slane %v1418, 7
      %v1435 = vsel %vm1424, %v1434, %v1433
      %v1436 = vsel %vm1426, %v1434, %v1435
      %v1437 = vsel %vm1428, %v1434, %v1436
      %v1438 = vsel %vm1430, %v1434, %v1437
      %1441 = vst [vmem:[#allocation2] sm:$0xff] %v1431
      %1442 = vst [vmem:[#allocation2 + $0x8] sm:$0xff] %v1438
    $region105: #{tpu_custom_call.1} parent=1 // pred_fallthru
      _
    %p1443 = scmp.gt.s32.totalorder 0, 0
    // Predicated region
    $region106: #{tpu_custom_call.1} parent=1 // pred_check
      %p1444 = pneg %p1443
    $region107: #{tpu_custom_call.1} parent=1 // pred_check_branch
      %1446 = sbr.rel (%p1444) target = $region109
    $region108: #{tpu_custom_call.1} parent=1 // pred_region
      %v1447 = vld [vmem:[#allocation2] sm:$0xff]
      %v1448 = vld [vmem:[#allocation2 + $0x8] sm:$0xff]
      %v1465 = vcombine.low %v1195, %v1204
      %v1466 = vcombine.low %v1213, %v1222
      %v1468 = vunpack.c.l.s4 1983009808
      %v1469 = vunpack.c.0.s8 %v1468
      %v1470 = vlaneseq
      %v1471 = vshrl.u32 %v1470, 7
      %v1472 = vsub.s32 %v1469, %v1471
      %v1473 = vrot.slane %v1465, %v1472
      %v1475 = vunpack.c.l.s4 1983009808
      %v1476 = vunpack.c.0.s8 %v1475
      %v1477 = vlaneseq
      %v1478 = vshrl.u32 %v1477, 7
      %v1479 = vsub.s32 %v1476, %v1478
      %v1480 = vrot.slane %v1466, %v1479
      %v1481 = vcombine.low %v1473, %v1480
      %v1482 = vcombine.low %v1231, %v1240
      %v1483 = vcombine.low %v1249, %v1258
      %v1485 = vunpack.c.l.s4 1983009808
      %v1486 = vunpack.c.0.s8 %v1485
      %v1487 = vlaneseq
      %v1488 = vshrl.u32 %v1487, 7
      %v1489 = vsub.s32 %v1486, %v1488
      %v1490 = vrot.slane %v1482, %v1489
      %v1492 = vunpack.c.l.s4 1983009808
      %v1493 = vunpack.c.0.s8 %v1492
      %v1494 = vlaneseq
      %v1495 = vshrl.u32 %v1494, 7
      %v1496 = vsub.s32 %v1493, %v1495
      %v1497 = vrot.slane %v1483, %v1496
      %v1498 = vcombine.low %v1490, %v1497
      %v1499 = vcombine.low %v1267, %v1276
      %v1500 = vcombine.low %v1285, %v1294
      %v1502 = vunpack.c.l.s4 1983009808
      %v1503 = vunpack.c.0.s8 %v1502
      %v1504 = vlaneseq
      %v1505 = vshrl.u32 %v1504, 7
      %v1506 = vsub.s32 %v1503, %v1505
      %v1507 = vrot.slane %v1499, %v1506
      %v1509 = vunpack.c.l.s4 1983009808
      %v1510 = vunpack.c.0.s8 %v1509
      %v1511 = vlaneseq
      %v1512 = vshrl.u32 %v1511, 7
      %v1513 = vsub.s32 %v1510, %v1512
      %v1514 = vrot.slane %v1500, %v1513
      %v1515 = vcombine.low %v1507, %v1514
      %v1516 = vcombine.low %v1303, %v1312
      %v1517 = vcombine.low %v1321, %v1330
      %v1519 = vunpack.c.l.s4 1983009808
      %v1520 = vunpack.c.0.s8 %v1519
      %v1521 = vlaneseq
      %v1522 = vshrl.u32 %v1521, 7
      %v1523 = vsub.s32 %v1520, %v1522
      %v1524 = vrot.slane %v1516, %v1523
      %v1526 = vunpack.c.l.s4 1983009808
      %v1527 = vunpack.c.0.s8 %v1526
      %v1528 = vlaneseq
      %v1529 = vshrl.u32 %v1528, 7
      %v1530 = vsub.s32 %v1527, %v1529
      %v1531 = vrot.slane %v1517, %v1530
      %v1532 = vcombine.low %v1524, %v1531
      %vm1533 = vcmask 1044484
      %v1534 = vsel %vm1533, %v1481, %v1481
      %vm1535 = vcmask 1046534
      %v1536 = vsel %vm1535, %v1481, %v1534
      %v1537 = vrot.slane %v1515, 7
      %vm1538 = vcmask 1041409
      %v1539 = vsel %vm1538, %v1537, %v1536
      %vm1540 = vcmask 1043459
      %v1541 = vsel %vm1540, %v1537, %v1539
      %vm1542 = vcmask 1045509
      %v1543 = vsel %vm1542, %v1537, %v1541
      %vm1544 = vcmask 1047559
      %v1545 = vsel %vm1544, %v1537, %v1543
      %v1546 = vsel %vm1533, %v1498, %v1498
      %v1547 = vsel %vm1535, %v1498, %v1546
      %v1548 = vrot.slane %v1532, 7
      %v1549 = vsel %vm1538, %v1548, %v1547
      %v1550 = vsel %vm1540, %v1548, %v1549
      %v1551 = vsel %vm1542, %v1548, %v1550
      %v1552 = vsel %vm1544, %v1548, %v1551
      %v1555 = vmax.f32 %v1447, %v1545
      %v1556 = vmax.f32 %v1448, %v1552
      %1557 = vst [vmem:[#allocation2] sm:$0xff] %v1555
      %1558 = vst [vmem:[#allocation2 + $0x8] sm:$0xff] %v1556
    $region109: #{tpu_custom_call.1} parent=1 // pred_fallthru
      _
    // Predicated region
    $region110: #{tpu_custom_call.1} parent=1 // pred_check
      %p1559 = pneg %p1331
    $region111: #{tpu_custom_call.1} parent=1 // pred_check_branch
      %1561 = sbr.rel (%p1559) target = $region113
    $region112: #{tpu_custom_call.1} parent=1 // pred_region
      %v1562 = vld [vmem:[#allocation2] sm:$0xff]
      %v1563 = vld [vmem:[#allocation2 + $0x8] sm:$0xff]
      %v1564 = vld [vmem:[#allocation14] sm:$0xff]
      %v1565 = vld [vmem:[#allocation14 + $0x8] sm:$0xff]
      %v1566 = vld [vmem:[#allocation14 + $0x10] sm:$0xff]
      %v1567 = vld [vmem:[#allocation14 + $0x18] sm:$0xff]
      %v1568 = vld [vmem:[#allocation14 + $0x20] sm:$0xff]
      %v1569 = vld [vmem:[#allocation14 + $0x28] sm:$0xff]
      %v1570 = vld [vmem:[#allocation14 + $0x30] sm:$0xff]
      %v1571 = vld [vmem:[#allocation14 + $0x38] sm:$0xff]
      %v1572 = vld [vmem:[#allocation14 + $0x40] sm:$0xff]
      %v1573 = vld [vmem:[#allocation14 + $0x48] sm:$0xff]
      %v1574 = vld [vmem:[#allocation14 + $0x50] sm:$0xff]
      %v1575 = vld [vmem:[#allocation14 + $0x58] sm:$0xff]
      %v1576 = vld [vmem:[#allocation14 + $0x60] sm:$0xff]
      %v1577 = vld [vmem:[#allocation14 + $0x68] sm:$0xff]
      %v1578 = vld [vmem:[#allocation14 + $0x70] sm:$0xff]
      %v1579 = vld [vmem:[#allocation14 + $0x78] sm:$0xff]
      %v1580 = vld [vmem:[#allocation14 + $0x80] sm:$0xff]
      %v1581 = vld [vmem:[#allocation14 + $0x88] sm:$0xff]
      %v1582 = vld [vmem:[#allocation14 + $0x90] sm:$0xff]
      %v1583 = vld [vmem:[#allocation14 + $0x98] sm:$0xff]
      %v1584 = vld [vmem:[#allocation14 + $0xa0] sm:$0xff]
      %v1585 = vld [vmem:[#allocation14 + $0xa8] sm:$0xff]
      %v1586 = vld [vmem:[#allocation14 + $0xb0] sm:$0xff]
      %v1587 = vld [vmem:[#allocation14 + $0xb8] sm:$0xff]
      %v1588 = vld [vmem:[#allocation14 + $0xc0] sm:$0xff]
      %v1589 = vld [vmem:[#allocation14 + $0xc8] sm:$0xff]
      %v1590 = vld [vmem:[#allocation14 + $0xd0] sm:$0xff]
      %v1591 = vld [vmem:[#allocation14 + $0xd8] sm:$0xff]
      %v1592 = vld [vmem:[#allocation14 + $0xe0] sm:$0xff]
      %v1593 = vld [vmem:[#allocation14 + $0xe8] sm:$0xff]
      %v1594 = vld [vmem:[#allocation14 + $0xf0] sm:$0xff]
      %v1595 = vld [vmem:[#allocation14 + $0xf8] sm:$0xff]
      %v1596 = vld [vmem:[#allocation14 + $0x100] sm:$0xff]
      %v1597 = vld [vmem:[#allocation14 + $0x108] sm:$0xff]
      %v1598 = vld [vmem:[#allocation14 + $0x110] sm:$0xff]
      %v1599 = vld [vmem:[#allocation14 + $0x118] sm:$0xff]
      %v1600 = vld [vmem:[#allocation14 + $0x120] sm:$0xff]
      %v1601 = vld [vmem:[#allocation14 + $0x128] sm:$0xff]
      %v1602 = vld [vmem:[#allocation14 + $0x130] sm:$0xff]
      %v1603 = vld [vmem:[#allocation14 + $0x138] sm:$0xff]
      %v1604 = vld [vmem:[#allocation14 + $0x140] sm:$0xff]
      %v1605 = vld [vmem:[#allocation14 + $0x148] sm:$0xff]
      %v1606 = vld [vmem:[#allocation14 + $0x150] sm:$0xff]
      %v1607 = vld [vmem:[#allocation14 + $0x158] sm:$0xff]
      %v1608 = vld [vmem:[#allocation14 + $0x160] sm:$0xff]
      %v1609 = vld [vmem:[#allocation14 + $0x168] sm:$0xff]
      %v1610 = vld [vmem:[#allocation14 + $0x170] sm:$0xff]
      %v1611 = vld [vmem:[#allocation14 + $0x178] sm:$0xff]
      %v1612 = vld [vmem:[#allocation14 + $0x180] sm:$0xff]
      %v1613 = vld [vmem:[#allocation14 + $0x188] sm:$0xff]
      %v1614 = vld [vmem:[#allocation14 + $0x190] sm:$0xff]
      %v1615 = vld [vmem:[#allocation14 + $0x198] sm:$0xff]
      %v1616 = vld [vmem:[#allocation14 + $0x1a0] sm:$0xff]
      %v1617 = vld [vmem:[#allocation14 + $0x1a8] sm:$0xff]
      %v1618 = vld [vmem:[#allocation14 + $0x1b0] sm:$0xff]
      %v1619 = vld [vmem:[#allocation14 + $0x1b8] sm:$0xff]
      %v1620 = vld [vmem:[#allocation14 + $0x1c0] sm:$0xff]
      %v1621 = vld [vmem:[#allocation14 + $0x1c8] sm:$0xff]
      %v1622 = vld [vmem:[#allocation14 + $0x1d0] sm:$0xff]
      %v1623 = vld [vmem:[#allocation14 + $0x1d8] sm:$0xff]
      %v1624 = vld [vmem:[#allocation14 + $0x1e0] sm:$0xff]
      %v1625 = vld [vmem:[#allocation14 + $0x1e8] sm:$0xff]
      %v1626 = vld [vmem:[#allocation14 + $0x1f0] sm:$0xff]
      %v1627 = vld [vmem:[#allocation14 + $0x1f8] sm:$0xff]
      %v1628 = vld [vmem:[#allocation14 + $0x200] sm:$0xff]
      %v1629 = vld [vmem:[#allocation14 + $0x208] sm:$0xff]
      %v1630 = vld [vmem:[#allocation14 + $0x210] sm:$0xff]
      %v1631 = vld [vmem:[#allocation14 + $0x218] sm:$0xff]
      %v1632 = vld [vmem:[#allocation14 + $0x220] sm:$0xff]
      %v1633 = vld [vmem:[#allocation14 + $0x228] sm:$0xff]
      %v1634 = vld [vmem:[#allocation14 + $0x230] sm:$0xff]
      %v1635 = vld [vmem:[#allocation14 + $0x238] sm:$0xff]
      %v1636 = vld [vmem:[#allocation14 + $0x240] sm:$0xff]
      %v1637 = vld [vmem:[#allocation14 + $0x248] sm:$0xff]
      %v1638 = vld [vmem:[#allocation14 + $0x250] sm:$0xff]
      %v1639 = vld [vmem:[#allocation14 + $0x258] sm:$0xff]
      %v1640 = vld [vmem:[#allocation14 + $0x260] sm:$0xff]
      %v1641 = vld [vmem:[#allocation14 + $0x268] sm:$0xff]
      %v1642 = vld [vmem:[#allocation14 + $0x270] sm:$0xff]
      %v1643 = vld [vmem:[#allocation14 + $0x278] sm:$0xff]
      %v1644 = vld [vmem:[#allocation14 + $0x280] sm:$0xff]
      %v1645 = vld [vmem:[#allocation14 + $0x288] sm:$0xff]
      %v1646 = vld [vmem:[#allocation14 + $0x290] sm:$0xff]
      %v1647 = vld [vmem:[#allocation14 + $0x298] sm:$0xff]
      %v1648 = vld [vmem:[#allocation14 + $0x2a0] sm:$0xff]
      %v1649 = vld [vmem:[#allocation14 + $0x2a8] sm:$0xff]
      %v1650 = vld [vmem:[#allocation14 + $0x2b0] sm:$0xff]
      %v1651 = vld [vmem:[#allocation14 + $0x2b8] sm:$0xff]
      %v1652 = vld [vmem:[#allocation14 + $0x2c0] sm:$0xff]
      %v1653 = vld [vmem:[#allocation14 + $0x2c8] sm:$0xff]
      %v1654 = vld [vmem:[#allocation14 + $0x2d0] sm:$0xff]
      %v1655 = vld [vmem:[#allocation14 + $0x2d8] sm:$0xff]
      %v1656 = vld [vmem:[#allocation14 + $0x2e0] sm:$0xff]
      %v1657 = vld [vmem:[#allocation14 + $0x2e8] sm:$0xff]
      %v1658 = vld [vmem:[#allocation14 + $0x2f0] sm:$0xff]
      %v1659 = vld [vmem:[#allocation14 + $0x2f8] sm:$0xff]
      %v1660 = vld [vmem:[#allocation14 + $0x300] sm:$0xff]
      %v1661 = vld [vmem:[#allocation14 + $0x308] sm:$0xff]
      %v1662 = vld [vmem:[#allocation14 + $0x310] sm:$0xff]
      %v1663 = vld [vmem:[#allocation14 + $0x318] sm:$0xff]
      %v1664 = vld [vmem:[#allocation14 + $0x320] sm:$0xff]
      %v1665 = vld [vmem:[#allocation14 + $0x328] sm:$0xff]
      %v1666 = vld [vmem:[#allocation14 + $0x330] sm:$0xff]
      %v1667 = vld [vmem:[#allocation14 + $0x338] sm:$0xff]
      %v1668 = vld [vmem:[#allocation14 + $0x340] sm:$0xff]
      %v1669 = vld [vmem:[#allocation14 + $0x348] sm:$0xff]
      %v1670 = vld [vmem:[#allocation14 + $0x350] sm:$0xff]
      %v1671 = vld [vmem:[#allocation14 + $0x358] sm:$0xff]
      %v1672 = vld [vmem:[#allocation14 + $0x360] sm:$0xff]
      %v1673 = vld [vmem:[#allocation14 + $0x368] sm:$0xff]
      %v1674 = vld [vmem:[#allocation14 + $0x370] sm:$0xff]
      %v1675 = vld [vmem:[#allocation14 + $0x378] sm:$0xff]
      %v1676 = vld [vmem:[#allocation14 + $0x380] sm:$0xff]
      %v1677 = vld [vmem:[#allocation14 + $0x388] sm:$0xff]
      %v1678 = vld [vmem:[#allocation14 + $0x390] sm:$0xff]
      %v1679 = vld [vmem:[#allocation14 + $0x398] sm:$0xff]
      %v1680 = vld [vmem:[#allocation14 + $0x3a0] sm:$0xff]
      %v1681 = vld [vmem:[#allocation14 + $0x3a8] sm:$0xff]
      %v1682 = vld [vmem:[#allocation14 + $0x3b0] sm:$0xff]
      %v1683 = vld [vmem:[#allocation14 + $0x3b8] sm:$0xff]
      %v1684 = vld [vmem:[#allocation14 + $0x3c0] sm:$0xff]
      %v1685 = vld [vmem:[#allocation14 + $0x3c8] sm:$0xff]
      %v1686 = vld [vmem:[#allocation14 + $0x3d0] sm:$0xff]
      %v1687 = vld [vmem:[#allocation14 + $0x3d8] sm:$0xff]
      %v1688 = vld [vmem:[#allocation14 + $0x3e0] sm:$0xff]
      %v1689 = vld [vmem:[#allocation14 + $0x3e8] sm:$0xff]
      %v1690 = vld [vmem:[#allocation14 + $0x3f0] sm:$0xff]
      %v1691 = vld [vmem:[#allocation14 + $0x3f8] sm:$0xff]
      %v1692 = vld [vmem:[#allocation14 + $0x400] sm:$0xff]
      %v1693 = vld [vmem:[#allocation14 + $0x408] sm:$0xff]
      %v1694 = vld [vmem:[#allocation14 + $0x410] sm:$0xff]
      %v1695 = vld [vmem:[#allocation14 + $0x418] sm:$0xff]
      %v1696 = vld [vmem:[#allocation14 + $0x420] sm:$0xff]
      %v1697 = vld [vmem:[#allocation14 + $0x428] sm:$0xff]
      %v1698 = vld [vmem:[#allocation14 + $0x430] sm:$0xff]
      %v1699 = vld [vmem:[#allocation14 + $0x438] sm:$0xff]
      %v1700 = vld [vmem:[#allocation14 + $0x440] sm:$0xff]
      %v1701 = vld [vmem:[#allocation14 + $0x448] sm:$0xff]
      %v1702 = vld [vmem:[#allocation14 + $0x450] sm:$0xff]
      %v1703 = vld [vmem:[#allocation14 + $0x458] sm:$0xff]
      %v1704 = vld [vmem:[#allocation14 + $0x460] sm:$0xff]
      %v1705 = vld [vmem:[#allocation14 + $0x468] sm:$0xff]
      %v1706 = vld [vmem:[#allocation14 + $0x470] sm:$0xff]
      %v1707 = vld [vmem:[#allocation14 + $0x478] sm:$0xff]
      %v1708 = vld [vmem:[#allocation14 + $0x480] sm:$0xff]
      %v1709 = vld [vmem:[#allocation14 + $0x488] sm:$0xff]
      %v1710 = vld [vmem:[#allocation14 + $0x490] sm:$0xff]
      %v1711 = vld [vmem:[#allocation14 + $0x498] sm:$0xff]
      %v1712 = vld [vmem:[#allocation14 + $0x4a0] sm:$0xff]
      %v1713 = vld [vmem:[#allocation14 + $0x4a8] sm:$0xff]
      %v1714 = vld [vmem:[#allocation14 + $0x4b0] sm:$0xff]
      %v1715 = vld [vmem:[#allocation14 + $0x4b8] sm:$0xff]
      %v1716 = vld [vmem:[#allocation14 + $0x4c0] sm:$0xff]
      %v1717 = vld [vmem:[#allocation14 + $0x4c8] sm:$0xff]
      %v1718 = vld [vmem:[#allocation14 + $0x4d0] sm:$0xff]
      %v1719 = vld [vmem:[#allocation14 + $0x4d8] sm:$0xff]
      %v1720 = vld [vmem:[#allocation14 + $0x4e0] sm:$0xff]
      %v1721 = vld [vmem:[#allocation14 + $0x4e8] sm:$0xff]
      %v1722 = vld [vmem:[#allocation14 + $0x4f0] sm:$0xff]
      %v1723 = vld [vmem:[#allocation14 + $0x4f8] sm:$0xff]
      %v1724 = vld [vmem:[#allocation14 + $0x500] sm:$0xff]
      %v1725 = vld [vmem:[#allocation14 + $0x508] sm:$0xff]
      %v1726 = vld [vmem:[#allocation14 + $0x510] sm:$0xff]
      %v1727 = vld [vmem:[#allocation14 + $0x518] sm:$0xff]
      %v1728 = vld [vmem:[#allocation14 + $0x520] sm:$0xff]
      %v1729 = vld [vmem:[#allocation14 + $0x528] sm:$0xff]
      %v1730 = vld [vmem:[#allocation14 + $0x530] sm:$0xff]
      %v1731 = vld [vmem:[#allocation14 + $0x538] sm:$0xff]
      %v1732 = vld [vmem:[#allocation14 + $0x540] sm:$0xff]
      %v1733 = vld [vmem:[#allocation14 + $0x548] sm:$0xff]
      %v1734 = vld [vmem:[#allocation14 + $0x550] sm:$0xff]
      %v1735 = vld [vmem:[#allocation14 + $0x558] sm:$0xff]
      %v1736 = vld [vmem:[#allocation14 + $0x560] sm:$0xff]
      %v1737 = vld [vmem:[#allocation14 + $0x568] sm:$0xff]
      %v1738 = vld [vmem:[#allocation14 + $0x570] sm:$0xff]
      %v1739 = vld [vmem:[#allocation14 + $0x578] sm:$0xff]
      %v1740 = vld [vmem:[#allocation14 + $0x580] sm:$0xff]
      %v1741 = vld [vmem:[#allocation14 + $0x588] sm:$0xff]
      %v1742 = vld [vmem:[#allocation14 + $0x590] sm:$0xff]
      %v1743 = vld [vmem:[#allocation14 + $0x598] sm:$0xff]
      %v1744 = vld [vmem:[#allocation14 + $0x5a0] sm:$0xff]
      %v1745 = vld [vmem:[#allocation14 + $0x5a8] sm:$0xff]
      %v1746 = vld [vmem:[#allocation14 + $0x5b0] sm:$0xff]
      %v1747 = vld [vmem:[#allocation14 + $0x5b8] sm:$0xff]
      %v1748 = vld [vmem:[#allocation14 + $0x5c0] sm:$0xff]
      %v1749 = vld [vmem:[#allocation14 + $0x5c8] sm:$0xff]
      %v1750 = vld [vmem:[#allocation14 + $0x5d0] sm:$0xff]
      %v1751 = vld [vmem:[#allocation14 + $0x5d8] sm:$0xff]
      %v1752 = vld [vmem:[#allocation14 + $0x5e0] sm:$0xff]
      %v1753 = vld [vmem:[#allocation14 + $0x5e8] sm:$0xff]
      %v1754 = vld [vmem:[#allocation14 + $0x5f0] sm:$0xff]
      %v1755 = vld [vmem:[#allocation14 + $0x5f8] sm:$0xff]
      %v1756 = vld [vmem:[#allocation14 + $0x600] sm:$0xff]
      %v1757 = vld [vmem:[#allocation14 + $0x608] sm:$0xff]
      %v1758 = vld [vmem:[#allocation14 + $0x610] sm:$0xff]
      %v1759 = vld [vmem:[#allocation14 + $0x618] sm:$0xff]
      %v1760 = vld [vmem:[#allocation14 + $0x620] sm:$0xff]
      %v1761 = vld [vmem:[#allocation14 + $0x628] sm:$0xff]
      %v1762 = vld [vmem:[#allocation14 + $0x630] sm:$0xff]
      %v1763 = vld [vmem:[#allocation14 + $0x638] sm:$0xff]
      %v1764 = vld [vmem:[#allocation14 + $0x640] sm:$0xff]
      %v1765 = vld [vmem:[#allocation14 + $0x648] sm:$0xff]
      %v1766 = vld [vmem:[#allocation14 + $0x650] sm:$0xff]
      %v1767 = vld [vmem:[#allocation14 + $0x658] sm:$0xff]
      %v1768 = vld [vmem:[#allocation14 + $0x660] sm:$0xff]
      %v1769 = vld [vmem:[#allocation14 + $0x668] sm:$0xff]
      %v1770 = vld [vmem:[#allocation14 + $0x670] sm:$0xff]
      %v1771 = vld [vmem:[#allocation14 + $0x678] sm:$0xff]
      %v1772 = vld [vmem:[#allocation14 + $0x680] sm:$0xff]
      %v1773 = vld [vmem:[#allocation14 + $0x688] sm:$0xff]
      %v1774 = vld [vmem:[#allocation14 + $0x690] sm:$0xff]
      %v1775 = vld [vmem:[#allocation14 + $0x698] sm:$0xff]
      %v1776 = vld [vmem:[#allocation14 + $0x6a0] sm:$0xff]
      %v1777 = vld [vmem:[#allocation14 + $0x6a8] sm:$0xff]
      %v1778 = vld [vmem:[#allocation14 + $0x6b0] sm:$0xff]
      %v1779 = vld [vmem:[#allocation14 + $0x6b8] sm:$0xff]
      %v1780 = vld [vmem:[#allocation14 + $0x6c0] sm:$0xff]
      %v1781 = vld [vmem:[#allocation14 + $0x6c8] sm:$0xff]
      %v1782 = vld [vmem:[#allocation14 + $0x6d0] sm:$0xff]
      %v1783 = vld [vmem:[#allocation14 + $0x6d8] sm:$0xff]
      %v1784 = vld [vmem:[#allocation14 + $0x6e0] sm:$0xff]
      %v1785 = vld [vmem:[#allocation14 + $0x6e8] sm:$0xff]
      %v1786 = vld [vmem:[#allocation14 + $0x6f0] sm:$0xff]
      %v1787 = vld [vmem:[#allocation14 + $0x6f8] sm:$0xff]
      %v1788 = vld [vmem:[#allocation14 + $0x700] sm:$0xff]
      %v1789 = vld [vmem:[#allocation14 + $0x708] sm:$0xff]
      %v1790 = vld [vmem:[#allocation14 + $0x710] sm:$0xff]
      %v1791 = vld [vmem:[#allocation14 + $0x718] sm:$0xff]
      %v1792 = vld [vmem:[#allocation14 + $0x720] sm:$0xff]
      %v1793 = vld [vmem:[#allocation14 + $0x728] sm:$0xff]
      %v1794 = vld [vmem:[#allocation14 + $0x730] sm:$0xff]
      %v1795 = vld [vmem:[#allocation14 + $0x738] sm:$0xff]
      %v1796 = vld [vmem:[#allocation14 + $0x740] sm:$0xff]
      %v1797 = vld [vmem:[#allocation14 + $0x748] sm:$0xff]
      %v1798 = vld [vmem:[#allocation14 + $0x750] sm:$0xff]
      %v1799 = vld [vmem:[#allocation14 + $0x758] sm:$0xff]
      %v1800 = vld [vmem:[#allocation14 + $0x760] sm:$0xff]
      %v1801 = vld [vmem:[#allocation14 + $0x768] sm:$0xff]
      %v1802 = vld [vmem:[#allocation14 + $0x770] sm:$0xff]
      %v1803 = vld [vmem:[#allocation14 + $0x778] sm:$0xff]
      %v1804 = vld [vmem:[#allocation14 + $0x780] sm:$0xff]
      %v1805 = vld [vmem:[#allocation14 + $0x788] sm:$0xff]
      %v1806 = vld [vmem:[#allocation14 + $0x790] sm:$0xff]
      %v1807 = vld [vmem:[#allocation14 + $0x798] sm:$0xff]
      %v1808 = vld [vmem:[#allocation14 + $0x7a0] sm:$0xff]
      %v1809 = vld [vmem:[#allocation14 + $0x7a8] sm:$0xff]
      %v1810 = vld [vmem:[#allocation14 + $0x7b0] sm:$0xff]
      %v1811 = vld [vmem:[#allocation14 + $0x7b8] sm:$0xff]
      %v1812 = vld [vmem:[#allocation14 + $0x7c0] sm:$0xff]
      %v1813 = vld [vmem:[#allocation14 + $0x7c8] sm:$0xff]
      %v1814 = vld [vmem:[#allocation14 + $0x7d0] sm:$0xff]
      %v1815 = vld [vmem:[#allocation14 + $0x7d8] sm:$0xff]
      %v1816 = vld [vmem:[#allocation14 + $0x7e0] sm:$0xff]
      %v1817 = vld [vmem:[#allocation14 + $0x7e8] sm:$0xff]
      %v1818 = vld [vmem:[#allocation14 + $0x7f0] sm:$0xff]
      %v1819 = vld [vmem:[#allocation14 + $0x7f8] sm:$0xff]
      %v1820 = vld [vmem:[#allocation14 + $0x800] sm:$0xff]
      %v1821 = vld [vmem:[#allocation14 + $0x808] sm:$0xff]
      %v1822 = vld [vmem:[#allocation14 + $0x810] sm:$0xff]
      %v1823 = vld [vmem:[#allocation14 + $0x818] sm:$0xff]
      %v1824 = vld [vmem:[#allocation14 + $0x820] sm:$0xff]
      %v1825 = vld [vmem:[#allocation14 + $0x828] sm:$0xff]
      %v1826 = vld [vmem:[#allocation14 + $0x830] sm:$0xff]
      %v1827 = vld [vmem:[#allocation14 + $0x838] sm:$0xff]
      %v1828 = vld [vmem:[#allocation14 + $0x840] sm:$0xff]
      %v1829 = vld [vmem:[#allocation14 + $0x848] sm:$0xff]
      %v1830 = vld [vmem:[#allocation14 + $0x850] sm:$0xff]
      %v1831 = vld [vmem:[#allocation14 + $0x858] sm:$0xff]
      %v1832 = vld [vmem:[#allocation14 + $0x860] sm:$0xff]
      %v1833 = vld [vmem:[#allocation14 + $0x868] sm:$0xff]
      %v1834 = vld [vmem:[#allocation14 + $0x870] sm:$0xff]
      %v1835 = vld [vmem:[#allocation14 + $0x878] sm:$0xff]
      %v1836 = vld [vmem:[#allocation14 + $0x880] sm:$0xff]
      %v1837 = vld [vmem:[#allocation14 + $0x888] sm:$0xff]
      %v1838 = vld [vmem:[#allocation14 + $0x890] sm:$0xff]
      %v1839 = vld [vmem:[#allocation14 + $0x898] sm:$0xff]
      %v1840 = vld [vmem:[#allocation14 + $0x8a0] sm:$0xff]
      %v1841 = vld [vmem:[#allocation14 + $0x8a8] sm:$0xff]
      %v1842 = vld [vmem:[#allocation14 + $0x8b0] sm:$0xff]
      %v1843 = vld [vmem:[#allocation14 + $0x8b8] sm:$0xff]
      %v1844 = vld [vmem:[#allocation14 + $0x8c0] sm:$0xff]
      %v1845 = vld [vmem:[#allocation14 + $0x8c8] sm:$0xff]
      %v1846 = vld [vmem:[#allocation14 + $0x8d0] sm:$0xff]
      %v1847 = vld [vmem:[#allocation14 + $0x8d8] sm:$0xff]
      %v1848 = vld [vmem:[#allocation14 + $0x8e0] sm:$0xff]
      %v1849 = vld [vmem:[#allocation14 + $0x8e8] sm:$0xff]
      %v1850 = vld [vmem:[#allocation14 + $0x8f0] sm:$0xff]
      %v1851 = vld [vmem:[#allocation14 + $0x8f8] sm:$0xff]
      %v1852 = vld [vmem:[#allocation14 + $0x900] sm:$0xff]
      %v1853 = vld [vmem:[#allocation14 + $0x908] sm:$0xff]
      %v1854 = vld [vmem:[#allocation14 + $0x910] sm:$0xff]
      %v1855 = vld [vmem:[#allocation14 + $0x918] sm:$0xff]
      %v1856 = vld [vmem:[#allocation14 + $0x920] sm:$0xff]
      %v1857 = vld [vmem:[#allocation14 + $0x928] sm:$0xff]
      %v1858 = vld [vmem:[#allocation14 + $0x930] sm:$0xff]
      %v1859 = vld [vmem:[#allocation14 + $0x938] sm:$0xff]
      %v1860 = vld [vmem:[#allocation14 + $0x940] sm:$0xff]
      %v1861 = vld [vmem:[#allocation14 + $0x948] sm:$0xff]
      %v1862 = vld [vmem:[#allocation14 + $0x950] sm:$0xff]
      %v1863 = vld [vmem:[#allocation14 + $0x958] sm:$0xff]
      %v1864 = vld [vmem:[#allocation14 + $0x960] sm:$0xff]
      %v1865 = vld [vmem:[#allocation14 + $0x968] sm:$0xff]
      %v1866 = vld [vmem:[#allocation14 + $0x970] sm:$0xff]
      %v1867 = vld [vmem:[#allocation14 + $0x978] sm:$0xff]
      %v1868 = vld [vmem:[#allocation14 + $0x980] sm:$0xff]
      %v1869 = vld [vmem:[#allocation14 + $0x988] sm:$0xff]
      %v1870 = vld [vmem:[#allocation14 + $0x990] sm:$0xff]
      %v1871 = vld [vmem:[#allocation14 + $0x998] sm:$0xff]
      %v1872 = vld [vmem:[#allocation14 + $0x9a0] sm:$0xff]
      %v1873 = vld [vmem:[#allocation14 + $0x9a8] sm:$0xff]
      %v1874 = vld [vmem:[#allocation14 + $0x9b0] sm:$0xff]
      %v1875 = vld [vmem:[#allocation14 + $0x9b8] sm:$0xff]
      %v1876 = vld [vmem:[#allocation14 + $0x9c0] sm:$0xff]
      %v1877 = vld [vmem:[#allocation14 + $0x9c8] sm:$0xff]
      %v1878 = vld [vmem:[#allocation14 + $0x9d0] sm:$0xff]
      %v1879 = vld [vmem:[#allocation14 + $0x9d8] sm:$0xff]
      %v1880 = vld [vmem:[#allocation14 + $0x9e0] sm:$0xff]
      %v1881 = vld [vmem:[#allocation14 + $0x9e8] sm:$0xff]
      %v1882 = vld [vmem:[#allocation14 + $0x9f0] sm:$0xff]
      %v1883 = vld [vmem:[#allocation14 + $0x9f8] sm:$0xff]
      %v1884 = vld [vmem:[#allocation14 + $0xa00] sm:$0xff]
      %v1885 = vld [vmem:[#allocation14 + $0xa08] sm:$0xff]
      %v1886 = vld [vmem:[#allocation14 + $0xa10] sm:$0xff]
      %v1887 = vld [vmem:[#allocation14 + $0xa18] sm:$0xff]
      %v1888 = vld [vmem:[#allocation14 + $0xa20] sm:$0xff]
      %v1889 = vld [vmem:[#allocation14 + $0xa28] sm:$0xff]
      %v1890 = vld [vmem:[#allocation14 + $0xa30] sm:$0xff]
      %v1891 = vld [vmem:[#allocation14 + $0xa38] sm:$0xff]
      %v1892 = vld [vmem:[#allocation14 + $0xa40] sm:$0xff]
      %v1893 = vld [vmem:[#allocation14 + $0xa48] sm:$0xff]
      %v1894 = vld [vmem:[#allocation14 + $0xa50] sm:$0xff]
      %v1895 = vld [vmem:[#allocation14 + $0xa58] sm:$0xff]
      %v1896 = vld [vmem:[#allocation14 + $0xa60] sm:$0xff]
      %v1897 = vld [vmem:[#allocation14 + $0xa68] sm:$0xff]
      %v1898 = vld [vmem:[#allocation14 + $0xa70] sm:$0xff]
      %v1899 = vld [vmem:[#allocation14 + $0xa78] sm:$0xff]
      %v1900 = vld [vmem:[#allocation14 + $0xa80] sm:$0xff]
      %v1901 = vld [vmem:[#allocation14 + $0xa88] sm:$0xff]
      %v1902 = vld [vmem:[#allocation14 + $0xa90] sm:$0xff]
      %v1903 = vld [vmem:[#allocation14 + $0xa98] sm:$0xff]
      %v1904 = vld [vmem:[#allocation14 + $0xaa0] sm:$0xff]
      %v1905 = vld [vmem:[#allocation14 + $0xaa8] sm:$0xff]
      %v1906 = vld [vmem:[#allocation14 + $0xab0] sm:$0xff]
      %v1907 = vld [vmem:[#allocation14 + $0xab8] sm:$0xff]
      %v1908 = vld [vmem:[#allocation14 + $0xac0] sm:$0xff]
      %v1909 = vld [vmem:[#allocation14 + $0xac8] sm:$0xff]
      %v1910 = vld [vmem:[#allocation14 + $0xad0] sm:$0xff]
      %v1911 = vld [vmem:[#allocation14 + $0xad8] sm:$0xff]
      %v1912 = vld [vmem:[#allocation14 + $0xae0] sm:$0xff]
      %v1913 = vld [vmem:[#allocation14 + $0xae8] sm:$0xff]
      %v1914 = vld [vmem:[#allocation14 + $0xaf0] sm:$0xff]
      %v1915 = vld [vmem:[#allocation14 + $0xaf8] sm:$0xff]
      %v1916 = vld [vmem:[#allocation14 + $0xb00] sm:$0xff]
      %v1917 = vld [vmem:[#allocation14 + $0xb08] sm:$0xff]
      %v1918 = vld [vmem:[#allocation14 + $0xb10] sm:$0xff]
      %v1919 = vld [vmem:[#allocation14 + $0xb18] sm:$0xff]
      %v1920 = vld [vmem:[#allocation14 + $0xb20] sm:$0xff]
      %v1921 = vld [vmem:[#allocation14 + $0xb28] sm:$0xff]
      %v1922 = vld [vmem:[#allocation14 + $0xb30] sm:$0xff]
      %v1923 = vld [vmem:[#allocation14 + $0xb38] sm:$0xff]
      %v1924 = vld [vmem:[#allocation14 + $0xb40] sm:$0xff]
      %v1925 = vld [vmem:[#allocation14 + $0xb48] sm:$0xff]
      %v1926 = vld [vmem:[#allocation14 + $0xb50] sm:$0xff]
      %v1927 = vld [vmem:[#allocation14 + $0xb58] sm:$0xff]
      %v1928 = vld [vmem:[#allocation14 + $0xb60] sm:$0xff]
      %v1929 = vld [vmem:[#allocation14 + $0xb68] sm:$0xff]
      %v1930 = vld [vmem:[#allocation14 + $0xb70] sm:$0xff]
      %v1931 = vld [vmem:[#allocation14 + $0xb78] sm:$0xff]
      %v1932 = vld [vmem:[#allocation14 + $0xb80] sm:$0xff]
      %v1933 = vld [vmem:[#allocation14 + $0xb88] sm:$0xff]
      %v1934 = vld [vmem:[#allocation14 + $0xb90] sm:$0xff]
      %v1935 = vld [vmem:[#allocation14 + $0xb98] sm:$0xff]
      %v1936 = vld [vmem:[#allocation14 + $0xba0] sm:$0xff]
      %v1937 = vld [vmem:[#allocation14 + $0xba8] sm:$0xff]
      %v1938 = vld [vmem:[#allocation14 + $0xbb0] sm:$0xff]
      %v1939 = vld [vmem:[#allocation14 + $0xbb8] sm:$0xff]
      %v1940 = vld [vmem:[#allocation14 + $0xbc0] sm:$0xff]
      %v1941 = vld [vmem:[#allocation14 + $0xbc8] sm:$0xff]
      %v1942 = vld [vmem:[#allocation14 + $0xbd0] sm:$0xff]
      %v1943 = vld [vmem:[#allocation14 + $0xbd8] sm:$0xff]
      %v1944 = vld [vmem:[#allocation14 + $0xbe0] sm:$0xff]
      %v1945 = vld [vmem:[#allocation14 + $0xbe8] sm:$0xff]
      %v1946 = vld [vmem:[#allocation14 + $0xbf0] sm:$0xff]
      %v1947 = vld [vmem:[#allocation14 + $0xbf8] sm:$0xff]
      %v1948 = vld [vmem:[#allocation14 + $0xc00] sm:$0xff]
      %v1949 = vld [vmem:[#allocation14 + $0xc08] sm:$0xff]
      %v1950 = vld [vmem:[#allocation14 + $0xc10] sm:$0xff]
      %v1951 = vld [vmem:[#allocation14 + $0xc18] sm:$0xff]
      %v1952 = vld [vmem:[#allocation14 + $0xc20] sm:$0xff]
      %v1953 = vld [vmem:[#allocation14 + $0xc28] sm:$0xff]
      %v1954 = vld [vmem:[#allocation14 + $0xc30] sm:$0xff]
      %v1955 = vld [vmem:[#allocation14 + $0xc38] sm:$0xff]
      %v1956 = vld [vmem:[#allocation14 + $0xc40] sm:$0xff]
      %v1957 = vld [vmem:[#allocation14 + $0xc48] sm:$0xff]
      %v1958 = vld [vmem:[#allocation14 + $0xc50] sm:$0xff]
      %v1959 = vld [vmem:[#allocation14 + $0xc58] sm:$0xff]
      %v1960 = vld [vmem:[#allocation14 + $0xc60] sm:$0xff]
      %v1961 = vld [vmem:[#allocation14 + $0xc68] sm:$0xff]
      %v1962 = vld [vmem:[#allocation14 + $0xc70] sm:$0xff]
      %v1963 = vld [vmem:[#allocation14 + $0xc78] sm:$0xff]
      %v1964 = vld [vmem:[#allocation14 + $0xc80] sm:$0xff]
      %v1965 = vld [vmem:[#allocation14 + $0xc88] sm:$0xff]
      %v1966 = vld [vmem:[#allocation14 + $0xc90] sm:$0xff]
      %v1967 = vld [vmem:[#allocation14 + $0xc98] sm:$0xff]
      %v1968 = vld [vmem:[#allocation14 + $0xca0] sm:$0xff]
      %v1969 = vld [vmem:[#allocation14 + $0xca8] sm:$0xff]
      %v1970 = vld [vmem:[#allocation14 + $0xcb0] sm:$0xff]
      %v1971 = vld [vmem:[#allocation14 + $0xcb8] sm:$0xff]
      %v1972 = vld [vmem:[#allocation14 + $0xcc0] sm:$0xff]
      %v1973 = vld [vmem:[#allocation14 + $0xcc8] sm:$0xff]
      %v1974 = vld [vmem:[#allocation14 + $0xcd0] sm:$0xff]
      %v1975 = vld [vmem:[#allocation14 + $0xcd8] sm:$0xff]
      %v1976 = vld [vmem:[#allocation14 + $0xce0] sm:$0xff]
      %v1977 = vld [vmem:[#allocation14 + $0xce8] sm:$0xff]
      %v1978 = vld [vmem:[#allocation14 + $0xcf0] sm:$0xff]
      %v1979 = vld [vmem:[#allocation14 + $0xcf8] sm:$0xff]
      %v1980 = vld [vmem:[#allocation14 + $0xd00] sm:$0xff]
      %v1981 = vld [vmem:[#allocation14 + $0xd08] sm:$0xff]
      %v1982 = vld [vmem:[#allocation14 + $0xd10] sm:$0xff]
      %v1983 = vld [vmem:[#allocation14 + $0xd18] sm:$0xff]
      %v1984 = vld [vmem:[#allocation14 + $0xd20] sm:$0xff]
      %v1985 = vld [vmem:[#allocation14 + $0xd28] sm:$0xff]
      %v1986 = vld [vmem:[#allocation14 + $0xd30] sm:$0xff]
      %v1987 = vld [vmem:[#allocation14 + $0xd38] sm:$0xff]
      %v1988 = vld [vmem:[#allocation14 + $0xd40] sm:$0xff]
      %v1989 = vld [vmem:[#allocation14 + $0xd48] sm:$0xff]
      %v1990 = vld [vmem:[#allocation14 + $0xd50] sm:$0xff]
      %v1991 = vld [vmem:[#allocation14 + $0xd58] sm:$0xff]
      %v1992 = vld [vmem:[#allocation14 + $0xd60] sm:$0xff]
      %v1993 = vld [vmem:[#allocation14 + $0xd68] sm:$0xff]
      %v1994 = vld [vmem:[#allocation14 + $0xd70] sm:$0xff]
      %v1995 = vld [vmem:[#allocation14 + $0xd78] sm:$0xff]
      %v1996 = vld [vmem:[#allocation14 + $0xd80] sm:$0xff]
      %v1997 = vld [vmem:[#allocation14 + $0xd88] sm:$0xff]
      %v1998 = vld [vmem:[#allocation14 + $0xd90] sm:$0xff]
      %v1999 = vld [vmem:[#allocation14 + $0xd98] sm:$0xff]
      %v2000 = vld [vmem:[#allocation14 + $0xda0] sm:$0xff]
      %v2001 = vld [vmem:[#allocation14 + $0xda8] sm:$0xff]
      %v2002 = vld [vmem:[#allocation14 + $0xdb0] sm:$0xff]
      %v2003 = vld [vmem:[#allocation14 + $0xdb8] sm:$0xff]
      %v2004 = vld [vmem:[#allocation14 + $0xdc0] sm:$0xff]
      %v2005 = vld [vmem:[#allocation14 + $0xdc8] sm:$0xff]
      %v2006 = vld [vmem:[#allocation14 + $0xdd0] sm:$0xff]
      %v2007 = vld [vmem:[#allocation14 + $0xdd8] sm:$0xff]
      %v2008 = vld [vmem:[#allocation14 + $0xde0] sm:$0xff]
      %v2009 = vld [vmem:[#allocation14 + $0xde8] sm:$0xff]
      %v2010 = vld [vmem:[#allocation14 + $0xdf0] sm:$0xff]
      %v2011 = vld [vmem:[#allocation14 + $0xdf8] sm:$0xff]
      %v2012 = vld [vmem:[#allocation14 + $0xe00] sm:$0xff]
      %v2013 = vld [vmem:[#allocation14 + $0xe08] sm:$0xff]
      %v2014 = vld [vmem:[#allocation14 + $0xe10] sm:$0xff]
      %v2015 = vld [vmem:[#allocation14 + $0xe18] sm:$0xff]
      %v2016 = vld [vmem:[#allocation14 + $0xe20] sm:$0xff]
      %v2017 = vld [vmem:[#allocation14 + $0xe28] sm:$0xff]
      %v2018 = vld [vmem:[#allocation14 + $0xe30] sm:$0xff]
      %v2019 = vld [vmem:[#allocation14 + $0xe38] sm:$0xff]
      %v2020 = vld [vmem:[#allocation14 + $0xe40] sm:$0xff]
      %v2021 = vld [vmem:[#allocation14 + $0xe48] sm:$0xff]
      %v2022 = vld [vmem:[#allocation14 + $0xe50] sm:$0xff]
      %v2023 = vld [vmem:[#allocation14 + $0xe58] sm:$0xff]
      %v2024 = vld [vmem:[#allocation14 + $0xe60] sm:$0xff]
      %v2025 = vld [vmem:[#allocation14 + $0xe68] sm:$0xff]
      %v2026 = vld [vmem:[#allocation14 + $0xe70] sm:$0xff]
      %v2027 = vld [vmem:[#allocation14 + $0xe78] sm:$0xff]
      %v2028 = vld [vmem:[#allocation14 + $0xe80] sm:$0xff]
      %v2029 = vld [vmem:[#allocation14 + $0xe88] sm:$0xff]
      %v2030 = vld [vmem:[#allocation14 + $0xe90] sm:$0xff]
      %v2031 = vld [vmem:[#allocation14 + $0xe98] sm:$0xff]
      %v2032 = vld [vmem:[#allocation14 + $0xea0] sm:$0xff]
      %v2033 = vld [vmem:[#allocation14 + $0xea8] sm:$0xff]
      %v2034 = vld [vmem:[#allocation14 + $0xeb0] sm:$0xff]
      %v2035 = vld [vmem:[#allocation14 + $0xeb8] sm:$0xff]
      %v2036 = vld [vmem:[#allocation14 + $0xec0] sm:$0xff]
      %v2037 = vld [vmem:[#allocation14 + $0xec8] sm:$0xff]
      %v2038 = vld [vmem:[#allocation14 + $0xed0] sm:$0xff]
      %v2039 = vld [vmem:[#allocation14 + $0xed8] sm:$0xff]
      %v2040 = vld [vmem:[#allocation14 + $0xee0] sm:$0xff]
      %v2041 = vld [vmem:[#allocation14 + $0xee8] sm:$0xff]
      %v2042 = vld [vmem:[#allocation14 + $0xef0] sm:$0xff]
      %v2043 = vld [vmem:[#allocation14 + $0xef8] sm:$0xff]
      %v2044 = vld [vmem:[#allocation14 + $0xf00] sm:$0xff]
      %v2045 = vld [vmem:[#allocation14 + $0xf08] sm:$0xff]
      %v2046 = vld [vmem:[#allocation14 + $0xf10] sm:$0xff]
      %v2047 = vld [vmem:[#allocation14 + $0xf18] sm:$0xff]
      %v2048 = vld [vmem:[#allocation14 + $0xf20] sm:$0xff]
      %v2049 = vld [vmem:[#allocation14 + $0xf28] sm:$0xff]
      %v2050 = vld [vmem:[#allocation14 + $0xf30] sm:$0xff]
      %v2051 = vld [vmem:[#allocation14 + $0xf38] sm:$0xff]
      %v2052 = vld [vmem:[#allocation14 + $0xf40] sm:$0xff]
      %v2053 = vld [vmem:[#allocation14 + $0xf48] sm:$0xff]
      %v2054 = vld [vmem:[#allocation14 + $0xf50] sm:$0xff]
      %v2055 = vld [vmem:[#allocation14 + $0xf58] sm:$0xff]
      %v2056 = vld [vmem:[#allocation14 + $0xf60] sm:$0xff]
      %v2057 = vld [vmem:[#allocation14 + $0xf68] sm:$0xff]
      %v2058 = vld [vmem:[#allocation14 + $0xf70] sm:$0xff]
      %v2059 = vld [vmem:[#allocation14 + $0xf78] sm:$0xff]
      %v2060 = vld [vmem:[#allocation14 + $0xf80] sm:$0xff]
      %v2061 = vld [vmem:[#allocation14 + $0xf88] sm:$0xff]
      %v2062 = vld [vmem:[#allocation14 + $0xf90] sm:$0xff]
      %v2063 = vld [vmem:[#allocation14 + $0xf98] sm:$0xff]
      %v2064 = vld [vmem:[#allocation14 + $0xfa0] sm:$0xff]
      %v2065 = vld [vmem:[#allocation14 + $0xfa8] sm:$0xff]
      %v2066 = vld [vmem:[#allocation14 + $0xfb0] sm:$0xff]
      %v2067 = vld [vmem:[#allocation14 + $0xfb8] sm:$0xff]
      %v2068 = vld [vmem:[#allocation14 + $0xfc0] sm:$0xff]
      %v2069 = vld [vmem:[#allocation14 + $0xfc8] sm:$0xff]
      %v2070 = vld [vmem:[#allocation14 + $0xfd0] sm:$0xff]
      %v2071 = vld [vmem:[#allocation14 + $0xfd8] sm:$0xff]
      %v2072 = vld [vmem:[#allocation14 + $0xfe0] sm:$0xff]
      %v2073 = vld [vmem:[#allocation14 + $0xfe8] sm:$0xff]
      %v2074 = vld [vmem:[#allocation14 + $0xff0] sm:$0xff]
      %v2075 = vld [vmem:[#allocation14 + $0xff8] sm:$0xff]
      %v2076 = vld [vmem:[#allocation15] sm:$0xf]
      %v2078 = vlaneseq
      %v2079 = vshrl.u32 %v2078, 7
      %v2080 = vsub.s32 0, %v2079
      %v2081 = vrot.slane %v2076, %v2080
      %v2082 = vlaneseq
      %v2083 = vshrl.u32 %v2082, 7
      %v2084 = vsub.s32 1, %v2083
      %v2085 = vrot.slane %v2076, %v2084
      %v2086 = vlaneseq
      %v2087 = vshrl.u32 %v2086, 7
      %v2088 = vsub.s32 2, %v2087
      %v2089 = vrot.slane %v2076, %v2088
      %v2090 = vlaneseq
      %v2091 = vshrl.u32 %v2090, 7
      %v2092 = vsub.s32 3, %v2091
      %v2093 = vrot.slane %v2076, %v2092
      %v2100 = vcombine.high %v1562, %v1562
      %v2102 = vunpack.c.l.s4 1983009808
      %v2103 = vunpack.c.0.s8 %v2102
      %v2104 = vlaneseq
      %v2105 = vshrl.u32 %v2104, 7
      %v2106 = vsub.s32 %v2103, %v2105
      %v2107 = vrot.slane %v1562, %v2106
      %v2109 = vunpack.c.l.s4 1983009808
      %v2110 = vunpack.c.0.s8 %v2109
      %v2111 = vlaneseq
      %v2112 = vshrl.u32 %v2111, 7
      %v2113 = vsub.s32 %v2110, %v2112
      %v2114 = vrot.slane %v2100, %v2113
      %v2115 = vcombine.high %v2107, %v2107
      %v2116 = vcombine.high %v2114, %v2114
      %v2117 = vcombine.high %v1563, %v1563
      %v2119 = vunpack.c.l.s4 1983009808
      %v2120 = vunpack.c.0.s8 %v2119
      %v2121 = vlaneseq
      %v2122 = vshrl.u32 %v2121, 7
      %v2123 = vsub.s32 %v2120, %v2122
      %v2124 = vrot.slane %v1563, %v2123
      %v2126 = vunpack.c.l.s4 1983009808
      %v2127 = vunpack.c.0.s8 %v2126
      %v2128 = vlaneseq
      %v2129 = vshrl.u32 %v2128, 7
      %v2130 = vsub.s32 %v2127, %v2129
      %v2131 = vrot.slane %v2117, %v2130
      %v2132 = vcombine.high %v2124, %v2124
      %v2133 = vcombine.high %v2131, %v2131
      %2142 = vmatprep.subr.mxu0 %v1625
      %2143 = vmatpush1.msra.mxu0 %v1624
      %2144 = vmatprep.subr.mxu0 %v1621
      %2145 = vmatpush1.msra.mxu0 %v1620
      %2146 = vmatprep.subr.mxu0 %v1617
      %2147 = vmatpush1.msra.mxu0 %v1616
      %2148 = vmatprep.subr.mxu0 %v1613
      %2149 = vmatpush1.msra.mxu0 %v1612
      %2150 = vmatprep.subr.mxu0 %v1609
      %2151 = vmatpush1.msra.mxu0 %v1608
      %2152 = vmatprep.subr.mxu0 %v1605
      %2153 = vmatpush1.msra.mxu0 %v1604
      %2154 = vmatprep.subr.mxu0 %v1601
      %2155 = vmatpush1.msra.mxu0 %v1600
      %2156 = vmatprep.subr.mxu0 %v1597
      %2157 = vmatpush1.msra.mxu0 %v1596
      %2158 = vmatprep.subr.mxu0 %v1593
      %2159 = vmatpush1.msra.mxu0 %v1592
      %2160 = vmatprep.subr.mxu0 %v1589
      %2161 = vmatpush1.msra.mxu0 %v1588
      %2162 = vmatprep.subr.mxu0 %v1585
      %2163 = vmatpush1.msra.mxu0 %v1584
      %2164 = vmatprep.subr.mxu0 %v1581
      %2165 = vmatpush1.msra.mxu0 %v1580
      %2166 = vmatprep.subr.mxu0 %v1577
      %2167 = vmatpush1.msra.mxu0 %v1576
      %2168 = vmatprep.subr.mxu0 %v1573
      %2169 = vmatpush1.msra.mxu0 %v1572
      %2170 = vmatprep.subr.mxu0 %v1569
      %2171 = vmatpush1.msra.mxu0 %v1568
      %2172 = vmatprep.subr.mxu0 %v1565
      %2173 = vmatpush1.msra.mxu0 %v1564
      %2174 = vmatprep.subr.mxu0 %v1689
      %2175 = vmatpush2.msra.mxu0 %v1688
      %2176 = vmatprep.subr.mxu0 %v1685
      %2177 = vmatpush2.msra.mxu0 %v1684
      %2178 = vmatprep.subr.mxu0 %v1681
      %2179 = vmatpush2.msra.mxu0 %v1680
      %2180 = vmatprep.subr.mxu0 %v1677
      %2181 = vmatpush2.msra.mxu0 %v1676
      %2182 = vmatprep.subr.mxu0 %v1673
      %2183 = vmatpush2.msra.mxu0 %v1672
      %2184 = vmatprep.subr.mxu0 %v1669
      %2185 = vmatpush2.msra.mxu0 %v1668
      %2186 = vmatprep.subr.mxu0 %v1665
      %2187 = vmatpush2.msra.mxu0 %v1664
      %2188 = vmatprep.subr.mxu0 %v1661
      %2189 = vmatpush2.msra.mxu0 %v1660
      %2190 = vmatprep.subr.mxu0 %v1657
      %2191 = vmatpush2.msra.mxu0 %v1656
      %2192 = vmatprep.subr.mxu0 %v1653
      %2193 = vmatpush2.msra.mxu0 %v1652
      %2194 = vmatprep.subr.mxu0 %v1649
      %2195 = vmatpush2.msra.mxu0 %v1648
      %2196 = vmatprep.subr.mxu0 %v1645
      %2197 = vmatpush2.msra.mxu0 %v1644
      %2198 = vmatprep.subr.mxu0 %v1641
      %2199 = vmatpush2.msra.mxu0 %v1640
      %2200 = vmatprep.subr.mxu0 %v1637
      %2201 = vmatpush2.msra.mxu0 %v1636
      %2202 = vmatprep.subr.mxu0 %v1633
      %2203 = vmatpush2.msra.mxu0 %v1632
      %2204 = vmatprep.subr.mxu0 %v1629
      %2205 = vmatpush2.msra.mxu0 %v1628
      %2206 = vmatprep.mubr.f32.mxu0 %v2115
      %2207 = vmatmul.mubr.f32.gmra.mxu0 %v2107
      %v2208 = vpop.f32.mrf.mxu0
      %v2209 = vadd.f32 %v2081, %v2208
      %v2210 = vpop.f32.mrf.mxu0
      %v2211 = vadd.f32 %v2085, %v2210
      %2212 = vdwg.mxu0
      %2213 = vmatprep.subr.mxu0 %v1753
      %2214 = vmatpush1.msra.mxu0 %v1752
      %2215 = vmatprep.subr.mxu0 %v1749
      %2216 = vmatpush1.msra.mxu0 %v1748
      %2217 = vmatprep.subr.mxu0 %v1745
      %2218 = vmatpush1.msra.mxu0 %v1744
      %2219 = vmatprep.subr.mxu0 %v1741
      %2220 = vmatpush1.msra.mxu0 %v1740
      %2221 = vmatprep.subr.mxu0 %v1737
      %2222 = vmatpush1.msra.mxu0 %v1736
      %2223 = vmatprep.subr.mxu0 %v1733
      %2224 = vmatpush1.msra.mxu0 %v1732
      %2225 = vmatprep.subr.mxu0 %v1729
      %2226 = vmatpush1.msra.mxu0 %v1728
      %2227 = vmatprep.subr.mxu0 %v1725
      %2228 = vmatpush1.msra.mxu0 %v1724
      %2229 = vmatprep.subr.mxu0 %v1721
      %2230 = vmatpush1.msra.mxu0 %v1720
      %2231 = vmatprep.subr.mxu0 %v1717
      %2232 = vmatpush1.msra.mxu0 %v1716
      %2233 = vmatprep.subr.mxu0 %v1713
      %2234 = vmatpush1.msra.mxu0 %v1712
      %2235 = vmatprep.subr.mxu0 %v1709
      %2236 = vmatpush1.msra.mxu0 %v1708
      %2237 = vmatprep.subr.mxu0 %v1705
      %2238 = vmatpush1.msra.mxu0 %v1704
      %2239 = vmatprep.subr.mxu0 %v1701
      %2240 = vmatpush1.msra.mxu0 %v1700
      %2241 = vmatprep.subr.mxu0 %v1697
      %2242 = vmatpush1.msra.mxu0 %v1696
      %2243 = vmatprep.subr.mxu0 %v1693
      %2244 = vmatpush1.msra.mxu0 %v1692
      %2245 = vmatprep.subr.mxu0 %v1817
      %2246 = vmatpush2.msra.mxu0 %v1816
      %2247 = vmatprep.subr.mxu0 %v1813
      %2248 = vmatpush2.msra.mxu0 %v1812
      %2249 = vmatprep.subr.mxu0 %v1809
      %2250 = vmatpush2.msra.mxu0 %v1808
      %2251 = vmatprep.subr.mxu0 %v1805
      %2252 = vmatpush2.msra.mxu0 %v1804
      %2253 = vmatprep.subr.mxu0 %v1801
      %2254 = vmatpush2.msra.mxu0 %v1800
      %2255 = vmatprep.subr.mxu0 %v1797
      %2256 = vmatpush2.msra.mxu0 %v1796
      %2257 = vmatprep.subr.mxu0 %v1793
      %2258 = vmatpush2.msra.mxu0 %v1792
      %2259 = vmatprep.subr.mxu0 %v1789
      %2260 = vmatpush2.msra.mxu0 %v1788
      %2261 = vmatprep.subr.mxu0 %v1785
      %2262 = vmatpush2.msra.mxu0 %v1784
      %2263 = vmatprep.subr.mxu0 %v1781
      %2264 = vmatpush2.msra.mxu0 %v1780
      %2265 = vmatprep.subr.mxu0 %v1777
      %2266 = vmatpush2.msra.mxu0 %v1776
      %2267 = vmatprep.subr.mxu0 %v1773
      %2268 = vmatpush2.msra.mxu0 %v1772
      %2269 = vmatprep.subr.mxu0 %v1769
      %2270 = vmatpush2.msra.mxu0 %v1768
      %2271 = vmatprep.subr.mxu0 %v1765
      %2272 = vmatpush2.msra.mxu0 %v1764
      %2273 = vmatprep.subr.mxu0 %v1761
      %2274 = vmatpush2.msra.mxu0 %v1760
      %2275 = vmatprep.subr.mxu0 %v1757
      %2276 = vmatpush2.msra.mxu0 %v1756
      %2277 = vmatprep.mubr.f32.mxu0 %v2116
      %2278 = vmatmul.mubr.f32.gmra.mxu0 %v2114
      %v2279 = vpop.f32.mrf.mxu0
      %v2280 = vadd.f32 %v2209, %v2279
      %v2281 = vpop.f32.mrf.mxu0
      %v2282 = vadd.f32 %v2211, %v2281
      %2283 = vdwg.mxu0
      %2284 = vmatprep.subr.mxu0 %v1881
      %2285 = vmatpush1.msra.mxu0 %v1880
      %2286 = vmatprep.subr.mxu0 %v1877
      %2287 = vmatpush1.msra.mxu0 %v1876
      %2288 = vmatprep.subr.mxu0 %v1873
      %2289 = vmatpush1.msra.mxu0 %v1872
      %2290 = vmatprep.subr.mxu0 %v1869
      %2291 = vmatpush1.msra.mxu0 %v1868
      %2292 = vmatprep.subr.mxu0 %v1865
      %2293 = vmatpush1.msra.mxu0 %v1864
      %2294 = vmatprep.subr.mxu0 %v1861
      %2295 = vmatpush1.msra.mxu0 %v1860
      %2296 = vmatprep.subr.mxu0 %v1857
      %2297 = vmatpush1.msra.mxu0 %v1856
      %2298 = vmatprep.subr.mxu0 %v1853
      %2299 = vmatpush1.msra.mxu0 %v1852
      %2300 = vmatprep.subr.mxu0 %v1849
      %2301 = vmatpush1.msra.mxu0 %v1848
      %2302 = vmatprep.subr.mxu0 %v1845
      %2303 = vmatpush1.msra.mxu0 %v1844
      %2304 = vmatprep.subr.mxu0 %v1841
      %2305 = vmatpush1.msra.mxu0 %v1840
      %2306 = vmatprep.subr.mxu0 %v1837
      %2307 = vmatpush1.msra.mxu0 %v1836
      %2308 = vmatprep.subr.mxu0 %v1833
      %2309 = vmatpush1.msra.mxu0 %v1832
      %2310 = vmatprep.subr.mxu0 %v1829
      %2311 = vmatpush1.msra.mxu0 %v1828
      %2312 = vmatprep.subr.mxu0 %v1825
      %2313 = vmatpush1.msra.mxu0 %v1824
      %2314 = vmatprep.subr.mxu0 %v1821
      %2315 = vmatpush1.msra.mxu0 %v1820
      %2316 = vmatprep.subr.mxu0 %v1945
      %2317 = vmatpush2.msra.mxu0 %v1944
      %2318 = vmatprep.subr.mxu0 %v1941
      %2319 = vmatpush2.msra.mxu0 %v1940
      %2320 = vmatprep.subr.mxu0 %v1937
      %2321 = vmatpush2.msra.mxu0 %v1936
      %2322 = vmatprep.subr.mxu0 %v1933
      %2323 = vmatpush2.msra.mxu0 %v1932
      %2324 = vmatprep.subr.mxu0 %v1929
      %2325 = vmatpush2.msra.mxu0 %v1928
      %2326 = vmatprep.subr.mxu0 %v1925
      %2327 = vmatpush2.msra.mxu0 %v1924
      %2328 = vmatprep.subr.mxu0 %v1921
      %2329 = vmatpush2.msra.mxu0 %v1920
      %2330 = vmatprep.subr.mxu0 %v1917
      %2331 = vmatpush2.msra.mxu0 %v1916
      %2332 = vmatprep.subr.mxu0 %v1913
      %2333 = vmatpush2.msra.mxu0 %v1912
      %2334 = vmatprep.subr.mxu0 %v1909
      %2335 = vmatpush2.msra.mxu0 %v1908
      %2336 = vmatprep.subr.mxu0 %v1905
      %2337 = vmatpush2.msra.mxu0 %v1904
      %2338 = vmatprep.subr.mxu0 %v1901
      %2339 = vmatpush2.msra.mxu0 %v1900
      %2340 = vmatprep.subr.mxu0 %v1897
      %2341 = vmatpush2.msra.mxu0 %v1896
      %2342 = vmatprep.subr.mxu0 %v1893
      %2343 = vmatpush2.msra.mxu0 %v1892
      %2344 = vmatprep.subr.mxu0 %v1889
      %2345 = vmatpush2.msra.mxu0 %v1888
      %2346 = vmatprep.subr.mxu0 %v1885
      %2347 = vmatpush2.msra.mxu0 %v1884
      %2348 = vmatprep.mubr.f32.mxu0 %v2132
      %2349 = vmatmul.mubr.f32.gmra.mxu0 %v2124
      %v2350 = vpop.f32.mrf.mxu0
      %v2351 = vadd.f32 %v2280, %v2350
      %v2352 = vpop.f32.mrf.mxu0
      %v2353 = vadd.f32 %v2282, %v2352
      %2354 = vdwg.mxu0
      %2355 = vmatprep.subr.mxu0 %v2009
      %2356 = vmatpush1.msra.mxu0 %v2008
      %2357 = vmatprep.subr.mxu0 %v2005
      %2358 = vmatpush1.msra.mxu0 %v2004
      %2359 = vmatprep.subr.mxu0 %v2001
      %2360 = vmatpush1.msra.mxu0 %v2000
      %2361 = vmatprep.subr.mxu0 %v1997
      %2362 = vmatpush1.msra.mxu0 %v1996
      %2363 = vmatprep.subr.mxu0 %v1993
      %2364 = vmatpush1.msra.mxu0 %v1992
      %2365 = vmatprep.subr.mxu0 %v1989
      %2366 = vmatpush1.msra.mxu0 %v1988
      %2367 = vmatprep.subr.mxu0 %v1985
      %2368 = vmatpush1.msra.mxu0 %v1984
      %2369 = vmatprep.subr.mxu0 %v1981
      %2370 = vmatpush1.msra.mxu0 %v1980
      %2371 = vmatprep.subr.mxu0 %v1977
      %2372 = vmatpush1.msra.mxu0 %v1976
      %2373 = vmatprep.subr.mxu0 %v1973
      %2374 = vmatpush1.msra.mxu0 %v1972
      %2375 = vmatprep.subr.mxu0 %v1969
      %2376 = vmatpush1.msra.mxu0 %v1968
      %2377 = vmatprep.subr.mxu0 %v1965
      %2378 = vmatpush1.msra.mxu0 %v1964
      %2379 = vmatprep.subr.mxu0 %v1961
      %2380 = vmatpush1.msra.mxu0 %v1960
      %2381 = vmatprep.subr.mxu0 %v1957
      %2382 = vmatpush1.msra.mxu0 %v1956
      %2383 = vmatprep.subr.mxu0 %v1953
      %2384 = vmatpush1.msra.mxu0 %v1952
      %2385 = vmatprep.subr.mxu0 %v1949
      %2386 = vmatpush1.msra.mxu0 %v1948
      %2387 = vmatprep.subr.mxu0 %v2073
      %2388 = vmatpush2.msra.mxu0 %v2072
      %2389 = vmatprep.subr.mxu0 %v2069
      %2390 = vmatpush2.msra.mxu0 %v2068
      %2391 = vmatprep.subr.mxu0 %v2065
      %2392 = vmatpush2.msra.mxu0 %v2064
      %2393 = vmatprep.subr.mxu0 %v2061
      %2394 = vmatpush2.msra.mxu0 %v2060
      %2395 = vmatprep.subr.mxu0 %v2057
      %2396 = vmatpush2.msra.mxu0 %v2056
      %2397 = vmatprep.subr.mxu0 %v2053
      %2398 = vmatpush2.msra.mxu0 %v2052
      %2399 = vmatprep.subr.mxu0 %v2049
      %2400 = vmatpush2.msra.mxu0 %v2048
      %2401 = vmatprep.subr.mxu0 %v2045
      %2402 = vmatpush2.msra.mxu0 %v2044
      %2403 = vmatprep.subr.mxu0 %v2041
      %2404 = vmatpush2.msra.mxu0 %v2040
      %2405 = vmatprep.subr.mxu0 %v2037
      %2406 = vmatpush2.msra.mxu0 %v2036
      %2407 = vmatprep.subr.mxu0 %v2033
      %2408 = vmatpush2.msra.mxu0 %v2032
      %2409 = vmatprep.subr.mxu0 %v2029
      %2410 = vmatpush2.msra.mxu0 %v2028
      %2411 = vmatprep.subr.mxu0 %v2025
      %2412 = vmatpush2.msra.mxu0 %v2024
      %2413 = vmatprep.subr.mxu0 %v2021
      %2414 = vmatpush2.msra.mxu0 %v2020
      %2415 = vmatprep.subr.mxu0 %v2017
      %2416 = vmatpush2.msra.mxu0 %v2016
      %2417 = vmatprep.subr.mxu0 %v2013
      %2418 = vmatpush2.msra.mxu0 %v2012
      %2419 = vmatprep.mubr.f32.mxu0 %v2133
      %2420 = vmatmul.mubr.f32.gmra.mxu0 %v2131
      %v2421 = vpop.f32.mrf.mxu0
      %v2422 = vadd.f32 %v2351, %v2421
      %v2423 = vpop.f32.mrf.mxu0
      %v2424 = vadd.f32 %v2353, %v2423
      %2425 = vdwg.mxu0
      %2426 = vmatprep.subr.mxu0 %v1627
      %2427 = vmatpush1.msra.mxu0 %v1626
      %2428 = vmatprep.subr.mxu0 %v1623
      %2429 = vmatpush1.msra.mxu0 %v1622
      %2430 = vmatprep.subr.mxu0 %v1619
      %2431 = vmatpush1.msra.mxu0 %v1618
      %2432 = vmatprep.subr.mxu0 %v1615
      %2433 = vmatpush1.msra.mxu0 %v1614
      %2434 = vmatprep.subr.mxu0 %v1611
      %2435 = vmatpush1.msra.mxu0 %v1610
      %2436 = vmatprep.subr.mxu0 %v1607
      %2437 = vmatpush1.msra.mxu0 %v1606
      %2438 = vmatprep.subr.mxu0 %v1603
      %2439 = vmatpush1.msra.mxu0 %v1602
      %2440 = vmatprep.subr.mxu0 %v1599
      %2441 = vmatpush1.msra.mxu0 %v1598
      %2442 = vmatprep.subr.mxu0 %v1595
      %2443 = vmatpush1.msra.mxu0 %v1594
      %2444 = vmatprep.subr.mxu0 %v1591
      %2445 = vmatpush1.msra.mxu0 %v1590
      %2446 = vmatprep.subr.mxu0 %v1587
      %2447 = vmatpush1.msra.mxu0 %v1586
      %2448 = vmatprep.subr.mxu0 %v1583
      %2449 = vmatpush1.msra.mxu0 %v1582
      %2450 = vmatprep.subr.mxu0 %v1579
      %2451 = vmatpush1.msra.mxu0 %v1578
      %2452 = vmatprep.subr.mxu0 %v1575
      %2453 = vmatpush1.msra.mxu0 %v1574
      %2454 = vmatprep.subr.mxu0 %v1571
      %2455 = vmatpush1.msra.mxu0 %v1570
      %2456 = vmatprep.subr.mxu0 %v1567
      %2457 = vmatpush1.msra.mxu0 %v1566
      %2458 = vmatprep.subr.mxu0 %v1691
      %2459 = vmatpush2.msra.mxu0 %v1690
      %2460 = vmatprep.subr.mxu0 %v1687
      %2461 = vmatpush2.msra.mxu0 %v1686
      %2462 = vmatprep.subr.mxu0 %v1683
      %2463 = vmatpush2.msra.mxu0 %v1682
      %2464 = vmatprep.subr.mxu0 %v1679
      %2465 = vmatpush2.msra.mxu0 %v1678
      %2466 = vmatprep.subr.mxu0 %v1675
      %2467 = vmatpush2.msra.mxu0 %v1674
      %2468 = vmatprep.subr.mxu0 %v1671
      %2469 = vmatpush2.msra.mxu0 %v1670
      %2470 = vmatprep.subr.mxu0 %v1667
      %2471 = vmatpush2.msra.mxu0 %v1666
      %2472 = vmatprep.subr.mxu0 %v1663
      %2473 = vmatpush2.msra.mxu0 %v1662
      %2474 = vmatprep.subr.mxu0 %v1659
      %2475 = vmatpush2.msra.mxu0 %v1658
      %2476 = vmatprep.subr.mxu0 %v1655
      %2477 = vmatpush2.msra.mxu0 %v1654
      %2478 = vmatprep.subr.mxu0 %v1651
      %2479 = vmatpush2.msra.mxu0 %v1650
      %2480 = vmatprep.subr.mxu0 %v1647
      %2481 = vmatpush2.msra.mxu0 %v1646
      %2482 = vmatprep.subr.mxu0 %v1643
      %2483 = vmatpush2.msra.mxu0 %v1642
      %2484 = vmatprep.subr.mxu0 %v1639
      %2485 = vmatpush2.msra.mxu0 %v1638
      %2486 = vmatprep.subr.mxu0 %v1635
      %2487 = vmatpush2.msra.mxu0 %v1634
      %2488 = vmatprep.subr.mxu0 %v1631
      %2489 = vmatpush2.msra.mxu0 %v1630
      %2490 = vmatprep.mubr.f32.mxu0 %v2115
      %2491 = vmatmul.mubr.f32.gmra.mxu0 %v2107
      %v2492 = vpop.f32.mrf.mxu0
      %v2493 = vadd.f32 %v2089, %v2492
      %v2494 = vpop.f32.mrf.mxu0
      %v2495 = vadd.f32 %v2093, %v2494
      %2496 = vdwg.mxu0
      %2497 = vmatprep.subr.mxu0 %v1755
      %2498 = vmatpush1.msra.mxu0 %v1754
      %2499 = vmatprep.subr.mxu0 %v1751
      %2500 = vmatpush1.msra.mxu0 %v1750
      %2501 = vmatprep.subr.mxu0 %v1747
      %2502 = vmatpush1.msra.mxu0 %v1746
      %2503 = vmatprep.subr.mxu0 %v1743
      %2504 = vmatpush1.msra.mxu0 %v1742
      %2505 = vmatprep.subr.mxu0 %v1739
      %2506 = vmatpush1.msra.mxu0 %v1738
      %2507 = vmatprep.subr.mxu0 %v1735
      %2508 = vmatpush1.msra.mxu0 %v1734
      %2509 = vmatprep.subr.mxu0 %v1731
      %2510 = vmatpush1.msra.mxu0 %v1730
      %2511 = vmatprep.subr.mxu0 %v1727
      %2512 = vmatpush1.msra.mxu0 %v1726
      %2513 = vmatprep.subr.mxu0 %v1723
      %2514 = vmatpush1.msra.mxu0 %v1722
      %2515 = vmatprep.subr.mxu0 %v1719
      %2516 = vmatpush1.msra.mxu0 %v1718
      %2517 = vmatprep.subr.mxu0 %v1715
      %2518 = vmatpush1.msra.mxu0 %v1714
      %2519 = vmatprep.subr.mxu0 %v1711
      %2520 = vmatpush1.msra.mxu0 %v1710
      %2521 = vmatprep.subr.mxu0 %v1707
      %2522 = vmatpush1.msra.mxu0 %v1706
      %2523 = vmatprep.subr.mxu0 %v1703
      %2524 = vmatpush1.msra.mxu0 %v1702
      %2525 = vmatprep.subr.mxu0 %v1699
      %2526 = vmatpush1.msra.mxu0 %v1698
      %2527 = vmatprep.subr.mxu0 %v1695
      %2528 = vmatpush1.msra.mxu0 %v1694
      %2529 = vmatprep.subr.mxu0 %v1819
      %2530 = vmatpush2.msra.mxu0 %v1818
      %2531 = vmatprep.subr.mxu0 %v1815
      %2532 = vmatpush2.msra.mxu0 %v1814
      %2533 = vmatprep.subr.mxu0 %v1811
      %2534 = vmatpush2.msra.mxu0 %v1810
      %2535 = vmatprep.subr.mxu0 %v1807
      %2536 = vmatpush2.msra.mxu0 %v1806
      %2537 = vmatprep.subr.mxu0 %v1803
      %2538 = vmatpush2.msra.mxu0 %v1802
      %2539 = vmatprep.subr.mxu0 %v1799
      %2540 = vmatpush2.msra.mxu0 %v1798
      %2541 = vmatprep.subr.mxu0 %v1795
      %2542 = vmatpush2.msra.mxu0 %v1794
      %2543 = vmatprep.subr.mxu0 %v1791
      %2544 = vmatpush2.msra.mxu0 %v1790
      %2545 = vmatprep.subr.mxu0 %v1787
      %2546 = vmatpush2.msra.mxu0 %v1786
      %2547 = vmatprep.subr.mxu0 %v1783
      %2548 = vmatpush2.msra.mxu0 %v1782
      %2549 = vmatprep.subr.mxu0 %v1779
      %2550 = vmatpush2.msra.mxu0 %v1778
      %2551 = vmatprep.subr.mxu0 %v1775
      %2552 = vmatpush2.msra.mxu0 %v1774
      %2553 = vmatprep.subr.mxu0 %v1771
      %2554 = vmatpush2.msra.mxu0 %v1770
      %2555 = vmatprep.subr.mxu0 %v1767
      %2556 = vmatpush2.msra.mxu0 %v1766
      %2557 = vmatprep.subr.mxu0 %v1763
      %2558 = vmatpush2.msra.mxu0 %v1762
      %2559 = vmatprep.subr.mxu0 %v1759
      %2560 = vmatpush2.msra.mxu0 %v1758
      %2561 = vmatprep.mubr.f32.mxu0 %v2116
      %2562 = vmatmul.mubr.f32.gmra.mxu0 %v2114
      %v2563 = vpop.f32.mrf.mxu0
      %v2564 = vadd.f32 %v2493, %v2563
      %v2565 = vpop.f32.mrf.mxu0
      %v2566 = vadd.f32 %v2495, %v2565
      %2567 = vdwg.mxu0
      %2568 = vmatprep.subr.mxu0 %v1883
      %2569 = vmatpush1.msra.mxu0 %v1882
      %2570 = vmatprep.subr.mxu0 %v1879
      %2571 = vmatpush1.msra.mxu0 %v1878
      %2572 = vmatprep.subr.mxu0 %v1875
      %2573 = vmatpush1.msra.mxu0 %v1874
      %2574 = vmatprep.subr.mxu0 %v1871
      %2575 = vmatpush1.msra.mxu0 %v1870
      %2576 = vmatprep.subr.mxu0 %v1867
      %2577 = vmatpush1.msra.mxu0 %v1866
      %2578 = vmatprep.subr.mxu0 %v1863
      %2579 = vmatpush1.msra.mxu0 %v1862
      %2580 = vmatprep.subr.mxu0 %v1859
      %2581 = vmatpush1.msra.mxu0 %v1858
      %2582 = vmatprep.subr.mxu0 %v1855
      %2583 = vmatpush1.msra.mxu0 %v1854
      %2584 = vmatprep.subr.mxu0 %v1851
      %2585 = vmatpush1.msra.mxu0 %v1850
      %2586 = vmatprep.subr.mxu0 %v1847
      %2587 = vmatpush1.msra.mxu0 %v1846
      %2588 = vmatprep.subr.mxu0 %v1843
      %2589 = vmatpush1.msra.mxu0 %v1842
      %2590 = vmatprep.subr.mxu0 %v1839
      %2591 = vmatpush1.msra.mxu0 %v1838
      %2592 = vmatprep.subr.mxu0 %v1835
      %2593 = vmatpush1.msra.mxu0 %v1834
      %2594 = vmatprep.subr.mxu0 %v1831
      %2595 = vmatpush1.msra.mxu0 %v1830
      %2596 = vmatprep.subr.mxu0 %v1827
      %2597 = vmatpush1.msra.mxu0 %v1826
      %2598 = vmatprep.subr.mxu0 %v1823
      %2599 = vmatpush1.msra.mxu0 %v1822
      %2600 = vmatprep.subr.mxu0 %v1947
      %2601 = vmatpush2.msra.mxu0 %v1946
      %2602 = vmatprep.subr.mxu0 %v1943
      %2603 = vmatpush2.msra.mxu0 %v1942
      %2604 = vmatprep.subr.mxu0 %v1939
      %2605 = vmatpush2.msra.mxu0 %v1938
      %2606 = vmatprep.subr.mxu0 %v1935
      %2607 = vmatpush2.msra.mxu0 %v1934
      %2608 = vmatprep.subr.mxu0 %v1931
      %2609 = vmatpush2.msra.mxu0 %v1930
      %2610 = vmatprep.subr.mxu0 %v1927
      %2611 = vmatpush2.msra.mxu0 %v1926
      %2612 = vmatprep.subr.mxu0 %v1923
      %2613 = vmatpush2.msra.mxu0 %v1922
      %2614 = vmatprep.subr.mxu0 %v1919
      %2615 = vmatpush2.msra.mxu0 %v1918
      %2616 = vmatprep.subr.mxu0 %v1915
      %2617 = vmatpush2.msra.mxu0 %v1914
      %2618 = vmatprep.subr.mxu0 %v1911
      %2619 = vmatpush2.msra.mxu0 %v1910
      %2620 = vmatprep.subr.mxu0 %v1907
      %2621 = vmatpush2.msra.mxu0 %v1906
      %2622 = vmatprep.subr.mxu0 %v1903
      %2623 = vmatpush2.msra.mxu0 %v1902
      %2624 = vmatprep.subr.mxu0 %v1899
      %2625 = vmatpush2.msra.mxu0 %v1898
      %2626 = vmatprep.subr.mxu0 %v1895
      %2627 = vmatpush2.msra.mxu0 %v1894
      %2628 = vmatprep.subr.mxu0 %v1891
      %2629 = vmatpush2.msra.mxu0 %v1890
      %2630 = vmatprep.subr.mxu0 %v1887
      %2631 = vmatpush2.msra.mxu0 %v1886
      %2632 = vmatprep.mubr.f32.mxu0 %v2132
      %2633 = vmatmul.mubr.f32.gmra.mxu0 %v2124
      %v2634 = vpop.f32.mrf.mxu0
      %v2635 = vadd.f32 %v2564, %v2634
      %v2636 = vpop.f32.mrf.mxu0
      %v2637 = vadd.f32 %v2566, %v2636
      %2638 = vdwg.mxu0
      %2639 = vmatprep.subr.mxu0 %v2011
      %2640 = vmatpush1.msra.mxu0 %v2010
      %2641 = vmatprep.subr.mxu0 %v2007
      %2642 = vmatpush1.msra.mxu0 %v2006
      %2643 = vmatprep.subr.mxu0 %v2003
      %2644 = vmatpush1.msra.mxu0 %v2002
      %2645 = vmatprep.subr.mxu0 %v1999
      %2646 = vmatpush1.msra.mxu0 %v1998
      %2647 = vmatprep.subr.mxu0 %v1995
      %2648 = vmatpush1.msra.mxu0 %v1994
      %2649 = vmatprep.subr.mxu0 %v1991
      %2650 = vmatpush1.msra.mxu0 %v1990
      %2651 = vmatprep.subr.mxu0 %v1987
      %2652 = vmatpush1.msra.mxu0 %v1986
      %2653 = vmatprep.subr.mxu0 %v1983
      %2654 = vmatpush1.msra.mxu0 %v1982
      %2655 = vmatprep.subr.mxu0 %v1979
      %2656 = vmatpush1.msra.mxu0 %v1978
      %2657 = vmatprep.subr.mxu0 %v1975
      %2658 = vmatpush1.msra.mxu0 %v1974
      %2659 = vmatprep.subr.mxu0 %v1971
      %2660 = vmatpush1.msra.mxu0 %v1970
      %2661 = vmatprep.subr.mxu0 %v1967
      %2662 = vmatpush1.msra.mxu0 %v1966
      %2663 = vmatprep.subr.mxu0 %v1963
      %2664 = vmatpush1.msra.mxu0 %v1962
      %2665 = vmatprep.subr.mxu0 %v1959
      %2666 = vmatpush1.msra.mxu0 %v1958
      %2667 = vmatprep.subr.mxu0 %v1955
      %2668 = vmatpush1.msra.mxu0 %v1954
      %2669 = vmatprep.subr.mxu0 %v1951
      %2670 = vmatpush1.msra.mxu0 %v1950
      %2671 = vmatprep.subr.mxu0 %v2075
      %2672 = vmatpush2.msra.mxu0 %v2074
      %2673 = vmatprep.subr.mxu0 %v2071
      %2674 = vmatpush2.msra.mxu0 %v2070
      %2675 = vmatprep.subr.mxu0 %v2067
      %2676 = vmatpush2.msra.mxu0 %v2066
      %2677 = vmatprep.subr.mxu0 %v2063
      %2678 = vmatpush2.msra.mxu0 %v2062
      %2679 = vmatprep.subr.mxu0 %v2059
      %2680 = vmatpush2.msra.mxu0 %v2058
      %2681 = vmatprep.subr.mxu0 %v2055
      %2682 = vmatpush2.msra.mxu0 %v2054
      %2683 = vmatprep.subr.mxu0 %v2051
      %2684 = vmatpush2.msra.mxu0 %v2050
      %2685 = vmatprep.subr.mxu0 %v2047
      %2686 = vmatpush2.msra.mxu0 %v2046
      %2687 = vmatprep.subr.mxu0 %v2043
      %2688 = vmatpush2.msra.mxu0 %v2042
      %2689 = vmatprep.subr.mxu0 %v2039
      %2690 = vmatpush2.msra.mxu0 %v2038
      %2691 = vmatprep.subr.mxu0 %v2035
      %2692 = vmatpush2.msra.mxu0 %v2034
      %2693 = vmatprep.subr.mxu0 %v2031
      %2694 = vmatpush2.msra.mxu0 %v2030
      %2695 = vmatprep.subr.mxu0 %v2027
      %2696 = vmatpush2.msra.mxu0 %v2026
      %2697 = vmatprep.subr.mxu0 %v2023
      %2698 = vmatpush2.msra.mxu0 %v2022
      %2699 = vmatprep.subr.mxu0 %v2019
      %2700 = vmatpush2.msra.mxu0 %v2018
      %2701 = vmatprep.subr.mxu0 %v2015
      %2702 = vmatpush2.msra.mxu0 %v2014
      %2703 = vmatprep.mubr.f32.mxu0 %v2133
      %2704 = vmatmul.mubr.f32.gmra.mxu0 %v2131
      %v2705 = vpop.f32.mrf.mxu0
      %v2706 = vadd.f32 %v2635, %v2705
      %v2707 = vpop.f32.mrf.mxu0
      %v2708 = vadd.f32 %v2637, %v2707
      %2709 = vdwg.mxu0
      %v2710 = vmax.f32 %v2422, 0.0
      %v2711 = vmax.f32 %v2424, 0.0
      %v2712 = vmax.f32 %v2706, 0.0
      %v2713 = vmax.f32 %v2708, 0.0
      %v2714 = vld [vmem:[#allocation17] sm:$0xff]
      %v2715 = vld [vmem:[#allocation17 + $0x8] sm:$0xff]
      %v2716 = vld [vmem:[#allocation17 + $0x10] sm:$0xff]
      %v2717 = vld [vmem:[#allocation17 + $0x18] sm:$0xff]
      %v2718 = vld [vmem:[#allocation17 + $0x20] sm:$0xff]
      %v2719 = vld [vmem:[#allocation17 + $0x28] sm:$0xff]
      %v2720 = vld [vmem:[#allocation17 + $0x30] sm:$0xff]
      %v2721 = vld [vmem:[#allocation17 + $0x38] sm:$0xff]
      %v2722 = vld [vmem:[#allocation17 + $0x40] sm:$0xff]
      %v2723 = vld [vmem:[#allocation17 + $0x48] sm:$0xff]
      %v2724 = vld [vmem:[#allocation17 + $0x50] sm:$0xff]
      %v2725 = vld [vmem:[#allocation17 + $0x58] sm:$0xff]
      %v2726 = vld [vmem:[#allocation17 + $0x60] sm:$0xff]
      %v2727 = vld [vmem:[#allocation17 + $0x68] sm:$0xff]
      %v2728 = vld [vmem:[#allocation17 + $0x70] sm:$0xff]
      %v2729 = vld [vmem:[#allocation17 + $0x78] sm:$0xff]
      %v2730 = vld [vmem:[#allocation17 + $0x80] sm:$0xff]
      %v2731 = vld [vmem:[#allocation17 + $0x88] sm:$0xff]
      %v2732 = vld [vmem:[#allocation17 + $0x90] sm:$0xff]
      %v2733 = vld [vmem:[#allocation17 + $0x98] sm:$0xff]
      %v2734 = vld [vmem:[#allocation17 + $0xa0] sm:$0xff]
      %v2735 = vld [vmem:[#allocation17 + $0xa8] sm:$0xff]
      %v2736 = vld [vmem:[#allocation17 + $0xb0] sm:$0xff]
      %v2737 = vld [vmem:[#allocation17 + $0xb8] sm:$0xff]
      %v2738 = vld [vmem:[#allocation17 + $0xc0] sm:$0xff]
      %v2739 = vld [vmem:[#allocation17 + $0xc8] sm:$0xff]
      %v2740 = vld [vmem:[#allocation17 + $0xd0] sm:$0xff]
      %v2741 = vld [vmem:[#allocation17 + $0xd8] sm:$0xff]
      %v2742 = vld [vmem:[#allocation17 + $0xe0] sm:$0xff]
      %v2743 = vld [vmem:[#allocation17 + $0xe8] sm:$0xff]
      %v2744 = vld [vmem:[#allocation17 + $0xf0] sm:$0xff]
      %v2745 = vld [vmem:[#allocation17 + $0xf8] sm:$0xff]
      %v2746 = vld [vmem:[#allocation17 + $0x100] sm:$0xff]
      %v2747 = vld [vmem:[#allocation17 + $0x108] sm:$0xff]
      %v2748 = vld [vmem:[#allocation17 + $0x110] sm:$0xff]
      %v2749 = vld [vmem:[#allocation17 + $0x118] sm:$0xff]
      %v2750 = vld [vmem:[#allocation17 + $0x120] sm:$0xff]
      %v2751 = vld [vmem:[#allocation17 + $0x128] sm:$0xff]
      %v2752 = vld [vmem:[#allocation17 + $0x130] sm:$0xff]
      %v2753 = vld [vmem:[#allocation17 + $0x138] sm:$0xff]
      %v2754 = vld [vmem:[#allocation17 + $0x140] sm:$0xff]
      %v2755 = vld [vmem:[#allocation17 + $0x148] sm:$0xff]
      %v2756 = vld [vmem:[#allocation17 + $0x150] sm:$0xff]
      %v2757 = vld [vmem:[#allocation17 + $0x158] sm:$0xff]
      %v2758 = vld [vmem:[#allocation17 + $0x160] sm:$0xff]
      %v2759 = vld [vmem:[#allocation17 + $0x168] sm:$0xff]
      %v2760 = vld [vmem:[#allocation17 + $0x170] sm:$0xff]
      %v2761 = vld [vmem:[#allocation17 + $0x178] sm:$0xff]
      %v2762 = vld [vmem:[#allocation17 + $0x180] sm:$0xff]
      %v2763 = vld [vmem:[#allocation17 + $0x188] sm:$0xff]
      %v2764 = vld [vmem:[#allocation17 + $0x190] sm:$0xff]
      %v2765 = vld [vmem:[#allocation17 + $0x198] sm:$0xff]
      %v2766 = vld [vmem:[#allocation17 + $0x1a0] sm:$0xff]
      %v2767 = vld [vmem:[#allocation17 + $0x1a8] sm:$0xff]
      %v2768 = vld [vmem:[#allocation17 + $0x1b0] sm:$0xff]
      %v2769 = vld [vmem:[#allocation17 + $0x1b8] sm:$0xff]
      %v2770 = vld [vmem:[#allocation17 + $0x1c0] sm:$0xff]
      %v2771 = vld [vmem:[#allocation17 + $0x1c8] sm:$0xff]
      %v2772 = vld [vmem:[#allocation17 + $0x1d0] sm:$0xff]
      %v2773 = vld [vmem:[#allocation17 + $0x1d8] sm:$0xff]
      %v2774 = vld [vmem:[#allocation17 + $0x1e0] sm:$0xff]
      %v2775 = vld [vmem:[#allocation17 + $0x1e8] sm:$0xff]
      %v2776 = vld [vmem:[#allocation17 + $0x1f0] sm:$0xff]
      %v2777 = vld [vmem:[#allocation17 + $0x1f8] sm:$0xff]
      %v2778 = vld [vmem:[#allocation17 + $0x200] sm:$0xff]
      %v2779 = vld [vmem:[#allocation17 + $0x208] sm:$0xff]
      %v2780 = vld [vmem:[#allocation17 + $0x210] sm:$0xff]
      %v2781 = vld [vmem:[#allocation17 + $0x218] sm:$0xff]
      %v2782 = vld [vmem:[#allocation17 + $0x220] sm:$0xff]
      %v2783 = vld [vmem:[#allocation17 + $0x228] sm:$0xff]
      %v2784 = vld [vmem:[#allocation17 + $0x230] sm:$0xff]
      %v2785 = vld [vmem:[#allocation17 + $0x238] sm:$0xff]
      %v2786 = vld [vmem:[#allocation17 + $0x240] sm:$0xff]
      %v2787 = vld [vmem:[#allocation17 + $0x248] sm:$0xff]
      %v2788 = vld [vmem:[#allocation17 + $0x250] sm:$0xff]
      %v2789 = vld [vmem:[#allocation17 + $0x258] sm:$0xff]
      %v2790 = vld [vmem:[#allocation17 + $0x260] sm:$0xff]
      %v2791 = vld [vmem:[#allocation17 + $0x268] sm:$0xff]
      %v2792 = vld [vmem:[#allocation17 + $0x270] sm:$0xff]
      %v2793 = vld [vmem:[#allocation17 + $0x278] sm:$0xff]
      %v2794 = vld [vmem:[#allocation17 + $0x280] sm:$0xff]
      %v2795 = vld [vmem:[#allocation17 + $0x288] sm:$0xff]
      %v2796 = vld [vmem:[#allocation17 + $0x290] sm:$0xff]
      %v2797 = vld [vmem:[#allocation17 + $0x298] sm:$0xff]
      %v2798 = vld [vmem:[#allocation17 + $0x2a0] sm:$0xff]
      %v2799 = vld [vmem:[#allocation17 + $0x2a8] sm:$0xff]
      %v2800 = vld [vmem:[#allocation17 + $0x2b0] sm:$0xff]
      %v2801 = vld [vmem:[#allocation17 + $0x2b8] sm:$0xff]
      %v2802 = vld [vmem:[#allocation17 + $0x2c0] sm:$0xff]
      %v2803 = vld [vmem:[#allocation17 + $0x2c8] sm:$0xff]
      %v2804 = vld [vmem:[#allocation17 + $0x2d0] sm:$0xff]
      %v2805 = vld [vmem:[#allocation17 + $0x2d8] sm:$0xff]
      %v2806 = vld [vmem:[#allocation17 + $0x2e0] sm:$0xff]
      %v2807 = vld [vmem:[#allocation17 + $0x2e8] sm:$0xff]
      %v2808 = vld [vmem:[#allocation17 + $0x2f0] sm:$0xff]
      %v2809 = vld [vmem:[#allocation17 + $0x2f8] sm:$0xff]
      %v2810 = vld [vmem:[#allocation17 + $0x300] sm:$0xff]
      %v2811 = vld [vmem:[#allocation17 + $0x308] sm:$0xff]
      %v2812 = vld [vmem:[#allocation17 + $0x310] sm:$0xff]
      %v2813 = vld [vmem:[#allocation17 + $0x318] sm:$0xff]
      %v2814 = vld [vmem:[#allocation17 + $0x320] sm:$0xff]
      %v2815 = vld [vmem:[#allocation17 + $0x328] sm:$0xff]
      %v2816 = vld [vmem:[#allocation17 + $0x330] sm:$0xff]
      %v2817 = vld [vmem:[#allocation17 + $0x338] sm:$0xff]
      %v2818 = vld [vmem:[#allocation17 + $0x340] sm:$0xff]
      %v2819 = vld [vmem:[#allocation17 + $0x348] sm:$0xff]
      %v2820 = vld [vmem:[#allocation17 + $0x350] sm:$0xff]
      %v2821 = vld [vmem:[#allocation17 + $0x358] sm:$0xff]
      %v2822 = vld [vmem:[#allocation17 + $0x360] sm:$0xff]
      %v2823 = vld [vmem:[#allocation17 + $0x368] sm:$0xff]
      %v2824 = vld [vmem:[#allocation17 + $0x370] sm:$0xff]
      %v2825 = vld [vmem:[#allocation17 + $0x378] sm:$0xff]
      %v2826 = vld [vmem:[#allocation17 + $0x380] sm:$0xff]
      %v2827 = vld [vmem:[#allocation17 + $0x388] sm:$0xff]
      %v2828 = vld [vmem:[#allocation17 + $0x390] sm:$0xff]
      %v2829 = vld [vmem:[#allocation17 + $0x398] sm:$0xff]
      %v2830 = vld [vmem:[#allocation17 + $0x3a0] sm:$0xff]
      %v2831 = vld [vmem:[#allocation17 + $0x3a8] sm:$0xff]
      %v2832 = vld [vmem:[#allocation17 + $0x3b0] sm:$0xff]
      %v2833 = vld [vmem:[#allocation17 + $0x3b8] sm:$0xff]
      %v2834 = vld [vmem:[#allocation17 + $0x3c0] sm:$0xff]
      %v2835 = vld [vmem:[#allocation17 + $0x3c8] sm:$0xff]
      %v2836 = vld [vmem:[#allocation17 + $0x3d0] sm:$0xff]
      %v2837 = vld [vmem:[#allocation17 + $0x3d8] sm:$0xff]
      %v2838 = vld [vmem:[#allocation17 + $0x3e0] sm:$0xff]
      %v2839 = vld [vmem:[#allocation17 + $0x3e8] sm:$0xff]
      %v2840 = vld [vmem:[#allocation17 + $0x3f0] sm:$0xff]
      %v2841 = vld [vmem:[#allocation17 + $0x3f8] sm:$0xff]
      %v2842 = vld [vmem:[#allocation18] sm:$0x3]
      %v2844 = vlaneseq
      %v2845 = vshrl.u32 %v2844, 7
      %v2846 = vsub.s32 0, %v2845
      %v2847 = vrot.slane %v2842, %v2846
      %v2848 = vlaneseq
      %v2849 = vshrl.u32 %v2848, 7
      %v2850 = vsub.s32 1, %v2849
      %v2851 = vrot.slane %v2842, %v2850
      %2854 = vmatprep.subr.mxu0 %v2745
      %2855 = vmatpush1.msra.mxu0 %v2744
      %2856 = vmatprep.subr.mxu0 %v2743
      %2857 = vmatpush1.msra.mxu0 %v2742
      %2858 = vmatprep.subr.mxu0 %v2741
      %2859 = vmatpush1.msra.mxu0 %v2740
      %2860 = vmatprep.subr.mxu0 %v2739
      %2861 = vmatpush1.msra.mxu0 %v2738
      %2862 = vmatprep.subr.mxu0 %v2737
      %2863 = vmatpush1.msra.mxu0 %v2736
      %2864 = vmatprep.subr.mxu0 %v2735
      %2865 = vmatpush1.msra.mxu0 %v2734
      %2866 = vmatprep.subr.mxu0 %v2733
      %2867 = vmatpush1.msra.mxu0 %v2732
      %2868 = vmatprep.subr.mxu0 %v2731
      %2869 = vmatpush1.msra.mxu0 %v2730
      %2870 = vmatprep.subr.mxu0 %v2729
      %2871 = vmatpush1.msra.mxu0 %v2728
      %2872 = vmatprep.subr.mxu0 %v2727
      %2873 = vmatpush1.msra.mxu0 %v2726
      %2874 = vmatprep.subr.mxu0 %v2725
      %2875 = vmatpush1.msra.mxu0 %v2724
      %2876 = vmatprep.subr.mxu0 %v2723
      %2877 = vmatpush1.msra.mxu0 %v2722
      %2878 = vmatprep.subr.mxu0 %v2721
      %2879 = vmatpush1.msra.mxu0 %v2720
      %2880 = vmatprep.subr.mxu0 %v2719
      %2881 = vmatpush1.msra.mxu0 %v2718
      %2882 = vmatprep.subr.mxu0 %v2717
      %2883 = vmatpush1.msra.mxu0 %v2716
      %2884 = vmatprep.subr.mxu0 %v2715
      %2885 = vmatpush1.msra.mxu0 %v2714
      %2886 = vmatprep.subr.mxu0 %v2777
      %2887 = vmatpush2.msra.mxu0 %v2776
      %2888 = vmatprep.subr.mxu0 %v2775
      %2889 = vmatpush2.msra.mxu0 %v2774
      %2890 = vmatprep.subr.mxu0 %v2773
      %2891 = vmatpush2.msra.mxu0 %v2772
      %2892 = vmatprep.subr.mxu0 %v2771
      %2893 = vmatpush2.msra.mxu0 %v2770
      %2894 = vmatprep.subr.mxu0 %v2769
      %2895 = vmatpush2.msra.mxu0 %v2768
      %2896 = vmatprep.subr.mxu0 %v2767
      %2897 = vmatpush2.msra.mxu0 %v2766
      %2898 = vmatprep.subr.mxu0 %v2765
      %2899 = vmatpush2.msra.mxu0 %v2764
      %2900 = vmatprep.subr.mxu0 %v2763
      %2901 = vmatpush2.msra.mxu0 %v2762
      %2902 = vmatprep.subr.mxu0 %v2761
      %2903 = vmatpush2.msra.mxu0 %v2760
      %2904 = vmatprep.subr.mxu0 %v2759
      %2905 = vmatpush2.msra.mxu0 %v2758
      %2906 = vmatprep.subr.mxu0 %v2757
      %2907 = vmatpush2.msra.mxu0 %v2756
      %2908 = vmatprep.subr.mxu0 %v2755
      %2909 = vmatpush2.msra.mxu0 %v2754
      %2910 = vmatprep.subr.mxu0 %v2753
      %2911 = vmatpush2.msra.mxu0 %v2752
      %2912 = vmatprep.subr.mxu0 %v2751
      %2913 = vmatpush2.msra.mxu0 %v2750
      %2914 = vmatprep.subr.mxu0 %v2749
      %2915 = vmatpush2.msra.mxu0 %v2748
      %2916 = vmatprep.subr.mxu0 %v2747
      %2917 = vmatpush2.msra.mxu0 %v2746
      %2918 = vmatprep.mubr.f32.mxu0 %v2711
      %2919 = vmatmul.mubr.f32.gmra.mxu0 %v2710
      %v2920 = vpop.f32.mrf.mxu0
      %v2921 = vadd.f32 %v2847, %v2920
      %v2922 = vpop.f32.mrf.mxu0
      %v2923 = vadd.f32 %v2851, %v2922
      %2924 = vdwg.mxu0
      %2925 = vmatprep.subr.mxu0 %v2809
      %2926 = vmatpush1.msra.mxu0 %v2808
      %2927 = vmatprep.subr.mxu0 %v2807
      %2928 = vmatpush1.msra.mxu0 %v2806
      %2929 = vmatprep.subr.mxu0 %v2805
      %2930 = vmatpush1.msra.mxu0 %v2804
      %2931 = vmatprep.subr.mxu0 %v2803
      %2932 = vmatpush1.msra.mxu0 %v2802
      %2933 = vmatprep.subr.mxu0 %v2801
      %2934 = vmatpush1.msra.mxu0 %v2800
      %2935 = vmatprep.subr.mxu0 %v2799
      %2936 = vmatpush1.msra.mxu0 %v2798
      %2937 = vmatprep.subr.mxu0 %v2797
      %2938 = vmatpush1.msra.mxu0 %v2796
      %2939 = vmatprep.subr.mxu0 %v2795
      %2940 = vmatpush1.msra.mxu0 %v2794
      %2941 = vmatprep.subr.mxu0 %v2793
      %2942 = vmatpush1.msra.mxu0 %v2792
      %2943 = vmatprep.subr.mxu0 %v2791
      %2944 = vmatpush1.msra.mxu0 %v2790
      %2945 = vmatprep.subr.mxu0 %v2789
      %2946 = vmatpush1.msra.mxu0 %v2788
      %2947 = vmatprep.subr.mxu0 %v2787
      %2948 = vmatpush1.msra.mxu0 %v2786
      %2949 = vmatprep.subr.mxu0 %v2785
      %2950 = vmatpush1.msra.mxu0 %v2784
      %2951 = vmatprep.subr.mxu0 %v2783
      %2952 = vmatpush1.msra.mxu0 %v2782
      %2953 = vmatprep.subr.mxu0 %v2781
      %2954 = vmatpush1.msra.mxu0 %v2780
      %2955 = vmatprep.subr.mxu0 %v2779
      %2956 = vmatpush1.msra.mxu0 %v2778
      %2957 = vmatprep.subr.mxu0 %v2841
      %2958 = vmatpush2.msra.mxu0 %v2840
      %2959 = vmatprep.subr.mxu0 %v2839
      %2960 = vmatpush2.msra.mxu0 %v2838
      %2961 = vmatprep.subr.mxu0 %v2837
      %2962 = vmatpush2.msra.mxu0 %v2836
      %2963 = vmatprep.subr.mxu0 %v2835
      %2964 = vmatpush2.msra.mxu0 %v2834
      %2965 = vmatprep.subr.mxu0 %v2833
      %2966 = vmatpush2.msra.mxu0 %v2832
      %2967 = vmatprep.subr.mxu0 %v2831
      %2968 = vmatpush2.msra.mxu0 %v2830
      %2969 = vmatprep.subr.mxu0 %v2829
      %2970 = vmatpush2.msra.mxu0 %v2828
      %2971 = vmatprep.subr.mxu0 %v2827
      %2972 = vmatpush2.msra.mxu0 %v2826
      %2973 = vmatprep.subr.mxu0 %v2825
      %2974 = vmatpush2.msra.mxu0 %v2824
      %2975 = vmatprep.subr.mxu0 %v2823
      %2976 = vmatpush2.msra.mxu0 %v2822
      %2977 = vmatprep.subr.mxu0 %v2821
      %2978 = vmatpush2.msra.mxu0 %v2820
      %2979 = vmatprep.subr.mxu0 %v2819
      %2980 = vmatpush2.msra.mxu0 %v2818
      %2981 = vmatprep.subr.mxu0 %v2817
      %2982 = vmatpush2.msra.mxu0 %v2816
      %2983 = vmatprep.subr.mxu0 %v2815
      %2984 = vmatpush2.msra.mxu0 %v2814
      %2985 = vmatprep.subr.mxu0 %v2813
      %2986 = vmatpush2.msra.mxu0 %v2812
      %2987 = vmatprep.subr.mxu0 %v2811
      %2988 = vmatpush2.msra.mxu0 %v2810
      %2989 = vmatprep.mubr.f32.mxu0 %v2713
      %2990 = vmatmul.mubr.f32.gmra.mxu0 %v2712
      %v2991 = vpop.f32.mrf.mxu0
      %v2992 = vadd.f32 %v2921, %v2991
      %v2993 = vpop.f32.mrf.mxu0
      %v2994 = vadd.f32 %v2923, %v2993
      %2995 = vdwg.mxu0
      %v2996 = vmax.f32 %v2992, 0.0
      %v2997 = vmax.f32 %v2994, 0.0
      %v2998 = vld [vmem:[#allocation20] sm:$0xff]
      %v2999 = vld [vmem:[#allocation20 + $0x8] sm:$0xff]
      %v3000 = vld [vmem:[#allocation20 + $0x10] sm:$0xff]
      %v3001 = vld [vmem:[#allocation20 + $0x18] sm:$0xff]
      %v3002 = vld [vmem:[#allocation20 + $0x20] sm:$0xff]
      %v3003 = vld [vmem:[#allocation20 + $0x28] sm:$0xff]
      %v3004 = vld [vmem:[#allocation20 + $0x30] sm:$0xff]
      %v3005 = vld [vmem:[#allocation20 + $0x38] sm:$0xff]
      %v3006 = vld [vmem:[#allocation20 + $0x40] sm:$0xff]
      %v3007 = vld [vmem:[#allocation20 + $0x48] sm:$0xff]
      %v3008 = vld [vmem:[#allocation20 + $0x50] sm:$0xff]
      %v3009 = vld [vmem:[#allocation20 + $0x58] sm:$0xff]
      %v3010 = vld [vmem:[#allocation20 + $0x60] sm:$0xff]
      %v3011 = vld [vmem:[#allocation20 + $0x68] sm:$0xff]
      %v3012 = vld [vmem:[#allocation20 + $0x70] sm:$0xff]
      %v3013 = vld [vmem:[#allocation20 + $0x78] sm:$0xff]
      %v3014 = vld [vmem:[#allocation20 + $0x80] sm:$0xff]
      %v3015 = vld [vmem:[#allocation20 + $0x88] sm:$0xff]
      %v3016 = vld [vmem:[#allocation20 + $0x90] sm:$0xff]
      %v3017 = vld [vmem:[#allocation20 + $0x98] sm:$0xff]
      %v3018 = vld [vmem:[#allocation20 + $0xa0] sm:$0xff]
      %v3019 = vld [vmem:[#allocation20 + $0xa8] sm:$0xff]
      %v3020 = vld [vmem:[#allocation20 + $0xb0] sm:$0xff]
      %v3021 = vld [vmem:[#allocation20 + $0xb8] sm:$0xff]
      %v3022 = vld [vmem:[#allocation20 + $0xc0] sm:$0xff]
      %v3023 = vld [vmem:[#allocation20 + $0xc8] sm:$0xff]
      %v3024 = vld [vmem:[#allocation20 + $0xd0] sm:$0xff]
      %v3025 = vld [vmem:[#allocation20 + $0xd8] sm:$0xff]
      %v3026 = vld [vmem:[#allocation20 + $0xe0] sm:$0xff]
      %v3027 = vld [vmem:[#allocation20 + $0xe8] sm:$0xff]
      %v3028 = vld [vmem:[#allocation20 + $0xf0] sm:$0xff]
      %v3029 = vld [vmem:[#allocation20 + $0xf8] sm:$0xff]
      %v3030 = vld [vmem:[#allocation21] sm:$0x1]
      %v3032 = vlaneseq
      %v3033 = vshrl.u32 %v3032, 7
      %v3034 = vsub.s32 0, %v3033
      %v3035 = vrot.slane %v3030, %v3034
      %3037 = vmatprep.subr.mxu0 0.0
      %3038 = vmatpush1.msra.mxu0 %v3013
      %3039 = vmatprep.subr.mxu0 0.0
      %3040 = vmatpush1.msra.mxu0 %v3012
      %3041 = vmatprep.subr.mxu0 0.0
      %3042 = vmatpush1.msra.mxu0 %v3011
      %3043 = vmatprep.subr.mxu0 0.0
      %3044 = vmatpush1.msra.mxu0 %v3010
      %3045 = vmatprep.subr.mxu0 0.0
      %3046 = vmatpush1.msra.mxu0 %v3009
      %3047 = vmatprep.subr.mxu0 0.0
      %3048 = vmatpush1.msra.mxu0 %v3008
      %3049 = vmatprep.subr.mxu0 0.0
      %3050 = vmatpush1.msra.mxu0 %v3007
      %3051 = vmatprep.subr.mxu0 0.0
      %3052 = vmatpush1.msra.mxu0 %v3006
      %3053 = vmatprep.subr.mxu0 0.0
      %3054 = vmatpush1.msra.mxu0 %v3005
      %3055 = vmatprep.subr.mxu0 0.0
      %3056 = vmatpush1.msra.mxu0 %v3004
      %3057 = vmatprep.subr.mxu0 0.0
      %3058 = vmatpush1.msra.mxu0 %v3003
      %3059 = vmatprep.subr.mxu0 0.0
      %3060 = vmatpush1.msra.mxu0 %v3002
      %3061 = vmatprep.subr.mxu0 0.0
      %3062 = vmatpush1.msra.mxu0 %v3001
      %3063 = vmatprep.subr.mxu0 0.0
      %3064 = vmatpush1.msra.mxu0 %v3000
      %3065 = vmatprep.subr.mxu0 0.0
      %3066 = vmatpush1.msra.mxu0 %v2999
      %3067 = vmatprep.subr.mxu0 0.0
      %3068 = vmatpush1.msra.mxu0 %v2998
      %3069 = vmatprep.subr.mxu0 0.0
      %3070 = vmatpush2.msra.mxu0 %v3029
      %3071 = vmatprep.subr.mxu0 0.0
      %3072 = vmatpush2.msra.mxu0 %v3028
      %3073 = vmatprep.subr.mxu0 0.0
      %3074 = vmatpush2.msra.mxu0 %v3027
      %3075 = vmatprep.subr.mxu0 0.0
      %3076 = vmatpush2.msra.mxu0 %v3026
      %3077 = vmatprep.subr.mxu0 0.0
      %3078 = vmatpush2.msra.mxu0 %v3025
      %3079 = vmatprep.subr.mxu0 0.0
      %3080 = vmatpush2.msra.mxu0 %v3024
      %3081 = vmatprep.subr.mxu0 0.0
      %3082 = vmatpush2.msra.mxu0 %v3023
      %3083 = vmatprep.subr.mxu0 0.0
      %3084 = vmatpush2.msra.mxu0 %v3022
      %3085 = vmatprep.subr.mxu0 0.0
      %3086 = vmatpush2.msra.mxu0 %v3021
      %3087 = vmatprep.subr.mxu0 0.0
      %3088 = vmatpush2.msra.mxu0 %v3020
      %3089 = vmatprep.subr.mxu0 0.0
      %3090 = vmatpush2.msra.mxu0 %v3019
      %3091 = vmatprep.subr.mxu0 0.0
      %3092 = vmatpush2.msra.mxu0 %v3018
      %3093 = vmatprep.subr.mxu0 0.0
      %3094 = vmatpush2.msra.mxu0 %v3017
      %3095 = vmatprep.subr.mxu0 0.0
      %3096 = vmatpush2.msra.mxu0 %v3016
      %3097 = vmatprep.subr.mxu0 0.0
      %3098 = vmatpush2.msra.mxu0 %v3015
      %3099 = vmatprep.subr.mxu0 0.0
      %3100 = vmatpush2.msra.mxu0 %v3014
      %3101 = vmatprep.mubr.f32.mxu0 %v2997
      %3102 = vmatmul.mubr.f32.gmra.mxu0 %v2996
      %v3103 = vpop.f32.mrf.mxu0
      %v3104 = vadd.f32 %v3035, %v3103
      %v3105 = vpop.f32.mrf.mxu0
      %3106 = vdwg.mxu0
      %v3109 = vunpack.c.l.s4 1966171168
      %v3110 = vunpack.c.0.s8 %v3109
      %v3111 = vlaneseq
      %v3112 = vshrl.u32 %v3111, 7
      %v3113 = vsub.s32 %v3110, %v3112
      %v3114 = vrot.slane %v3104, %v3113
      %v3115 = vcombine.high %v3114, %v3114
      %v3117 = vunpack.c.l.s4 1966171168
      %v3118 = vunpack.c.0.s8 %v3117
      %v3119 = vlaneseq
      %v3120 = vshrl.u32 %v3119, 7
      %v3121 = vsub.s32 %v3118, %v3120
      %v3122 = vrot.slane %v3114, %v3121
      %v3124 = vunpack.c.l.s4 1966171168
      %v3125 = vunpack.c.0.s8 %v3124
      %v3126 = vlaneseq
      %v3127 = vshrl.u32 %v3126, 7
      %v3128 = vsub.s32 %v3125, %v3127
      %v3129 = vrot.slane %v3115, %v3128
      %3132 = vst [vmem:[#allocation23] sm:$0x1] %v3122
      %3133 = vst [vmem:[#allocation23 + $0x1] sm:$0x1] %v3129
    $region113: #{tpu_custom_call.1} parent=1 // pred_fallthru
      _
    // Predicated region
    $region114: #{tpu_custom_call.1} parent=1 // pred_check
      _
    $region115: #{tpu_custom_call.1} parent=1 // pred_check_branch
      %3135 = sbr.rel (0) target = $region117
    $region116: #{tpu_custom_call.1} parent=1 // pred_region
      %s3137 = ssub.s32 32, 32
      %3138 = vsyncadd [#allocation5], %s3137
      %s3139 = sshll.u32 [#allocation23], 4
      %s3140 = int_to_ptr.vmem [resolvable:$true] %s3139
      %3145 = dma.vmem_to_hbm [thread:$0]  %s3140, 32, %s13, [#allocation5], 16, 16, 1
    $region117: #{tpu_custom_call.1} parent=1 // pred_fallthru
      _
    // Predicated region
    $region118: #{tpu_custom_call.1} parent=1 // pred_check
      _
    $region119: #{tpu_custom_call.1} parent=1 // pred_check_branch
      %3147 = sbr.rel (0) target = $region121
    $region120: #{tpu_custom_call.1} parent=1 // pred_region
      %3148 = dma.done [#allocation5], 32
    $region121: #{tpu_custom_call.1} parent=1 // pred_fallthru
      _
    %3149 = vsyncpa [#allocation4], 1
    %3150 = vsyncpa [#allocation7], 1
    %3151 = vsyncpa [#allocation10], 1
    %3152 = vsyncpa [#allocation13], 1
    %3153 = vsyncpa [#allocation16], 1
    %3154 = vsyncpa [#allocation19], 1
    %3155 = vsyncpa [#allocation22], 1
    %3156 = vsyncpa [#allocation5], 1

</llo_original>
